<compile_context>
chip_gen: v6e
topology: v6e:2x2x1
jax: 0.10.0
libtpu: 0.0.40
codegen_flags: <defaults>
</compile_context>

<pallas_src>
import jax
import jax.numpy as jnp
from jax.experimental import pallas as pl
from jax.experimental.pallas import tpu as pltpu


def _round_up(x, m):
    return ((x + m - 1) // m) * m


def _compiler_params(vmem_mb):
    return pltpu.CompilerParams(
        dimension_semantics=("parallel",),
        vmem_limit_bytes=vmem_mb * 1024 * 1024,
    )


# ----------------------------- Pallas kernels ------------------------------

def _fused_conv_pool_kernel(ysp_ref, w1m_ref, b1m_ref, w2_ref, b2_ref, o_ref,
                            y1_scr, acc_scr):
    # ysp_ref : (IMG, 832, 27) bf16  -- conv1 patches, rows r = wpar*416 + h*16
    #           + q_w (h in [0,26), q_w in [0,16), q_w>=12 is zero padding),
    #           lanes l = kw2*9 + kh1*3 + kw1.
    # w1m_ref : (27, 96) bf16  block-diagonal conv1 weights (kw2-replicated)
    # b1m_ref : (1, 96)  f32   conv1 bias tiled 3x
    # w2_ref  : (3, 96, 64) bf16  conv2 weights, w2[kh, kw*32+c, o]
    # b2_ref  : (1, 64)  f32
    # o_ref   : (IMG, 12, 16, 64) bf16  pooled+relu'd features (q_w padded)
    # y1_scr  : (IMG, 832, 96) bf16 VMEM scratch  -- conv1 output (relu'd)
    # acc_scr : (2, IMG*384, 64) f32 VMEM scratch -- conv2 acc per w-parity
    img = ysp_ref.shape[0]

    # ---- conv1 + relu: one (IMG*832, 27) @ (27, 96) dot, f32 accumulation.
    p = ysp_ref[...].reshape(img * 832, 27)
    y1 = jnp.dot(p, w1m_ref[...], preferred_element_type=jnp.float32)
    y1 = jnp.maximum(y1 + b1m_ref[...], 0.0)
    y1_scr[...] = y1.astype(jnp.bfloat16).reshape(img, 832, 96)

    # ---- conv2: per w-parity accumulator, 3 kh taps, kw merged along K=96.
    # Window slice offsets wpar*416 + kh*16 are all multiples of 8 (aligned).
    for wpar in range(2):
        for kh in range(3):
            start = wpar * 416 + kh * 16
            lhs = y1_scr[:, pl.ds(start, 384), :].reshape(img * 384, 96)
            contrib = jnp.dot(lhs, w2_ref[kh],
                              preferred_element_type=jnp.float32)
            if kh == 0:
                acc_scr[wpar] = contrib
            else:
                acc_scr[wpar] += contrib

    # ---- 2x2 max-pool (pre-bias; max/relu/(+b) commute): W-pool across the
    # two w-parity accumulators, H-pool across adjacent oh via a
    # layout-preserving (.., 12, 2, 16, 64) reshape (16 rows = 2 sublane tiles).
    wpool = jnp.maximum(acc_scr[0], acc_scr[1])            # (IMG*384, 64)
    v = wpool.reshape(img, 12, 2, 16, 64)                  # (img,q_h,hp,q_w,c)
    pooled = jnp.maximum(v[:, :, 0], v[:, :, 1])           # (img, 12, 16, 64)
    o_ref[...] = jnp.maximum(pooled + b2_ref[...], 0.0).astype(o_ref.dtype)


def _fc_head_kernel(x_ref, w1_ref, b1_ref, w2_ref, b2_ref, o_ref):
    # o = log_softmax(relu(x @ w1 + b1) @ w2 + b2); classes padded to 128 lanes.
    # Logits stay f32 so the -1e30 pad bias is safe (no bf16 -inf / NaN).
    h = jnp.dot(x_ref[...], w1_ref[...], preferred_element_type=jnp.float32)
    h = jnp.maximum(h + b1_ref[...], 0.0)
    logits = jnp.dot(h.astype(jnp.bfloat16), w2_ref[...],
                     preferred_element_type=jnp.float32) + b2_ref[...]
    m = jnp.max(logits, axis=-1, keepdims=True)
    lse = jnp.log(jnp.sum(jnp.exp(logits - m), axis=-1, keepdims=True)) + m
    o_ref[...] = logits - lse


# ----------------------------- Pallas wrappers ------------------------------

def fused_conv_pool(ysp, w1m, b1m, w2, b2, *, img_per_block):
    """conv1+relu+conv2+relu+maxpool, IMG images per grid step.

    ysp: (N, 832, 27) bf16 (N multiple of img_per_block) -> (N, 12, 16, 64) bf16.
    """
    n = ysp.shape[0]
    assert n % img_per_block == 0
    grid = n // img_per_block
    return pl.pallas_call(
        _fused_conv_pool_kernel,
        out_shape=jax.ShapeDtypeStruct((n, 12, 16, 64), jnp.bfloat16),
        grid=(grid,),
        in_specs=[
            pl.BlockSpec((img_per_block, 832, 27), lambda g: (g, 0, 0)),
            pl.BlockSpec((27, 96), lambda g: (0, 0)),
            pl.BlockSpec((1, 96), lambda g: (0, 0)),
            pl.BlockSpec((3, 96, 64), lambda g: (0, 0, 0)),
            pl.BlockSpec((1, 64), lambda g: (0, 0)),
        ],
        out_specs=pl.BlockSpec((img_per_block, 12, 16, 64),
                               lambda g: (g, 0, 0, 0)),
        scratch_shapes=[
            pltpu.VMEM((img_per_block, 832, 96), jnp.bfloat16),
            pltpu.VMEM((2, img_per_block * 384, 64), jnp.float32),
        ],
        compiler_params=_compiler_params(32),
    )(ysp, w1m, b1m, w2, b2)


def fc_head(flat, wfc1, bfc1, wfc2p, bfc2p, *, block_m=512):
    """Fused fc1 + relu + fc2 + log_softmax. flat:(N,12288) bf16 -> (N,128) f32."""
    M, K = flat.shape
    bm = min(block_m, _round_up(M, 8))
    # v7x has two TensorCores: make sure there are >=2 parallel grid steps.
    if M >= 16 and M <= bm:
        bm = _round_up(pl.cdiv(M, 2), 8)
    num_blocks = pl.cdiv(M, bm)
    Mp = num_blocks * bm
    if Mp != M:
        flat = jnp.pad(flat, ((0, Mp - M), (0, 0)))
    out = pl.pallas_call(
        _fc_head_kernel,
        out_shape=jax.ShapeDtypeStruct((Mp, 128), jnp.float32),
        grid=(num_blocks,),
        in_specs=[
            pl.BlockSpec((bm, K), lambda i: (i, 0)),
            pl.BlockSpec((K, 128), lambda i: (0, 0)),
            pl.BlockSpec((1, 128), lambda i: (0, 0)),
            pl.BlockSpec((128, 128), lambda i: (0, 0)),
            pl.BlockSpec((1, 128), lambda i: (0, 0)),
        ],
        out_specs=pl.BlockSpec((bm, 128), lambda i: (i, 0)),
        compiler_params=_compiler_params(48),
    )(flat, wfc1, bfc1, wfc2p, bfc2p)
    return out[:M]


# ------------------------------ XLA glue -------------------------------------

def _build_conv_patches(x):
    """x: (N, 28, 28) bf16 -> conv1 patch tensor (N, 832, 27) bf16.

    rows  r = wpar*416 + h*16 + q_w   (h in [0,26), q_w in [0,16), pad q_w>=12)
    lanes l = kw2*9 + kh1*3 + kw1
    value   = x[n, h + kh1, 2*q_w + wpar + kw2 + kw1]
    """
    n = x.shape[0]
    planes = []
    for wpar in range(2):
        lanes = []
        for kw2 in range(3):
            for kh1 in range(3):
                for kw1 in range(3):
                    sw = wpar + kw2 + kw1                       # w shift in [0,5]
                    lanes.append(x[:, kh1:kh1 + 26, sw:sw + 24:2])  # (N,26,12)
        plane = jnp.stack(lanes, axis=-1)                       # (N,26,12,27)
        plane = jnp.pad(plane, ((0, 0), (0, 0), (0, 4), (0, 0)))  # q_w 12->16
        planes.append(plane.reshape(n, 416, 27))
    return jnp.concatenate(planes, axis=1)                      # (N,832,27)


# ------------------------------ Forward pass --------------------------------

def net_forward(x, params, *, images_per_block=8):
    """x: (N, 1, 28, 28) float32 (NCHW, like PyTorch) -> log-probs (N, 10) f32."""
    N = x.shape[0]
    xb = x[:, 0].astype(jnp.bfloat16)                   # cast BEFORE the glue

    # Images per conv grid step: amortise per-step overhead, but keep >=2
    # grid steps whenever batch >= 2 (both TensorCores on v7x).
    img = max(1, min(images_per_block, N // 2)) if N >= 2 else 1
    Np = _round_up(N, img)
    if Np != N:
        xb = jnp.pad(xb, ((0, Np - N), (0, 0), (0, 0)))

    ysp = _build_conv_patches(xb)                                  # (Np,832,27)

    # conv1 + relu + conv2 + relu + 2x2 max-pool, fused.
    pooled = fused_conv_pool(ysp, params["w1m"], params["b1m"],
                             params["w2"], params["b2"],
                             img_per_block=img)                    # (Np,12,16,64)

    # dropout1 / dropout2: identity at inference time.
    flat = pooled.reshape(Np, 12 * 16 * 64)                        # (Np, 12288)

    # fc1 + relu + fc2 (lane-padded) + log_softmax, fused.
    out = fc_head(flat, params["wfc1"], params["bfc1"],
                  params["wfc2p"], params["bfc2p"])                # (Np, 128)
    return out[:N, :10]


# ------------------------------ Parameter init ------------------------------

def init_params(key):
    # Kernel-friendly layouts (mapping from a real PyTorch checkpoint):
    #   w1m  (27, 96)       block-diag of w1[k1, out] = conv1.weight[out,0,kh,kw]
    #   b1m  (1, 96)        conv1.bias tiled 3x
    #   w2   (3, 96, 64)    w2[kh, kw*32+c, o] = conv2.weight[o, c, kh, kw]
    #   wfc1 (12288, 128)   fc1.weight.T rows permuted (C,H,W)->(H, Wpad16, C),
    #                       zero rows at the q_w >= 12 padding positions
    #   wfc2p (128, 128)    fc2.weight.T zero-padded 10 -> 128 output lanes
    #   bfc2p (1, 128)      fc2.bias padded with -1e30 (f32!) so pad lanes vanish
    ks = jax.random.split(key, 8)

    def w_init(k, shape, fan_in):
        return jax.random.normal(k, shape, jnp.float32) / jnp.sqrt(float(fan_in))

    w1 = w_init(ks[0], (9, 32), 9)
    b1 = w_init(ks[1], (1, 32), 9)
    w1m = jnp.zeros((27, 96), jnp.float32)
    for kw2 in range(3):
        w1m = w1m.at[kw2 * 9:(kw2 + 1) * 9, kw2 * 32:(kw2 + 1) * 32].set(w1)

    params = {
        "w1m": w1m.astype(jnp.bfloat16),
        "b1m": jnp.tile(b1, (1, 3)),                                # (1,96) f32
        "w2": w_init(ks[2], (3, 96, 64), 288).astype(jnp.bfloat16),
        "b2": w_init(ks[3], (1, 64), 288),
        "bfc1": w_init(ks[5], (1, 128), 9216),
    }

    wfc1_real = w_init(ks[4], (12, 12, 64, 128), 9216)              # (h,w,c,out)
    wfc1 = jnp.zeros((12, 16, 64, 128), jnp.float32).at[:, :12].set(wfc1_real)
    params["wfc1"] = wfc1.reshape(12 * 16 * 64, 128).astype(jnp.bfloat16)

    wfc2 = w_init(ks[6], (128, 10), 128)
    bfc2 = w_init(ks[7], (1, 10), 128)
    params["wfc2p"] = (jnp.zeros((128, 128), jnp.float32)
                       .at[:, :10].set(wfc2).astype(jnp.bfloat16))
    params["bfc2p"] = jnp.full((1, 128), -1e30, jnp.float32).at[:, :10].set(bfc2)
    return params


# ----------------------------------- Main ------------------------------------

if __name__ == "__main__":
    key = jax.random.PRNGKey(0)
    k_x, k_p = jax.random.split(key)

    # Spatial size must be 28x28 so fc1 input is 9216 = 64*12*12 (as in the spec).
    x = jax.random.normal(k_x, (2, 1, 28, 28), jnp.float32)
    params = init_params(k_p)

    out = jax.jit(net_forward)(x, params)
    out = jax.block_until_ready(out)

    assert out.shape == (2, 10)
    assert out.dtype == jnp.float32
    # log-probabilities must exponentiate-and-sum to ~1 per row
    row_sums = jnp.exp(out).sum(axis=-1)
    assert jnp.allclose(row_sums, 1.0, atol=1e-2)
    print("KERNEL_OK")
</pallas_src>

<mosaic_0001>
module attributes {stable_mosaic.version = 11 : i64} {
  func.func @_fused_conv_pool_kernel(%arg0: i32, %arg1: memref<1x832x27xbf16, #tpu.memory_space<vmem>>, %arg2: memref<27x96xbf16, #tpu.memory_space<vmem>>, %arg3: memref<1x96xf32, #tpu.memory_space<vmem>>, %arg4: memref<3x96x64xbf16, #tpu.memory_space<vmem>>, %arg5: memref<1x64xf32, #tpu.memory_space<vmem>>, %arg6: memref<1x12x16x64xbf16, #tpu.memory_space<vmem>>, %arg7: memref<1x832x96xbf16, #tpu.memory_space<vmem>>, %arg8: memref<2x384x64xf32, #tpu.memory_space<vmem>>) attributes {dimension_semantics = [#tpu.dimension_semantics<parallel>], iteration_bounds = array<i64: 2>, scalar_prefetch = 0 : i64, scratch_operands = 2 : i64, tpu.core_type = #tpu.core_type<tc>, window_params = [{transform_indices = @transform_0, window_bounds = array<i64: 1, 832, 27>}, {pipeline_mode = #tpu.pipeline_mode<synchronous>, transform_indices = @transform_1, window_bounds = array<i64: 27, 96>}, {pipeline_mode = #tpu.pipeline_mode<synchronous>, transform_indices = @transform_2, window_bounds = array<i64: 1, 96>}, {pipeline_mode = #tpu.pipeline_mode<synchronous>, transform_indices = @transform_3, window_bounds = array<i64: 3, 96, 64>}, {pipeline_mode = #tpu.pipeline_mode<synchronous>, transform_indices = @transform_4, window_bounds = array<i64: 1, 64>}, {transform_indices = @transform_5, window_bounds = array<i64: 1, 12, 16, 64>}]} {
    %c0 = arith.constant 0 : index
    %c0_0 = arith.constant 0 : index
    %c0_1 = arith.constant 0 : index
    %0 = vector.load %arg1[%c0, %c0_0, %c0_1] : memref<1x832x27xbf16, #tpu.memory_space<vmem>>, vector<1x832x27xbf16>
    %1 = vector.shape_cast %0 : vector<1x832x27xbf16> to vector<832x27xbf16>
    %c0_2 = arith.constant 0 : index
    %c0_3 = arith.constant 0 : index
    %2 = vector.load %arg2[%c0_2, %c0_3] : memref<27x96xbf16, #tpu.memory_space<vmem>>, vector<27x96xbf16>
    %cst = arith.constant dense<0.000000e+00> : vector<832x96xf32>
    %3 = tpu.matmul %1, %2, %cst {dimension_numbers = #tpu.dot_dimension_numbers<[1], [0], [0], [1], [0, 0, 1, 1], [], []>} : vector<832x27xbf16>, vector<27x96xbf16>, vector<832x96xf32> -> vector<832x96xf32>
    %c0_4 = arith.constant 0 : index
    %c0_5 = arith.constant 0 : index
    %4 = vector.load %arg3[%c0_4, %c0_5] : memref<1x96xf32, #tpu.memory_space<vmem>>, vector<1x96xf32>
    %5 = vector.broadcast %4 : vector<1x96xf32> to vector<832x96xf32>
    %6 = arith.addf %3, %5 : vector<832x96xf32>
    %cst_6 = arith.constant 0.000000e+00 : f32
    %7 = vector.broadcast %cst_6 : f32 to vector<832x96xf32>
    %8 = arith.maximumf %6, %7 : vector<832x96xf32>
    %9 = arith.truncf %8 : vector<832x96xf32> to vector<832x96xbf16>
    %10 = vector.shape_cast %9 : vector<832x96xbf16> to vector<1x832x96xbf16>
    %c0_7 = arith.constant 0 : index
    %c0_8 = arith.constant 0 : index
    %c0_9 = arith.constant 0 : index
    %11 = vector.load %arg7[%c0_7, %c0_8, %c0_9] : memref<1x832x96xbf16, #tpu.memory_space<vmem>>, vector<1x832x96xbf16>
    tpu.vector_store %arg7[%c0_7, %c0_8, %c0_9], %10 {strides = array<i32>} : memref<1x832x96xbf16, #tpu.memory_space<vmem>>, vector<1x832x96xbf16>,
    %c0_10 = arith.constant 0 : index
    %c0_11 = arith.constant 0 : index
    %c0_12 = arith.constant 0 : index
    %12 = vector.load %arg7[%c0_10, %c0_11, %c0_12] : memref<1x832x96xbf16, #tpu.memory_space<vmem>>, vector<1x384x96xbf16>
    %13 = vector.shape_cast %12 : vector<1x384x96xbf16> to vector<384x96xbf16>
    %c0_13 = arith.constant 0 : index
    %c0_14 = arith.constant 0 : index
    %c0_15 = arith.constant 0 : index
    %14 = vector.load %arg4[%c0_13, %c0_14, %c0_15] : memref<3x96x64xbf16, #tpu.memory_space<vmem>>, vector<1x96x64xbf16>
    %15 = vector.shape_cast %14 : vector<1x96x64xbf16> to vector<96x64xbf16>
    %cst_16 = arith.constant dense<0.000000e+00> : vector<384x64xf32>
    %16 = tpu.matmul %13, %15, %cst_16 {dimension_numbers = #tpu.dot_dimension_numbers<[1], [0], [0], [1], [0, 0, 1, 1], [], []>} : vector<384x96xbf16>, vector<96x64xbf16>, vector<384x64xf32> -> vector<384x64xf32>
    %c0_17 = arith.constant 0 : index
    %c0_18 = arith.constant 0 : index
    %c0_19 = arith.constant 0 : index
    %17 = vector.load %arg8[%c0_17, %c0_18, %c0_19] : memref<2x384x64xf32, #tpu.memory_space<vmem>>, vector<1x384x64xf32>
    %18 = vector.shape_cast %17 : vector<1x384x64xf32> to vector<384x64xf32>
    %19 = vector.shape_cast %16 : vector<384x64xf32> to vector<1x384x64xf32>
    tpu.vector_store %arg8[%c0_17, %c0_18, %c0_19], %19 {strides = array<i32>} : memref<2x384x64xf32, #tpu.memory_space<vmem>>, vector<1x384x64xf32>,
    %c0_20 = arith.constant 0 : index
    %c16 = arith.constant 16 : index
    %c0_21 = arith.constant 0 : index
    %20 = vector.load %arg7[%c0_20, %c16, %c0_21] : memref<1x832x96xbf16, #tpu.memory_space<vmem>>, vector<1x384x96xbf16>
    %21 = vector.shape_cast %20 : vector<1x384x96xbf16> to vector<384x96xbf16>
    %c1 = arith.constant 1 : index
    %c0_22 = arith.constant 0 : index
    %c0_23 = arith.constant 0 : index
    %22 = vector.load %arg4[%c1, %c0_22, %c0_23] : memref<3x96x64xbf16, #tpu.memory_space<vmem>>, vector<1x96x64xbf16>
    %23 = vector.shape_cast %22 : vector<1x96x64xbf16> to vector<96x64xbf16>
    %cst_24 = arith.constant dense<0.000000e+00> : vector<384x64xf32>
    %24 = tpu.matmul %21, %23, %cst_24 {dimension_numbers = #tpu.dot_dimension_numbers<[1], [0], [0], [1], [0, 0, 1, 1], [], []>} : vector<384x96xbf16>, vector<96x64xbf16>, vector<384x64xf32> -> vector<384x64xf32>
    %c0_25 = arith.constant 0 : index
    %c0_26 = arith.constant 0 : index
    %c0_27 = arith.constant 0 : index
    %25 = vector.load %arg8[%c0_25, %c0_26, %c0_27] : memref<2x384x64xf32, #tpu.memory_space<vmem>>, vector<1x384x64xf32>
    %26 = vector.shape_cast %25 : vector<1x384x64xf32> to vector<384x64xf32>
    %27 = arith.addf %26, %24 : vector<384x64xf32>
    %c0_28 = arith.constant 0 : index
    %c0_29 = arith.constant 0 : index
    %c0_30 = arith.constant 0 : index
    %28 = vector.load %arg8[%c0_28, %c0_29, %c0_30] : memref<2x384x64xf32, #tpu.memory_space<vmem>>, vector<1x384x64xf32>
    %29 = vector.shape_cast %28 : vector<1x384x64xf32> to vector<384x64xf32>
    %30 = vector.shape_cast %27 : vector<384x64xf32> to vector<1x384x64xf32>
    tpu.vector_store %arg8[%c0_28, %c0_29, %c0_30], %30 {strides = array<i32>} : memref<2x384x64xf32, #tpu.memory_space<vmem>>, vector<1x384x64xf32>,
    %c0_31 = arith.constant 0 : index
    %c32 = arith.constant 32 : index
    %c0_32 = arith.constant 0 : index
    %31 = vector.load %arg7[%c0_31, %c32, %c0_32] : memref<1x832x96xbf16, #tpu.memory_space<vmem>>, vector<1x384x96xbf16>
    %32 = vector.shape_cast %31 : vector<1x384x96xbf16> to vector<384x96xbf16>
    %c2 = arith.constant 2 : index
    %c0_33 = arith.constant 0 : index
    %c0_34 = arith.constant 0 : index
    %33 = vector.load %arg4[%c2, %c0_33, %c0_34] : memref<3x96x64xbf16, #tpu.memory_space<vmem>>, vector<1x96x64xbf16>
    %34 = vector.shape_cast %33 : vector<1x96x64xbf16> to vector<96x64xbf16>
    %cst_35 = arith.constant dense<0.000000e+00> : vector<384x64xf32>
    %35 = tpu.matmul %32, %34, %cst_35 {dimension_numbers = #tpu.dot_dimension_numbers<[1], [0], [0], [1], [0, 0, 1, 1], [], []>} : vector<384x96xbf16>, vector<96x64xbf16>, vector<384x64xf32> -> vector<384x64xf32>
    %c0_36 = arith.constant 0 : index
    %c0_37 = arith.constant 0 : index
    %c0_38 = arith.constant 0 : index
    %36 = vector.load %arg8[%c0_36, %c0_37, %c0_38] : memref<2x384x64xf32, #tpu.memory_space<vmem>>, vector<1x384x64xf32>
    %37 = vector.shape_cast %36 : vector<1x384x64xf32> to vector<384x64xf32>
    %38 = arith.addf %37, %35 : vector<384x64xf32>
    %c0_39 = arith.constant 0 : index
    %c0_40 = arith.constant 0 : index
    %c0_41 = arith.constant 0 : index
    %39 = vector.load %arg8[%c0_39, %c0_40, %c0_41] : memref<2x384x64xf32, #tpu.memory_space<vmem>>, vector<1x384x64xf32>
    %40 = vector.shape_cast %39 : vector<1x384x64xf32> to vector<384x64xf32>
    %41 = vector.shape_cast %38 : vector<384x64xf32> to vector<1x384x64xf32>
    tpu.vector_store %arg8[%c0_39, %c0_40, %c0_41], %41 {strides = array<i32>} : memref<2x384x64xf32, #tpu.memory_space<vmem>>, vector<1x384x64xf32>,
    %c0_42 = arith.constant 0 : index
    %c416 = arith.constant 416 : index
    %c0_43 = arith.constant 0 : index
    %42 = vector.load %arg7[%c0_42, %c416, %c0_43] : memref<1x832x96xbf16, #tpu.memory_space<vmem>>, vector<1x384x96xbf16>
    %43 = vector.shape_cast %42 : vector<1x384x96xbf16> to vector<384x96xbf16>
    %c0_44 = arith.constant 0 : index
    %c0_45 = arith.constant 0 : index
    %c0_46 = arith.constant 0 : index
    %44 = vector.load %arg4[%c0_44, %c0_45, %c0_46] : memref<3x96x64xbf16, #tpu.memory_space<vmem>>, vector<1x96x64xbf16>
    %45 = vector.shape_cast %44 : vector<1x96x64xbf16> to vector<96x64xbf16>
    %cst_47 = arith.constant dense<0.000000e+00> : vector<384x64xf32>
    %46 = tpu.matmul %43, %45, %cst_47 {dimension_numbers = #tpu.dot_dimension_numbers<[1], [0], [0], [1], [0, 0, 1, 1], [], []>} : vector<384x96xbf16>, vector<96x64xbf16>, vector<384x64xf32> -> vector<384x64xf32>
    %c1_48 = arith.constant 1 : index
    %c0_49 = arith.constant 0 : index
    %c0_50 = arith.constant 0 : index
    %47 = vector.load %arg8[%c1_48, %c0_49, %c0_50] : memref<2x384x64xf32, #tpu.memory_space<vmem>>, vector<1x384x64xf32>
    %48 = vector.shape_cast %47 : vector<1x384x64xf32> to vector<384x64xf32>
    %49 = vector.shape_cast %46 : vector<384x64xf32> to vector<1x384x64xf32>
    tpu.vector_store %arg8[%c1_48, %c0_49, %c0_50], %49 {strides = array<i32>} : memref<2x384x64xf32, #tpu.memory_space<vmem>>, vector<1x384x64xf32>,
    %c0_51 = arith.constant 0 : index
    %c432 = arith.constant 432 : index
    %c0_52 = arith.constant 0 : index
    %50 = vector.load %arg7[%c0_51, %c432, %c0_52] : memref<1x832x96xbf16, #tpu.memory_space<vmem>>, vector<1x384x96xbf16>
    %51 = vector.shape_cast %50 : vector<1x384x96xbf16> to vector<384x96xbf16>
    %c1_53 = arith.constant 1 : index
    %c0_54 = arith.constant 0 : index
    %c0_55 = arith.constant 0 : index
    %52 = vector.load %arg4[%c1_53, %c0_54, %c0_55] : memref<3x96x64xbf16, #tpu.memory_space<vmem>>, vector<1x96x64xbf16>
    %53 = vector.shape_cast %52 : vector<1x96x64xbf16> to vector<96x64xbf16>
    %cst_56 = arith.constant dense<0.000000e+00> : vector<384x64xf32>
    %54 = tpu.matmul %51, %53, %cst_56 {dimension_numbers = #tpu.dot_dimension_numbers<[1], [0], [0], [1], [0, 0, 1, 1], [], []>} : vector<384x96xbf16>, vector<96x64xbf16>, vector<384x64xf32> -> vector<384x64xf32>
    %c1_57 = arith.constant 1 : index
    %c0_58 = arith.constant 0 : index
    %c0_59 = arith.constant 0 : index
    %55 = vector.load %arg8[%c1_57, %c0_58, %c0_59] : memref<2x384x64xf32, #tpu.memory_space<vmem>>, vector<1x384x64xf32>
    %56 = vector.shape_cast %55 : vector<1x384x64xf32> to vector<384x64xf32>
    %57 = arith.addf %56, %54 : vector<384x64xf32>
    %c1_60 = arith.constant 1 : index
    %c0_61 = arith.constant 0 : index
    %c0_62 = arith.constant 0 : index
    %58 = vector.load %arg8[%c1_60, %c0_61, %c0_62] : memref<2x384x64xf32, #tpu.memory_space<vmem>>, vector<1x384x64xf32>
    %59 = vector.shape_cast %58 : vector<1x384x64xf32> to vector<384x64xf32>
    %60 = vector.shape_cast %57 : vector<384x64xf32> to vector<1x384x64xf32>
    tpu.vector_store %arg8[%c1_60, %c0_61, %c0_62], %60 {strides = array<i32>} : memref<2x384x64xf32, #tpu.memory_space<vmem>>, vector<1x384x64xf32>,
    %c0_63 = arith.constant 0 : index
    %c448 = arith.constant 448 : index
    %c0_64 = arith.constant 0 : index
    %61 = vector.load %arg7[%c0_63, %c448, %c0_64] : memref<1x832x96xbf16, #tpu.memory_space<vmem>>, vector<1x384x96xbf16>
    %62 = vector.shape_cast %61 : vector<1x384x96xbf16> to vector<384x96xbf16>
    %c2_65 = arith.constant 2 : index
    %c0_66 = arith.constant 0 : index
    %c0_67 = arith.constant 0 : index
    %63 = vector.load %arg4[%c2_65, %c0_66, %c0_67] : memref<3x96x64xbf16, #tpu.memory_space<vmem>>, vector<1x96x64xbf16>
    %64 = vector.shape_cast %63 : vector<1x96x64xbf16> to vector<96x64xbf16>
    %cst_68 = arith.constant dense<0.000000e+00> : vector<384x64xf32>
    %65 = tpu.matmul %62, %64, %cst_68 {dimension_numbers = #tpu.dot_dimension_numbers<[1], [0], [0], [1], [0, 0, 1, 1], [], []>} : vector<384x96xbf16>, vector<96x64xbf16>, vector<384x64xf32> -> vector<384x64xf32>
    %c1_69 = arith.constant 1 : index
    %c0_70 = arith.constant 0 : index
    %c0_71 = arith.constant 0 : index
    %66 = vector.load %arg8[%c1_69, %c0_70, %c0_71] : memref<2x384x64xf32, #tpu.memory_space<vmem>>, vector<1x384x64xf32>
    %67 = vector.shape_cast %66 : vector<1x384x64xf32> to vector<384x64xf32>
    %68 = arith.addf %67, %65 : vector<384x64xf32>
    %c1_72 = arith.constant 1 : index
    %c0_73 = arith.constant 0 : index
    %c0_74 = arith.constant 0 : index
    %69 = vector.load %arg8[%c1_72, %c0_73, %c0_74] : memref<2x384x64xf32, #tpu.memory_space<vmem>>, vector<1x384x64xf32>
    %70 = vector.shape_cast %69 : vector<1x384x64xf32> to vector<384x64xf32>
    %71 = vector.shape_cast %68 : vector<384x64xf32> to vector<1x384x64xf32>
    tpu.vector_store %arg8[%c1_72, %c0_73, %c0_74], %71 {strides = array<i32>} : memref<2x384x64xf32, #tpu.memory_space<vmem>>, vector<1x384x64xf32>,
    %c0_75 = arith.constant 0 : index
    %c0_76 = arith.constant 0 : index
    %c0_77 = arith.constant 0 : index
    %72 = vector.load %arg8[%c0_75, %c0_76, %c0_77] : memref<2x384x64xf32, #tpu.memory_space<vmem>>, vector<1x384x64xf32>
    %73 = vector.shape_cast %72 : vector<1x384x64xf32> to vector<384x64xf32>
    %c1_78 = arith.constant 1 : index
    %c0_79 = arith.constant 0 : index
    %c0_80 = arith.constant 0 : index
    %74 = vector.load %arg8[%c1_78, %c0_79, %c0_80] : memref<2x384x64xf32, #tpu.memory_space<vmem>>, vector<1x384x64xf32>
    %75 = vector.shape_cast %74 : vector<1x384x64xf32> to vector<384x64xf32>
    %76 = arith.maximumf %73, %75 : vector<384x64xf32>
    %77 = vector.shape_cast %76 : vector<384x64xf32> to vector<1x12x2x16x64xf32>
    %78 = vector.extract_strided_slice %77 {offsets = [0, 0, 0, 0, 0], sizes = [1, 12, 1, 16, 64], strides = [1, 1, 1, 1, 1]} : vector<1x12x2x16x64xf32> to vector<1x12x1x16x64xf32>
    %79 = vector.shape_cast %78 : vector<1x12x1x16x64xf32> to vector<1x12x16x64xf32>
    %80 = vector.extract_strided_slice %77 {offsets = [0, 0, 1, 0, 0], sizes = [1, 12, 1, 16, 64], strides = [1, 1, 1, 1, 1]} : vector<1x12x2x16x64xf32> to vector<1x12x1x16x64xf32>
    %81 = vector.shape_cast %80 : vector<1x12x1x16x64xf32> to vector<1x12x16x64xf32>
    %82 = arith.maximumf %79, %81 : vector<1x12x16x64xf32>
    %c0_81 = arith.constant 0 : index
    %c0_82 = arith.constant 0 : index
    %83 = vector.load %arg5[%c0_81, %c0_82] : memref<1x64xf32, #tpu.memory_space<vmem>>, vector<1x64xf32>
    %84 = vector.shape_cast %83 : vector<1x64xf32> to vector<1x1x1x64xf32>
    %85 = vector.broadcast %84 : vector<1x1x1x64xf32> to vector<1x12x16x64xf32>
    %86 = arith.addf %82, %85 : vector<1x12x16x64xf32>
    %cst_83 = arith.constant 0.000000e+00 : f32
    %87 = vector.broadcast %cst_83 : f32 to vector<1x12x16x64xf32>
    %88 = arith.maximumf %86, %87 : vector<1x12x16x64xf32>
    %89 = arith.truncf %88 : vector<1x12x16x64xf32> to vector<1x12x16x64xbf16>
    %c0_84 = arith.constant 0 : index
    %c0_85 = arith.constant 0 : index
    %c0_86 = arith.constant 0 : index
    %c0_87 = arith.constant 0 : index
    %90 = vector.load %arg6[%c0_84, %c0_85, %c0_86, %c0_87] : memref<1x12x16x64xbf16, #tpu.memory_space<vmem>>, vector<1x12x16x64xbf16>
    tpu.vector_store %arg6[%c0_84, %c0_85, %c0_86, %c0_87], %89 {strides = array<i32>} : memref<1x12x16x64xbf16, #tpu.memory_space<vmem>>, vector<1x12x16x64xbf16>,
    return
  }
  func.func @transform_0(%arg0: i32) -> (i32, i32, i32) {
    %c0_i32 = arith.constant 0 : i32
    %c0_i32_0 = arith.constant 0 : i32
    %c0_i32_1 = arith.constant 0 : i32
    return %arg0, %c0_i32, %c0_i32_0 : i32, i32, i32
  }
  func.func @transform_1(%arg0: i32) -> (i32, i32) {
    %c0_i32 = arith.constant 0 : i32
    %c0_i32_0 = arith.constant 0 : i32
    %c0_i32_1 = arith.constant 0 : i32
    return %c0_i32, %c0_i32_0 : i32, i32
  }
  func.func @transform_2(%arg0: i32) -> (i32, i32) {
    %c0_i32 = arith.constant 0 : i32
    %c0_i32_0 = arith.constant 0 : i32
    %c0_i32_1 = arith.constant 0 : i32
    return %c0_i32, %c0_i32_0 : i32, i32
  }
  func.func @transform_3(%arg0: i32) -> (i32, i32, i32) {
    %c0_i32 = arith.constant 0 : i32
    %c0_i32_0 = arith.constant 0 : i32
    %c0_i32_1 = arith.constant 0 : i32
    %c0_i32_2 = arith.constant 0 : i32
    return %c0_i32, %c0_i32_0, %c0_i32_1 : i32, i32, i32
  }
  func.func @transform_4(%arg0: i32) -> (i32, i32) {
    %c0_i32 = arith.constant 0 : i32
    %c0_i32_0 = arith.constant 0 : i32
    %c0_i32_1 = arith.constant 0 : i32
    return %c0_i32, %c0_i32_0 : i32, i32
  }
  func.func @transform_5(%arg0: i32) -> (i32, i32, i32, i32) {
    %c0_i32 = arith.constant 0 : i32
    %c0_i32_0 = arith.constant 0 : i32
    %c0_i32_1 = arith.constant 0 : i32
    %c0_i32_2 = arith.constant 0 : i32
    return %arg0, %c0_i32, %c0_i32_0, %c0_i32_1 : i32, i32, i32, i32
  }
}

module attributes {stable_mosaic.version = 11 : i64} {
  func.func @_fc_head_kernel(%arg0: i32, %arg1: memref<8x12288xbf16, #tpu.memory_space<vmem>>, %arg2: memref<12288x128xbf16, #tpu.memory_space<vmem>>, %arg3: memref<1x128xf32, #tpu.memory_space<vmem>>, %arg4: memref<128x128xbf16, #tpu.memory_space<vmem>>, %arg5: memref<1x128xf32, #tpu.memory_space<vmem>>, %arg6: memref<8x128xf32, #tpu.memory_space<vmem>>) attributes {dimension_semantics = [#tpu.dimension_semantics<parallel>], iteration_bounds = array<i64: 1>, scalar_prefetch = 0 : i64, scratch_operands = 0 : i64, tpu.core_type = #tpu.core_type<tc>, window_params = [{transform_indices = @transform_0, window_bounds = array<i64: 8, 12288>}, {pipeline_mode = #tpu.pipeline_mode<synchronous>, transform_indices = @transform_1, window_bounds = array<i64: 12288, 128>}, {pipeline_mode = #tpu.pipeline_mode<synchronous>, transform_indices = @transform_2, window_bounds = array<i64: 1, 128>}, {pipeline_mode = #tpu.pipeline_mode<synchronous>, transform_indices = @transform_3, window_bounds = array<i64: 128, 128>}, {pipeline_mode = #tpu.pipeline_mode<synchronous>, transform_indices = @transform_4, window_bounds = array<i64: 1, 128>}, {transform_indices = @transform_5, window_bounds = array<i64: 8, 128>}]} {
    %c0 = arith.constant 0 : index
    %c0_0 = arith.constant 0 : index
    %0 = vector.load %arg1[%c0, %c0_0] : memref<8x12288xbf16, #tpu.memory_space<vmem>>, vector<8x12288xbf16>
    %c0_1 = arith.constant 0 : index
    %c0_2 = arith.constant 0 : index
    %1 = vector.load %arg2[%c0_1, %c0_2] : memref<12288x128xbf16, #tpu.memory_space<vmem>>, vector<12288x128xbf16>
    %cst = arith.constant dense<0.000000e+00> : vector<8x128xf32>
    %2 = tpu.matmul %0, %1, %cst {dimension_numbers = #tpu.dot_dimension_numbers<[1], [0], [0], [1], [0, 0, 1, 1], [], []>} : vector<8x12288xbf16>, vector<12288x128xbf16>, vector<8x128xf32> -> vector<8x128xf32>
    %c0_3 = arith.constant 0 : index
    %c0_4 = arith.constant 0 : index
    %3 = vector.load %arg3[%c0_3, %c0_4] : memref<1x128xf32, #tpu.memory_space<vmem>>, vector<1x128xf32>
    %4 = vector.broadcast %3 : vector<1x128xf32> to vector<8x128xf32>
    %5 = arith.addf %2, %4 : vector<8x128xf32>
    %cst_5 = arith.constant 0.000000e+00 : f32
    %6 = vector.broadcast %cst_5 : f32 to vector<8x128xf32>
    %7 = arith.maximumf %5, %6 : vector<8x128xf32>
    %8 = arith.truncf %7 : vector<8x128xf32> to vector<8x128xbf16>
    %c0_6 = arith.constant 0 : index
    %c0_7 = arith.constant 0 : index
    %9 = vector.load %arg4[%c0_6, %c0_7] : memref<128x128xbf16, #tpu.memory_space<vmem>>, vector<128x128xbf16>
    %cst_8 = arith.constant dense<0.000000e+00> : vector<8x128xf32>
    %10 = tpu.matmul %8, %9, %cst_8 {dimension_numbers = #tpu.dot_dimension_numbers<[1], [0], [0], [1], [0, 0, 1, 1], [], []>} : vector<8x128xbf16>, vector<128x128xbf16>, vector<8x128xf32> -> vector<8x128xf32>
    %c0_9 = arith.constant 0 : index
    %c0_10 = arith.constant 0 : index
    %11 = vector.load %arg5[%c0_9, %c0_10] : memref<1x128xf32, #tpu.memory_space<vmem>>, vector<1x128xf32>
    %12 = vector.broadcast %11 : vector<1x128xf32> to vector<8x128xf32>
    %13 = arith.addf %10, %12 : vector<8x128xf32>
    %cst_11 = arith.constant dense<0xFF800000> : vector<8xf32>
    %14 = vector.multi_reduction <maximumf>, %13, %cst_11 [1] : vector<8x128xf32> to vector<8xf32>
    %15 = vector.shape_cast %14 : vector<8xf32> to vector<8x1xf32>
    %16 = vector.broadcast %15 : vector<8x1xf32> to vector<8x128xf32>
    %17 = arith.subf %13, %16 : vector<8x128xf32>
    %18 = math.exp %17 : vector<8x128xf32>
    %cst_12 = arith.constant dense<0.000000e+00> : vector<8xf32>
    %19 = vector.multi_reduction <add>, %18, %cst_12 [1] : vector<8x128xf32> to vector<8xf32>
    %20 = vector.shape_cast %19 : vector<8xf32> to vector<8x1xf32>
    %21 = math.log %20 : vector<8x1xf32>
    %22 = arith.addf %21, %15 : vector<8x1xf32>
    %23 = vector.broadcast %22 : vector<8x1xf32> to vector<8x128xf32>
    %24 = arith.subf %13, %23 : vector<8x128xf32>
    %c0_13 = arith.constant 0 : index
    %c0_14 = arith.constant 0 : index
    %25 = vector.load %arg6[%c0_13, %c0_14] : memref<8x128xf32, #tpu.memory_space<vmem>>, vector<8x128xf32>
    tpu.vector_store %arg6[%c0_13, %c0_14], %24 {strides = array<i32>} : memref<8x128xf32, #tpu.memory_space<vmem>>, vector<8x128xf32>,
    return
  }
  func.func @transform_0(%arg0: i32) -> (i32, i32) {
    %c0_i32 = arith.constant 0 : i32
    %c0_i32_0 = arith.constant 0 : i32
    return %arg0, %c0_i32 : i32, i32
  }
  func.func @transform_1(%arg0: i32) -> (i32, i32) {
    %c0_i32 = arith.constant 0 : i32
    %c0_i32_0 = arith.constant 0 : i32
    %c0_i32_1 = arith.constant 0 : i32
    return %c0_i32, %c0_i32_0 : i32, i32
  }
  func.func @transform_2(%arg0: i32) -> (i32, i32) {
    %c0_i32 = arith.constant 0 : i32
    %c0_i32_0 = arith.constant 0 : i32
    %c0_i32_1 = arith.constant 0 : i32
    return %c0_i32, %c0_i32_0 : i32, i32
  }
  func.func @transform_3(%arg0: i32) -> (i32, i32) {
    %c0_i32 = arith.constant 0 : i32
    %c0_i32_0 = arith.constant 0 : i32
    %c0_i32_1 = arith.constant 0 : i32
    return %c0_i32, %c0_i32_0 : i32, i32
  }
  func.func @transform_4(%arg0: i32) -> (i32, i32) {
    %c0_i32 = arith.constant 0 : i32
    %c0_i32_0 = arith.constant 0 : i32
    %c0_i32_1 = arith.constant 0 : i32
    return %c0_i32, %c0_i32_0 : i32, i32
  }
  func.func @transform_5(%arg0: i32) -> (i32, i32) {
    %c0_i32 = arith.constant 0 : i32
    %c0_i32_0 = arith.constant 0 : i32
    return %arg0, %c0_i32 : i32, i32
  }
}

</mosaic_0001>

<llo_original>
// kernel: net_forward.2
$region0: #{net_forward.2}
  #allocation0 [shape = 'u32[]', space=smem, size = 0x4, offset = 0x4, fixed_abs, tag = 'smem constant byte address 0x4 - core index']
  #allocation1 [shape = 'u32[144,128]{1,0:T(1,128)}', space=vmem, size = 0x12000, scoped, tag = 'internal scratch']
  #allocation2 [shape = 'bf16[1,832,96]{2,1,0:T(8,128)(2,1)}', space=vmem, size = 0x34000, scoped, tag = 'scratch operand']
  #allocation3 [shape = 'f32[2,384,64]{2,1,0:T(8,128)}', space=vmem, size = 0x60000, scoped, tag = 'scratch operand']
  %s0 = inlined_call_operand.vmem [shape: bf16[2,832,27], index: 0, kind: input, shape index: {}]
  %s1 = inlined_call_operand.vmem [shape: bf16[27,96], index: 1, kind: input, shape index: {}]
  %s2 = inlined_call_operand.vmem [shape: f32[1,96], index: 2, kind: input, shape index: {}]
  %s3 = inlined_call_operand.vmem [shape: bf16[3,96,64], index: 3, kind: input, shape index: {}]
  %s4 = inlined_call_operand.vmem [shape: f32[1,64], index: 4, kind: input, shape index: {}]
  %s5 = inlined_call_operand.vmem [shape: bf16[2,12,16,64], index: 5, kind: output, shape index: {}]
  %s6 = sld [smem:[#allocation0]]
  $region53: #{net_forward.2} parent=0
    _
  %s8 = ssub.s32 1, %s6
  %s9 = scalar_select 0, %s8, %s6
  loop: start=0, step=1, limit=4
  $region2: #{net_forward.2} parent=0 // loop_pre_header
    _
  $region3: #{net_forward.2} parent=0 // loop_header
    %s11 = sphi 0, %s15
    %p12 = scmp.ge.s32.totalorder %s11, 4
    %s21 = sphi 0, %s23
    %s24 = sphi 0, %s21
    %s25 = sphi 0, %s24
    %s41 = sphi 0, %s25
    %s45 = sphi 0, %s45
    %s47 = sphi 0, %s45
    %s48 = sphi 0, %s47
    %s62 = sphi 0, %s48
    %s66 = sphi 0, %s66
    %s68 = sphi 0, %s66
    %s69 = sphi 0, %s68
    %s83 = sphi 0, %s69
    %s87 = sphi 0, %s87
    %s89 = sphi 0, %s87
    %s90 = sphi 0, %s89
    %s104 = sphi 0, %s90
    %s108 = sphi 0, %s108
    %s110 = sphi 0, %s108
    %s111 = sphi 0, %s110
    %s125 = sphi 0, %s111
    %s131 = sphi 0, %s133
    %s134 = sphi 0, %s131
    %s135 = sphi 0, %s134
    %s151 = sphi 0, %s135
  $region4: #{net_forward.2} parent=0 // loop_header_branch
    %14 = sbr.rel (%p12) target = $region8
  $region5: #{net_forward.2} parent=0 // loop_body
    %s16 = ssub.s32 %s11, 1
    %s17 = ssub.s32 %s11, 2
    %s18 = sadd.s32 %s11, 1
    %s19 = ssub.s32 %s11, %s18
    %p20 = scmp.eq.s32.totalorder %s19, 0
    %s22 = sadd.s32 %s21, 1
    %s23 = scalar_select %p20, %s21, %s22
    %p26 = pneg %p20
    %p27 = scmp.eq.s32.totalorder %s11, 1
    %p28 = por %p26, %p27
    %p29 = scmp.ne.s32.totalorder %s21, %s24
    %p30 = scmp.eq.s32.totalorder %s11, 0
    %p31 = por %p29, %p30
    %p32 = scmp.ne.s32.totalorder %s21, %s24
    %p33 = scmp.eq.s32.totalorder %s16, 1
    %p34 = por %p32, %p33
    %p35 = scmp.ne.s32.totalorder %s24, %s25
    %p36 = scmp.eq.s32.totalorder %s16, 0
    %p37 = por %p35, %p36
    %p38 = scmp.ne.s32.totalorder %s24, %s25
    %p39 = scmp.eq.s32.totalorder %s17, 1
    %p40 = por %p38, %p39
    %p42 = scmp.ne.s32.totalorder %s25, %s41
    %p43 = scmp.eq.s32.totalorder %s17, 0
    %p44 = por %p42, %p43
    %s46 = sadd.s32 %s45, 1
    %p49 = scmp.eq.s32.totalorder %s11, 1
    %p50 = scmp.ne.s32.totalorder %s45, %s47
    %p51 = scmp.eq.s32.totalorder %s11, 0
    %p52 = por %p50, %p51
    %p53 = scmp.ne.s32.totalorder %s45, %s47
    %p54 = scmp.eq.s32.totalorder %s16, 1
    %p55 = por %p53, %p54
    %p56 = scmp.ne.s32.totalorder %s47, %s48
    %p57 = scmp.eq.s32.totalorder %s16, 0
    %p58 = por %p56, %p57
    %p59 = scmp.ne.s32.totalorder %s47, %s48
    %p60 = scmp.eq.s32.totalorder %s17, 1
    %p61 = por %p59, %p60
    %p63 = scmp.ne.s32.totalorder %s48, %s62
    %p64 = scmp.eq.s32.totalorder %s17, 0
    %p65 = por %p63, %p64
    %s67 = sadd.s32 %s66, 1
    %p70 = scmp.eq.s32.totalorder %s11, 1
    %p71 = scmp.ne.s32.totalorder %s66, %s68
    %p72 = scmp.eq.s32.totalorder %s11, 0
    %p73 = por %p71, %p72
    %p74 = scmp.ne.s32.totalorder %s66, %s68
    %p75 = scmp.eq.s32.totalorder %s16, 1
    %p76 = por %p74, %p75
    %p77 = scmp.ne.s32.totalorder %s68, %s69
    %p78 = scmp.eq.s32.totalorder %s16, 0
    %p79 = por %p77, %p78
    %p80 = scmp.ne.s32.totalorder %s68, %s69
    %p81 = scmp.eq.s32.totalorder %s17, 1
    %p82 = por %p80, %p81
    %p84 = scmp.ne.s32.totalorder %s69, %s83
    %p85 = scmp.eq.s32.totalorder %s17, 0
    %p86 = por %p84, %p85
    %s88 = sadd.s32 %s87, 1
    %p91 = scmp.eq.s32.totalorder %s11, 1
    %p92 = scmp.ne.s32.totalorder %s87, %s89
    %p93 = scmp.eq.s32.totalorder %s11, 0
    %p94 = por %p92, %p93
    %p95 = scmp.ne.s32.totalorder %s87, %s89
    %p96 = scmp.eq.s32.totalorder %s16, 1
    %p97 = por %p95, %p96
    %p98 = scmp.ne.s32.totalorder %s89, %s90
    %p99 = scmp.eq.s32.totalorder %s16, 0
    %p100 = por %p98, %p99
    %p101 = scmp.ne.s32.totalorder %s89, %s90
    %p102 = scmp.eq.s32.totalorder %s17, 1
    %p103 = por %p101, %p102
    %p105 = scmp.ne.s32.totalorder %s90, %s104
    %p106 = scmp.eq.s32.totalorder %s17, 0
    %p107 = por %p105, %p106
    %s109 = sadd.s32 %s108, 1
    %p112 = scmp.eq.s32.totalorder %s11, 1
    %p113 = scmp.ne.s32.totalorder %s108, %s110
    %p114 = scmp.eq.s32.totalorder %s11, 0
    %p115 = por %p113, %p114
    %p116 = scmp.ne.s32.totalorder %s108, %s110
    %p117 = scmp.eq.s32.totalorder %s16, 1
    %p118 = por %p116, %p117
    %p119 = scmp.ne.s32.totalorder %s110, %s111
    %p120 = scmp.eq.s32.totalorder %s16, 0
    %p121 = por %p119, %p120
    %p122 = scmp.ne.s32.totalorder %s110, %s111
    %p123 = scmp.eq.s32.totalorder %s17, 1
    %p124 = por %p122, %p123
    %p126 = scmp.ne.s32.totalorder %s111, %s125
    %p127 = scmp.eq.s32.totalorder %s17, 0
    %p128 = por %p126, %p127
    %s129 = ssub.s32 %s11, %s18
    %p130 = scmp.eq.s32.totalorder %s129, 0
    %s132 = sadd.s32 %s131, 1
    %s133 = scalar_select %p130, %s131, %s132
    %p136 = pneg %p130
    %p137 = scmp.eq.s32.totalorder %s11, 1
    %p138 = por %p136, %p137
    %p139 = scmp.ne.s32.totalorder %s131, %s134
    %p140 = scmp.eq.s32.totalorder %s11, 0
    %p141 = por %p139, %p140
    %p142 = scmp.ne.s32.totalorder %s131, %s134
    %p143 = scmp.eq.s32.totalorder %s16, 1
    %p144 = por %p142, %p143
    %p145 = scmp.ne.s32.totalorder %s134, %s135
    %p146 = scmp.eq.s32.totalorder %s16, 0
    %p147 = por %p145, %p146
    %p148 = scmp.ne.s32.totalorder %s134, %s135
    %p149 = scmp.eq.s32.totalorder %s17, 1
    %p150 = por %p148, %p149
    %p152 = scmp.ne.s32.totalorder %s135, %s151
    %p153 = scmp.eq.s32.totalorder %s17, 0
    %p154 = por %p152, %p153
    %p155 = scmp.le.s32.totalorder 1, %s11
    %p156 = scmp.lt.s32.totalorder %s11, 3
    %p157 = pnand %p155, %p156
    %p158 = pneg %p157
    // Predicated region
    $region9: #{net_forward.2} parent=5 // pred_check
      _
    $region10: #{net_forward.2} parent=5 // pred_check_branch
      %160 = sbr.rel (%p157) target = $region12
    $region11: #{net_forward.2} parent=5 // pred_region
      %s161 = ssub.s32 %s11, 1
      // Predicated region
      $region13: #{net_forward.2} parent=11 // pred_check
        %p162 = pneg %p58
      $region14: #{net_forward.2} parent=11 // pred_check_branch
        %164 = sbr.rel (%p162) target = $region16
      $region15: #{net_forward.2} parent=11 // pred_region
        _
      $region16: #{net_forward.2} parent=11 // pred_fallthru
        _
      // Predicated region
      $region17: #{net_forward.2} parent=11 // pred_check
        %p165 = pneg %p79
      $region18: #{net_forward.2} parent=11 // pred_check_branch
        %167 = sbr.rel (%p165) target = $region20
      $region19: #{net_forward.2} parent=11 // pred_region
        _
      $region20: #{net_forward.2} parent=11 // pred_fallthru
        _
      // Predicated region
      $region21: #{net_forward.2} parent=11 // pred_check
        %p168 = pneg %p100
      $region22: #{net_forward.2} parent=11 // pred_check_branch
        %170 = sbr.rel (%p168) target = $region24
      $region23: #{net_forward.2} parent=11 // pred_region
        _
      $region24: #{net_forward.2} parent=11 // pred_fallthru
        _
      // Predicated region
      $region25: #{net_forward.2} parent=11 // pred_check
        %p171 = pneg %p121
      $region26: #{net_forward.2} parent=11 // pred_check_branch
        %173 = sbr.rel (%p171) target = $region28
      $region27: #{net_forward.2} parent=11 // pred_region
        _
      $region28: #{net_forward.2} parent=11 // pred_fallthru
        _
    $region12: #{net_forward.2} parent=5 // pred_fallthru
      _
    %p174 = scmp.lt.s32.totalorder %s11, 2
    // Predicated region
    $region29: #{net_forward.2} parent=5 // pred_check
      %p175 = pneg %p174
    $region30: #{net_forward.2} parent=5 // pred_check_branch
      %177 = sbr.rel (%p175) target = $region32
    $region31: #{net_forward.2} parent=5 // pred_region
      // Predicated region
      $region33: #{net_forward.2} parent=31 // pred_check
        %p178 = pneg %p31
      $region34: #{net_forward.2} parent=31 // pred_check_branch
        %180 = sbr.rel (%p178) target = $region36
      $region35: #{net_forward.2} parent=31 // pred_region
        %p181 = scmp.lt.s32.totalorder %s11, 1
        %s182 = scalar_select %p181, %s11, 1
        %s183 = smul.addr %s182, 104
        %s184 = smul.addr %s183, 4
        %s185 = scalar_lea.vmem %s0, %s184
      $region36: #{net_forward.2} parent=31 // pred_fallthru
        _
    $region32: #{net_forward.2} parent=5 // pred_fallthru
      _
    %p186 = scmp.le.s32.totalorder 1, %s11
    %p187 = scmp.lt.s32.totalorder %s11, 3
    %p188 = pnand %p186, %p187
    %p189 = pneg %p188
    // Predicated region
    $region37: #{net_forward.2} parent=5 // pred_check
      _
    $region38: #{net_forward.2} parent=5 // pred_check_branch
      %191 = sbr.rel (%p188) target = $region40
    $region39: #{net_forward.2} parent=5 // pred_region
      %s192 = ssub.s32 %s11, 1
      %p193 = scmp.lt.s32.totalorder %s16, 1
      %s194 = scalar_select %p193, %s16, 1
      %s195 = smul.addr %s194, 104
      %s196 = smul.addr %s195, 4
      %s197 = scalar_lea.vmem %s0, %s196
      %p198 = pneg %p37
      %p199 = pneg %p34
      %p200 = pneg %p58
      %p201 = pneg %p55
      %p202 = pneg %p79
      %p203 = pneg %p76
      %p204 = pneg %p100
      %p205 = pneg %p97
      %p206 = pneg %p121
      %p207 = pneg %p118
      %p208 = pneg %p147
      %p209 = pneg %p144
      %p210 = scmp.lt.s32.totalorder %s16, 1
      %s211 = scalar_select %p210, %s16, 1
      %s212 = smul.addr %s211, 24
      %s213 = smul.addr %s212, 4
      %s214 = scalar_lea.vmem %s5, %s213
      %p215 = scmp.lt.s32.totalorder %s16, 1
      %s216 = scalar_select %p215, %s16, 1
      %s217 = smul.addr %s216, 104
      %s218 = smul.addr %s217, 4
      %s219 = scalar_lea.vmem %s0, %s218
      %p220 = scmp.lt.s32.totalorder %s16, 1
      %s221 = scalar_select %p220, %s16, 1
      %s222 = smul.addr %s221, 24
      %s223 = smul.addr %s222, 4
      %s224 = scalar_lea.vmem %s5, %s223
      %v226 = vld [vmem:[%s219] sm:$0xf]
      %v227 = vld [vmem:[%s219 + $0x4] sm:$0xf]
      %v228 = vld [vmem:[%s219 + $0x8] sm:$0xf]
      %v229 = vld [vmem:[%s219 + $0xc] sm:$0xf]
      %v230 = vld [vmem:[%s219 + $0x10] sm:$0xf]
      %v231 = vld [vmem:[%s219 + $0x14] sm:$0xf]
      %v232 = vld [vmem:[%s219 + $0x18] sm:$0xf]
      %v233 = vld [vmem:[%s219 + $0x1c] sm:$0xf]
      %v234 = vld [vmem:[%s219 + $0x20] sm:$0xf]
      %v235 = vld [vmem:[%s219 + $0x24] sm:$0xf]
      %v236 = vld [vmem:[%s219 + $0x28] sm:$0xf]
      %v237 = vld [vmem:[%s219 + $0x2c] sm:$0xf]
      %v238 = vld [vmem:[%s219 + $0x30] sm:$0xf]
      %v239 = vld [vmem:[%s219 + $0x34] sm:$0xf]
      %v240 = vld [vmem:[%s219 + $0x38] sm:$0xf]
      %v241 = vld [vmem:[%s219 + $0x3c] sm:$0xf]
      %v242 = vld [vmem:[%s219 + $0x40] sm:$0xf]
      %v243 = vld [vmem:[%s219 + $0x44] sm:$0xf]
      %v244 = vld [vmem:[%s219 + $0x48] sm:$0xf]
      %v245 = vld [vmem:[%s219 + $0x4c] sm:$0xf]
      %v246 = vld [vmem:[%s219 + $0x50] sm:$0xf]
      %v247 = vld [vmem:[%s219 + $0x54] sm:$0xf]
      %v248 = vld [vmem:[%s219 + $0x58] sm:$0xf]
      %v249 = vld [vmem:[%s219 + $0x5c] sm:$0xf]
      %v250 = vld [vmem:[%s219 + $0x60] sm:$0xf]
      %v251 = vld [vmem:[%s219 + $0x64] sm:$0xf]
      %v252 = vld [vmem:[%s219 + $0x68] sm:$0xf]
      %v253 = vld [vmem:[%s219 + $0x6c] sm:$0xf]
      %v254 = vld [vmem:[%s219 + $0x70] sm:$0xf]
      %v255 = vld [vmem:[%s219 + $0x74] sm:$0xf]
      %v256 = vld [vmem:[%s219 + $0x78] sm:$0xf]
      %v257 = vld [vmem:[%s219 + $0x7c] sm:$0xf]
      %v258 = vld [vmem:[%s219 + $0x80] sm:$0xf]
      %v259 = vld [vmem:[%s219 + $0x84] sm:$0xf]
      %v260 = vld [vmem:[%s219 + $0x88] sm:$0xf]
      %v261 = vld [vmem:[%s219 + $0x8c] sm:$0xf]
      %v262 = vld [vmem:[%s219 + $0x90] sm:$0xf]
      %v263 = vld [vmem:[%s219 + $0x94] sm:$0xf]
      %v264 = vld [vmem:[%s219 + $0x98] sm:$0xf]
      %v265 = vld [vmem:[%s219 + $0x9c] sm:$0xf]
      %v266 = vld [vmem:[%s219 + $0xa0] sm:$0xf]
      %v267 = vld [vmem:[%s219 + $0xa4] sm:$0xf]
      %v268 = vld [vmem:[%s219 + $0xa8] sm:$0xf]
      %v269 = vld [vmem:[%s219 + $0xac] sm:$0xf]
      %v270 = vld [vmem:[%s219 + $0xb0] sm:$0xf]
      %v271 = vld [vmem:[%s219 + $0xb4] sm:$0xf]
      %v272 = vld [vmem:[%s219 + $0xb8] sm:$0xf]
      %v273 = vld [vmem:[%s219 + $0xbc] sm:$0xf]
      %v274 = vld [vmem:[%s219 + $0xc0] sm:$0xf]
      %v275 = vld [vmem:[%s219 + $0xc4] sm:$0xf]
      %v276 = vld [vmem:[%s219 + $0xc8] sm:$0xf]
      %v277 = vld [vmem:[%s219 + $0xcc] sm:$0xf]
      %v278 = vld [vmem:[%s219 + $0xd0] sm:$0xf]
      %v279 = vld [vmem:[%s219 + $0xd4] sm:$0xf]
      %v280 = vld [vmem:[%s219 + $0xd8] sm:$0xf]
      %v281 = vld [vmem:[%s219 + $0xdc] sm:$0xf]
      %v282 = vld [vmem:[%s219 + $0xe0] sm:$0xf]
      %v283 = vld [vmem:[%s219 + $0xe4] sm:$0xf]
      %v284 = vld [vmem:[%s219 + $0xe8] sm:$0xf]
      %v285 = vld [vmem:[%s219 + $0xec] sm:$0xf]
      %v286 = vld [vmem:[%s219 + $0xf0] sm:$0xf]
      %v287 = vld [vmem:[%s219 + $0xf4] sm:$0xf]
      %v288 = vld [vmem:[%s219 + $0xf8] sm:$0xf]
      %v289 = vld [vmem:[%s219 + $0xfc] sm:$0xf]
      %v290 = vld [vmem:[%s219 + $0x100] sm:$0xf]
      %v291 = vld [vmem:[%s219 + $0x104] sm:$0xf]
      %v292 = vld [vmem:[%s219 + $0x108] sm:$0xf]
      %v293 = vld [vmem:[%s219 + $0x10c] sm:$0xf]
      %v294 = vld [vmem:[%s219 + $0x110] sm:$0xf]
      %v295 = vld [vmem:[%s219 + $0x114] sm:$0xf]
      %v296 = vld [vmem:[%s219 + $0x118] sm:$0xf]
      %v297 = vld [vmem:[%s219 + $0x11c] sm:$0xf]
      %v298 = vld [vmem:[%s219 + $0x120] sm:$0xf]
      %v299 = vld [vmem:[%s219 + $0x124] sm:$0xf]
      %v300 = vld [vmem:[%s219 + $0x128] sm:$0xf]
      %v301 = vld [vmem:[%s219 + $0x12c] sm:$0xf]
      %v302 = vld [vmem:[%s219 + $0x130] sm:$0xf]
      %v303 = vld [vmem:[%s219 + $0x134] sm:$0xf]
      %v304 = vld [vmem:[%s219 + $0x138] sm:$0xf]
      %v305 = vld [vmem:[%s219 + $0x13c] sm:$0xf]
      %v306 = vld [vmem:[%s219 + $0x140] sm:$0xf]
      %v307 = vld [vmem:[%s219 + $0x144] sm:$0xf]
      %v308 = vld [vmem:[%s219 + $0x148] sm:$0xf]
      %v309 = vld [vmem:[%s219 + $0x14c] sm:$0xf]
      %v310 = vld [vmem:[%s219 + $0x150] sm:$0xf]
      %v311 = vld [vmem:[%s219 + $0x154] sm:$0xf]
      %v312 = vld [vmem:[%s219 + $0x158] sm:$0xf]
      %v313 = vld [vmem:[%s219 + $0x15c] sm:$0xf]
      %v314 = vld [vmem:[%s219 + $0x160] sm:$0xf]
      %v315 = vld [vmem:[%s219 + $0x164] sm:$0xf]
      %v316 = vld [vmem:[%s219 + $0x168] sm:$0xf]
      %v317 = vld [vmem:[%s219 + $0x16c] sm:$0xf]
      %v318 = vld [vmem:[%s219 + $0x170] sm:$0xf]
      %v319 = vld [vmem:[%s219 + $0x174] sm:$0xf]
      %v320 = vld [vmem:[%s219 + $0x178] sm:$0xf]
      %v321 = vld [vmem:[%s219 + $0x17c] sm:$0xf]
      %v322 = vld [vmem:[%s219 + $0x180] sm:$0xf]
      %v323 = vld [vmem:[%s219 + $0x184] sm:$0xf]
      %v324 = vld [vmem:[%s219 + $0x188] sm:$0xf]
      %v325 = vld [vmem:[%s219 + $0x18c] sm:$0xf]
      %v326 = vld [vmem:[%s219 + $0x190] sm:$0xf]
      %v327 = vld [vmem:[%s219 + $0x194] sm:$0xf]
      %v328 = vld [vmem:[%s219 + $0x198] sm:$0xf]
      %v329 = vld [vmem:[%s219 + $0x19c] sm:$0xf]
      %v330 = vld [vmem:[%s1] sm:$0xf]
      %v331 = vld [vmem:[%s1 + $0x4] sm:$0xf]
      %v332 = vld [vmem:[%s1 + $0x8] sm:$0xf]
      %v333 = vld [vmem:[%s1 + $0xc] sm:$0x3]
      %v334 = vld [vmem:[%s2] sm:$0x1]
      %v336 = vlaneseq
      %v337 = vshrl.u32 %v336, 7
      %v338 = vsub.s32 0, %v337
      %v339 = vrot.slane %v334, %v338
      %v445 = vunpack.c.l.b16 %v226
      %v446 = vunpack.c.l.b16 %v227
      %v447 = vunpack.c.l.b16 %v228
      %v448 = vunpack.c.l.b16 %v229
      %v449 = vunpack.c.l.b16 %v230
      %v450 = vunpack.c.l.b16 %v231
      %v451 = vunpack.c.l.b16 %v232
      %v452 = vunpack.c.l.b16 %v233
      %v453 = vunpack.c.l.b16 %v234
      %v454 = vunpack.c.l.b16 %v235
      %v455 = vunpack.c.l.b16 %v236
      %v456 = vunpack.c.l.b16 %v237
      %v457 = vunpack.c.l.b16 %v238
      %v458 = vunpack.c.l.b16 %v239
      %v459 = vunpack.c.l.b16 %v240
      %v460 = vunpack.c.l.b16 %v241
      %v461 = vunpack.c.l.b16 %v242
      %v462 = vunpack.c.l.b16 %v243
      %v463 = vunpack.c.l.b16 %v244
      %v464 = vunpack.c.l.b16 %v245
      %v465 = vunpack.c.l.b16 %v246
      %v466 = vunpack.c.l.b16 %v247
      %v467 = vunpack.c.l.b16 %v248
      %v468 = vunpack.c.l.b16 %v249
      %v469 = vunpack.c.l.b16 %v250
      %v470 = vunpack.c.l.b16 %v251
      %v471 = vunpack.c.l.b16 %v252
      %v472 = vunpack.c.l.b16 %v253
      %v473 = vunpack.c.l.b16 %v254
      %v474 = vunpack.c.l.b16 %v255
      %v475 = vunpack.c.l.b16 %v256
      %v476 = vunpack.c.l.b16 %v257
      %v477 = vunpack.c.l.b16 %v258
      %v478 = vunpack.c.l.b16 %v259
      %v479 = vunpack.c.l.b16 %v260
      %v480 = vunpack.c.l.b16 %v261
      %v481 = vunpack.c.l.b16 %v262
      %v482 = vunpack.c.l.b16 %v263
      %v483 = vunpack.c.l.b16 %v264
      %v484 = vunpack.c.l.b16 %v265
      %v485 = vunpack.c.l.b16 %v266
      %v486 = vunpack.c.l.b16 %v267
      %v487 = vunpack.c.l.b16 %v268
      %v488 = vunpack.c.l.b16 %v269
      %v489 = vunpack.c.l.b16 %v270
      %v490 = vunpack.c.l.b16 %v271
      %v491 = vunpack.c.l.b16 %v272
      %v492 = vunpack.c.l.b16 %v273
      %v493 = vunpack.c.l.b16 %v274
      %v494 = vunpack.c.l.b16 %v275
      %v495 = vunpack.c.l.b16 %v276
      %v496 = vunpack.c.l.b16 %v277
      %v497 = vunpack.c.l.b16 %v278
      %v498 = vunpack.c.l.b16 %v279
      %v499 = vunpack.c.l.b16 %v280
      %v500 = vunpack.c.l.b16 %v281
      %v501 = vunpack.c.l.b16 %v282
      %v502 = vunpack.c.l.b16 %v283
      %v503 = vunpack.c.l.b16 %v284
      %v504 = vunpack.c.l.b16 %v285
      %v505 = vunpack.c.l.b16 %v286
      %v506 = vunpack.c.l.b16 %v287
      %v507 = vunpack.c.l.b16 %v288
      %v508 = vunpack.c.l.b16 %v289
      %v509 = vunpack.c.l.b16 %v290
      %v510 = vunpack.c.l.b16 %v291
      %v511 = vunpack.c.l.b16 %v292
      %v512 = vunpack.c.l.b16 %v293
      %v513 = vunpack.c.l.b16 %v294
      %v514 = vunpack.c.l.b16 %v295
      %v515 = vunpack.c.l.b16 %v296
      %v516 = vunpack.c.l.b16 %v297
      %v517 = vunpack.c.l.b16 %v298
      %v518 = vunpack.c.l.b16 %v299
      %v519 = vunpack.c.l.b16 %v300
      %v520 = vunpack.c.l.b16 %v301
      %v521 = vunpack.c.l.b16 %v302
      %v522 = vunpack.c.l.b16 %v303
      %v523 = vunpack.c.l.b16 %v304
      %v524 = vunpack.c.l.b16 %v305
      %v525 = vunpack.c.l.b16 %v306
      %v526 = vunpack.c.l.b16 %v307
      %v527 = vunpack.c.l.b16 %v308
      %v528 = vunpack.c.l.b16 %v309
      %v529 = vunpack.c.l.b16 %v310
      %v530 = vunpack.c.l.b16 %v311
      %v531 = vunpack.c.l.b16 %v312
      %v532 = vunpack.c.l.b16 %v313
      %v533 = vunpack.c.l.b16 %v314
      %v534 = vunpack.c.l.b16 %v315
      %v535 = vunpack.c.l.b16 %v316
      %v536 = vunpack.c.l.b16 %v317
      %v537 = vunpack.c.l.b16 %v318
      %v538 = vunpack.c.l.b16 %v319
      %v539 = vunpack.c.l.b16 %v320
      %v540 = vunpack.c.l.b16 %v321
      %v541 = vunpack.c.l.b16 %v322
      %v542 = vunpack.c.l.b16 %v323
      %v543 = vunpack.c.l.b16 %v324
      %v544 = vunpack.c.l.b16 %v325
      %v545 = vunpack.c.l.b16 %v326
      %v546 = vunpack.c.l.b16 %v327
      %v547 = vunpack.c.l.b16 %v328
      %v548 = vunpack.c.l.b16 %v329
      %v549 = vpack.c.b16 %v446, %v445
      %v550 = vpack.c.b16 %v448, %v447
      %v551 = vpack.c.b16 %v450, %v449
      %v552 = vpack.c.b16 %v452, %v451
      %v553 = vpack.c.b16 %v454, %v453
      %v554 = vpack.c.b16 %v456, %v455
      %v555 = vpack.c.b16 %v458, %v457
      %v556 = vpack.c.b16 %v460, %v459
      %v557 = vpack.c.b16 %v462, %v461
      %v558 = vpack.c.b16 %v464, %v463
      %v559 = vpack.c.b16 %v466, %v465
      %v560 = vpack.c.b16 %v468, %v467
      %v561 = vpack.c.b16 %v470, %v469
      %v562 = vpack.c.b16 %v472, %v471
      %v563 = vpack.c.b16 %v474, %v473
      %v564 = vpack.c.b16 %v476, %v475
      %v565 = vpack.c.b16 %v478, %v477
      %v566 = vpack.c.b16 %v480, %v479
      %v567 = vpack.c.b16 %v482, %v481
      %v568 = vpack.c.b16 %v484, %v483
      %v569 = vpack.c.b16 %v486, %v485
      %v570 = vpack.c.b16 %v488, %v487
      %v571 = vpack.c.b16 %v490, %v489
      %v572 = vpack.c.b16 %v492, %v491
      %v573 = vpack.c.b16 %v494, %v493
      %v574 = vpack.c.b16 %v496, %v495
      %v575 = vpack.c.b16 %v498, %v497
      %v576 = vpack.c.b16 %v500, %v499
      %v577 = vpack.c.b16 %v502, %v501
      %v578 = vpack.c.b16 %v504, %v503
      %v579 = vpack.c.b16 %v506, %v505
      %v580 = vpack.c.b16 %v508, %v507
      %v581 = vpack.c.b16 %v510, %v509
      %v582 = vpack.c.b16 %v512, %v511
      %v583 = vpack.c.b16 %v514, %v513
      %v584 = vpack.c.b16 %v516, %v515
      %v585 = vpack.c.b16 %v518, %v517
      %v586 = vpack.c.b16 %v520, %v519
      %v587 = vpack.c.b16 %v522, %v521
      %v588 = vpack.c.b16 %v524, %v523
      %v589 = vpack.c.b16 %v526, %v525
      %v590 = vpack.c.b16 %v528, %v527
      %v591 = vpack.c.b16 %v530, %v529
      %v592 = vpack.c.b16 %v532, %v531
      %v593 = vpack.c.b16 %v534, %v533
      %v594 = vpack.c.b16 %v536, %v535
      %v595 = vpack.c.b16 %v538, %v537
      %v596 = vpack.c.b16 %v540, %v539
      %v597 = vpack.c.b16 %v542, %v541
      %v598 = vpack.c.b16 %v544, %v543
      %v599 = vpack.c.b16 %v546, %v545
      %v600 = vpack.c.b16 %v548, %v547
      %v605 = vunpack.c.l.b16 %v330
      %v606 = vunpack.c.l.b16 %v331
      %v607 = vunpack.c.l.b16 %v332
      %v608 = vunpack.c.l.b16 %v333
      %v609 = vpack.c.b16 %v606, %v605
      %v610 = vpack.c.b16 %v608, %v607
      %vm612 = vcmask 220160
      %v614 = vsel %vm612, %v549, 0
      %v617 = vsel %vm612, %v550, 0
      %v620 = vsel %vm612, %v551, 0
      %v623 = vsel %vm612, %v552, 0
      %v626 = vsel %vm612, %v553, 0
      %v629 = vsel %vm612, %v554, 0
      %v632 = vsel %vm612, %v555, 0
      %v635 = vsel %vm612, %v556, 0
      %v638 = vsel %vm612, %v557, 0
      %v641 = vsel %vm612, %v558, 0
      %v644 = vsel %vm612, %v559, 0
      %v647 = vsel %vm612, %v560, 0
      %v650 = vsel %vm612, %v561, 0
      %v653 = vsel %vm612, %v562, 0
      %v656 = vsel %vm612, %v563, 0
      %v659 = vsel %vm612, %v564, 0
      %v662 = vsel %vm612, %v565, 0
      %v665 = vsel %vm612, %v566, 0
      %v668 = vsel %vm612, %v567, 0
      %v671 = vsel %vm612, %v568, 0
      %v674 = vsel %vm612, %v569, 0
      %v677 = vsel %vm612, %v570, 0
      %v680 = vsel %vm612, %v571, 0
      %v683 = vsel %vm612, %v572, 0
      %v686 = vsel %vm612, %v573, 0
      %v689 = vsel %vm612, %v574, 0
      %v692 = vsel %vm612, %v575, 0
      %v695 = vsel %vm612, %v576, 0
      %v698 = vsel %vm612, %v577, 0
      %v701 = vsel %vm612, %v578, 0
      %v704 = vsel %vm612, %v579, 0
      %v707 = vsel %vm612, %v580, 0
      %v710 = vsel %vm612, %v581, 0
      %v713 = vsel %vm612, %v582, 0
      %v716 = vsel %vm612, %v583, 0
      %v719 = vsel %vm612, %v584, 0
      %v722 = vsel %vm612, %v585, 0
      %v725 = vsel %vm612, %v586, 0
      %v728 = vsel %vm612, %v587, 0
      %v731 = vsel %vm612, %v588, 0
      %v734 = vsel %vm612, %v589, 0
      %v737 = vsel %vm612, %v590, 0
      %v740 = vsel %vm612, %v591, 0
      %v743 = vsel %vm612, %v592, 0
      %v746 = vsel %vm612, %v593, 0
      %v749 = vsel %vm612, %v594, 0
      %v752 = vsel %vm612, %v595, 0
      %v755 = vsel %vm612, %v596, 0
      %v758 = vsel %vm612, %v597, 0
      %v761 = vsel %vm612, %v598, 0
      %v764 = vsel %vm612, %v599, 0
      %v767 = vsel %vm612, %v600, 0
      %vm769 = vcmask 1044480
      %vm770 = vcmask 1045504
      %v771 = vsel %vm769, 4294967295, 65535
      %v772 = vsel %vm770, %v771, 0
      %v774 = vand.u32 %v610, %v772
      %776 = vmatprep.subr.bf16.mxu0 0
      %777 = vmatpush1.bf16.msra.mxu0 0
      %778 = vmatprep.subr.bf16.mxu0 0
      %779 = vmatpush1.bf16.msra.mxu0 0
      %780 = vmatprep.subr.bf16.mxu0 0
      %781 = vmatpush1.bf16.msra.mxu0 0
      %782 = vmatprep.subr.bf16.mxu0 0
      %783 = vmatpush1.bf16.msra.mxu0 0
      %784 = vmatprep.subr.bf16.mxu0 0
      %785 = vmatpush1.bf16.msra.mxu0 0
      %786 = vmatprep.subr.bf16.mxu0 0
      %787 = vmatpush1.bf16.msra.mxu0 0
      %788 = vmatprep.subr.bf16.mxu0 0
      %789 = vmatpush1.bf16.msra.mxu0 %v774
      %790 = vmatprep.subr.bf16.mxu0 0
      %791 = vmatpush1.bf16.msra.mxu0 %v609
      %792 = vmatprep.subr.bf16.mxu0 0
      %793 = vmatpush2.bf16.msra.mxu0 0
      %794 = vmatprep.subr.bf16.mxu0 0
      %795 = vmatpush2.bf16.msra.mxu0 0
      %796 = vmatprep.subr.bf16.mxu0 0
      %797 = vmatpush2.bf16.msra.mxu0 0
      %798 = vmatprep.subr.bf16.mxu0 0
      %799 = vmatpush2.bf16.msra.mxu0 0
      %800 = vmatprep.subr.bf16.mxu0 0
      %801 = vmatpush2.bf16.msra.mxu0 0
      %802 = vmatprep.subr.bf16.mxu0 0
      %803 = vmatpush2.bf16.msra.mxu0 0
      %804 = vmatprep.subr.bf16.mxu0 0
      %805 = vmatpush2.bf16.msra.mxu0 0
      %806 = vmatprep.subr.bf16.mxu0 0
      %807 = vmatpush2.bf16.msra.mxu0 0
      %808 = vmatprep.mubr.bf16.mxu0 0
      %809 = vmatmul.mubr.bf16.gmra.mxu0 %v614
      %v810 = vpop.f32.mrf.mxu0
      %v811 = vadd.f32 %v339, %v810
      %v812 = vpop.f32.mrf.mxu0
      %v813 = vpop.f32.mrf.mxu0
      %v814 = vadd.f32 %v339, %v813
      %v815 = vpop.f32.mrf.mxu0
      %816 = vmatprep.mubr.bf16.mxu0 0
      %817 = vmatmul.mubr.bf16.gmra.mxu0 %v617
      %v818 = vpop.f32.mrf.mxu0
      %v819 = vadd.f32 %v339, %v818
      %v820 = vpop.f32.mrf.mxu0
      %v821 = vpop.f32.mrf.mxu0
      %v822 = vadd.f32 %v339, %v821
      %v823 = vpop.f32.mrf.mxu0
      %824 = vmatprep.mubr.bf16.mxu0 0
      %825 = vmatmul.mubr.bf16.gmra.mxu0 %v620
      %v826 = vpop.f32.mrf.mxu0
      %v827 = vadd.f32 %v339, %v826
      %v828 = vpop.f32.mrf.mxu0
      %v829 = vpop.f32.mrf.mxu0
      %v830 = vadd.f32 %v339, %v829
      %v831 = vpop.f32.mrf.mxu0
      %832 = vmatprep.mubr.bf16.mxu0 0
      %833 = vmatmul.mubr.bf16.gmra.mxu0 %v623
      %v834 = vpop.f32.mrf.mxu0
      %v835 = vadd.f32 %v339, %v834
      %v836 = vpop.f32.mrf.mxu0
      %v837 = vpop.f32.mrf.mxu0
      %v838 = vadd.f32 %v339, %v837
      %v839 = vpop.f32.mrf.mxu0
      %840 = vmatprep.mubr.bf16.mxu0 0
      %841 = vmatmul.mubr.bf16.gmra.mxu0 %v626
      %v842 = vpop.f32.mrf.mxu0
      %v843 = vadd.f32 %v339, %v842
      %v844 = vpop.f32.mrf.mxu0
      %v845 = vpop.f32.mrf.mxu0
      %v846 = vadd.f32 %v339, %v845
      %v847 = vpop.f32.mrf.mxu0
      %848 = vmatprep.mubr.bf16.mxu0 0
      %849 = vmatmul.mubr.bf16.gmra.mxu0 %v629
      %v850 = vpop.f32.mrf.mxu0
      %v851 = vadd.f32 %v339, %v850
      %v852 = vpop.f32.mrf.mxu0
      %v853 = vpop.f32.mrf.mxu0
      %v854 = vadd.f32 %v339, %v853
      %v855 = vpop.f32.mrf.mxu0
      %856 = vmatprep.mubr.bf16.mxu0 0
      %857 = vmatmul.mubr.bf16.gmra.mxu0 %v632
      %v858 = vpop.f32.mrf.mxu0
      %v859 = vadd.f32 %v339, %v858
      %v860 = vpop.f32.mrf.mxu0
      %v861 = vpop.f32.mrf.mxu0
      %v862 = vadd.f32 %v339, %v861
      %v863 = vpop.f32.mrf.mxu0
      %864 = vmatprep.mubr.bf16.mxu0 0
      %865 = vmatmul.mubr.bf16.gmra.mxu0 %v635
      %v866 = vpop.f32.mrf.mxu0
      %v867 = vadd.f32 %v339, %v866
      %v868 = vpop.f32.mrf.mxu0
      %v869 = vpop.f32.mrf.mxu0
      %v870 = vadd.f32 %v339, %v869
      %v871 = vpop.f32.mrf.mxu0
      %872 = vmatprep.mubr.bf16.mxu0 0
      %873 = vmatmul.mubr.bf16.gmra.mxu0 %v638
      %v874 = vpop.f32.mrf.mxu0
      %v875 = vadd.f32 %v339, %v874
      %v876 = vpop.f32.mrf.mxu0
      %v877 = vpop.f32.mrf.mxu0
      %v878 = vadd.f32 %v339, %v877
      %v879 = vpop.f32.mrf.mxu0
      %880 = vmatprep.mubr.bf16.mxu0 0
      %881 = vmatmul.mubr.bf16.gmra.mxu0 %v641
      %v882 = vpop.f32.mrf.mxu0
      %v883 = vadd.f32 %v339, %v882
      %v884 = vpop.f32.mrf.mxu0
      %v885 = vpop.f32.mrf.mxu0
      %v886 = vadd.f32 %v339, %v885
      %v887 = vpop.f32.mrf.mxu0
      %888 = vmatprep.mubr.bf16.mxu0 0
      %889 = vmatmul.mubr.bf16.gmra.mxu0 %v644
      %v890 = vpop.f32.mrf.mxu0
      %v891 = vadd.f32 %v339, %v890
      %v892 = vpop.f32.mrf.mxu0
      %v893 = vpop.f32.mrf.mxu0
      %v894 = vadd.f32 %v339, %v893
      %v895 = vpop.f32.mrf.mxu0
      %896 = vmatprep.mubr.bf16.mxu0 0
      %897 = vmatmul.mubr.bf16.gmra.mxu0 %v647
      %v898 = vpop.f32.mrf.mxu0
      %v899 = vadd.f32 %v339, %v898
      %v900 = vpop.f32.mrf.mxu0
      %v901 = vpop.f32.mrf.mxu0
      %v902 = vadd.f32 %v339, %v901
      %v903 = vpop.f32.mrf.mxu0
      %904 = vmatprep.mubr.bf16.mxu0 0
      %905 = vmatmul.mubr.bf16.gmra.mxu0 %v650
      %v906 = vpop.f32.mrf.mxu0
      %v907 = vadd.f32 %v339, %v906
      %v908 = vpop.f32.mrf.mxu0
      %v909 = vpop.f32.mrf.mxu0
      %v910 = vadd.f32 %v339, %v909
      %v911 = vpop.f32.mrf.mxu0
      %912 = vmatprep.mubr.bf16.mxu0 0
      %913 = vmatmul.mubr.bf16.gmra.mxu0 %v653
      %v914 = vpop.f32.mrf.mxu0
      %v915 = vadd.f32 %v339, %v914
      %v916 = vpop.f32.mrf.mxu0
      %v917 = vpop.f32.mrf.mxu0
      %v918 = vadd.f32 %v339, %v917
      %v919 = vpop.f32.mrf.mxu0
      %920 = vmatprep.mubr.bf16.mxu0 0
      %921 = vmatmul.mubr.bf16.gmra.mxu0 %v656
      %v922 = vpop.f32.mrf.mxu0
      %v923 = vadd.f32 %v339, %v922
      %v924 = vpop.f32.mrf.mxu0
      %v925 = vpop.f32.mrf.mxu0
      %v926 = vadd.f32 %v339, %v925
      %v927 = vpop.f32.mrf.mxu0
      %928 = vmatprep.mubr.bf16.mxu0 0
      %929 = vmatmul.mubr.bf16.gmra.mxu0 %v659
      %v930 = vpop.f32.mrf.mxu0
      %v931 = vadd.f32 %v339, %v930
      %v932 = vpop.f32.mrf.mxu0
      %v933 = vpop.f32.mrf.mxu0
      %v934 = vadd.f32 %v339, %v933
      %v935 = vpop.f32.mrf.mxu0
      %936 = vmatprep.mubr.bf16.mxu0 0
      %937 = vmatmul.mubr.bf16.gmra.mxu0 %v662
      %v938 = vpop.f32.mrf.mxu0
      %v939 = vadd.f32 %v339, %v938
      %v940 = vpop.f32.mrf.mxu0
      %v941 = vpop.f32.mrf.mxu0
      %v942 = vadd.f32 %v339, %v941
      %v943 = vpop.f32.mrf.mxu0
      %944 = vmatprep.mubr.bf16.mxu0 0
      %945 = vmatmul.mubr.bf16.gmra.mxu0 %v665
      %v946 = vpop.f32.mrf.mxu0
      %v947 = vadd.f32 %v339, %v946
      %v948 = vpop.f32.mrf.mxu0
      %v949 = vpop.f32.mrf.mxu0
      %v950 = vadd.f32 %v339, %v949
      %v951 = vpop.f32.mrf.mxu0
      %952 = vmatprep.mubr.bf16.mxu0 0
      %953 = vmatmul.mubr.bf16.gmra.mxu0 %v668
      %v954 = vpop.f32.mrf.mxu0
      %v955 = vadd.f32 %v339, %v954
      %v956 = vpop.f32.mrf.mxu0
      %v957 = vpop.f32.mrf.mxu0
      %v958 = vadd.f32 %v339, %v957
      %v959 = vpop.f32.mrf.mxu0
      %960 = vmatprep.mubr.bf16.mxu0 0
      %961 = vmatmul.mubr.bf16.gmra.mxu0 %v671
      %v962 = vpop.f32.mrf.mxu0
      %v963 = vadd.f32 %v339, %v962
      %v964 = vpop.f32.mrf.mxu0
      %v965 = vpop.f32.mrf.mxu0
      %v966 = vadd.f32 %v339, %v965
      %v967 = vpop.f32.mrf.mxu0
      %968 = vmatprep.mubr.bf16.mxu0 0
      %969 = vmatmul.mubr.bf16.gmra.mxu0 %v674
      %v970 = vpop.f32.mrf.mxu0
      %v971 = vadd.f32 %v339, %v970
      %v972 = vpop.f32.mrf.mxu0
      %v973 = vpop.f32.mrf.mxu0
      %v974 = vadd.f32 %v339, %v973
      %v975 = vpop.f32.mrf.mxu0
      %976 = vmatprep.mubr.bf16.mxu0 0
      %977 = vmatmul.mubr.bf16.gmra.mxu0 %v677
      %v978 = vpop.f32.mrf.mxu0
      %v979 = vadd.f32 %v339, %v978
      %v980 = vpop.f32.mrf.mxu0
      %v981 = vpop.f32.mrf.mxu0
      %v982 = vadd.f32 %v339, %v981
      %v983 = vpop.f32.mrf.mxu0
      %984 = vmatprep.mubr.bf16.mxu0 0
      %985 = vmatmul.mubr.bf16.gmra.mxu0 %v680
      %v986 = vpop.f32.mrf.mxu0
      %v987 = vadd.f32 %v339, %v986
      %v988 = vpop.f32.mrf.mxu0
      %v989 = vpop.f32.mrf.mxu0
      %v990 = vadd.f32 %v339, %v989
      %v991 = vpop.f32.mrf.mxu0
      %992 = vmatprep.mubr.bf16.mxu0 0
      %993 = vmatmul.mubr.bf16.gmra.mxu0 %v683
      %v994 = vpop.f32.mrf.mxu0
      %v995 = vadd.f32 %v339, %v994
      %v996 = vpop.f32.mrf.mxu0
      %v997 = vpop.f32.mrf.mxu0
      %v998 = vadd.f32 %v339, %v997
      %v999 = vpop.f32.mrf.mxu0
      %1000 = vmatprep.mubr.bf16.mxu0 0
      %1001 = vmatmul.mubr.bf16.gmra.mxu0 %v686
      %v1002 = vpop.f32.mrf.mxu0
      %v1003 = vadd.f32 %v339, %v1002
      %v1004 = vpop.f32.mrf.mxu0
      %v1005 = vpop.f32.mrf.mxu0
      %v1006 = vadd.f32 %v339, %v1005
      %v1007 = vpop.f32.mrf.mxu0
      %1008 = vmatprep.mubr.bf16.mxu0 0
      %1009 = vmatmul.mubr.bf16.gmra.mxu0 %v689
      %v1010 = vpop.f32.mrf.mxu0
      %v1011 = vadd.f32 %v339, %v1010
      %v1012 = vpop.f32.mrf.mxu0
      %v1013 = vpop.f32.mrf.mxu0
      %v1014 = vadd.f32 %v339, %v1013
      %v1015 = vpop.f32.mrf.mxu0
      %1016 = vmatprep.mubr.bf16.mxu0 0
      %1017 = vmatmul.mubr.bf16.gmra.mxu0 %v692
      %v1018 = vpop.f32.mrf.mxu0
      %v1019 = vadd.f32 %v339, %v1018
      %v1020 = vpop.f32.mrf.mxu0
      %v1021 = vpop.f32.mrf.mxu0
      %v1022 = vadd.f32 %v339, %v1021
      %v1023 = vpop.f32.mrf.mxu0
      %1024 = vmatprep.mubr.bf16.mxu0 0
      %1025 = vmatmul.mubr.bf16.gmra.mxu0 %v695
      %v1026 = vpop.f32.mrf.mxu0
      %v1027 = vadd.f32 %v339, %v1026
      %v1028 = vpop.f32.mrf.mxu0
      %v1029 = vpop.f32.mrf.mxu0
      %v1030 = vadd.f32 %v339, %v1029
      %v1031 = vpop.f32.mrf.mxu0
      %1032 = vmatprep.mubr.bf16.mxu0 0
      %1033 = vmatmul.mubr.bf16.gmra.mxu0 %v698
      %v1034 = vpop.f32.mrf.mxu0
      %v1035 = vadd.f32 %v339, %v1034
      %v1036 = vpop.f32.mrf.mxu0
      %v1037 = vpop.f32.mrf.mxu0
      %v1038 = vadd.f32 %v339, %v1037
      %v1039 = vpop.f32.mrf.mxu0
      %1040 = vmatprep.mubr.bf16.mxu0 0
      %1041 = vmatmul.mubr.bf16.gmra.mxu0 %v701
      %v1042 = vpop.f32.mrf.mxu0
      %v1043 = vadd.f32 %v339, %v1042
      %v1044 = vpop.f32.mrf.mxu0
      %v1045 = vpop.f32.mrf.mxu0
      %v1046 = vadd.f32 %v339, %v1045
      %v1047 = vpop.f32.mrf.mxu0
      %1048 = vmatprep.mubr.bf16.mxu0 0
      %1049 = vmatmul.mubr.bf16.gmra.mxu0 %v704
      %v1050 = vpop.f32.mrf.mxu0
      %v1051 = vadd.f32 %v339, %v1050
      %v1052 = vpop.f32.mrf.mxu0
      %v1053 = vpop.f32.mrf.mxu0
      %v1054 = vadd.f32 %v339, %v1053
      %v1055 = vpop.f32.mrf.mxu0
      %1056 = vmatprep.mubr.bf16.mxu0 0
      %1057 = vmatmul.mubr.bf16.gmra.mxu0 %v707
      %v1058 = vpop.f32.mrf.mxu0
      %v1059 = vadd.f32 %v339, %v1058
      %v1060 = vpop.f32.mrf.mxu0
      %v1061 = vpop.f32.mrf.mxu0
      %v1062 = vadd.f32 %v339, %v1061
      %v1063 = vpop.f32.mrf.mxu0
      %1064 = vmatprep.mubr.bf16.mxu0 0
      %1065 = vmatmul.mubr.bf16.gmra.mxu0 %v710
      %v1066 = vpop.f32.mrf.mxu0
      %v1067 = vadd.f32 %v339, %v1066
      %v1068 = vpop.f32.mrf.mxu0
      %v1069 = vpop.f32.mrf.mxu0
      %v1070 = vadd.f32 %v339, %v1069
      %v1071 = vpop.f32.mrf.mxu0
      %1072 = vmatprep.mubr.bf16.mxu0 0
      %1073 = vmatmul.mubr.bf16.gmra.mxu0 %v713
      %v1074 = vpop.f32.mrf.mxu0
      %v1075 = vadd.f32 %v339, %v1074
      %v1076 = vpop.f32.mrf.mxu0
      %v1077 = vpop.f32.mrf.mxu0
      %v1078 = vadd.f32 %v339, %v1077
      %v1079 = vpop.f32.mrf.mxu0
      %1080 = vmatprep.mubr.bf16.mxu0 0
      %1081 = vmatmul.mubr.bf16.gmra.mxu0 %v716
      %v1082 = vpop.f32.mrf.mxu0
      %v1083 = vadd.f32 %v339, %v1082
      %v1084 = vpop.f32.mrf.mxu0
      %v1085 = vpop.f32.mrf.mxu0
      %v1086 = vadd.f32 %v339, %v1085
      %v1087 = vpop.f32.mrf.mxu0
      %1088 = vmatprep.mubr.bf16.mxu0 0
      %1089 = vmatmul.mubr.bf16.gmra.mxu0 %v719
      %v1090 = vpop.f32.mrf.mxu0
      %v1091 = vadd.f32 %v339, %v1090
      %v1092 = vpop.f32.mrf.mxu0
      %v1093 = vpop.f32.mrf.mxu0
      %v1094 = vadd.f32 %v339, %v1093
      %v1095 = vpop.f32.mrf.mxu0
      %1096 = vmatprep.mubr.bf16.mxu0 0
      %1097 = vmatmul.mubr.bf16.gmra.mxu0 %v722
      %v1098 = vpop.f32.mrf.mxu0
      %v1099 = vadd.f32 %v339, %v1098
      %v1100 = vpop.f32.mrf.mxu0
      %v1101 = vpop.f32.mrf.mxu0
      %v1102 = vadd.f32 %v339, %v1101
      %v1103 = vpop.f32.mrf.mxu0
      %1104 = vmatprep.mubr.bf16.mxu0 0
      %1105 = vmatmul.mubr.bf16.gmra.mxu0 %v725
      %v1106 = vpop.f32.mrf.mxu0
      %v1107 = vadd.f32 %v339, %v1106
      %v1108 = vpop.f32.mrf.mxu0
      %v1109 = vpop.f32.mrf.mxu0
      %v1110 = vadd.f32 %v339, %v1109
      %v1111 = vpop.f32.mrf.mxu0
      %1112 = vmatprep.mubr.bf16.mxu0 0
      %1113 = vmatmul.mubr.bf16.gmra.mxu0 %v728
      %v1114 = vpop.f32.mrf.mxu0
      %v1115 = vadd.f32 %v339, %v1114
      %v1116 = vpop.f32.mrf.mxu0
      %v1117 = vpop.f32.mrf.mxu0
      %v1118 = vadd.f32 %v339, %v1117
      %v1119 = vpop.f32.mrf.mxu0
      %1120 = vmatprep.mubr.bf16.mxu0 0
      %1121 = vmatmul.mubr.bf16.gmra.mxu0 %v731
      %v1122 = vpop.f32.mrf.mxu0
      %v1123 = vadd.f32 %v339, %v1122
      %v1124 = vpop.f32.mrf.mxu0
      %v1125 = vpop.f32.mrf.mxu0
      %v1126 = vadd.f32 %v339, %v1125
      %v1127 = vpop.f32.mrf.mxu0
      %1128 = vmatprep.mubr.bf16.mxu0 0
      %1129 = vmatmul.mubr.bf16.gmra.mxu0 %v734
      %v1130 = vpop.f32.mrf.mxu0
      %v1131 = vadd.f32 %v339, %v1130
      %v1132 = vpop.f32.mrf.mxu0
      %v1133 = vpop.f32.mrf.mxu0
      %v1134 = vadd.f32 %v339, %v1133
      %v1135 = vpop.f32.mrf.mxu0
      %1136 = vmatprep.mubr.bf16.mxu0 0
      %1137 = vmatmul.mubr.bf16.gmra.mxu0 %v737
      %v1138 = vpop.f32.mrf.mxu0
      %v1139 = vadd.f32 %v339, %v1138
      %v1140 = vpop.f32.mrf.mxu0
      %v1141 = vpop.f32.mrf.mxu0
      %v1142 = vadd.f32 %v339, %v1141
      %v1143 = vpop.f32.mrf.mxu0
      %1144 = vmatprep.mubr.bf16.mxu0 0
      %1145 = vmatmul.mubr.bf16.gmra.mxu0 %v740
      %v1146 = vpop.f32.mrf.mxu0
      %v1147 = vadd.f32 %v339, %v1146
      %v1148 = vpop.f32.mrf.mxu0
      %v1149 = vpop.f32.mrf.mxu0
      %v1150 = vadd.f32 %v339, %v1149
      %v1151 = vpop.f32.mrf.mxu0
      %1152 = vmatprep.mubr.bf16.mxu0 0
      %1153 = vmatmul.mubr.bf16.gmra.mxu0 %v743
      %v1154 = vpop.f32.mrf.mxu0
      %v1155 = vadd.f32 %v339, %v1154
      %v1156 = vpop.f32.mrf.mxu0
      %v1157 = vpop.f32.mrf.mxu0
      %v1158 = vadd.f32 %v339, %v1157
      %v1159 = vpop.f32.mrf.mxu0
      %1160 = vmatprep.mubr.bf16.mxu0 0
      %1161 = vmatmul.mubr.bf16.gmra.mxu0 %v746
      %v1162 = vpop.f32.mrf.mxu0
      %v1163 = vadd.f32 %v339, %v1162
      %v1164 = vpop.f32.mrf.mxu0
      %v1165 = vpop.f32.mrf.mxu0
      %v1166 = vadd.f32 %v339, %v1165
      %v1167 = vpop.f32.mrf.mxu0
      %1168 = vmatprep.mubr.bf16.mxu0 0
      %1169 = vmatmul.mubr.bf16.gmra.mxu0 %v749
      %v1170 = vpop.f32.mrf.mxu0
      %v1171 = vadd.f32 %v339, %v1170
      %v1172 = vpop.f32.mrf.mxu0
      %v1173 = vpop.f32.mrf.mxu0
      %v1174 = vadd.f32 %v339, %v1173
      %v1175 = vpop.f32.mrf.mxu0
      %1176 = vmatprep.mubr.bf16.mxu0 0
      %1177 = vmatmul.mubr.bf16.gmra.mxu0 %v752
      %v1178 = vpop.f32.mrf.mxu0
      %v1179 = vadd.f32 %v339, %v1178
      %v1180 = vpop.f32.mrf.mxu0
      %v1181 = vpop.f32.mrf.mxu0
      %v1182 = vadd.f32 %v339, %v1181
      %v1183 = vpop.f32.mrf.mxu0
      %1184 = vmatprep.mubr.bf16.mxu0 0
      %1185 = vmatmul.mubr.bf16.gmra.mxu0 %v755
      %v1186 = vpop.f32.mrf.mxu0
      %v1187 = vadd.f32 %v339, %v1186
      %v1188 = vpop.f32.mrf.mxu0
      %v1189 = vpop.f32.mrf.mxu0
      %v1190 = vadd.f32 %v339, %v1189
      %v1191 = vpop.f32.mrf.mxu0
      %1192 = vmatprep.mubr.bf16.mxu0 0
      %1193 = vmatmul.mubr.bf16.gmra.mxu0 %v758
      %v1194 = vpop.f32.mrf.mxu0
      %v1195 = vadd.f32 %v339, %v1194
      %v1196 = vpop.f32.mrf.mxu0
      %v1197 = vpop.f32.mrf.mxu0
      %v1198 = vadd.f32 %v339, %v1197
      %v1199 = vpop.f32.mrf.mxu0
      %1200 = vmatprep.mubr.bf16.mxu0 0
      %1201 = vmatmul.mubr.bf16.gmra.mxu0 %v761
      %v1202 = vpop.f32.mrf.mxu0
      %v1203 = vadd.f32 %v339, %v1202
      %v1204 = vpop.f32.mrf.mxu0
      %v1205 = vpop.f32.mrf.mxu0
      %v1206 = vadd.f32 %v339, %v1205
      %v1207 = vpop.f32.mrf.mxu0
      %1208 = vmatprep.mubr.bf16.mxu0 0
      %1209 = vmatmul.mubr.bf16.gmra.mxu0 %v764
      %v1210 = vpop.f32.mrf.mxu0
      %v1211 = vadd.f32 %v339, %v1210
      %v1212 = vpop.f32.mrf.mxu0
      %v1213 = vpop.f32.mrf.mxu0
      %v1214 = vadd.f32 %v339, %v1213
      %v1215 = vpop.f32.mrf.mxu0
      %1216 = vmatprep.mubr.bf16.mxu0 0
      %1217 = vmatmul.mubr.bf16.gmra.mxu0 %v767
      %v1218 = vpop.f32.mrf.mxu0
      %v1219 = vadd.f32 %v339, %v1218
      %v1220 = vpop.f32.mrf.mxu0
      %v1221 = vpop.f32.mrf.mxu0
      %v1222 = vadd.f32 %v339, %v1221
      %v1223 = vpop.f32.mrf.mxu0
      %1224 = vdwg.mxu0
      %v1225 = vmax.f32 %v811, 0.0
      %v1226 = vmax.f32 %v814, 0.0
      %v1227 = vmax.f32 %v819, 0.0
      %v1228 = vmax.f32 %v822, 0.0
      %v1229 = vmax.f32 %v827, 0.0
      %v1230 = vmax.f32 %v830, 0.0
      %v1231 = vmax.f32 %v835, 0.0
      %v1232 = vmax.f32 %v838, 0.0
      %v1233 = vmax.f32 %v843, 0.0
      %v1234 = vmax.f32 %v846, 0.0
      %v1235 = vmax.f32 %v851, 0.0
      %v1236 = vmax.f32 %v854, 0.0
      %v1237 = vmax.f32 %v859, 0.0
      %v1238 = vmax.f32 %v862, 0.0
      %v1239 = vmax.f32 %v867, 0.0
      %v1240 = vmax.f32 %v870, 0.0
      %v1241 = vmax.f32 %v875, 0.0
      %v1242 = vmax.f32 %v878, 0.0
      %v1243 = vmax.f32 %v883, 0.0
      %v1244 = vmax.f32 %v886, 0.0
      %v1245 = vmax.f32 %v891, 0.0
      %v1246 = vmax.f32 %v894, 0.0
      %v1247 = vmax.f32 %v899, 0.0
      %v1248 = vmax.f32 %v902, 0.0
      %v1249 = vmax.f32 %v907, 0.0
      %v1250 = vmax.f32 %v910, 0.0
      %v1251 = vmax.f32 %v915, 0.0
      %v1252 = vmax.f32 %v918, 0.0
      %v1253 = vmax.f32 %v923, 0.0
      %v1254 = vmax.f32 %v926, 0.0
      %v1255 = vmax.f32 %v931, 0.0
      %v1256 = vmax.f32 %v934, 0.0
      %v1257 = vmax.f32 %v939, 0.0
      %v1258 = vmax.f32 %v942, 0.0
      %v1259 = vmax.f32 %v947, 0.0
      %v1260 = vmax.f32 %v950, 0.0
      %v1261 = vmax.f32 %v955, 0.0
      %v1262 = vmax.f32 %v958, 0.0
      %v1263 = vmax.f32 %v963, 0.0
      %v1264 = vmax.f32 %v966, 0.0
      %v1265 = vmax.f32 %v971, 0.0
      %v1266 = vmax.f32 %v974, 0.0
      %v1267 = vmax.f32 %v979, 0.0
      %v1268 = vmax.f32 %v982, 0.0
      %v1269 = vmax.f32 %v987, 0.0
      %v1270 = vmax.f32 %v990, 0.0
      %v1271 = vmax.f32 %v995, 0.0
      %v1272 = vmax.f32 %v998, 0.0
      %v1273 = vmax.f32 %v1003, 0.0
      %v1274 = vmax.f32 %v1006, 0.0
      %v1275 = vmax.f32 %v1011, 0.0
      %v1276 = vmax.f32 %v1014, 0.0
      %v1277 = vmax.f32 %v1019, 0.0
      %v1278 = vmax.f32 %v1022, 0.0
      %v1279 = vmax.f32 %v1027, 0.0
      %v1280 = vmax.f32 %v1030, 0.0
      %v1281 = vmax.f32 %v1035, 0.0
      %v1282 = vmax.f32 %v1038, 0.0
      %v1283 = vmax.f32 %v1043, 0.0
      %v1284 = vmax.f32 %v1046, 0.0
      %v1285 = vmax.f32 %v1051, 0.0
      %v1286 = vmax.f32 %v1054, 0.0
      %v1287 = vmax.f32 %v1059, 0.0
      %v1288 = vmax.f32 %v1062, 0.0
      %v1289 = vmax.f32 %v1067, 0.0
      %v1290 = vmax.f32 %v1070, 0.0
      %v1291 = vmax.f32 %v1075, 0.0
      %v1292 = vmax.f32 %v1078, 0.0
      %v1293 = vmax.f32 %v1083, 0.0
      %v1294 = vmax.f32 %v1086, 0.0
      %v1295 = vmax.f32 %v1091, 0.0
      %v1296 = vmax.f32 %v1094, 0.0
      %v1297 = vmax.f32 %v1099, 0.0
      %v1298 = vmax.f32 %v1102, 0.0
      %v1299 = vmax.f32 %v1107, 0.0
      %v1300 = vmax.f32 %v1110, 0.0
      %v1301 = vmax.f32 %v1115, 0.0
      %v1302 = vmax.f32 %v1118, 0.0
      %v1303 = vmax.f32 %v1123, 0.0
      %v1304 = vmax.f32 %v1126, 0.0
      %v1305 = vmax.f32 %v1131, 0.0
      %v1306 = vmax.f32 %v1134, 0.0
      %v1307 = vmax.f32 %v1139, 0.0
      %v1308 = vmax.f32 %v1142, 0.0
      %v1309 = vmax.f32 %v1147, 0.0
      %v1310 = vmax.f32 %v1150, 0.0
      %v1311 = vmax.f32 %v1155, 0.0
      %v1312 = vmax.f32 %v1158, 0.0
      %v1313 = vmax.f32 %v1163, 0.0
      %v1314 = vmax.f32 %v1166, 0.0
      %v1315 = vmax.f32 %v1171, 0.0
      %v1316 = vmax.f32 %v1174, 0.0
      %v1317 = vmax.f32 %v1179, 0.0
      %v1318 = vmax.f32 %v1182, 0.0
      %v1319 = vmax.f32 %v1187, 0.0
      %v1320 = vmax.f32 %v1190, 0.0
      %v1321 = vmax.f32 %v1195, 0.0
      %v1322 = vmax.f32 %v1198, 0.0
      %v1323 = vmax.f32 %v1203, 0.0
      %v1324 = vmax.f32 %v1206, 0.0
      %v1325 = vmax.f32 %v1211, 0.0
      %v1326 = vmax.f32 %v1214, 0.0
      %v1327 = vmax.f32 %v1219, 0.0
      %v1328 = vmax.f32 %v1222, 0.0
      %v1329 = vpack.c.bf16 %v1226, %v1225
      %v1330 = vpack.c.bf16 %v1228, %v1227
      %v1331 = vpack.c.bf16 %v1230, %v1229
      %v1332 = vpack.c.bf16 %v1232, %v1231
      %v1333 = vpack.c.bf16 %v1234, %v1233
      %v1334 = vpack.c.bf16 %v1236, %v1235
      %v1335 = vpack.c.bf16 %v1238, %v1237
      %v1336 = vpack.c.bf16 %v1240, %v1239
      %v1337 = vpack.c.bf16 %v1242, %v1241
      %v1338 = vpack.c.bf16 %v1244, %v1243
      %v1339 = vpack.c.bf16 %v1246, %v1245
      %v1340 = vpack.c.bf16 %v1248, %v1247
      %v1341 = vpack.c.bf16 %v1250, %v1249
      %v1342 = vpack.c.bf16 %v1252, %v1251
      %v1343 = vpack.c.bf16 %v1254, %v1253
      %v1344 = vpack.c.bf16 %v1256, %v1255
      %v1345 = vpack.c.bf16 %v1258, %v1257
      %v1346 = vpack.c.bf16 %v1260, %v1259
      %v1347 = vpack.c.bf16 %v1262, %v1261
      %v1348 = vpack.c.bf16 %v1264, %v1263
      %v1349 = vpack.c.bf16 %v1266, %v1265
      %v1350 = vpack.c.bf16 %v1268, %v1267
      %v1351 = vpack.c.bf16 %v1270, %v1269
      %v1352 = vpack.c.bf16 %v1272, %v1271
      %v1353 = vpack.c.bf16 %v1274, %v1273
      %v1354 = vpack.c.bf16 %v1276, %v1275
      %v1355 = vpack.c.bf16 %v1278, %v1277
      %v1356 = vpack.c.bf16 %v1280, %v1279
      %v1357 = vpack.c.bf16 %v1282, %v1281
      %v1358 = vpack.c.bf16 %v1284, %v1283
      %v1359 = vpack.c.bf16 %v1286, %v1285
      %v1360 = vpack.c.bf16 %v1288, %v1287
      %v1361 = vpack.c.bf16 %v1290, %v1289
      %v1362 = vpack.c.bf16 %v1292, %v1291
      %v1363 = vpack.c.bf16 %v1294, %v1293
      %v1364 = vpack.c.bf16 %v1296, %v1295
      %v1365 = vpack.c.bf16 %v1298, %v1297
      %v1366 = vpack.c.bf16 %v1300, %v1299
      %v1367 = vpack.c.bf16 %v1302, %v1301
      %v1368 = vpack.c.bf16 %v1304, %v1303
      %v1369 = vpack.c.bf16 %v1306, %v1305
      %v1370 = vpack.c.bf16 %v1308, %v1307
      %v1371 = vpack.c.bf16 %v1310, %v1309
      %v1372 = vpack.c.bf16 %v1312, %v1311
      %v1373 = vpack.c.bf16 %v1314, %v1313
      %v1374 = vpack.c.bf16 %v1316, %v1315
      %v1375 = vpack.c.bf16 %v1318, %v1317
      %v1376 = vpack.c.bf16 %v1320, %v1319
      %v1377 = vpack.c.bf16 %v1322, %v1321
      %v1378 = vpack.c.bf16 %v1324, %v1323
      %v1379 = vpack.c.bf16 %v1326, %v1325
      %v1380 = vpack.c.bf16 %v1328, %v1327
      %v1433 = vunpack.c.l.b16 %v1329
      %v1434 = vunpack.c.h.b16 %v1329
      %v1435 = vunpack.c.l.b16 %v1330
      %v1436 = vunpack.c.h.b16 %v1330
      %v1437 = vunpack.c.l.b16 %v1331
      %v1438 = vunpack.c.h.b16 %v1331
      %v1439 = vunpack.c.l.b16 %v1332
      %v1440 = vunpack.c.h.b16 %v1332
      %v1441 = vunpack.c.l.b16 %v1333
      %v1442 = vunpack.c.h.b16 %v1333
      %v1443 = vunpack.c.l.b16 %v1334
      %v1444 = vunpack.c.h.b16 %v1334
      %v1445 = vunpack.c.l.b16 %v1335
      %v1446 = vunpack.c.h.b16 %v1335
      %v1447 = vunpack.c.l.b16 %v1336
      %v1448 = vunpack.c.h.b16 %v1336
      %v1449 = vunpack.c.l.b16 %v1337
      %v1450 = vunpack.c.h.b16 %v1337
      %v1451 = vunpack.c.l.b16 %v1338
      %v1452 = vunpack.c.h.b16 %v1338
      %v1453 = vunpack.c.l.b16 %v1339
      %v1454 = vunpack.c.h.b16 %v1339
      %v1455 = vunpack.c.l.b16 %v1340
      %v1456 = vunpack.c.h.b16 %v1340
      %v1457 = vunpack.c.l.b16 %v1341
      %v1458 = vunpack.c.h.b16 %v1341
      %v1459 = vunpack.c.l.b16 %v1342
      %v1460 = vunpack.c.h.b16 %v1342
      %v1461 = vunpack.c.l.b16 %v1343
      %v1462 = vunpack.c.h.b16 %v1343
      %v1463 = vunpack.c.l.b16 %v1344
      %v1464 = vunpack.c.h.b16 %v1344
      %v1465 = vunpack.c.l.b16 %v1345
      %v1466 = vunpack.c.h.b16 %v1345
      %v1467 = vunpack.c.l.b16 %v1346
      %v1468 = vunpack.c.h.b16 %v1346
      %v1469 = vunpack.c.l.b16 %v1347
      %v1470 = vunpack.c.h.b16 %v1347
      %v1471 = vunpack.c.l.b16 %v1348
      %v1472 = vunpack.c.h.b16 %v1348
      %v1473 = vunpack.c.l.b16 %v1349
      %v1474 = vunpack.c.h.b16 %v1349
      %v1475 = vunpack.c.l.b16 %v1350
      %v1476 = vunpack.c.h.b16 %v1350
      %v1477 = vunpack.c.l.b16 %v1351
      %v1478 = vunpack.c.h.b16 %v1351
      %v1479 = vunpack.c.l.b16 %v1352
      %v1480 = vunpack.c.h.b16 %v1352
      %v1481 = vunpack.c.l.b16 %v1353
      %v1482 = vunpack.c.h.b16 %v1353
      %v1483 = vunpack.c.l.b16 %v1354
      %v1484 = vunpack.c.h.b16 %v1354
      %v1485 = vunpack.c.l.b16 %v1355
      %v1486 = vunpack.c.h.b16 %v1355
      %v1487 = vunpack.c.l.b16 %v1356
      %v1488 = vunpack.c.h.b16 %v1356
      %v1489 = vunpack.c.l.b16 %v1357
      %v1490 = vunpack.c.h.b16 %v1357
      %v1491 = vunpack.c.l.b16 %v1358
      %v1492 = vunpack.c.h.b16 %v1358
      %v1493 = vunpack.c.l.b16 %v1359
      %v1494 = vunpack.c.h.b16 %v1359
      %v1495 = vunpack.c.l.b16 %v1360
      %v1496 = vunpack.c.h.b16 %v1360
      %v1497 = vunpack.c.l.b16 %v1361
      %v1498 = vunpack.c.h.b16 %v1361
      %v1499 = vunpack.c.l.b16 %v1362
      %v1500 = vunpack.c.h.b16 %v1362
      %v1501 = vunpack.c.l.b16 %v1363
      %v1502 = vunpack.c.h.b16 %v1363
      %v1503 = vunpack.c.l.b16 %v1364
      %v1504 = vunpack.c.h.b16 %v1364
      %v1505 = vunpack.c.l.b16 %v1365
      %v1506 = vunpack.c.h.b16 %v1365
      %v1507 = vunpack.c.l.b16 %v1366
      %v1508 = vunpack.c.h.b16 %v1366
      %v1509 = vunpack.c.l.b16 %v1367
      %v1510 = vunpack.c.h.b16 %v1367
      %v1511 = vunpack.c.l.b16 %v1368
      %v1512 = vunpack.c.h.b16 %v1368
      %v1513 = vunpack.c.l.b16 %v1369
      %v1514 = vunpack.c.h.b16 %v1369
      %v1515 = vunpack.c.l.b16 %v1370
      %v1516 = vunpack.c.h.b16 %v1370
      %v1517 = vunpack.c.l.b16 %v1371
      %v1518 = vunpack.c.h.b16 %v1371
      %v1519 = vunpack.c.l.b16 %v1372
      %v1520 = vunpack.c.h.b16 %v1372
      %v1521 = vunpack.c.l.b16 %v1373
      %v1522 = vunpack.c.h.b16 %v1373
      %v1523 = vunpack.c.l.b16 %v1374
      %v1524 = vunpack.c.h.b16 %v1374
      %v1525 = vunpack.c.l.b16 %v1375
      %v1526 = vunpack.c.h.b16 %v1375
      %v1527 = vunpack.c.l.b16 %v1376
      %v1528 = vunpack.c.h.b16 %v1376
      %v1529 = vunpack.c.l.b16 %v1377
      %v1530 = vunpack.c.h.b16 %v1377
      %v1531 = vunpack.c.l.b16 %v1378
      %v1532 = vunpack.c.h.b16 %v1378
      %v1533 = vunpack.c.l.b16 %v1379
      %v1534 = vunpack.c.h.b16 %v1379
      %v1535 = vunpack.c.l.b16 %v1380
      %v1536 = vunpack.c.h.b16 %v1380
      %v1537 = vpack.c.b16 %v1433, %v1433
      %v1538 = vpack.c.b16 %v1434, %v1434
      %v1539 = vpack.c.b16 %v1435, %v1435
      %v1540 = vpack.c.b16 %v1436, %v1436
      %v1541 = vpack.c.b16 %v1437, %v1437
      %v1542 = vpack.c.b16 %v1438, %v1438
      %v1543 = vpack.c.b16 %v1439, %v1439
      %v1544 = vpack.c.b16 %v1440, %v1440
      %v1545 = vpack.c.b16 %v1441, %v1441
      %v1546 = vpack.c.b16 %v1442, %v1442
      %v1547 = vpack.c.b16 %v1443, %v1443
      %v1548 = vpack.c.b16 %v1444, %v1444
      %v1549 = vpack.c.b16 %v1445, %v1445
      %v1550 = vpack.c.b16 %v1446, %v1446
      %v1551 = vpack.c.b16 %v1447, %v1447
      %v1552 = vpack.c.b16 %v1448, %v1448
      %v1553 = vpack.c.b16 %v1449, %v1449
      %v1554 = vpack.c.b16 %v1450, %v1450
      %v1555 = vpack.c.b16 %v1451, %v1451
      %v1556 = vpack.c.b16 %v1452, %v1452
      %v1557 = vpack.c.b16 %v1453, %v1453
      %v1558 = vpack.c.b16 %v1454, %v1454
      %v1559 = vpack.c.b16 %v1455, %v1455
      %v1560 = vpack.c.b16 %v1456, %v1456
      %v1561 = vpack.c.b16 %v1457, %v1457
      %v1562 = vpack.c.b16 %v1458, %v1458
      %v1563 = vpack.c.b16 %v1459, %v1459
      %v1564 = vpack.c.b16 %v1460, %v1460
      %v1565 = vpack.c.b16 %v1461, %v1461
      %v1566 = vpack.c.b16 %v1462, %v1462
      %v1567 = vpack.c.b16 %v1463, %v1463
      %v1568 = vpack.c.b16 %v1464, %v1464
      %v1569 = vpack.c.b16 %v1465, %v1465
      %v1570 = vpack.c.b16 %v1466, %v1466
      %v1571 = vpack.c.b16 %v1467, %v1467
      %v1572 = vpack.c.b16 %v1468, %v1468
      %v1573 = vpack.c.b16 %v1469, %v1469
      %v1574 = vpack.c.b16 %v1470, %v1470
      %v1575 = vpack.c.b16 %v1471, %v1471
      %v1576 = vpack.c.b16 %v1472, %v1472
      %v1577 = vpack.c.b16 %v1473, %v1473
      %v1578 = vpack.c.b16 %v1474, %v1474
      %v1579 = vpack.c.b16 %v1475, %v1475
      %v1580 = vpack.c.b16 %v1476, %v1476
      %v1581 = vpack.c.b16 %v1477, %v1477
      %v1582 = vpack.c.b16 %v1478, %v1478
      %v1583 = vpack.c.b16 %v1479, %v1479
      %v1584 = vpack.c.b16 %v1480, %v1480
      %v1585 = vpack.c.b16 %v1481, %v1481
      %v1586 = vpack.c.b16 %v1482, %v1482
      %v1587 = vpack.c.b16 %v1483, %v1483
      %v1588 = vpack.c.b16 %v1484, %v1484
      %v1589 = vpack.c.b16 %v1485, %v1485
      %v1590 = vpack.c.b16 %v1486, %v1486
      %v1591 = vpack.c.b16 %v1487, %v1487
      %v1592 = vpack.c.b16 %v1488, %v1488
      %v1593 = vpack.c.b16 %v1489, %v1489
      %v1594 = vpack.c.b16 %v1490, %v1490
      %v1595 = vpack.c.b16 %v1491, %v1491
      %v1596 = vpack.c.b16 %v1492, %v1492
      %v1597 = vpack.c.b16 %v1493, %v1493
      %v1598 = vpack.c.b16 %v1494, %v1494
      %v1599 = vpack.c.b16 %v1495, %v1495
      %v1600 = vpack.c.b16 %v1496, %v1496
      %v1601 = vpack.c.b16 %v1497, %v1497
      %v1602 = vpack.c.b16 %v1498, %v1498
      %v1603 = vpack.c.b16 %v1499, %v1499
      %v1604 = vpack.c.b16 %v1500, %v1500
      %v1605 = vpack.c.b16 %v1501, %v1501
      %v1606 = vpack.c.b16 %v1502, %v1502
      %v1607 = vpack.c.b16 %v1503, %v1503
      %v1608 = vpack.c.b16 %v1504, %v1504
      %v1609 = vpack.c.b16 %v1505, %v1505
      %v1610 = vpack.c.b16 %v1506, %v1506
      %v1611 = vpack.c.b16 %v1507, %v1507
      %v1612 = vpack.c.b16 %v1508, %v1508
      %v1613 = vpack.c.b16 %v1509, %v1509
      %v1614 = vpack.c.b16 %v1510, %v1510
      %v1615 = vpack.c.b16 %v1511, %v1511
      %v1616 = vpack.c.b16 %v1512, %v1512
      %v1617 = vpack.c.b16 %v1513, %v1513
      %v1618 = vpack.c.b16 %v1514, %v1514
      %v1619 = vpack.c.b16 %v1515, %v1515
      %v1620 = vpack.c.b16 %v1516, %v1516
      %v1621 = vpack.c.b16 %v1517, %v1517
      %v1622 = vpack.c.b16 %v1518, %v1518
      %v1623 = vpack.c.b16 %v1519, %v1519
      %v1624 = vpack.c.b16 %v1520, %v1520
      %v1625 = vpack.c.b16 %v1521, %v1521
      %v1626 = vpack.c.b16 %v1522, %v1522
      %v1627 = vpack.c.b16 %v1523, %v1523
      %v1628 = vpack.c.b16 %v1524, %v1524
      %v1629 = vpack.c.b16 %v1525, %v1525
      %v1630 = vpack.c.b16 %v1526, %v1526
      %v1631 = vpack.c.b16 %v1527, %v1527
      %v1632 = vpack.c.b16 %v1528, %v1528
      %v1633 = vpack.c.b16 %v1529, %v1529
      %v1634 = vpack.c.b16 %v1530, %v1530
      %v1635 = vpack.c.b16 %v1531, %v1531
      %v1636 = vpack.c.b16 %v1532, %v1532
      %v1637 = vpack.c.b16 %v1533, %v1533
      %v1638 = vpack.c.b16 %v1534, %v1534
      %v1639 = vpack.c.b16 %v1535, %v1535
      %v1640 = vpack.c.b16 %v1536, %v1536
      %vm1745 = vcmask 781312
      %1746 = vst.msk [vmem:[#allocation2] sm:$0xf] %vm1745, %v1537
      %1747 = vst.msk [vmem:[#allocation2 + $0x4] sm:$0xf] %vm1745, %v1538
      %1748 = vst.msk [vmem:[#allocation2 + $0x8] sm:$0xf] %vm1745, %v1539
      %1749 = vst.msk [vmem:[#allocation2 + $0xc] sm:$0xf] %vm1745, %v1540
      %1750 = vst.msk [vmem:[#allocation2 + $0x10] sm:$0xf] %vm1745, %v1541
      %1751 = vst.msk [vmem:[#allocation2 + $0x14] sm:$0xf] %vm1745, %v1542
      %1752 = vst.msk [vmem:[#allocation2 + $0x18] sm:$0xf] %vm1745, %v1543
      %1753 = vst.msk [vmem:[#allocation2 + $0x1c] sm:$0xf] %vm1745, %v1544
      %1754 = vst.msk [vmem:[#allocation2 + $0x20] sm:$0xf] %vm1745, %v1545
      %1755 = vst.msk [vmem:[#allocation2 + $0x24] sm:$0xf] %vm1745, %v1546
      %1756 = vst.msk [vmem:[#allocation2 + $0x28] sm:$0xf] %vm1745, %v1547
      %1757 = vst.msk [vmem:[#allocation2 + $0x2c] sm:$0xf] %vm1745, %v1548
      %1758 = vst.msk [vmem:[#allocation2 + $0x30] sm:$0xf] %vm1745, %v1549
      %1759 = vst.msk [vmem:[#allocation2 + $0x34] sm:$0xf] %vm1745, %v1550
      %1760 = vst.msk [vmem:[#allocation2 + $0x38] sm:$0xf] %vm1745, %v1551
      %1761 = vst.msk [vmem:[#allocation2 + $0x3c] sm:$0xf] %vm1745, %v1552
      %1762 = vst.msk [vmem:[#allocation2 + $0x40] sm:$0xf] %vm1745, %v1553
      %1763 = vst.msk [vmem:[#allocation2 + $0x44] sm:$0xf] %vm1745, %v1554
      %1764 = vst.msk [vmem:[#allocation2 + $0x48] sm:$0xf] %vm1745, %v1555
      %1765 = vst.msk [vmem:[#allocation2 + $0x4c] sm:$0xf] %vm1745, %v1556
      %1766 = vst.msk [vmem:[#allocation2 + $0x50] sm:$0xf] %vm1745, %v1557
      %1767 = vst.msk [vmem:[#allocation2 + $0x54] sm:$0xf] %vm1745, %v1558
      %1768 = vst.msk [vmem:[#allocation2 + $0x58] sm:$0xf] %vm1745, %v1559
      %1769 = vst.msk [vmem:[#allocation2 + $0x5c] sm:$0xf] %vm1745, %v1560
      %1770 = vst.msk [vmem:[#allocation2 + $0x60] sm:$0xf] %vm1745, %v1561
      %1771 = vst.msk [vmem:[#allocation2 + $0x64] sm:$0xf] %vm1745, %v1562
      %1772 = vst.msk [vmem:[#allocation2 + $0x68] sm:$0xf] %vm1745, %v1563
      %1773 = vst.msk [vmem:[#allocation2 + $0x6c] sm:$0xf] %vm1745, %v1564
      %1774 = vst.msk [vmem:[#allocation2 + $0x70] sm:$0xf] %vm1745, %v1565
      %1775 = vst.msk [vmem:[#allocation2 + $0x74] sm:$0xf] %vm1745, %v1566
      %1776 = vst.msk [vmem:[#allocation2 + $0x78] sm:$0xf] %vm1745, %v1567
      %1777 = vst.msk [vmem:[#allocation2 + $0x7c] sm:$0xf] %vm1745, %v1568
      %1778 = vst.msk [vmem:[#allocation2 + $0x80] sm:$0xf] %vm1745, %v1569
      %1779 = vst.msk [vmem:[#allocation2 + $0x84] sm:$0xf] %vm1745, %v1570
      %1780 = vst.msk [vmem:[#allocation2 + $0x88] sm:$0xf] %vm1745, %v1571
      %1781 = vst.msk [vmem:[#allocation2 + $0x8c] sm:$0xf] %vm1745, %v1572
      %1782 = vst.msk [vmem:[#allocation2 + $0x90] sm:$0xf] %vm1745, %v1573
      %1783 = vst.msk [vmem:[#allocation2 + $0x94] sm:$0xf] %vm1745, %v1574
      %1784 = vst.msk [vmem:[#allocation2 + $0x98] sm:$0xf] %vm1745, %v1575
      %1785 = vst.msk [vmem:[#allocation2 + $0x9c] sm:$0xf] %vm1745, %v1576
      %1786 = vst.msk [vmem:[#allocation2 + $0xa0] sm:$0xf] %vm1745, %v1577
      %1787 = vst.msk [vmem:[#allocation2 + $0xa4] sm:$0xf] %vm1745, %v1578
      %1788 = vst.msk [vmem:[#allocation2 + $0xa8] sm:$0xf] %vm1745, %v1579
      %1789 = vst.msk [vmem:[#allocation2 + $0xac] sm:$0xf] %vm1745, %v1580
      %1790 = vst.msk [vmem:[#allocation2 + $0xb0] sm:$0xf] %vm1745, %v1581
      %1791 = vst.msk [vmem:[#allocation2 + $0xb4] sm:$0xf] %vm1745, %v1582
      %1792 = vst.msk [vmem:[#allocation2 + $0xb8] sm:$0xf] %vm1745, %v1583
      %1793 = vst.msk [vmem:[#allocation2 + $0xbc] sm:$0xf] %vm1745, %v1584
      %1794 = vst.msk [vmem:[#allocation2 + $0xc0] sm:$0xf] %vm1745, %v1585
      %1795 = vst.msk [vmem:[#allocation2 + $0xc4] sm:$0xf] %vm1745, %v1586
      %1796 = vst.msk [vmem:[#allocation2 + $0xc8] sm:$0xf] %vm1745, %v1587
      %1797 = vst.msk [vmem:[#allocation2 + $0xcc] sm:$0xf] %vm1745, %v1588
      %1798 = vst.msk [vmem:[#allocation2 + $0xd0] sm:$0xf] %vm1745, %v1589
      %1799 = vst.msk [vmem:[#allocation2 + $0xd4] sm:$0xf] %vm1745, %v1590
      %1800 = vst.msk [vmem:[#allocation2 + $0xd8] sm:$0xf] %vm1745, %v1591
      %1801 = vst.msk [vmem:[#allocation2 + $0xdc] sm:$0xf] %vm1745, %v1592
      %1802 = vst.msk [vmem:[#allocation2 + $0xe0] sm:$0xf] %vm1745, %v1593
      %1803 = vst.msk [vmem:[#allocation2 + $0xe4] sm:$0xf] %vm1745, %v1594
      %1804 = vst.msk [vmem:[#allocation2 + $0xe8] sm:$0xf] %vm1745, %v1595
      %1805 = vst.msk [vmem:[#allocation2 + $0xec] sm:$0xf] %vm1745, %v1596
      %1806 = vst.msk [vmem:[#allocation2 + $0xf0] sm:$0xf] %vm1745, %v1597
      %1807 = vst.msk [vmem:[#allocation2 + $0xf4] sm:$0xf] %vm1745, %v1598
      %1808 = vst.msk [vmem:[#allocation2 + $0xf8] sm:$0xf] %vm1745, %v1599
      %1809 = vst.msk [vmem:[#allocation2 + $0xfc] sm:$0xf] %vm1745, %v1600
      %1810 = vst.msk [vmem:[#allocation2 + $0x100] sm:$0xf] %vm1745, %v1601
      %1811 = vst.msk [vmem:[#allocation2 + $0x104] sm:$0xf] %vm1745, %v1602
      %1812 = vst.msk [vmem:[#allocation2 + $0x108] sm:$0xf] %vm1745, %v1603
      %1813 = vst.msk [vmem:[#allocation2 + $0x10c] sm:$0xf] %vm1745, %v1604
      %1814 = vst.msk [vmem:[#allocation2 + $0x110] sm:$0xf] %vm1745, %v1605
      %1815 = vst.msk [vmem:[#allocation2 + $0x114] sm:$0xf] %vm1745, %v1606
      %1816 = vst.msk [vmem:[#allocation2 + $0x118] sm:$0xf] %vm1745, %v1607
      %1817 = vst.msk [vmem:[#allocation2 + $0x11c] sm:$0xf] %vm1745, %v1608
      %1818 = vst.msk [vmem:[#allocation2 + $0x120] sm:$0xf] %vm1745, %v1609
      %1819 = vst.msk [vmem:[#allocation2 + $0x124] sm:$0xf] %vm1745, %v1610
      %1820 = vst.msk [vmem:[#allocation2 + $0x128] sm:$0xf] %vm1745, %v1611
      %1821 = vst.msk [vmem:[#allocation2 + $0x12c] sm:$0xf] %vm1745, %v1612
      %1822 = vst.msk [vmem:[#allocation2 + $0x130] sm:$0xf] %vm1745, %v1613
      %1823 = vst.msk [vmem:[#allocation2 + $0x134] sm:$0xf] %vm1745, %v1614
      %1824 = vst.msk [vmem:[#allocation2 + $0x138] sm:$0xf] %vm1745, %v1615
      %1825 = vst.msk [vmem:[#allocation2 + $0x13c] sm:$0xf] %vm1745, %v1616
      %1826 = vst.msk [vmem:[#allocation2 + $0x140] sm:$0xf] %vm1745, %v1617
      %1827 = vst.msk [vmem:[#allocation2 + $0x144] sm:$0xf] %vm1745, %v1618
      %1828 = vst.msk [vmem:[#allocation2 + $0x148] sm:$0xf] %vm1745, %v1619
      %1829 = vst.msk [vmem:[#allocation2 + $0x14c] sm:$0xf] %vm1745, %v1620
      %1830 = vst.msk [vmem:[#allocation2 + $0x150] sm:$0xf] %vm1745, %v1621
      %1831 = vst.msk [vmem:[#allocation2 + $0x154] sm:$0xf] %vm1745, %v1622
      %1832 = vst.msk [vmem:[#allocation2 + $0x158] sm:$0xf] %vm1745, %v1623
      %1833 = vst.msk [vmem:[#allocation2 + $0x15c] sm:$0xf] %vm1745, %v1624
      %1834 = vst.msk [vmem:[#allocation2 + $0x160] sm:$0xf] %vm1745, %v1625
      %1835 = vst.msk [vmem:[#allocation2 + $0x164] sm:$0xf] %vm1745, %v1626
      %1836 = vst.msk [vmem:[#allocation2 + $0x168] sm:$0xf] %vm1745, %v1627
      %1837 = vst.msk [vmem:[#allocation2 + $0x16c] sm:$0xf] %vm1745, %v1628
      %1838 = vst.msk [vmem:[#allocation2 + $0x170] sm:$0xf] %vm1745, %v1629
      %1839 = vst.msk [vmem:[#allocation2 + $0x174] sm:$0xf] %vm1745, %v1630
      %1840 = vst.msk [vmem:[#allocation2 + $0x178] sm:$0xf] %vm1745, %v1631
      %1841 = vst.msk [vmem:[#allocation2 + $0x17c] sm:$0xf] %vm1745, %v1632
      %1842 = vst.msk [vmem:[#allocation2 + $0x180] sm:$0xf] %vm1745, %v1633
      %1843 = vst.msk [vmem:[#allocation2 + $0x184] sm:$0xf] %vm1745, %v1634
      %1844 = vst.msk [vmem:[#allocation2 + $0x188] sm:$0xf] %vm1745, %v1635
      %1845 = vst.msk [vmem:[#allocation2 + $0x18c] sm:$0xf] %vm1745, %v1636
      %1846 = vst.msk [vmem:[#allocation2 + $0x190] sm:$0xf] %vm1745, %v1637
      %1847 = vst.msk [vmem:[#allocation2 + $0x194] sm:$0xf] %vm1745, %v1638
      %1848 = vst.msk [vmem:[#allocation2 + $0x198] sm:$0xf] %vm1745, %v1639
      %1849 = vst.msk [vmem:[#allocation2 + $0x19c] sm:$0xf] %vm1745, %v1640
      %v1850 = vld [vmem:[#allocation2] sm:$0xf]
      %v1851 = vld [vmem:[#allocation2 + $0x4] sm:$0xf]
      %v1852 = vld [vmem:[#allocation2 + $0x8] sm:$0xf]
      %v1853 = vld [vmem:[#allocation2 + $0xc] sm:$0xf]
      %v1854 = vld [vmem:[#allocation2 + $0x10] sm:$0xf]
      %v1855 = vld [vmem:[#allocation2 + $0x14] sm:$0xf]
      %v1856 = vld [vmem:[#allocation2 + $0x18] sm:$0xf]
      %v1857 = vld [vmem:[#allocation2 + $0x1c] sm:$0xf]
      %v1858 = vld [vmem:[#allocation2 + $0x20] sm:$0xf]
      %v1859 = vld [vmem:[#allocation2 + $0x24] sm:$0xf]
      %v1860 = vld [vmem:[#allocation2 + $0x28] sm:$0xf]
      %v1861 = vld [vmem:[#allocation2 + $0x2c] sm:$0xf]
      %v1862 = vld [vmem:[#allocation2 + $0x30] sm:$0xf]
      %v1863 = vld [vmem:[#allocation2 + $0x34] sm:$0xf]
      %v1864 = vld [vmem:[#allocation2 + $0x38] sm:$0xf]
      %v1865 = vld [vmem:[#allocation2 + $0x3c] sm:$0xf]
      %v1866 = vld [vmem:[#allocation2 + $0x40] sm:$0xf]
      %v1867 = vld [vmem:[#allocation2 + $0x44] sm:$0xf]
      %v1868 = vld [vmem:[#allocation2 + $0x48] sm:$0xf]
      %v1869 = vld [vmem:[#allocation2 + $0x4c] sm:$0xf]
      %v1870 = vld [vmem:[#allocation2 + $0x50] sm:$0xf]
      %v1871 = vld [vmem:[#allocation2 + $0x54] sm:$0xf]
      %v1872 = vld [vmem:[#allocation2 + $0x58] sm:$0xf]
      %v1873 = vld [vmem:[#allocation2 + $0x5c] sm:$0xf]
      %v1874 = vld [vmem:[#allocation2 + $0x60] sm:$0xf]
      %v1875 = vld [vmem:[#allocation2 + $0x64] sm:$0xf]
      %v1876 = vld [vmem:[#allocation2 + $0x68] sm:$0xf]
      %v1877 = vld [vmem:[#allocation2 + $0x6c] sm:$0xf]
      %v1878 = vld [vmem:[#allocation2 + $0x70] sm:$0xf]
      %v1879 = vld [vmem:[#allocation2 + $0x74] sm:$0xf]
      %v1880 = vld [vmem:[#allocation2 + $0x78] sm:$0xf]
      %v1881 = vld [vmem:[#allocation2 + $0x7c] sm:$0xf]
      %v1882 = vld [vmem:[#allocation2 + $0x80] sm:$0xf]
      %v1883 = vld [vmem:[#allocation2 + $0x84] sm:$0xf]
      %v1884 = vld [vmem:[#allocation2 + $0x88] sm:$0xf]
      %v1885 = vld [vmem:[#allocation2 + $0x8c] sm:$0xf]
      %v1886 = vld [vmem:[#allocation2 + $0x90] sm:$0xf]
      %v1887 = vld [vmem:[#allocation2 + $0x94] sm:$0xf]
      %v1888 = vld [vmem:[#allocation2 + $0x98] sm:$0xf]
      %v1889 = vld [vmem:[#allocation2 + $0x9c] sm:$0xf]
      %v1890 = vld [vmem:[#allocation2 + $0xa0] sm:$0xf]
      %v1891 = vld [vmem:[#allocation2 + $0xa4] sm:$0xf]
      %v1892 = vld [vmem:[#allocation2 + $0xa8] sm:$0xf]
      %v1893 = vld [vmem:[#allocation2 + $0xac] sm:$0xf]
      %v1894 = vld [vmem:[#allocation2 + $0xb0] sm:$0xf]
      %v1895 = vld [vmem:[#allocation2 + $0xb4] sm:$0xf]
      %v1896 = vld [vmem:[#allocation2 + $0xb8] sm:$0xf]
      %v1897 = vld [vmem:[#allocation2 + $0xbc] sm:$0xf]
      %v1898 = vld [vmem:[%s3] sm:$0xf]
      %v1899 = vld [vmem:[%s3 + $0x4] sm:$0xf]
      %v1900 = vld [vmem:[%s3 + $0x8] sm:$0xf]
      %v1901 = vld [vmem:[%s3 + $0xc] sm:$0xf]
      %v1902 = vld [vmem:[%s3 + $0x10] sm:$0xf]
      %v1903 = vld [vmem:[%s3 + $0x14] sm:$0xf]
      %v1904 = vld [vmem:[%s3 + $0x18] sm:$0xf]
      %v1905 = vld [vmem:[%s3 + $0x1c] sm:$0xf]
      %v1906 = vld [vmem:[%s3 + $0x20] sm:$0xf]
      %v1907 = vld [vmem:[%s3 + $0x24] sm:$0xf]
      %v1908 = vld [vmem:[%s3 + $0x28] sm:$0xf]
      %v1909 = vld [vmem:[%s3 + $0x2c] sm:$0xf]
      %v1958 = vunpack.c.l.b16 %v1850
      %v1959 = vunpack.c.l.b16 %v1851
      %v1960 = vunpack.c.l.b16 %v1852
      %v1961 = vunpack.c.l.b16 %v1853
      %v1962 = vunpack.c.l.b16 %v1854
      %v1963 = vunpack.c.l.b16 %v1855
      %v1964 = vunpack.c.l.b16 %v1856
      %v1965 = vunpack.c.l.b16 %v1857
      %v1966 = vunpack.c.l.b16 %v1858
      %v1967 = vunpack.c.l.b16 %v1859
      %v1968 = vunpack.c.l.b16 %v1860
      %v1969 = vunpack.c.l.b16 %v1861
      %v1970 = vunpack.c.l.b16 %v1862
      %v1971 = vunpack.c.l.b16 %v1863
      %v1972 = vunpack.c.l.b16 %v1864
      %v1973 = vunpack.c.l.b16 %v1865
      %v1974 = vunpack.c.l.b16 %v1866
      %v1975 = vunpack.c.l.b16 %v1867
      %v1976 = vunpack.c.l.b16 %v1868
      %v1977 = vunpack.c.l.b16 %v1869
      %v1978 = vunpack.c.l.b16 %v1870
      %v1979 = vunpack.c.l.b16 %v1871
      %v1980 = vunpack.c.l.b16 %v1872
      %v1981 = vunpack.c.l.b16 %v1873
      %v1982 = vunpack.c.l.b16 %v1874
      %v1983 = vunpack.c.l.b16 %v1875
      %v1984 = vunpack.c.l.b16 %v1876
      %v1985 = vunpack.c.l.b16 %v1877
      %v1986 = vunpack.c.l.b16 %v1878
      %v1987 = vunpack.c.l.b16 %v1879
      %v1988 = vunpack.c.l.b16 %v1880
      %v1989 = vunpack.c.l.b16 %v1881
      %v1990 = vunpack.c.l.b16 %v1882
      %v1991 = vunpack.c.l.b16 %v1883
      %v1992 = vunpack.c.l.b16 %v1884
      %v1993 = vunpack.c.l.b16 %v1885
      %v1994 = vunpack.c.l.b16 %v1886
      %v1995 = vunpack.c.l.b16 %v1887
      %v1996 = vunpack.c.l.b16 %v1888
      %v1997 = vunpack.c.l.b16 %v1889
      %v1998 = vunpack.c.l.b16 %v1890
      %v1999 = vunpack.c.l.b16 %v1891
      %v2000 = vunpack.c.l.b16 %v1892
      %v2001 = vunpack.c.l.b16 %v1893
      %v2002 = vunpack.c.l.b16 %v1894
      %v2003 = vunpack.c.l.b16 %v1895
      %v2004 = vunpack.c.l.b16 %v1896
      %v2005 = vunpack.c.l.b16 %v1897
      %v2006 = vpack.c.b16 %v1959, %v1958
      %v2007 = vpack.c.b16 %v1961, %v1960
      %v2008 = vpack.c.b16 %v1963, %v1962
      %v2009 = vpack.c.b16 %v1965, %v1964
      %v2010 = vpack.c.b16 %v1967, %v1966
      %v2011 = vpack.c.b16 %v1969, %v1968
      %v2012 = vpack.c.b16 %v1971, %v1970
      %v2013 = vpack.c.b16 %v1973, %v1972
      %v2014 = vpack.c.b16 %v1975, %v1974
      %v2015 = vpack.c.b16 %v1977, %v1976
      %v2016 = vpack.c.b16 %v1979, %v1978
      %v2017 = vpack.c.b16 %v1981, %v1980
      %v2018 = vpack.c.b16 %v1983, %v1982
      %v2019 = vpack.c.b16 %v1985, %v1984
      %v2020 = vpack.c.b16 %v1987, %v1986
      %v2021 = vpack.c.b16 %v1989, %v1988
      %v2022 = vpack.c.b16 %v1991, %v1990
      %v2023 = vpack.c.b16 %v1993, %v1992
      %v2024 = vpack.c.b16 %v1995, %v1994
      %v2025 = vpack.c.b16 %v1997, %v1996
      %v2026 = vpack.c.b16 %v1999, %v1998
      %v2027 = vpack.c.b16 %v2001, %v2000
      %v2028 = vpack.c.b16 %v2003, %v2002
      %v2029 = vpack.c.b16 %v2005, %v2004
      %v2042 = vunpack.c.l.b16 %v1898
      %v2043 = vunpack.c.l.b16 %v1899
      %v2044 = vunpack.c.l.b16 %v1900
      %v2045 = vunpack.c.l.b16 %v1901
      %v2046 = vunpack.c.l.b16 %v1902
      %v2047 = vunpack.c.l.b16 %v1903
      %v2048 = vunpack.c.l.b16 %v1904
      %v2049 = vunpack.c.l.b16 %v1905
      %v2050 = vunpack.c.l.b16 %v1906
      %v2051 = vunpack.c.l.b16 %v1907
      %v2052 = vunpack.c.l.b16 %v1908
      %v2053 = vunpack.c.l.b16 %v1909
      %v2054 = vpack.c.b16 %v2043, %v2042
      %v2055 = vpack.c.b16 %v2045, %v2044
      %v2056 = vpack.c.b16 %v2047, %v2046
      %v2057 = vpack.c.b16 %v2049, %v2048
      %v2058 = vpack.c.b16 %v2051, %v2050
      %v2059 = vpack.c.b16 %v2053, %v2052
      %vm2066 = vcmask 785408
      %v2068 = vsel %vm2066, %v2006, 0
      %v2071 = vsel %vm2066, %v2007, 0
      %v2074 = vsel %vm2066, %v2008, 0
      %v2077 = vsel %vm2066, %v2009, 0
      %v2080 = vsel %vm2066, %v2010, 0
      %v2083 = vsel %vm2066, %v2011, 0
      %v2086 = vsel %vm2066, %v2012, 0
      %v2089 = vsel %vm2066, %v2013, 0
      %v2092 = vsel %vm2066, %v2014, 0
      %v2095 = vsel %vm2066, %v2015, 0
      %v2098 = vsel %vm2066, %v2016, 0
      %v2101 = vsel %vm2066, %v2017, 0
      %v2104 = vsel %vm2066, %v2018, 0
      %v2107 = vsel %vm2066, %v2019, 0
      %v2110 = vsel %vm2066, %v2020, 0
      %v2113 = vsel %vm2066, %v2021, 0
      %v2116 = vsel %vm2066, %v2022, 0
      %v2119 = vsel %vm2066, %v2023, 0
      %v2122 = vsel %vm2066, %v2024, 0
      %v2125 = vsel %vm2066, %v2025, 0
      %v2128 = vsel %vm2066, %v2026, 0
      %v2131 = vsel %vm2066, %v2027, 0
      %v2134 = vsel %vm2066, %v2028, 0
      %v2137 = vsel %vm2066, %v2029, 0
      %2139 = vmatprep.subr.bf16.mxu0 0
      %2140 = vmatpush1.bf16.msra.mxu0 0
      %2141 = vmatprep.subr.bf16.mxu0 0
      %2142 = vmatpush1.bf16.msra.mxu0 0
      %2143 = vmatprep.subr.bf16.mxu0 0
      %2144 = vmatpush1.bf16.msra.mxu0 %v2059
      %2145 = vmatprep.subr.bf16.mxu0 0
      %2146 = vmatpush1.bf16.msra.mxu0 %v2058
      %2147 = vmatprep.subr.bf16.mxu0 0
      %2148 = vmatpush1.bf16.msra.mxu0 %v2057
      %2149 = vmatprep.subr.bf16.mxu0 0
      %2150 = vmatpush1.bf16.msra.mxu0 %v2056
      %2151 = vmatprep.subr.bf16.mxu0 0
      %2152 = vmatpush1.bf16.msra.mxu0 %v2055
      %2153 = vmatprep.subr.bf16.mxu0 0
      %2154 = vmatpush1.bf16.msra.mxu0 %v2054
      %2155 = vmatprep.subr.bf16.mxu0 0
      %2156 = vmatpush2.bf16.msra.mxu0 0
      %2157 = vmatprep.subr.bf16.mxu0 0
      %2158 = vmatpush2.bf16.msra.mxu0 0
      %2159 = vmatprep.subr.bf16.mxu0 0
      %2160 = vmatpush2.bf16.msra.mxu0 0
      %2161 = vmatprep.subr.bf16.mxu0 0
      %2162 = vmatpush2.bf16.msra.mxu0 0
      %2163 = vmatprep.subr.bf16.mxu0 0
      %2164 = vmatpush2.bf16.msra.mxu0 0
      %2165 = vmatprep.subr.bf16.mxu0 0
      %2166 = vmatpush2.bf16.msra.mxu0 0
      %2167 = vmatprep.subr.bf16.mxu0 0
      %2168 = vmatpush2.bf16.msra.mxu0 0
      %2169 = vmatprep.subr.bf16.mxu0 0
      %2170 = vmatpush2.bf16.msra.mxu0 0
      %2171 = vmatprep.mubr.bf16.mxu0 0
      %2172 = vmatmul.mubr.bf16.gmra.mxu0 %v2068
      %v2173 = vpop.f32.mrf.mxu0
      %v2174 = vadd.f32 0.0, %v2173
      %v2175 = vpop.f32.mrf.mxu0
      %v2176 = vpop.f32.mrf.mxu0
      %v2177 = vadd.f32 0.0, %v2176
      %v2178 = vpop.f32.mrf.mxu0
      %2179 = vmatprep.mubr.bf16.mxu0 0
      %2180 = vmatmul.mubr.bf16.gmra.mxu0 %v2071
      %v2181 = vpop.f32.mrf.mxu0
      %v2182 = vadd.f32 0.0, %v2181
      %v2183 = vpop.f32.mrf.mxu0
      %v2184 = vpop.f32.mrf.mxu0
      %v2185 = vadd.f32 0.0, %v2184
      %v2186 = vpop.f32.mrf.mxu0
      %2187 = vmatprep.mubr.bf16.mxu0 0
      %2188 = vmatmul.mubr.bf16.gmra.mxu0 %v2074
      %v2189 = vpop.f32.mrf.mxu0
      %v2190 = vadd.f32 0.0, %v2189
      %v2191 = vpop.f32.mrf.mxu0
      %v2192 = vpop.f32.mrf.mxu0
      %v2193 = vadd.f32 0.0, %v2192
      %v2194 = vpop.f32.mrf.mxu0
      %2195 = vmatprep.mubr.bf16.mxu0 0
      %2196 = vmatmul.mubr.bf16.gmra.mxu0 %v2077
      %v2197 = vpop.f32.mrf.mxu0
      %v2198 = vadd.f32 0.0, %v2197
      %v2199 = vpop.f32.mrf.mxu0
      %v2200 = vpop.f32.mrf.mxu0
      %v2201 = vadd.f32 0.0, %v2200
      %v2202 = vpop.f32.mrf.mxu0
      %2203 = vmatprep.mubr.bf16.mxu0 0
      %2204 = vmatmul.mubr.bf16.gmra.mxu0 %v2080
      %v2205 = vpop.f32.mrf.mxu0
      %v2206 = vadd.f32 0.0, %v2205
      %v2207 = vpop.f32.mrf.mxu0
      %v2208 = vpop.f32.mrf.mxu0
      %v2209 = vadd.f32 0.0, %v2208
      %v2210 = vpop.f32.mrf.mxu0
      %2211 = vmatprep.mubr.bf16.mxu0 0
      %2212 = vmatmul.mubr.bf16.gmra.mxu0 %v2083
      %v2213 = vpop.f32.mrf.mxu0
      %v2214 = vadd.f32 0.0, %v2213
      %v2215 = vpop.f32.mrf.mxu0
      %v2216 = vpop.f32.mrf.mxu0
      %v2217 = vadd.f32 0.0, %v2216
      %v2218 = vpop.f32.mrf.mxu0
      %2219 = vmatprep.mubr.bf16.mxu0 0
      %2220 = vmatmul.mubr.bf16.gmra.mxu0 %v2086
      %v2221 = vpop.f32.mrf.mxu0
      %v2222 = vadd.f32 0.0, %v2221
      %v2223 = vpop.f32.mrf.mxu0
      %v2224 = vpop.f32.mrf.mxu0
      %v2225 = vadd.f32 0.0, %v2224
      %v2226 = vpop.f32.mrf.mxu0
      %2227 = vmatprep.mubr.bf16.mxu0 0
      %2228 = vmatmul.mubr.bf16.gmra.mxu0 %v2089
      %v2229 = vpop.f32.mrf.mxu0
      %v2230 = vadd.f32 0.0, %v2229
      %v2231 = vpop.f32.mrf.mxu0
      %v2232 = vpop.f32.mrf.mxu0
      %v2233 = vadd.f32 0.0, %v2232
      %v2234 = vpop.f32.mrf.mxu0
      %2235 = vmatprep.mubr.bf16.mxu0 0
      %2236 = vmatmul.mubr.bf16.gmra.mxu0 %v2092
      %v2237 = vpop.f32.mrf.mxu0
      %v2238 = vadd.f32 0.0, %v2237
      %v2239 = vpop.f32.mrf.mxu0
      %v2240 = vpop.f32.mrf.mxu0
      %v2241 = vadd.f32 0.0, %v2240
      %v2242 = vpop.f32.mrf.mxu0
      %2243 = vmatprep.mubr.bf16.mxu0 0
      %2244 = vmatmul.mubr.bf16.gmra.mxu0 %v2095
      %v2245 = vpop.f32.mrf.mxu0
      %v2246 = vadd.f32 0.0, %v2245
      %v2247 = vpop.f32.mrf.mxu0
      %v2248 = vpop.f32.mrf.mxu0
      %v2249 = vadd.f32 0.0, %v2248
      %v2250 = vpop.f32.mrf.mxu0
      %2251 = vmatprep.mubr.bf16.mxu0 0
      %2252 = vmatmul.mubr.bf16.gmra.mxu0 %v2098
      %v2253 = vpop.f32.mrf.mxu0
      %v2254 = vadd.f32 0.0, %v2253
      %v2255 = vpop.f32.mrf.mxu0
      %v2256 = vpop.f32.mrf.mxu0
      %v2257 = vadd.f32 0.0, %v2256
      %v2258 = vpop.f32.mrf.mxu0
      %2259 = vmatprep.mubr.bf16.mxu0 0
      %2260 = vmatmul.mubr.bf16.gmra.mxu0 %v2101
      %v2261 = vpop.f32.mrf.mxu0
      %v2262 = vadd.f32 0.0, %v2261
      %v2263 = vpop.f32.mrf.mxu0
      %v2264 = vpop.f32.mrf.mxu0
      %v2265 = vadd.f32 0.0, %v2264
      %v2266 = vpop.f32.mrf.mxu0
      %2267 = vmatprep.mubr.bf16.mxu0 0
      %2268 = vmatmul.mubr.bf16.gmra.mxu0 %v2104
      %v2269 = vpop.f32.mrf.mxu0
      %v2270 = vadd.f32 0.0, %v2269
      %v2271 = vpop.f32.mrf.mxu0
      %v2272 = vpop.f32.mrf.mxu0
      %v2273 = vadd.f32 0.0, %v2272
      %v2274 = vpop.f32.mrf.mxu0
      %2275 = vmatprep.mubr.bf16.mxu0 0
      %2276 = vmatmul.mubr.bf16.gmra.mxu0 %v2107
      %v2277 = vpop.f32.mrf.mxu0
      %v2278 = vadd.f32 0.0, %v2277
      %v2279 = vpop.f32.mrf.mxu0
      %v2280 = vpop.f32.mrf.mxu0
      %v2281 = vadd.f32 0.0, %v2280
      %v2282 = vpop.f32.mrf.mxu0
      %2283 = vmatprep.mubr.bf16.mxu0 0
      %2284 = vmatmul.mubr.bf16.gmra.mxu0 %v2110
      %v2285 = vpop.f32.mrf.mxu0
      %v2286 = vadd.f32 0.0, %v2285
      %v2287 = vpop.f32.mrf.mxu0
      %v2288 = vpop.f32.mrf.mxu0
      %v2289 = vadd.f32 0.0, %v2288
      %v2290 = vpop.f32.mrf.mxu0
      %2291 = vmatprep.mubr.bf16.mxu0 0
      %2292 = vmatmul.mubr.bf16.gmra.mxu0 %v2113
      %v2293 = vpop.f32.mrf.mxu0
      %v2294 = vadd.f32 0.0, %v2293
      %v2295 = vpop.f32.mrf.mxu0
      %v2296 = vpop.f32.mrf.mxu0
      %v2297 = vadd.f32 0.0, %v2296
      %v2298 = vpop.f32.mrf.mxu0
      %2299 = vmatprep.mubr.bf16.mxu0 0
      %2300 = vmatmul.mubr.bf16.gmra.mxu0 %v2116
      %v2301 = vpop.f32.mrf.mxu0
      %v2302 = vadd.f32 0.0, %v2301
      %v2303 = vpop.f32.mrf.mxu0
      %v2304 = vpop.f32.mrf.mxu0
      %v2305 = vadd.f32 0.0, %v2304
      %v2306 = vpop.f32.mrf.mxu0
      %2307 = vmatprep.mubr.bf16.mxu0 0
      %2308 = vmatmul.mubr.bf16.gmra.mxu0 %v2119
      %v2309 = vpop.f32.mrf.mxu0
      %v2310 = vadd.f32 0.0, %v2309
      %v2311 = vpop.f32.mrf.mxu0
      %v2312 = vpop.f32.mrf.mxu0
      %v2313 = vadd.f32 0.0, %v2312
      %v2314 = vpop.f32.mrf.mxu0
      %2315 = vmatprep.mubr.bf16.mxu0 0
      %2316 = vmatmul.mubr.bf16.gmra.mxu0 %v2122
      %v2317 = vpop.f32.mrf.mxu0
      %v2318 = vadd.f32 0.0, %v2317
      %v2319 = vpop.f32.mrf.mxu0
      %v2320 = vpop.f32.mrf.mxu0
      %v2321 = vadd.f32 0.0, %v2320
      %v2322 = vpop.f32.mrf.mxu0
      %2323 = vmatprep.mubr.bf16.mxu0 0
      %2324 = vmatmul.mubr.bf16.gmra.mxu0 %v2125
      %v2325 = vpop.f32.mrf.mxu0
      %v2326 = vadd.f32 0.0, %v2325
      %v2327 = vpop.f32.mrf.mxu0
      %v2328 = vpop.f32.mrf.mxu0
      %v2329 = vadd.f32 0.0, %v2328
      %v2330 = vpop.f32.mrf.mxu0
      %2331 = vmatprep.mubr.bf16.mxu0 0
      %2332 = vmatmul.mubr.bf16.gmra.mxu0 %v2128
      %v2333 = vpop.f32.mrf.mxu0
      %v2334 = vadd.f32 0.0, %v2333
      %v2335 = vpop.f32.mrf.mxu0
      %v2336 = vpop.f32.mrf.mxu0
      %v2337 = vadd.f32 0.0, %v2336
      %v2338 = vpop.f32.mrf.mxu0
      %2339 = vmatprep.mubr.bf16.mxu0 0
      %2340 = vmatmul.mubr.bf16.gmra.mxu0 %v2131
      %v2341 = vpop.f32.mrf.mxu0
      %v2342 = vadd.f32 0.0, %v2341
      %v2343 = vpop.f32.mrf.mxu0
      %v2344 = vpop.f32.mrf.mxu0
      %v2345 = vadd.f32 0.0, %v2344
      %v2346 = vpop.f32.mrf.mxu0
      %2347 = vmatprep.mubr.bf16.mxu0 0
      %2348 = vmatmul.mubr.bf16.gmra.mxu0 %v2134
      %v2349 = vpop.f32.mrf.mxu0
      %v2350 = vadd.f32 0.0, %v2349
      %v2351 = vpop.f32.mrf.mxu0
      %v2352 = vpop.f32.mrf.mxu0
      %v2353 = vadd.f32 0.0, %v2352
      %v2354 = vpop.f32.mrf.mxu0
      %2355 = vmatprep.mubr.bf16.mxu0 0
      %2356 = vmatmul.mubr.bf16.gmra.mxu0 %v2137
      %v2357 = vpop.f32.mrf.mxu0
      %v2358 = vadd.f32 0.0, %v2357
      %v2359 = vpop.f32.mrf.mxu0
      %v2360 = vpop.f32.mrf.mxu0
      %v2361 = vadd.f32 0.0, %v2360
      %v2362 = vpop.f32.mrf.mxu0
      %2363 = vdwg.mxu0
      %vm2364 = vcmask 523264
      %2365 = vst.msk [vmem:[#allocation3] sm:$0xff] %vm2364, %v2174
      %2366 = vst.msk [vmem:[#allocation3 + $0x8] sm:$0xff] %vm2364, %v2177
      %2367 = vst.msk [vmem:[#allocation3 + $0x10] sm:$0xff] %vm2364, %v2182
      %2368 = vst.msk [vmem:[#allocation3 + $0x18] sm:$0xff] %vm2364, %v2185
      %2369 = vst.msk [vmem:[#allocation3 + $0x20] sm:$0xff] %vm2364, %v2190
      %2370 = vst.msk [vmem:[#allocation3 + $0x28] sm:$0xff] %vm2364, %v2193
      %2371 = vst.msk [vmem:[#allocation3 + $0x30] sm:$0xff] %vm2364, %v2198
      %2372 = vst.msk [vmem:[#allocation3 + $0x38] sm:$0xff] %vm2364, %v2201
      %2373 = vst.msk [vmem:[#allocation3 + $0x40] sm:$0xff] %vm2364, %v2206
      %2374 = vst.msk [vmem:[#allocation3 + $0x48] sm:$0xff] %vm2364, %v2209
      %2375 = vst.msk [vmem:[#allocation3 + $0x50] sm:$0xff] %vm2364, %v2214
      %2376 = vst.msk [vmem:[#allocation3 + $0x58] sm:$0xff] %vm2364, %v2217
      %2377 = vst.msk [vmem:[#allocation3 + $0x60] sm:$0xff] %vm2364, %v2222
      %2378 = vst.msk [vmem:[#allocation3 + $0x68] sm:$0xff] %vm2364, %v2225
      %2379 = vst.msk [vmem:[#allocation3 + $0x70] sm:$0xff] %vm2364, %v2230
      %2380 = vst.msk [vmem:[#allocation3 + $0x78] sm:$0xff] %vm2364, %v2233
      %2381 = vst.msk [vmem:[#allocation3 + $0x80] sm:$0xff] %vm2364, %v2238
      %2382 = vst.msk [vmem:[#allocation3 + $0x88] sm:$0xff] %vm2364, %v2241
      %2383 = vst.msk [vmem:[#allocation3 + $0x90] sm:$0xff] %vm2364, %v2246
      %2384 = vst.msk [vmem:[#allocation3 + $0x98] sm:$0xff] %vm2364, %v2249
      %2385 = vst.msk [vmem:[#allocation3 + $0xa0] sm:$0xff] %vm2364, %v2254
      %2386 = vst.msk [vmem:[#allocation3 + $0xa8] sm:$0xff] %vm2364, %v2257
      %2387 = vst.msk [vmem:[#allocation3 + $0xb0] sm:$0xff] %vm2364, %v2262
      %2388 = vst.msk [vmem:[#allocation3 + $0xb8] sm:$0xff] %vm2364, %v2265
      %2389 = vst.msk [vmem:[#allocation3 + $0xc0] sm:$0xff] %vm2364, %v2270
      %2390 = vst.msk [vmem:[#allocation3 + $0xc8] sm:$0xff] %vm2364, %v2273
      %2391 = vst.msk [vmem:[#allocation3 + $0xd0] sm:$0xff] %vm2364, %v2278
      %2392 = vst.msk [vmem:[#allocation3 + $0xd8] sm:$0xff] %vm2364, %v2281
      %2393 = vst.msk [vmem:[#allocation3 + $0xe0] sm:$0xff] %vm2364, %v2286
      %2394 = vst.msk [vmem:[#allocation3 + $0xe8] sm:$0xff] %vm2364, %v2289
      %2395 = vst.msk [vmem:[#allocation3 + $0xf0] sm:$0xff] %vm2364, %v2294
      %2396 = vst.msk [vmem:[#allocation3 + $0xf8] sm:$0xff] %vm2364, %v2297
      %2397 = vst.msk [vmem:[#allocation3 + $0x100] sm:$0xff] %vm2364, %v2302
      %2398 = vst.msk [vmem:[#allocation3 + $0x108] sm:$0xff] %vm2364, %v2305
      %2399 = vst.msk [vmem:[#allocation3 + $0x110] sm:$0xff] %vm2364, %v2310
      %2400 = vst.msk [vmem:[#allocation3 + $0x118] sm:$0xff] %vm2364, %v2313
      %2401 = vst.msk [vmem:[#allocation3 + $0x120] sm:$0xff] %vm2364, %v2318
      %2402 = vst.msk [vmem:[#allocation3 + $0x128] sm:$0xff] %vm2364, %v2321
      %2403 = vst.msk [vmem:[#allocation3 + $0x130] sm:$0xff] %vm2364, %v2326
      %2404 = vst.msk [vmem:[#allocation3 + $0x138] sm:$0xff] %vm2364, %v2329
      %2405 = vst.msk [vmem:[#allocation3 + $0x140] sm:$0xff] %vm2364, %v2334
      %2406 = vst.msk [vmem:[#allocation3 + $0x148] sm:$0xff] %vm2364, %v2337
      %2407 = vst.msk [vmem:[#allocation3 + $0x150] sm:$0xff] %vm2364, %v2342
      %2408 = vst.msk [vmem:[#allocation3 + $0x158] sm:$0xff] %vm2364, %v2345
      %2409 = vst.msk [vmem:[#allocation3 + $0x160] sm:$0xff] %vm2364, %v2350
      %2410 = vst.msk [vmem:[#allocation3 + $0x168] sm:$0xff] %vm2364, %v2353
      %2411 = vst.msk [vmem:[#allocation3 + $0x170] sm:$0xff] %vm2364, %v2358
      %2412 = vst.msk [vmem:[#allocation3 + $0x178] sm:$0xff] %vm2364, %v2361
      %v2413 = vld [vmem:[#allocation2 + $0x8] sm:$0xf]
      %v2414 = vld [vmem:[#allocation2 + $0xc] sm:$0xf]
      %v2415 = vld [vmem:[#allocation2 + $0x10] sm:$0xf]
      %v2416 = vld [vmem:[#allocation2 + $0x14] sm:$0xf]
      %v2417 = vld [vmem:[#allocation2 + $0x18] sm:$0xf]
      %v2418 = vld [vmem:[#allocation2 + $0x1c] sm:$0xf]
      %v2419 = vld [vmem:[#allocation2 + $0x20] sm:$0xf]
      %v2420 = vld [vmem:[#allocation2 + $0x24] sm:$0xf]
      %v2421 = vld [vmem:[#allocation2 + $0x28] sm:$0xf]
      %v2422 = vld [vmem:[#allocation2 + $0x2c] sm:$0xf]
      %v2423 = vld [vmem:[#allocation2 + $0x30] sm:$0xf]
      %v2424 = vld [vmem:[#allocation2 + $0x34] sm:$0xf]
      %v2425 = vld [vmem:[#allocation2 + $0x38] sm:$0xf]
      %v2426 = vld [vmem:[#allocation2 + $0x3c] sm:$0xf]
      %v2427 = vld [vmem:[#allocation2 + $0x40] sm:$0xf]
      %v2428 = vld [vmem:[#allocation2 + $0x44] sm:$0xf]
      %v2429 = vld [vmem:[#allocation2 + $0x48] sm:$0xf]
      %v2430 = vld [vmem:[#allocation2 + $0x4c] sm:$0xf]
      %v2431 = vld [vmem:[#allocation2 + $0x50] sm:$0xf]
      %v2432 = vld [vmem:[#allocation2 + $0x54] sm:$0xf]
      %v2433 = vld [vmem:[#allocation2 + $0x58] sm:$0xf]
      %v2434 = vld [vmem:[#allocation2 + $0x5c] sm:$0xf]
      %v2435 = vld [vmem:[#allocation2 + $0x60] sm:$0xf]
      %v2436 = vld [vmem:[#allocation2 + $0x64] sm:$0xf]
      %v2437 = vld [vmem:[#allocation2 + $0x68] sm:$0xf]
      %v2438 = vld [vmem:[#allocation2 + $0x6c] sm:$0xf]
      %v2439 = vld [vmem:[#allocation2 + $0x70] sm:$0xf]
      %v2440 = vld [vmem:[#allocation2 + $0x74] sm:$0xf]
      %v2441 = vld [vmem:[#allocation2 + $0x78] sm:$0xf]
      %v2442 = vld [vmem:[#allocation2 + $0x7c] sm:$0xf]
      %v2443 = vld [vmem:[#allocation2 + $0x80] sm:$0xf]
      %v2444 = vld [vmem:[#allocation2 + $0x84] sm:$0xf]
      %v2445 = vld [vmem:[#allocation2 + $0x88] sm:$0xf]
      %v2446 = vld [vmem:[#allocation2 + $0x8c] sm:$0xf]
      %v2447 = vld [vmem:[#allocation2 + $0x90] sm:$0xf]
      %v2448 = vld [vmem:[#allocation2 + $0x94] sm:$0xf]
      %v2449 = vld [vmem:[#allocation2 + $0x98] sm:$0xf]
      %v2450 = vld [vmem:[#allocation2 + $0x9c] sm:$0xf]
      %v2451 = vld [vmem:[#allocation2 + $0xa0] sm:$0xf]
      %v2452 = vld [vmem:[#allocation2 + $0xa4] sm:$0xf]
      %v2453 = vld [vmem:[#allocation2 + $0xa8] sm:$0xf]
      %v2454 = vld [vmem:[#allocation2 + $0xac] sm:$0xf]
      %v2455 = vld [vmem:[#allocation2 + $0xb0] sm:$0xf]
      %v2456 = vld [vmem:[#allocation2 + $0xb4] sm:$0xf]
      %v2457 = vld [vmem:[#allocation2 + $0xb8] sm:$0xf]
      %v2458 = vld [vmem:[#allocation2 + $0xbc] sm:$0xf]
      %v2459 = vld [vmem:[#allocation2 + $0xc0] sm:$0xf]
      %v2460 = vld [vmem:[#allocation2 + $0xc4] sm:$0xf]
      %s2461 = scalar_lea.vmem %s3, 48
      %v2462 = vld [vmem:[%s2461] sm:$0xf]
      %v2463 = vld [vmem:[%s2461 + $0x4] sm:$0xf]
      %v2464 = vld [vmem:[%s2461 + $0x8] sm:$0xf]
      %v2465 = vld [vmem:[%s2461 + $0xc] sm:$0xf]
      %v2466 = vld [vmem:[%s2461 + $0x10] sm:$0xf]
      %v2467 = vld [vmem:[%s2461 + $0x14] sm:$0xf]
      %v2468 = vld [vmem:[%s2461 + $0x18] sm:$0xf]
      %v2469 = vld [vmem:[%s2461 + $0x1c] sm:$0xf]
      %v2470 = vld [vmem:[%s2461 + $0x20] sm:$0xf]
      %v2471 = vld [vmem:[%s2461 + $0x24] sm:$0xf]
      %v2472 = vld [vmem:[%s2461 + $0x28] sm:$0xf]
      %v2473 = vld [vmem:[%s2461 + $0x2c] sm:$0xf]
      %v2522 = vunpack.c.l.b16 %v2413
      %v2523 = vunpack.c.l.b16 %v2414
      %v2524 = vunpack.c.l.b16 %v2415
      %v2525 = vunpack.c.l.b16 %v2416
      %v2526 = vunpack.c.l.b16 %v2417
      %v2527 = vunpack.c.l.b16 %v2418
      %v2528 = vunpack.c.l.b16 %v2419
      %v2529 = vunpack.c.l.b16 %v2420
      %v2530 = vunpack.c.l.b16 %v2421
      %v2531 = vunpack.c.l.b16 %v2422
      %v2532 = vunpack.c.l.b16 %v2423
      %v2533 = vunpack.c.l.b16 %v2424
      %v2534 = vunpack.c.l.b16 %v2425
      %v2535 = vunpack.c.l.b16 %v2426
      %v2536 = vunpack.c.l.b16 %v2427
      %v2537 = vunpack.c.l.b16 %v2428
      %v2538 = vunpack.c.l.b16 %v2429
      %v2539 = vunpack.c.l.b16 %v2430
      %v2540 = vunpack.c.l.b16 %v2431
      %v2541 = vunpack.c.l.b16 %v2432
      %v2542 = vunpack.c.l.b16 %v2433
      %v2543 = vunpack.c.l.b16 %v2434
      %v2544 = vunpack.c.l.b16 %v2435
      %v2545 = vunpack.c.l.b16 %v2436
      %v2546 = vunpack.c.l.b16 %v2437
      %v2547 = vunpack.c.l.b16 %v2438
      %v2548 = vunpack.c.l.b16 %v2439
      %v2549 = vunpack.c.l.b16 %v2440
      %v2550 = vunpack.c.l.b16 %v2441
      %v2551 = vunpack.c.l.b16 %v2442
      %v2552 = vunpack.c.l.b16 %v2443
      %v2553 = vunpack.c.l.b16 %v2444
      %v2554 = vunpack.c.l.b16 %v2445
      %v2555 = vunpack.c.l.b16 %v2446
      %v2556 = vunpack.c.l.b16 %v2447
      %v2557 = vunpack.c.l.b16 %v2448
      %v2558 = vunpack.c.l.b16 %v2449
      %v2559 = vunpack.c.l.b16 %v2450
      %v2560 = vunpack.c.l.b16 %v2451
      %v2561 = vunpack.c.l.b16 %v2452
      %v2562 = vunpack.c.l.b16 %v2453
      %v2563 = vunpack.c.l.b16 %v2454
      %v2564 = vunpack.c.l.b16 %v2455
      %v2565 = vunpack.c.l.b16 %v2456
      %v2566 = vunpack.c.l.b16 %v2457
      %v2567 = vunpack.c.l.b16 %v2458
      %v2568 = vunpack.c.l.b16 %v2459
      %v2569 = vunpack.c.l.b16 %v2460
      %v2570 = vpack.c.b16 %v2523, %v2522
      %v2571 = vpack.c.b16 %v2525, %v2524
      %v2572 = vpack.c.b16 %v2527, %v2526
      %v2573 = vpack.c.b16 %v2529, %v2528
      %v2574 = vpack.c.b16 %v2531, %v2530
      %v2575 = vpack.c.b16 %v2533, %v2532
      %v2576 = vpack.c.b16 %v2535, %v2534
      %v2577 = vpack.c.b16 %v2537, %v2536
      %v2578 = vpack.c.b16 %v2539, %v2538
      %v2579 = vpack.c.b16 %v2541, %v2540
      %v2580 = vpack.c.b16 %v2543, %v2542
      %v2581 = vpack.c.b16 %v2545, %v2544
      %v2582 = vpack.c.b16 %v2547, %v2546
      %v2583 = vpack.c.b16 %v2549, %v2548
      %v2584 = vpack.c.b16 %v2551, %v2550
      %v2585 = vpack.c.b16 %v2553, %v2552
      %v2586 = vpack.c.b16 %v2555, %v2554
      %v2587 = vpack.c.b16 %v2557, %v2556
      %v2588 = vpack.c.b16 %v2559, %v2558
      %v2589 = vpack.c.b16 %v2561, %v2560
      %v2590 = vpack.c.b16 %v2563, %v2562
      %v2591 = vpack.c.b16 %v2565, %v2564
      %v2592 = vpack.c.b16 %v2567, %v2566
      %v2593 = vpack.c.b16 %v2569, %v2568
      %v2606 = vunpack.c.l.b16 %v2462
      %v2607 = vunpack.c.l.b16 %v2463
      %v2608 = vunpack.c.l.b16 %v2464
      %v2609 = vunpack.c.l.b16 %v2465
      %v2610 = vunpack.c.l.b16 %v2466
      %v2611 = vunpack.c.l.b16 %v2467
      %v2612 = vunpack.c.l.b16 %v2468
      %v2613 = vunpack.c.l.b16 %v2469
      %v2614 = vunpack.c.l.b16 %v2470
      %v2615 = vunpack.c.l.b16 %v2471
      %v2616 = vunpack.c.l.b16 %v2472
      %v2617 = vunpack.c.l.b16 %v2473
      %v2618 = vpack.c.b16 %v2607, %v2606
      %v2619 = vpack.c.b16 %v2609, %v2608
      %v2620 = vpack.c.b16 %v2611, %v2610
      %v2621 = vpack.c.b16 %v2613, %v2612
      %v2622 = vpack.c.b16 %v2615, %v2614
      %v2623 = vpack.c.b16 %v2617, %v2616
      %v2631 = vsel %vm2066, %v2570, 0
      %v2634 = vsel %vm2066, %v2571, 0
      %v2637 = vsel %vm2066, %v2572, 0
      %v2640 = vsel %vm2066, %v2573, 0
      %v2643 = vsel %vm2066, %v2574, 0
      %v2646 = vsel %vm2066, %v2575, 0
      %v2649 = vsel %vm2066, %v2576, 0
      %v2652 = vsel %vm2066, %v2577, 0
      %v2655 = vsel %vm2066, %v2578, 0
      %v2658 = vsel %vm2066, %v2579, 0
      %v2661 = vsel %vm2066, %v2580, 0
      %v2664 = vsel %vm2066, %v2581, 0
      %v2667 = vsel %vm2066, %v2582, 0
      %v2670 = vsel %vm2066, %v2583, 0
      %v2673 = vsel %vm2066, %v2584, 0
      %v2676 = vsel %vm2066, %v2585, 0
      %v2679 = vsel %vm2066, %v2586, 0
      %v2682 = vsel %vm2066, %v2587, 0
      %v2685 = vsel %vm2066, %v2588, 0
      %v2688 = vsel %vm2066, %v2589, 0
      %v2691 = vsel %vm2066, %v2590, 0
      %v2694 = vsel %vm2066, %v2591, 0
      %v2697 = vsel %vm2066, %v2592, 0
      %v2700 = vsel %vm2066, %v2593, 0
      %2702 = vmatprep.subr.bf16.mxu0 0
      %2703 = vmatpush1.bf16.msra.mxu0 0
      %2704 = vmatprep.subr.bf16.mxu0 0
      %2705 = vmatpush1.bf16.msra.mxu0 0
      %2706 = vmatprep.subr.bf16.mxu0 0
      %2707 = vmatpush1.bf16.msra.mxu0 %v2623
      %2708 = vmatprep.subr.bf16.mxu0 0
      %2709 = vmatpush1.bf16.msra.mxu0 %v2622
      %2710 = vmatprep.subr.bf16.mxu0 0
      %2711 = vmatpush1.bf16.msra.mxu0 %v2621
      %2712 = vmatprep.subr.bf16.mxu0 0
      %2713 = vmatpush1.bf16.msra.mxu0 %v2620
      %2714 = vmatprep.subr.bf16.mxu0 0
      %2715 = vmatpush1.bf16.msra.mxu0 %v2619
      %2716 = vmatprep.subr.bf16.mxu0 0
      %2717 = vmatpush1.bf16.msra.mxu0 %v2618
      %2718 = vmatprep.subr.bf16.mxu0 0
      %2719 = vmatpush2.bf16.msra.mxu0 0
      %2720 = vmatprep.subr.bf16.mxu0 0
      %2721 = vmatpush2.bf16.msra.mxu0 0
      %2722 = vmatprep.subr.bf16.mxu0 0
      %2723 = vmatpush2.bf16.msra.mxu0 0
      %2724 = vmatprep.subr.bf16.mxu0 0
      %2725 = vmatpush2.bf16.msra.mxu0 0
      %2726 = vmatprep.subr.bf16.mxu0 0
      %2727 = vmatpush2.bf16.msra.mxu0 0
      %2728 = vmatprep.subr.bf16.mxu0 0
      %2729 = vmatpush2.bf16.msra.mxu0 0
      %2730 = vmatprep.subr.bf16.mxu0 0
      %2731 = vmatpush2.bf16.msra.mxu0 0
      %2732 = vmatprep.subr.bf16.mxu0 0
      %2733 = vmatpush2.bf16.msra.mxu0 0
      %2734 = vmatprep.mubr.bf16.mxu0 0
      %2735 = vmatmul.mubr.bf16.gmra.mxu0 %v2631
      %v2736 = vpop.f32.mrf.mxu0
      %v2737 = vadd.f32 0.0, %v2736
      %v2738 = vpop.f32.mrf.mxu0
      %v2739 = vpop.f32.mrf.mxu0
      %v2740 = vadd.f32 0.0, %v2739
      %v2741 = vpop.f32.mrf.mxu0
      %2742 = vmatprep.mubr.bf16.mxu0 0
      %2743 = vmatmul.mubr.bf16.gmra.mxu0 %v2634
      %v2744 = vpop.f32.mrf.mxu0
      %v2745 = vadd.f32 0.0, %v2744
      %v2746 = vpop.f32.mrf.mxu0
      %v2747 = vpop.f32.mrf.mxu0
      %v2748 = vadd.f32 0.0, %v2747
      %v2749 = vpop.f32.mrf.mxu0
      %2750 = vmatprep.mubr.bf16.mxu0 0
      %2751 = vmatmul.mubr.bf16.gmra.mxu0 %v2637
      %v2752 = vpop.f32.mrf.mxu0
      %v2753 = vadd.f32 0.0, %v2752
      %v2754 = vpop.f32.mrf.mxu0
      %v2755 = vpop.f32.mrf.mxu0
      %v2756 = vadd.f32 0.0, %v2755
      %v2757 = vpop.f32.mrf.mxu0
      %2758 = vmatprep.mubr.bf16.mxu0 0
      %2759 = vmatmul.mubr.bf16.gmra.mxu0 %v2640
      %v2760 = vpop.f32.mrf.mxu0
      %v2761 = vadd.f32 0.0, %v2760
      %v2762 = vpop.f32.mrf.mxu0
      %v2763 = vpop.f32.mrf.mxu0
      %v2764 = vadd.f32 0.0, %v2763
      %v2765 = vpop.f32.mrf.mxu0
      %2766 = vmatprep.mubr.bf16.mxu0 0
      %2767 = vmatmul.mubr.bf16.gmra.mxu0 %v2643
      %v2768 = vpop.f32.mrf.mxu0
      %v2769 = vadd.f32 0.0, %v2768
      %v2770 = vpop.f32.mrf.mxu0
      %v2771 = vpop.f32.mrf.mxu0
      %v2772 = vadd.f32 0.0, %v2771
      %v2773 = vpop.f32.mrf.mxu0
      %2774 = vmatprep.mubr.bf16.mxu0 0
      %2775 = vmatmul.mubr.bf16.gmra.mxu0 %v2646
      %v2776 = vpop.f32.mrf.mxu0
      %v2777 = vadd.f32 0.0, %v2776
      %v2778 = vpop.f32.mrf.mxu0
      %v2779 = vpop.f32.mrf.mxu0
      %v2780 = vadd.f32 0.0, %v2779
      %v2781 = vpop.f32.mrf.mxu0
      %2782 = vmatprep.mubr.bf16.mxu0 0
      %2783 = vmatmul.mubr.bf16.gmra.mxu0 %v2649
      %v2784 = vpop.f32.mrf.mxu0
      %v2785 = vadd.f32 0.0, %v2784
      %v2786 = vpop.f32.mrf.mxu0
      %v2787 = vpop.f32.mrf.mxu0
      %v2788 = vadd.f32 0.0, %v2787
      %v2789 = vpop.f32.mrf.mxu0
      %2790 = vmatprep.mubr.bf16.mxu0 0
      %2791 = vmatmul.mubr.bf16.gmra.mxu0 %v2652
      %v2792 = vpop.f32.mrf.mxu0
      %v2793 = vadd.f32 0.0, %v2792
      %v2794 = vpop.f32.mrf.mxu0
      %v2795 = vpop.f32.mrf.mxu0
      %v2796 = vadd.f32 0.0, %v2795
      %v2797 = vpop.f32.mrf.mxu0
      %2798 = vmatprep.mubr.bf16.mxu0 0
      %2799 = vmatmul.mubr.bf16.gmra.mxu0 %v2655
      %v2800 = vpop.f32.mrf.mxu0
      %v2801 = vadd.f32 0.0, %v2800
      %v2802 = vpop.f32.mrf.mxu0
      %v2803 = vpop.f32.mrf.mxu0
      %v2804 = vadd.f32 0.0, %v2803
      %v2805 = vpop.f32.mrf.mxu0
      %2806 = vmatprep.mubr.bf16.mxu0 0
      %2807 = vmatmul.mubr.bf16.gmra.mxu0 %v2658
      %v2808 = vpop.f32.mrf.mxu0
      %v2809 = vadd.f32 0.0, %v2808
      %v2810 = vpop.f32.mrf.mxu0
      %v2811 = vpop.f32.mrf.mxu0
      %v2812 = vadd.f32 0.0, %v2811
      %v2813 = vpop.f32.mrf.mxu0
      %2814 = vmatprep.mubr.bf16.mxu0 0
      %2815 = vmatmul.mubr.bf16.gmra.mxu0 %v2661
      %v2816 = vpop.f32.mrf.mxu0
      %v2817 = vadd.f32 0.0, %v2816
      %v2818 = vpop.f32.mrf.mxu0
      %v2819 = vpop.f32.mrf.mxu0
      %v2820 = vadd.f32 0.0, %v2819
      %v2821 = vpop.f32.mrf.mxu0
      %2822 = vmatprep.mubr.bf16.mxu0 0
      %2823 = vmatmul.mubr.bf16.gmra.mxu0 %v2664
      %v2824 = vpop.f32.mrf.mxu0
      %v2825 = vadd.f32 0.0, %v2824
      %v2826 = vpop.f32.mrf.mxu0
      %v2827 = vpop.f32.mrf.mxu0
      %v2828 = vadd.f32 0.0, %v2827
      %v2829 = vpop.f32.mrf.mxu0
      %2830 = vmatprep.mubr.bf16.mxu0 0
      %2831 = vmatmul.mubr.bf16.gmra.mxu0 %v2667
      %v2832 = vpop.f32.mrf.mxu0
      %v2833 = vadd.f32 0.0, %v2832
      %v2834 = vpop.f32.mrf.mxu0
      %v2835 = vpop.f32.mrf.mxu0
      %v2836 = vadd.f32 0.0, %v2835
      %v2837 = vpop.f32.mrf.mxu0
      %2838 = vmatprep.mubr.bf16.mxu0 0
      %2839 = vmatmul.mubr.bf16.gmra.mxu0 %v2670
      %v2840 = vpop.f32.mrf.mxu0
      %v2841 = vadd.f32 0.0, %v2840
      %v2842 = vpop.f32.mrf.mxu0
      %v2843 = vpop.f32.mrf.mxu0
      %v2844 = vadd.f32 0.0, %v2843
      %v2845 = vpop.f32.mrf.mxu0
      %2846 = vmatprep.mubr.bf16.mxu0 0
      %2847 = vmatmul.mubr.bf16.gmra.mxu0 %v2673
      %v2848 = vpop.f32.mrf.mxu0
      %v2849 = vadd.f32 0.0, %v2848
      %v2850 = vpop.f32.mrf.mxu0
      %v2851 = vpop.f32.mrf.mxu0
      %v2852 = vadd.f32 0.0, %v2851
      %v2853 = vpop.f32.mrf.mxu0
      %2854 = vmatprep.mubr.bf16.mxu0 0
      %2855 = vmatmul.mubr.bf16.gmra.mxu0 %v2676
      %v2856 = vpop.f32.mrf.mxu0
      %v2857 = vadd.f32 0.0, %v2856
      %v2858 = vpop.f32.mrf.mxu0
      %v2859 = vpop.f32.mrf.mxu0
      %v2860 = vadd.f32 0.0, %v2859
      %v2861 = vpop.f32.mrf.mxu0
      %2862 = vmatprep.mubr.bf16.mxu0 0
      %2863 = vmatmul.mubr.bf16.gmra.mxu0 %v2679
      %v2864 = vpop.f32.mrf.mxu0
      %v2865 = vadd.f32 0.0, %v2864
      %v2866 = vpop.f32.mrf.mxu0
      %v2867 = vpop.f32.mrf.mxu0
      %v2868 = vadd.f32 0.0, %v2867
      %v2869 = vpop.f32.mrf.mxu0
      %2870 = vmatprep.mubr.bf16.mxu0 0
      %2871 = vmatmul.mubr.bf16.gmra.mxu0 %v2682
      %v2872 = vpop.f32.mrf.mxu0
      %v2873 = vadd.f32 0.0, %v2872
      %v2874 = vpop.f32.mrf.mxu0
      %v2875 = vpop.f32.mrf.mxu0
      %v2876 = vadd.f32 0.0, %v2875
      %v2877 = vpop.f32.mrf.mxu0
      %2878 = vmatprep.mubr.bf16.mxu0 0
      %2879 = vmatmul.mubr.bf16.gmra.mxu0 %v2685
      %v2880 = vpop.f32.mrf.mxu0
      %v2881 = vadd.f32 0.0, %v2880
      %v2882 = vpop.f32.mrf.mxu0
      %v2883 = vpop.f32.mrf.mxu0
      %v2884 = vadd.f32 0.0, %v2883
      %v2885 = vpop.f32.mrf.mxu0
      %2886 = vmatprep.mubr.bf16.mxu0 0
      %2887 = vmatmul.mubr.bf16.gmra.mxu0 %v2688
      %v2888 = vpop.f32.mrf.mxu0
      %v2889 = vadd.f32 0.0, %v2888
      %v2890 = vpop.f32.mrf.mxu0
      %v2891 = vpop.f32.mrf.mxu0
      %v2892 = vadd.f32 0.0, %v2891
      %v2893 = vpop.f32.mrf.mxu0
      %2894 = vmatprep.mubr.bf16.mxu0 0
      %2895 = vmatmul.mubr.bf16.gmra.mxu0 %v2691
      %v2896 = vpop.f32.mrf.mxu0
      %v2897 = vadd.f32 0.0, %v2896
      %v2898 = vpop.f32.mrf.mxu0
      %v2899 = vpop.f32.mrf.mxu0
      %v2900 = vadd.f32 0.0, %v2899
      %v2901 = vpop.f32.mrf.mxu0
      %2902 = vmatprep.mubr.bf16.mxu0 0
      %2903 = vmatmul.mubr.bf16.gmra.mxu0 %v2694
      %v2904 = vpop.f32.mrf.mxu0
      %v2905 = vadd.f32 0.0, %v2904
      %v2906 = vpop.f32.mrf.mxu0
      %v2907 = vpop.f32.mrf.mxu0
      %v2908 = vadd.f32 0.0, %v2907
      %v2909 = vpop.f32.mrf.mxu0
      %2910 = vmatprep.mubr.bf16.mxu0 0
      %2911 = vmatmul.mubr.bf16.gmra.mxu0 %v2697
      %v2912 = vpop.f32.mrf.mxu0
      %v2913 = vadd.f32 0.0, %v2912
      %v2914 = vpop.f32.mrf.mxu0
      %v2915 = vpop.f32.mrf.mxu0
      %v2916 = vadd.f32 0.0, %v2915
      %v2917 = vpop.f32.mrf.mxu0
      %2918 = vmatprep.mubr.bf16.mxu0 0
      %2919 = vmatmul.mubr.bf16.gmra.mxu0 %v2700
      %v2920 = vpop.f32.mrf.mxu0
      %v2921 = vadd.f32 0.0, %v2920
      %v2922 = vpop.f32.mrf.mxu0
      %v2923 = vpop.f32.mrf.mxu0
      %v2924 = vadd.f32 0.0, %v2923
      %v2925 = vpop.f32.mrf.mxu0
      %2926 = vdwg.mxu0
      %v2927 = vld [vmem:[#allocation3] sm:$0xff]
      %v2928 = vld [vmem:[#allocation3 + $0x8] sm:$0xff]
      %v2929 = vld [vmem:[#allocation3 + $0x10] sm:$0xff]
      %v2930 = vld [vmem:[#allocation3 + $0x18] sm:$0xff]
      %v2931 = vld [vmem:[#allocation3 + $0x20] sm:$0xff]
      %v2932 = vld [vmem:[#allocation3 + $0x28] sm:$0xff]
      %v2933 = vld [vmem:[#allocation3 + $0x30] sm:$0xff]
      %v2934 = vld [vmem:[#allocation3 + $0x38] sm:$0xff]
      %v2935 = vld [vmem:[#allocation3 + $0x40] sm:$0xff]
      %v2936 = vld [vmem:[#allocation3 + $0x48] sm:$0xff]
      %v2937 = vld [vmem:[#allocation3 + $0x50] sm:$0xff]
      %v2938 = vld [vmem:[#allocation3 + $0x58] sm:$0xff]
      %v2939 = vld [vmem:[#allocation3 + $0x60] sm:$0xff]
      %v2940 = vld [vmem:[#allocation3 + $0x68] sm:$0xff]
      %v2941 = vld [vmem:[#allocation3 + $0x70] sm:$0xff]
      %v2942 = vld [vmem:[#allocation3 + $0x78] sm:$0xff]
      %v2943 = vld [vmem:[#allocation3 + $0x80] sm:$0xff]
      %v2944 = vld [vmem:[#allocation3 + $0x88] sm:$0xff]
      %v2945 = vld [vmem:[#allocation3 + $0x90] sm:$0xff]
      %v2946 = vld [vmem:[#allocation3 + $0x98] sm:$0xff]
      %v2947 = vld [vmem:[#allocation3 + $0xa0] sm:$0xff]
      %v2948 = vld [vmem:[#allocation3 + $0xa8] sm:$0xff]
      %v2949 = vld [vmem:[#allocation3 + $0xb0] sm:$0xff]
      %v2950 = vld [vmem:[#allocation3 + $0xb8] sm:$0xff]
      %v2951 = vld [vmem:[#allocation3 + $0xc0] sm:$0xff]
      %v2952 = vld [vmem:[#allocation3 + $0xc8] sm:$0xff]
      %v2953 = vld [vmem:[#allocation3 + $0xd0] sm:$0xff]
      %v2954 = vld [vmem:[#allocation3 + $0xd8] sm:$0xff]
      %v2955 = vld [vmem:[#allocation3 + $0xe0] sm:$0xff]
      %v2956 = vld [vmem:[#allocation3 + $0xe8] sm:$0xff]
      %v2957 = vld [vmem:[#allocation3 + $0xf0] sm:$0xff]
      %v2958 = vld [vmem:[#allocation3 + $0xf8] sm:$0xff]
      %v2959 = vld [vmem:[#allocation3 + $0x100] sm:$0xff]
      %v2960 = vld [vmem:[#allocation3 + $0x108] sm:$0xff]
      %v2961 = vld [vmem:[#allocation3 + $0x110] sm:$0xff]
      %v2962 = vld [vmem:[#allocation3 + $0x118] sm:$0xff]
      %v2963 = vld [vmem:[#allocation3 + $0x120] sm:$0xff]
      %v2964 = vld [vmem:[#allocation3 + $0x128] sm:$0xff]
      %v2965 = vld [vmem:[#allocation3 + $0x130] sm:$0xff]
      %v2966 = vld [vmem:[#allocation3 + $0x138] sm:$0xff]
      %v2967 = vld [vmem:[#allocation3 + $0x140] sm:$0xff]
      %v2968 = vld [vmem:[#allocation3 + $0x148] sm:$0xff]
      %v2969 = vld [vmem:[#allocation3 + $0x150] sm:$0xff]
      %v2970 = vld [vmem:[#allocation3 + $0x158] sm:$0xff]
      %v2971 = vld [vmem:[#allocation3 + $0x160] sm:$0xff]
      %v2972 = vld [vmem:[#allocation3 + $0x168] sm:$0xff]
      %v2973 = vld [vmem:[#allocation3 + $0x170] sm:$0xff]
      %v2974 = vld [vmem:[#allocation3 + $0x178] sm:$0xff]
      %v2975 = vadd.f32 %v2927, %v2737
      %v2976 = vadd.f32 %v2928, %v2740
      %v2977 = vadd.f32 %v2929, %v2745
      %v2978 = vadd.f32 %v2930, %v2748
      %v2979 = vadd.f32 %v2931, %v2753
      %v2980 = vadd.f32 %v2932, %v2756
      %v2981 = vadd.f32 %v2933, %v2761
      %v2982 = vadd.f32 %v2934, %v2764
      %v2983 = vadd.f32 %v2935, %v2769
      %v2984 = vadd.f32 %v2936, %v2772
      %v2985 = vadd.f32 %v2937, %v2777
      %v2986 = vadd.f32 %v2938, %v2780
      %v2987 = vadd.f32 %v2939, %v2785
      %v2988 = vadd.f32 %v2940, %v2788
      %v2989 = vadd.f32 %v2941, %v2793
      %v2990 = vadd.f32 %v2942, %v2796
      %v2991 = vadd.f32 %v2943, %v2801
      %v2992 = vadd.f32 %v2944, %v2804
      %v2993 = vadd.f32 %v2945, %v2809
      %v2994 = vadd.f32 %v2946, %v2812
      %v2995 = vadd.f32 %v2947, %v2817
      %v2996 = vadd.f32 %v2948, %v2820
      %v2997 = vadd.f32 %v2949, %v2825
      %v2998 = vadd.f32 %v2950, %v2828
      %v2999 = vadd.f32 %v2951, %v2833
      %v3000 = vadd.f32 %v2952, %v2836
      %v3001 = vadd.f32 %v2953, %v2841
      %v3002 = vadd.f32 %v2954, %v2844
      %v3003 = vadd.f32 %v2955, %v2849
      %v3004 = vadd.f32 %v2956, %v2852
      %v3005 = vadd.f32 %v2957, %v2857
      %v3006 = vadd.f32 %v2958, %v2860
      %v3007 = vadd.f32 %v2959, %v2865
      %v3008 = vadd.f32 %v2960, %v2868
      %v3009 = vadd.f32 %v2961, %v2873
      %v3010 = vadd.f32 %v2962, %v2876
      %v3011 = vadd.f32 %v2963, %v2881
      %v3012 = vadd.f32 %v2964, %v2884
      %v3013 = vadd.f32 %v2965, %v2889
      %v3014 = vadd.f32 %v2966, %v2892
      %v3015 = vadd.f32 %v2967, %v2897
      %v3016 = vadd.f32 %v2968, %v2900
      %v3017 = vadd.f32 %v2969, %v2905
      %v3018 = vadd.f32 %v2970, %v2908
      %v3019 = vadd.f32 %v2971, %v2913
      %v3020 = vadd.f32 %v2972, %v2916
      %v3021 = vadd.f32 %v2973, %v2921
      %v3022 = vadd.f32 %v2974, %v2924
      %3023 = vst.msk [vmem:[#allocation3] sm:$0xff] %vm2364, %v2975
      %3024 = vst.msk [vmem:[#allocation3 + $0x8] sm:$0xff] %vm2364, %v2976
      %3025 = vst.msk [vmem:[#allocation3 + $0x10] sm:$0xff] %vm2364, %v2977
      %3026 = vst.msk [vmem:[#allocation3 + $0x18] sm:$0xff] %vm2364, %v2978
      %3027 = vst.msk [vmem:[#allocation3 + $0x20] sm:$0xff] %vm2364, %v2979
      %3028 = vst.msk [vmem:[#allocation3 + $0x28] sm:$0xff] %vm2364, %v2980
      %3029 = vst.msk [vmem:[#allocation3 + $0x30] sm:$0xff] %vm2364, %v2981
      %3030 = vst.msk [vmem:[#allocation3 + $0x38] sm:$0xff] %vm2364, %v2982
      %3031 = vst.msk [vmem:[#allocation3 + $0x40] sm:$0xff] %vm2364, %v2983
      %3032 = vst.msk [vmem:[#allocation3 + $0x48] sm:$0xff] %vm2364, %v2984
      %3033 = vst.msk [vmem:[#allocation3 + $0x50] sm:$0xff] %vm2364, %v2985
      %3034 = vst.msk [vmem:[#allocation3 + $0x58] sm:$0xff] %vm2364, %v2986
      %3035 = vst.msk [vmem:[#allocation3 + $0x60] sm:$0xff] %vm2364, %v2987
      %3036 = vst.msk [vmem:[#allocation3 + $0x68] sm:$0xff] %vm2364, %v2988
      %3037 = vst.msk [vmem:[#allocation3 + $0x70] sm:$0xff] %vm2364, %v2989
      %3038 = vst.msk [vmem:[#allocation3 + $0x78] sm:$0xff] %vm2364, %v2990
      %3039 = vst.msk [vmem:[#allocation3 + $0x80] sm:$0xff] %vm2364, %v2991
      %3040 = vst.msk [vmem:[#allocation3 + $0x88] sm:$0xff] %vm2364, %v2992
      %3041 = vst.msk [vmem:[#allocation3 + $0x90] sm:$0xff] %vm2364, %v2993
      %3042 = vst.msk [vmem:[#allocation3 + $0x98] sm:$0xff] %vm2364, %v2994
      %3043 = vst.msk [vmem:[#allocation3 + $0xa0] sm:$0xff] %vm2364, %v2995
      %3044 = vst.msk [vmem:[#allocation3 + $0xa8] sm:$0xff] %vm2364, %v2996
      %3045 = vst.msk [vmem:[#allocation3 + $0xb0] sm:$0xff] %vm2364, %v2997
      %3046 = vst.msk [vmem:[#allocation3 + $0xb8] sm:$0xff] %vm2364, %v2998
      %3047 = vst.msk [vmem:[#allocation3 + $0xc0] sm:$0xff] %vm2364, %v2999
      %3048 = vst.msk [vmem:[#allocation3 + $0xc8] sm:$0xff] %vm2364, %v3000
      %3049 = vst.msk [vmem:[#allocation3 + $0xd0] sm:$0xff] %vm2364, %v3001
      %3050 = vst.msk [vmem:[#allocation3 + $0xd8] sm:$0xff] %vm2364, %v3002
      %3051 = vst.msk [vmem:[#allocation3 + $0xe0] sm:$0xff] %vm2364, %v3003
      %3052 = vst.msk [vmem:[#allocation3 + $0xe8] sm:$0xff] %vm2364, %v3004
      %3053 = vst.msk [vmem:[#allocation3 + $0xf0] sm:$0xff] %vm2364, %v3005
      %3054 = vst.msk [vmem:[#allocation3 + $0xf8] sm:$0xff] %vm2364, %v3006
      %3055 = vst.msk [vmem:[#allocation3 + $0x100] sm:$0xff] %vm2364, %v3007
      %3056 = vst.msk [vmem:[#allocation3 + $0x108] sm:$0xff] %vm2364, %v3008
      %3057 = vst.msk [vmem:[#allocation3 + $0x110] sm:$0xff] %vm2364, %v3009
      %3058 = vst.msk [vmem:[#allocation3 + $0x118] sm:$0xff] %vm2364, %v3010
      %3059 = vst.msk [vmem:[#allocation3 + $0x120] sm:$0xff] %vm2364, %v3011
      %3060 = vst.msk [vmem:[#allocation3 + $0x128] sm:$0xff] %vm2364, %v3012
      %3061 = vst.msk [vmem:[#allocation3 + $0x130] sm:$0xff] %vm2364, %v3013
      %3062 = vst.msk [vmem:[#allocation3 + $0x138] sm:$0xff] %vm2364, %v3014
      %3063 = vst.msk [vmem:[#allocation3 + $0x140] sm:$0xff] %vm2364, %v3015
      %3064 = vst.msk [vmem:[#allocation3 + $0x148] sm:$0xff] %vm2364, %v3016
      %3065 = vst.msk [vmem:[#allocation3 + $0x150] sm:$0xff] %vm2364, %v3017
      %3066 = vst.msk [vmem:[#allocation3 + $0x158] sm:$0xff] %vm2364, %v3018
      %3067 = vst.msk [vmem:[#allocation3 + $0x160] sm:$0xff] %vm2364, %v3019
      %3068 = vst.msk [vmem:[#allocation3 + $0x168] sm:$0xff] %vm2364, %v3020
      %3069 = vst.msk [vmem:[#allocation3 + $0x170] sm:$0xff] %vm2364, %v3021
      %3070 = vst.msk [vmem:[#allocation3 + $0x178] sm:$0xff] %vm2364, %v3022
      %v3071 = vld [vmem:[#allocation2 + $0x10] sm:$0xf]
      %v3072 = vld [vmem:[#allocation2 + $0x14] sm:$0xf]
      %v3073 = vld [vmem:[#allocation2 + $0x18] sm:$0xf]
      %v3074 = vld [vmem:[#allocation2 + $0x1c] sm:$0xf]
      %v3075 = vld [vmem:[#allocation2 + $0x20] sm:$0xf]
      %v3076 = vld [vmem:[#allocation2 + $0x24] sm:$0xf]
      %v3077 = vld [vmem:[#allocation2 + $0x28] sm:$0xf]
      %v3078 = vld [vmem:[#allocation2 + $0x2c] sm:$0xf]
      %v3079 = vld [vmem:[#allocation2 + $0x30] sm:$0xf]
      %v3080 = vld [vmem:[#allocation2 + $0x34] sm:$0xf]
      %v3081 = vld [vmem:[#allocation2 + $0x38] sm:$0xf]
      %v3082 = vld [vmem:[#allocation2 + $0x3c] sm:$0xf]
      %v3083 = vld [vmem:[#allocation2 + $0x40] sm:$0xf]
      %v3084 = vld [vmem:[#allocation2 + $0x44] sm:$0xf]
      %v3085 = vld [vmem:[#allocation2 + $0x48] sm:$0xf]
      %v3086 = vld [vmem:[#allocation2 + $0x4c] sm:$0xf]
      %v3087 = vld [vmem:[#allocation2 + $0x50] sm:$0xf]
      %v3088 = vld [vmem:[#allocation2 + $0x54] sm:$0xf]
      %v3089 = vld [vmem:[#allocation2 + $0x58] sm:$0xf]
      %v3090 = vld [vmem:[#allocation2 + $0x5c] sm:$0xf]
      %v3091 = vld [vmem:[#allocation2 + $0x60] sm:$0xf]
      %v3092 = vld [vmem:[#allocation2 + $0x64] sm:$0xf]
      %v3093 = vld [vmem:[#allocation2 + $0x68] sm:$0xf]
      %v3094 = vld [vmem:[#allocation2 + $0x6c] sm:$0xf]
      %v3095 = vld [vmem:[#allocation2 + $0x70] sm:$0xf]
      %v3096 = vld [vmem:[#allocation2 + $0x74] sm:$0xf]
      %v3097 = vld [vmem:[#allocation2 + $0x78] sm:$0xf]
      %v3098 = vld [vmem:[#allocation2 + $0x7c] sm:$0xf]
      %v3099 = vld [vmem:[#allocation2 + $0x80] sm:$0xf]
      %v3100 = vld [vmem:[#allocation2 + $0x84] sm:$0xf]
      %v3101 = vld [vmem:[#allocation2 + $0x88] sm:$0xf]
      %v3102 = vld [vmem:[#allocation2 + $0x8c] sm:$0xf]
      %v3103 = vld [vmem:[#allocation2 + $0x90] sm:$0xf]
      %v3104 = vld [vmem:[#allocation2 + $0x94] sm:$0xf]
      %v3105 = vld [vmem:[#allocation2 + $0x98] sm:$0xf]
      %v3106 = vld [vmem:[#allocation2 + $0x9c] sm:$0xf]
      %v3107 = vld [vmem:[#allocation2 + $0xa0] sm:$0xf]
      %v3108 = vld [vmem:[#allocation2 + $0xa4] sm:$0xf]
      %v3109 = vld [vmem:[#allocation2 + $0xa8] sm:$0xf]
      %v3110 = vld [vmem:[#allocation2 + $0xac] sm:$0xf]
      %v3111 = vld [vmem:[#allocation2 + $0xb0] sm:$0xf]
      %v3112 = vld [vmem:[#allocation2 + $0xb4] sm:$0xf]
      %v3113 = vld [vmem:[#allocation2 + $0xb8] sm:$0xf]
      %v3114 = vld [vmem:[#allocation2 + $0xbc] sm:$0xf]
      %v3115 = vld [vmem:[#allocation2 + $0xc0] sm:$0xf]
      %v3116 = vld [vmem:[#allocation2 + $0xc4] sm:$0xf]
      %v3117 = vld [vmem:[#allocation2 + $0xc8] sm:$0xf]
      %v3118 = vld [vmem:[#allocation2 + $0xcc] sm:$0xf]
      %s3119 = scalar_lea.vmem %s3, 96
      %v3120 = vld [vmem:[%s3119] sm:$0xf]
      %v3121 = vld [vmem:[%s3119 + $0x4] sm:$0xf]
      %v3122 = vld [vmem:[%s3119 + $0x8] sm:$0xf]
      %v3123 = vld [vmem:[%s3119 + $0xc] sm:$0xf]
      %v3124 = vld [vmem:[%s3119 + $0x10] sm:$0xf]
      %v3125 = vld [vmem:[%s3119 + $0x14] sm:$0xf]
      %v3126 = vld [vmem:[%s3119 + $0x18] sm:$0xf]
      %v3127 = vld [vmem:[%s3119 + $0x1c] sm:$0xf]
      %v3128 = vld [vmem:[%s3119 + $0x20] sm:$0xf]
      %v3129 = vld [vmem:[%s3119 + $0x24] sm:$0xf]
      %v3130 = vld [vmem:[%s3119 + $0x28] sm:$0xf]
      %v3131 = vld [vmem:[%s3119 + $0x2c] sm:$0xf]
      %v3180 = vunpack.c.l.b16 %v3071
      %v3181 = vunpack.c.l.b16 %v3072
      %v3182 = vunpack.c.l.b16 %v3073
      %v3183 = vunpack.c.l.b16 %v3074
      %v3184 = vunpack.c.l.b16 %v3075
      %v3185 = vunpack.c.l.b16 %v3076
      %v3186 = vunpack.c.l.b16 %v3077
      %v3187 = vunpack.c.l.b16 %v3078
      %v3188 = vunpack.c.l.b16 %v3079
      %v3189 = vunpack.c.l.b16 %v3080
      %v3190 = vunpack.c.l.b16 %v3081
      %v3191 = vunpack.c.l.b16 %v3082
      %v3192 = vunpack.c.l.b16 %v3083
      %v3193 = vunpack.c.l.b16 %v3084
      %v3194 = vunpack.c.l.b16 %v3085
      %v3195 = vunpack.c.l.b16 %v3086
      %v3196 = vunpack.c.l.b16 %v3087
      %v3197 = vunpack.c.l.b16 %v3088
      %v3198 = vunpack.c.l.b16 %v3089
      %v3199 = vunpack.c.l.b16 %v3090
      %v3200 = vunpack.c.l.b16 %v3091
      %v3201 = vunpack.c.l.b16 %v3092
      %v3202 = vunpack.c.l.b16 %v3093
      %v3203 = vunpack.c.l.b16 %v3094
      %v3204 = vunpack.c.l.b16 %v3095
      %v3205 = vunpack.c.l.b16 %v3096
      %v3206 = vunpack.c.l.b16 %v3097
      %v3207 = vunpack.c.l.b16 %v3098
      %v3208 = vunpack.c.l.b16 %v3099
      %v3209 = vunpack.c.l.b16 %v3100
      %v3210 = vunpack.c.l.b16 %v3101
      %v3211 = vunpack.c.l.b16 %v3102
      %v3212 = vunpack.c.l.b16 %v3103
      %v3213 = vunpack.c.l.b16 %v3104
      %v3214 = vunpack.c.l.b16 %v3105
      %v3215 = vunpack.c.l.b16 %v3106
      %v3216 = vunpack.c.l.b16 %v3107
      %v3217 = vunpack.c.l.b16 %v3108
      %v3218 = vunpack.c.l.b16 %v3109
      %v3219 = vunpack.c.l.b16 %v3110
      %v3220 = vunpack.c.l.b16 %v3111
      %v3221 = vunpack.c.l.b16 %v3112
      %v3222 = vunpack.c.l.b16 %v3113
      %v3223 = vunpack.c.l.b16 %v3114
      %v3224 = vunpack.c.l.b16 %v3115
      %v3225 = vunpack.c.l.b16 %v3116
      %v3226 = vunpack.c.l.b16 %v3117
      %v3227 = vunpack.c.l.b16 %v3118
      %v3228 = vpack.c.b16 %v3181, %v3180
      %v3229 = vpack.c.b16 %v3183, %v3182
      %v3230 = vpack.c.b16 %v3185, %v3184
      %v3231 = vpack.c.b16 %v3187, %v3186
      %v3232 = vpack.c.b16 %v3189, %v3188
      %v3233 = vpack.c.b16 %v3191, %v3190
      %v3234 = vpack.c.b16 %v3193, %v3192
      %v3235 = vpack.c.b16 %v3195, %v3194
      %v3236 = vpack.c.b16 %v3197, %v3196
      %v3237 = vpack.c.b16 %v3199, %v3198
      %v3238 = vpack.c.b16 %v3201, %v3200
      %v3239 = vpack.c.b16 %v3203, %v3202
      %v3240 = vpack.c.b16 %v3205, %v3204
      %v3241 = vpack.c.b16 %v3207, %v3206
      %v3242 = vpack.c.b16 %v3209, %v3208
      %v3243 = vpack.c.b16 %v3211, %v3210
      %v3244 = vpack.c.b16 %v3213, %v3212
      %v3245 = vpack.c.b16 %v3215, %v3214
      %v3246 = vpack.c.b16 %v3217, %v3216
      %v3247 = vpack.c.b16 %v3219, %v3218
      %v3248 = vpack.c.b16 %v3221, %v3220
      %v3249 = vpack.c.b16 %v3223, %v3222
      %v3250 = vpack.c.b16 %v3225, %v3224
      %v3251 = vpack.c.b16 %v3227, %v3226
      %v3264 = vunpack.c.l.b16 %v3120
      %v3265 = vunpack.c.l.b16 %v3121
      %v3266 = vunpack.c.l.b16 %v3122
      %v3267 = vunpack.c.l.b16 %v3123
      %v3268 = vunpack.c.l.b16 %v3124
      %v3269 = vunpack.c.l.b16 %v3125
      %v3270 = vunpack.c.l.b16 %v3126
      %v3271 = vunpack.c.l.b16 %v3127
      %v3272 = vunpack.c.l.b16 %v3128
      %v3273 = vunpack.c.l.b16 %v3129
      %v3274 = vunpack.c.l.b16 %v3130
      %v3275 = vunpack.c.l.b16 %v3131
      %v3276 = vpack.c.b16 %v3265, %v3264
      %v3277 = vpack.c.b16 %v3267, %v3266
      %v3278 = vpack.c.b16 %v3269, %v3268
      %v3279 = vpack.c.b16 %v3271, %v3270
      %v3280 = vpack.c.b16 %v3273, %v3272
      %v3281 = vpack.c.b16 %v3275, %v3274
      %v3289 = vsel %vm2066, %v3228, 0
      %v3292 = vsel %vm2066, %v3229, 0
      %v3295 = vsel %vm2066, %v3230, 0
      %v3298 = vsel %vm2066, %v3231, 0
      %v3301 = vsel %vm2066, %v3232, 0
      %v3304 = vsel %vm2066, %v3233, 0
      %v3307 = vsel %vm2066, %v3234, 0
      %v3310 = vsel %vm2066, %v3235, 0
      %v3313 = vsel %vm2066, %v3236, 0
      %v3316 = vsel %vm2066, %v3237, 0
      %v3319 = vsel %vm2066, %v3238, 0
      %v3322 = vsel %vm2066, %v3239, 0
      %v3325 = vsel %vm2066, %v3240, 0
      %v3328 = vsel %vm2066, %v3241, 0
      %v3331 = vsel %vm2066, %v3242, 0
      %v3334 = vsel %vm2066, %v3243, 0
      %v3337 = vsel %vm2066, %v3244, 0
      %v3340 = vsel %vm2066, %v3245, 0
      %v3343 = vsel %vm2066, %v3246, 0
      %v3346 = vsel %vm2066, %v3247, 0
      %v3349 = vsel %vm2066, %v3248, 0
      %v3352 = vsel %vm2066, %v3249, 0
      %v3355 = vsel %vm2066, %v3250, 0
      %v3358 = vsel %vm2066, %v3251, 0
      %3360 = vmatprep.subr.bf16.mxu0 0
      %3361 = vmatpush1.bf16.msra.mxu0 0
      %3362 = vmatprep.subr.bf16.mxu0 0
      %3363 = vmatpush1.bf16.msra.mxu0 0
      %3364 = vmatprep.subr.bf16.mxu0 0
      %3365 = vmatpush1.bf16.msra.mxu0 %v3281
      %3366 = vmatprep.subr.bf16.mxu0 0
      %3367 = vmatpush1.bf16.msra.mxu0 %v3280
      %3368 = vmatprep.subr.bf16.mxu0 0
      %3369 = vmatpush1.bf16.msra.mxu0 %v3279
      %3370 = vmatprep.subr.bf16.mxu0 0
      %3371 = vmatpush1.bf16.msra.mxu0 %v3278
      %3372 = vmatprep.subr.bf16.mxu0 0
      %3373 = vmatpush1.bf16.msra.mxu0 %v3277
      %3374 = vmatprep.subr.bf16.mxu0 0
      %3375 = vmatpush1.bf16.msra.mxu0 %v3276
      %3376 = vmatprep.subr.bf16.mxu0 0
      %3377 = vmatpush2.bf16.msra.mxu0 0
      %3378 = vmatprep.subr.bf16.mxu0 0
      %3379 = vmatpush2.bf16.msra.mxu0 0
      %3380 = vmatprep.subr.bf16.mxu0 0
      %3381 = vmatpush2.bf16.msra.mxu0 0
      %3382 = vmatprep.subr.bf16.mxu0 0
      %3383 = vmatpush2.bf16.msra.mxu0 0
      %3384 = vmatprep.subr.bf16.mxu0 0
      %3385 = vmatpush2.bf16.msra.mxu0 0
      %3386 = vmatprep.subr.bf16.mxu0 0
      %3387 = vmatpush2.bf16.msra.mxu0 0
      %3388 = vmatprep.subr.bf16.mxu0 0
      %3389 = vmatpush2.bf16.msra.mxu0 0
      %3390 = vmatprep.subr.bf16.mxu0 0
      %3391 = vmatpush2.bf16.msra.mxu0 0
      %3392 = vmatprep.mubr.bf16.mxu0 0
      %3393 = vmatmul.mubr.bf16.gmra.mxu0 %v3289
      %v3394 = vpop.f32.mrf.mxu0
      %v3395 = vadd.f32 0.0, %v3394
      %v3396 = vpop.f32.mrf.mxu0
      %v3397 = vpop.f32.mrf.mxu0
      %v3398 = vadd.f32 0.0, %v3397
      %v3399 = vpop.f32.mrf.mxu0
      %3400 = vmatprep.mubr.bf16.mxu0 0
      %3401 = vmatmul.mubr.bf16.gmra.mxu0 %v3292
      %v3402 = vpop.f32.mrf.mxu0
      %v3403 = vadd.f32 0.0, %v3402
      %v3404 = vpop.f32.mrf.mxu0
      %v3405 = vpop.f32.mrf.mxu0
      %v3406 = vadd.f32 0.0, %v3405
      %v3407 = vpop.f32.mrf.mxu0
      %3408 = vmatprep.mubr.bf16.mxu0 0
      %3409 = vmatmul.mubr.bf16.gmra.mxu0 %v3295
      %v3410 = vpop.f32.mrf.mxu0
      %v3411 = vadd.f32 0.0, %v3410
      %v3412 = vpop.f32.mrf.mxu0
      %v3413 = vpop.f32.mrf.mxu0
      %v3414 = vadd.f32 0.0, %v3413
      %v3415 = vpop.f32.mrf.mxu0
      %3416 = vmatprep.mubr.bf16.mxu0 0
      %3417 = vmatmul.mubr.bf16.gmra.mxu0 %v3298
      %v3418 = vpop.f32.mrf.mxu0
      %v3419 = vadd.f32 0.0, %v3418
      %v3420 = vpop.f32.mrf.mxu0
      %v3421 = vpop.f32.mrf.mxu0
      %v3422 = vadd.f32 0.0, %v3421
      %v3423 = vpop.f32.mrf.mxu0
      %3424 = vmatprep.mubr.bf16.mxu0 0
      %3425 = vmatmul.mubr.bf16.gmra.mxu0 %v3301
      %v3426 = vpop.f32.mrf.mxu0
      %v3427 = vadd.f32 0.0, %v3426
      %v3428 = vpop.f32.mrf.mxu0
      %v3429 = vpop.f32.mrf.mxu0
      %v3430 = vadd.f32 0.0, %v3429
      %v3431 = vpop.f32.mrf.mxu0
      %3432 = vmatprep.mubr.bf16.mxu0 0
      %3433 = vmatmul.mubr.bf16.gmra.mxu0 %v3304
      %v3434 = vpop.f32.mrf.mxu0
      %v3435 = vadd.f32 0.0, %v3434
      %v3436 = vpop.f32.mrf.mxu0
      %v3437 = vpop.f32.mrf.mxu0
      %v3438 = vadd.f32 0.0, %v3437
      %v3439 = vpop.f32.mrf.mxu0
      %3440 = vmatprep.mubr.bf16.mxu0 0
      %3441 = vmatmul.mubr.bf16.gmra.mxu0 %v3307
      %v3442 = vpop.f32.mrf.mxu0
      %v3443 = vadd.f32 0.0, %v3442
      %v3444 = vpop.f32.mrf.mxu0
      %v3445 = vpop.f32.mrf.mxu0
      %v3446 = vadd.f32 0.0, %v3445
      %v3447 = vpop.f32.mrf.mxu0
      %3448 = vmatprep.mubr.bf16.mxu0 0
      %3449 = vmatmul.mubr.bf16.gmra.mxu0 %v3310
      %v3450 = vpop.f32.mrf.mxu0
      %v3451 = vadd.f32 0.0, %v3450
      %v3452 = vpop.f32.mrf.mxu0
      %v3453 = vpop.f32.mrf.mxu0
      %v3454 = vadd.f32 0.0, %v3453
      %v3455 = vpop.f32.mrf.mxu0
      %3456 = vmatprep.mubr.bf16.mxu0 0
      %3457 = vmatmul.mubr.bf16.gmra.mxu0 %v3313
      %v3458 = vpop.f32.mrf.mxu0
      %v3459 = vadd.f32 0.0, %v3458
      %v3460 = vpop.f32.mrf.mxu0
      %v3461 = vpop.f32.mrf.mxu0
      %v3462 = vadd.f32 0.0, %v3461
      %v3463 = vpop.f32.mrf.mxu0
      %3464 = vmatprep.mubr.bf16.mxu0 0
      %3465 = vmatmul.mubr.bf16.gmra.mxu0 %v3316
      %v3466 = vpop.f32.mrf.mxu0
      %v3467 = vadd.f32 0.0, %v3466
      %v3468 = vpop.f32.mrf.mxu0
      %v3469 = vpop.f32.mrf.mxu0
      %v3470 = vadd.f32 0.0, %v3469
      %v3471 = vpop.f32.mrf.mxu0
      %3472 = vmatprep.mubr.bf16.mxu0 0
      %3473 = vmatmul.mubr.bf16.gmra.mxu0 %v3319
      %v3474 = vpop.f32.mrf.mxu0
      %v3475 = vadd.f32 0.0, %v3474
      %v3476 = vpop.f32.mrf.mxu0
      %v3477 = vpop.f32.mrf.mxu0
      %v3478 = vadd.f32 0.0, %v3477
      %v3479 = vpop.f32.mrf.mxu0
      %3480 = vmatprep.mubr.bf16.mxu0 0
      %3481 = vmatmul.mubr.bf16.gmra.mxu0 %v3322
      %v3482 = vpop.f32.mrf.mxu0
      %v3483 = vadd.f32 0.0, %v3482
      %v3484 = vpop.f32.mrf.mxu0
      %v3485 = vpop.f32.mrf.mxu0
      %v3486 = vadd.f32 0.0, %v3485
      %v3487 = vpop.f32.mrf.mxu0
      %3488 = vmatprep.mubr.bf16.mxu0 0
      %3489 = vmatmul.mubr.bf16.gmra.mxu0 %v3325
      %v3490 = vpop.f32.mrf.mxu0
      %v3491 = vadd.f32 0.0, %v3490
      %v3492 = vpop.f32.mrf.mxu0
      %v3493 = vpop.f32.mrf.mxu0
      %v3494 = vadd.f32 0.0, %v3493
      %v3495 = vpop.f32.mrf.mxu0
      %3496 = vmatprep.mubr.bf16.mxu0 0
      %3497 = vmatmul.mubr.bf16.gmra.mxu0 %v3328
      %v3498 = vpop.f32.mrf.mxu0
      %v3499 = vadd.f32 0.0, %v3498
      %v3500 = vpop.f32.mrf.mxu0
      %v3501 = vpop.f32.mrf.mxu0
      %v3502 = vadd.f32 0.0, %v3501
      %v3503 = vpop.f32.mrf.mxu0
      %3504 = vmatprep.mubr.bf16.mxu0 0
      %3505 = vmatmul.mubr.bf16.gmra.mxu0 %v3331
      %v3506 = vpop.f32.mrf.mxu0
      %v3507 = vadd.f32 0.0, %v3506
      %v3508 = vpop.f32.mrf.mxu0
      %v3509 = vpop.f32.mrf.mxu0
      %v3510 = vadd.f32 0.0, %v3509
      %v3511 = vpop.f32.mrf.mxu0
      %3512 = vmatprep.mubr.bf16.mxu0 0
      %3513 = vmatmul.mubr.bf16.gmra.mxu0 %v3334
      %v3514 = vpop.f32.mrf.mxu0
      %v3515 = vadd.f32 0.0, %v3514
      %v3516 = vpop.f32.mrf.mxu0
      %v3517 = vpop.f32.mrf.mxu0
      %v3518 = vadd.f32 0.0, %v3517
      %v3519 = vpop.f32.mrf.mxu0
      %3520 = vmatprep.mubr.bf16.mxu0 0
      %3521 = vmatmul.mubr.bf16.gmra.mxu0 %v3337
      %v3522 = vpop.f32.mrf.mxu0
      %v3523 = vadd.f32 0.0, %v3522
      %v3524 = vpop.f32.mrf.mxu0
      %v3525 = vpop.f32.mrf.mxu0
      %v3526 = vadd.f32 0.0, %v3525
      %v3527 = vpop.f32.mrf.mxu0
      %3528 = vmatprep.mubr.bf16.mxu0 0
      %3529 = vmatmul.mubr.bf16.gmra.mxu0 %v3340
      %v3530 = vpop.f32.mrf.mxu0
      %v3531 = vadd.f32 0.0, %v3530
      %v3532 = vpop.f32.mrf.mxu0
      %v3533 = vpop.f32.mrf.mxu0
      %v3534 = vadd.f32 0.0, %v3533
      %v3535 = vpop.f32.mrf.mxu0
      %3536 = vmatprep.mubr.bf16.mxu0 0
      %3537 = vmatmul.mubr.bf16.gmra.mxu0 %v3343
      %v3538 = vpop.f32.mrf.mxu0
      %v3539 = vadd.f32 0.0, %v3538
      %v3540 = vpop.f32.mrf.mxu0
      %v3541 = vpop.f32.mrf.mxu0
      %v3542 = vadd.f32 0.0, %v3541
      %v3543 = vpop.f32.mrf.mxu0
      %3544 = vmatprep.mubr.bf16.mxu0 0
      %3545 = vmatmul.mubr.bf16.gmra.mxu0 %v3346
      %v3546 = vpop.f32.mrf.mxu0
      %v3547 = vadd.f32 0.0, %v3546
      %v3548 = vpop.f32.mrf.mxu0
      %v3549 = vpop.f32.mrf.mxu0
      %v3550 = vadd.f32 0.0, %v3549
      %v3551 = vpop.f32.mrf.mxu0
      %3552 = vmatprep.mubr.bf16.mxu0 0
      %3553 = vmatmul.mubr.bf16.gmra.mxu0 %v3349
      %v3554 = vpop.f32.mrf.mxu0
      %v3555 = vadd.f32 0.0, %v3554
      %v3556 = vpop.f32.mrf.mxu0
      %v3557 = vpop.f32.mrf.mxu0
      %v3558 = vadd.f32 0.0, %v3557
      %v3559 = vpop.f32.mrf.mxu0
      %3560 = vmatprep.mubr.bf16.mxu0 0
      %3561 = vmatmul.mubr.bf16.gmra.mxu0 %v3352
      %v3562 = vpop.f32.mrf.mxu0
      %v3563 = vadd.f32 0.0, %v3562
      %v3564 = vpop.f32.mrf.mxu0
      %v3565 = vpop.f32.mrf.mxu0
      %v3566 = vadd.f32 0.0, %v3565
      %v3567 = vpop.f32.mrf.mxu0
      %3568 = vmatprep.mubr.bf16.mxu0 0
      %3569 = vmatmul.mubr.bf16.gmra.mxu0 %v3355
      %v3570 = vpop.f32.mrf.mxu0
      %v3571 = vadd.f32 0.0, %v3570
      %v3572 = vpop.f32.mrf.mxu0
      %v3573 = vpop.f32.mrf.mxu0
      %v3574 = vadd.f32 0.0, %v3573
      %v3575 = vpop.f32.mrf.mxu0
      %3576 = vmatprep.mubr.bf16.mxu0 0
      %3577 = vmatmul.mubr.bf16.gmra.mxu0 %v3358
      %v3578 = vpop.f32.mrf.mxu0
      %v3579 = vadd.f32 0.0, %v3578
      %v3580 = vpop.f32.mrf.mxu0
      %v3581 = vpop.f32.mrf.mxu0
      %v3582 = vadd.f32 0.0, %v3581
      %v3583 = vpop.f32.mrf.mxu0
      %3584 = vdwg.mxu0
      %v3585 = vld [vmem:[#allocation3] sm:$0xff]
      %v3586 = vld [vmem:[#allocation3 + $0x8] sm:$0xff]
      %v3587 = vld [vmem:[#allocation3 + $0x10] sm:$0xff]
      %v3588 = vld [vmem:[#allocation3 + $0x18] sm:$0xff]
      %v3589 = vld [vmem:[#allocation3 + $0x20] sm:$0xff]
      %v3590 = vld [vmem:[#allocation3 + $0x28] sm:$0xff]
      %v3591 = vld [vmem:[#allocation3 + $0x30] sm:$0xff]
      %v3592 = vld [vmem:[#allocation3 + $0x38] sm:$0xff]
      %v3593 = vld [vmem:[#allocation3 + $0x40] sm:$0xff]
      %v3594 = vld [vmem:[#allocation3 + $0x48] sm:$0xff]
      %v3595 = vld [vmem:[#allocation3 + $0x50] sm:$0xff]
      %v3596 = vld [vmem:[#allocation3 + $0x58] sm:$0xff]
      %v3597 = vld [vmem:[#allocation3 + $0x60] sm:$0xff]
      %v3598 = vld [vmem:[#allocation3 + $0x68] sm:$0xff]
      %v3599 = vld [vmem:[#allocation3 + $0x70] sm:$0xff]
      %v3600 = vld [vmem:[#allocation3 + $0x78] sm:$0xff]
      %v3601 = vld [vmem:[#allocation3 + $0x80] sm:$0xff]
      %v3602 = vld [vmem:[#allocation3 + $0x88] sm:$0xff]
      %v3603 = vld [vmem:[#allocation3 + $0x90] sm:$0xff]
      %v3604 = vld [vmem:[#allocation3 + $0x98] sm:$0xff]
      %v3605 = vld [vmem:[#allocation3 + $0xa0] sm:$0xff]
      %v3606 = vld [vmem:[#allocation3 + $0xa8] sm:$0xff]
      %v3607 = vld [vmem:[#allocation3 + $0xb0] sm:$0xff]
      %v3608 = vld [vmem:[#allocation3 + $0xb8] sm:$0xff]
      %v3609 = vld [vmem:[#allocation3 + $0xc0] sm:$0xff]
      %v3610 = vld [vmem:[#allocation3 + $0xc8] sm:$0xff]
      %v3611 = vld [vmem:[#allocation3 + $0xd0] sm:$0xff]
      %v3612 = vld [vmem:[#allocation3 + $0xd8] sm:$0xff]
      %v3613 = vld [vmem:[#allocation3 + $0xe0] sm:$0xff]
      %v3614 = vld [vmem:[#allocation3 + $0xe8] sm:$0xff]
      %v3615 = vld [vmem:[#allocation3 + $0xf0] sm:$0xff]
      %v3616 = vld [vmem:[#allocation3 + $0xf8] sm:$0xff]
      %v3617 = vld [vmem:[#allocation3 + $0x100] sm:$0xff]
      %v3618 = vld [vmem:[#allocation3 + $0x108] sm:$0xff]
      %v3619 = vld [vmem:[#allocation3 + $0x110] sm:$0xff]
      %v3620 = vld [vmem:[#allocation3 + $0x118] sm:$0xff]
      %v3621 = vld [vmem:[#allocation3 + $0x120] sm:$0xff]
      %v3622 = vld [vmem:[#allocation3 + $0x128] sm:$0xff]
      %v3623 = vld [vmem:[#allocation3 + $0x130] sm:$0xff]
      %v3624 = vld [vmem:[#allocation3 + $0x138] sm:$0xff]
      %v3625 = vld [vmem:[#allocation3 + $0x140] sm:$0xff]
      %v3626 = vld [vmem:[#allocation3 + $0x148] sm:$0xff]
      %v3627 = vld [vmem:[#allocation3 + $0x150] sm:$0xff]
      %v3628 = vld [vmem:[#allocation3 + $0x158] sm:$0xff]
      %v3629 = vld [vmem:[#allocation3 + $0x160] sm:$0xff]
      %v3630 = vld [vmem:[#allocation3 + $0x168] sm:$0xff]
      %v3631 = vld [vmem:[#allocation3 + $0x170] sm:$0xff]
      %v3632 = vld [vmem:[#allocation3 + $0x178] sm:$0xff]
      %v3633 = vadd.f32 %v3585, %v3395
      %v3634 = vadd.f32 %v3586, %v3398
      %v3635 = vadd.f32 %v3587, %v3403
      %v3636 = vadd.f32 %v3588, %v3406
      %v3637 = vadd.f32 %v3589, %v3411
      %v3638 = vadd.f32 %v3590, %v3414
      %v3639 = vadd.f32 %v3591, %v3419
      %v3640 = vadd.f32 %v3592, %v3422
      %v3641 = vadd.f32 %v3593, %v3427
      %v3642 = vadd.f32 %v3594, %v3430
      %v3643 = vadd.f32 %v3595, %v3435
      %v3644 = vadd.f32 %v3596, %v3438
      %v3645 = vadd.f32 %v3597, %v3443
      %v3646 = vadd.f32 %v3598, %v3446
      %v3647 = vadd.f32 %v3599, %v3451
      %v3648 = vadd.f32 %v3600, %v3454
      %v3649 = vadd.f32 %v3601, %v3459
      %v3650 = vadd.f32 %v3602, %v3462
      %v3651 = vadd.f32 %v3603, %v3467
      %v3652 = vadd.f32 %v3604, %v3470
      %v3653 = vadd.f32 %v3605, %v3475
      %v3654 = vadd.f32 %v3606, %v3478
      %v3655 = vadd.f32 %v3607, %v3483
      %v3656 = vadd.f32 %v3608, %v3486
      %v3657 = vadd.f32 %v3609, %v3491
      %v3658 = vadd.f32 %v3610, %v3494
      %v3659 = vadd.f32 %v3611, %v3499
      %v3660 = vadd.f32 %v3612, %v3502
      %v3661 = vadd.f32 %v3613, %v3507
      %v3662 = vadd.f32 %v3614, %v3510
      %v3663 = vadd.f32 %v3615, %v3515
      %v3664 = vadd.f32 %v3616, %v3518
      %v3665 = vadd.f32 %v3617, %v3523
      %v3666 = vadd.f32 %v3618, %v3526
      %v3667 = vadd.f32 %v3619, %v3531
      %v3668 = vadd.f32 %v3620, %v3534
      %v3669 = vadd.f32 %v3621, %v3539
      %v3670 = vadd.f32 %v3622, %v3542
      %v3671 = vadd.f32 %v3623, %v3547
      %v3672 = vadd.f32 %v3624, %v3550
      %v3673 = vadd.f32 %v3625, %v3555
      %v3674 = vadd.f32 %v3626, %v3558
      %v3675 = vadd.f32 %v3627, %v3563
      %v3676 = vadd.f32 %v3628, %v3566
      %v3677 = vadd.f32 %v3629, %v3571
      %v3678 = vadd.f32 %v3630, %v3574
      %v3679 = vadd.f32 %v3631, %v3579
      %v3680 = vadd.f32 %v3632, %v3582
      %3681 = vst.msk [vmem:[#allocation3] sm:$0xff] %vm2364, %v3633
      %3682 = vst.msk [vmem:[#allocation3 + $0x8] sm:$0xff] %vm2364, %v3634
      %3683 = vst.msk [vmem:[#allocation3 + $0x10] sm:$0xff] %vm2364, %v3635
      %3684 = vst.msk [vmem:[#allocation3 + $0x18] sm:$0xff] %vm2364, %v3636
      %3685 = vst.msk [vmem:[#allocation3 + $0x20] sm:$0xff] %vm2364, %v3637
      %3686 = vst.msk [vmem:[#allocation3 + $0x28] sm:$0xff] %vm2364, %v3638
      %3687 = vst.msk [vmem:[#allocation3 + $0x30] sm:$0xff] %vm2364, %v3639
      %3688 = vst.msk [vmem:[#allocation3 + $0x38] sm:$0xff] %vm2364, %v3640
      %3689 = vst.msk [vmem:[#allocation3 + $0x40] sm:$0xff] %vm2364, %v3641
      %3690 = vst.msk [vmem:[#allocation3 + $0x48] sm:$0xff] %vm2364, %v3642
      %3691 = vst.msk [vmem:[#allocation3 + $0x50] sm:$0xff] %vm2364, %v3643
      %3692 = vst.msk [vmem:[#allocation3 + $0x58] sm:$0xff] %vm2364, %v3644
      %3693 = vst.msk [vmem:[#allocation3 + $0x60] sm:$0xff] %vm2364, %v3645
      %3694 = vst.msk [vmem:[#allocation3 + $0x68] sm:$0xff] %vm2364, %v3646
      %3695 = vst.msk [vmem:[#allocation3 + $0x70] sm:$0xff] %vm2364, %v3647
      %3696 = vst.msk [vmem:[#allocation3 + $0x78] sm:$0xff] %vm2364, %v3648
      %3697 = vst.msk [vmem:[#allocation3 + $0x80] sm:$0xff] %vm2364, %v3649
      %3698 = vst.msk [vmem:[#allocation3 + $0x88] sm:$0xff] %vm2364, %v3650
      %3699 = vst.msk [vmem:[#allocation3 + $0x90] sm:$0xff] %vm2364, %v3651
      %3700 = vst.msk [vmem:[#allocation3 + $0x98] sm:$0xff] %vm2364, %v3652
      %3701 = vst.msk [vmem:[#allocation3 + $0xa0] sm:$0xff] %vm2364, %v3653
      %3702 = vst.msk [vmem:[#allocation3 + $0xa8] sm:$0xff] %vm2364, %v3654
      %3703 = vst.msk [vmem:[#allocation3 + $0xb0] sm:$0xff] %vm2364, %v3655
      %3704 = vst.msk [vmem:[#allocation3 + $0xb8] sm:$0xff] %vm2364, %v3656
      %3705 = vst.msk [vmem:[#allocation3 + $0xc0] sm:$0xff] %vm2364, %v3657
      %3706 = vst.msk [vmem:[#allocation3 + $0xc8] sm:$0xff] %vm2364, %v3658
      %3707 = vst.msk [vmem:[#allocation3 + $0xd0] sm:$0xff] %vm2364, %v3659
      %3708 = vst.msk [vmem:[#allocation3 + $0xd8] sm:$0xff] %vm2364, %v3660
      %3709 = vst.msk [vmem:[#allocation3 + $0xe0] sm:$0xff] %vm2364, %v3661
      %3710 = vst.msk [vmem:[#allocation3 + $0xe8] sm:$0xff] %vm2364, %v3662
      %3711 = vst.msk [vmem:[#allocation3 + $0xf0] sm:$0xff] %vm2364, %v3663
      %3712 = vst.msk [vmem:[#allocation3 + $0xf8] sm:$0xff] %vm2364, %v3664
      %3713 = vst.msk [vmem:[#allocation3 + $0x100] sm:$0xff] %vm2364, %v3665
      %3714 = vst.msk [vmem:[#allocation3 + $0x108] sm:$0xff] %vm2364, %v3666
      %3715 = vst.msk [vmem:[#allocation3 + $0x110] sm:$0xff] %vm2364, %v3667
      %3716 = vst.msk [vmem:[#allocation3 + $0x118] sm:$0xff] %vm2364, %v3668
      %3717 = vst.msk [vmem:[#allocation3 + $0x120] sm:$0xff] %vm2364, %v3669
      %3718 = vst.msk [vmem:[#allocation3 + $0x128] sm:$0xff] %vm2364, %v3670
      %3719 = vst.msk [vmem:[#allocation3 + $0x130] sm:$0xff] %vm2364, %v3671
      %3720 = vst.msk [vmem:[#allocation3 + $0x138] sm:$0xff] %vm2364, %v3672
      %3721 = vst.msk [vmem:[#allocation3 + $0x140] sm:$0xff] %vm2364, %v3673
      %3722 = vst.msk [vmem:[#allocation3 + $0x148] sm:$0xff] %vm2364, %v3674
      %3723 = vst.msk [vmem:[#allocation3 + $0x150] sm:$0xff] %vm2364, %v3675
      %3724 = vst.msk [vmem:[#allocation3 + $0x158] sm:$0xff] %vm2364, %v3676
      %3725 = vst.msk [vmem:[#allocation3 + $0x160] sm:$0xff] %vm2364, %v3677
      %3726 = vst.msk [vmem:[#allocation3 + $0x168] sm:$0xff] %vm2364, %v3678
      %3727 = vst.msk [vmem:[#allocation3 + $0x170] sm:$0xff] %vm2364, %v3679
      %3728 = vst.msk [vmem:[#allocation3 + $0x178] sm:$0xff] %vm2364, %v3680
      %v3729 = vld [vmem:[#allocation2 + $0xd0] sm:$0xf]
      %v3730 = vld [vmem:[#allocation2 + $0xd4] sm:$0xf]
      %v3731 = vld [vmem:[#allocation2 + $0xd8] sm:$0xf]
      %v3732 = vld [vmem:[#allocation2 + $0xdc] sm:$0xf]
      %v3733 = vld [vmem:[#allocation2 + $0xe0] sm:$0xf]
      %v3734 = vld [vmem:[#allocation2 + $0xe4] sm:$0xf]
      %v3735 = vld [vmem:[#allocation2 + $0xe8] sm:$0xf]
      %v3736 = vld [vmem:[#allocation2 + $0xec] sm:$0xf]
      %v3737 = vld [vmem:[#allocation2 + $0xf0] sm:$0xf]
      %v3738 = vld [vmem:[#allocation2 + $0xf4] sm:$0xf]
      %v3739 = vld [vmem:[#allocation2 + $0xf8] sm:$0xf]
      %v3740 = vld [vmem:[#allocation2 + $0xfc] sm:$0xf]
      %v3741 = vld [vmem:[#allocation2 + $0x100] sm:$0xf]
      %v3742 = vld [vmem:[#allocation2 + $0x104] sm:$0xf]
      %v3743 = vld [vmem:[#allocation2 + $0x108] sm:$0xf]
      %v3744 = vld [vmem:[#allocation2 + $0x10c] sm:$0xf]
      %v3745 = vld [vmem:[#allocation2 + $0x110] sm:$0xf]
      %v3746 = vld [vmem:[#allocation2 + $0x114] sm:$0xf]
      %v3747 = vld [vmem:[#allocation2 + $0x118] sm:$0xf]
      %v3748 = vld [vmem:[#allocation2 + $0x11c] sm:$0xf]
      %v3749 = vld [vmem:[#allocation2 + $0x120] sm:$0xf]
      %v3750 = vld [vmem:[#allocation2 + $0x124] sm:$0xf]
      %v3751 = vld [vmem:[#allocation2 + $0x128] sm:$0xf]
      %v3752 = vld [vmem:[#allocation2 + $0x12c] sm:$0xf]
      %v3753 = vld [vmem:[#allocation2 + $0x130] sm:$0xf]
      %v3754 = vld [vmem:[#allocation2 + $0x134] sm:$0xf]
      %v3755 = vld [vmem:[#allocation2 + $0x138] sm:$0xf]
      %v3756 = vld [vmem:[#allocation2 + $0x13c] sm:$0xf]
      %v3757 = vld [vmem:[#allocation2 + $0x140] sm:$0xf]
      %v3758 = vld [vmem:[#allocation2 + $0x144] sm:$0xf]
      %v3759 = vld [vmem:[#allocation2 + $0x148] sm:$0xf]
      %v3760 = vld [vmem:[#allocation2 + $0x14c] sm:$0xf]
      %v3761 = vld [vmem:[#allocation2 + $0x150] sm:$0xf]
      %v3762 = vld [vmem:[#allocation2 + $0x154] sm:$0xf]
      %v3763 = vld [vmem:[#allocation2 + $0x158] sm:$0xf]
      %v3764 = vld [vmem:[#allocation2 + $0x15c] sm:$0xf]
      %v3765 = vld [vmem:[#allocation2 + $0x160] sm:$0xf]
      %v3766 = vld [vmem:[#allocation2 + $0x164] sm:$0xf]
      %v3767 = vld [vmem:[#allocation2 + $0x168] sm:$0xf]
      %v3768 = vld [vmem:[#allocation2 + $0x16c] sm:$0xf]
      %v3769 = vld [vmem:[#allocation2 + $0x170] sm:$0xf]
      %v3770 = vld [vmem:[#allocation2 + $0x174] sm:$0xf]
      %v3771 = vld [vmem:[#allocation2 + $0x178] sm:$0xf]
      %v3772 = vld [vmem:[#allocation2 + $0x17c] sm:$0xf]
      %v3773 = vld [vmem:[#allocation2 + $0x180] sm:$0xf]
      %v3774 = vld [vmem:[#allocation2 + $0x184] sm:$0xf]
      %v3775 = vld [vmem:[#allocation2 + $0x188] sm:$0xf]
      %v3776 = vld [vmem:[#allocation2 + $0x18c] sm:$0xf]
      %v3777 = vld [vmem:[%s3] sm:$0xf]
      %v3778 = vld [vmem:[%s3 + $0x4] sm:$0xf]
      %v3779 = vld [vmem:[%s3 + $0x8] sm:$0xf]
      %v3780 = vld [vmem:[%s3 + $0xc] sm:$0xf]
      %v3781 = vld [vmem:[%s3 + $0x10] sm:$0xf]
      %v3782 = vld [vmem:[%s3 + $0x14] sm:$0xf]
      %v3783 = vld [vmem:[%s3 + $0x18] sm:$0xf]
      %v3784 = vld [vmem:[%s3 + $0x1c] sm:$0xf]
      %v3785 = vld [vmem:[%s3 + $0x20] sm:$0xf]
      %v3786 = vld [vmem:[%s3 + $0x24] sm:$0xf]
      %v3787 = vld [vmem:[%s3 + $0x28] sm:$0xf]
      %v3788 = vld [vmem:[%s3 + $0x2c] sm:$0xf]
      %v3837 = vunpack.c.l.b16 %v3729
      %v3838 = vunpack.c.l.b16 %v3730
      %v3839 = vunpack.c.l.b16 %v3731
      %v3840 = vunpack.c.l.b16 %v3732
      %v3841 = vunpack.c.l.b16 %v3733
      %v3842 = vunpack.c.l.b16 %v3734
      %v3843 = vunpack.c.l.b16 %v3735
      %v3844 = vunpack.c.l.b16 %v3736
      %v3845 = vunpack.c.l.b16 %v3737
      %v3846 = vunpack.c.l.b16 %v3738
      %v3847 = vunpack.c.l.b16 %v3739
      %v3848 = vunpack.c.l.b16 %v3740
      %v3849 = vunpack.c.l.b16 %v3741
      %v3850 = vunpack.c.l.b16 %v3742
      %v3851 = vunpack.c.l.b16 %v3743
      %v3852 = vunpack.c.l.b16 %v3744
      %v3853 = vunpack.c.l.b16 %v3745
      %v3854 = vunpack.c.l.b16 %v3746
      %v3855 = vunpack.c.l.b16 %v3747
      %v3856 = vunpack.c.l.b16 %v3748
      %v3857 = vunpack.c.l.b16 %v3749
      %v3858 = vunpack.c.l.b16 %v3750
      %v3859 = vunpack.c.l.b16 %v3751
      %v3860 = vunpack.c.l.b16 %v3752
      %v3861 = vunpack.c.l.b16 %v3753
      %v3862 = vunpack.c.l.b16 %v3754
      %v3863 = vunpack.c.l.b16 %v3755
      %v3864 = vunpack.c.l.b16 %v3756
      %v3865 = vunpack.c.l.b16 %v3757
      %v3866 = vunpack.c.l.b16 %v3758
      %v3867 = vunpack.c.l.b16 %v3759
      %v3868 = vunpack.c.l.b16 %v3760
      %v3869 = vunpack.c.l.b16 %v3761
      %v3870 = vunpack.c.l.b16 %v3762
      %v3871 = vunpack.c.l.b16 %v3763
      %v3872 = vunpack.c.l.b16 %v3764
      %v3873 = vunpack.c.l.b16 %v3765
      %v3874 = vunpack.c.l.b16 %v3766
      %v3875 = vunpack.c.l.b16 %v3767
      %v3876 = vunpack.c.l.b16 %v3768
      %v3877 = vunpack.c.l.b16 %v3769
      %v3878 = vunpack.c.l.b16 %v3770
      %v3879 = vunpack.c.l.b16 %v3771
      %v3880 = vunpack.c.l.b16 %v3772
      %v3881 = vunpack.c.l.b16 %v3773
      %v3882 = vunpack.c.l.b16 %v3774
      %v3883 = vunpack.c.l.b16 %v3775
      %v3884 = vunpack.c.l.b16 %v3776
      %v3885 = vpack.c.b16 %v3838, %v3837
      %v3886 = vpack.c.b16 %v3840, %v3839
      %v3887 = vpack.c.b16 %v3842, %v3841
      %v3888 = vpack.c.b16 %v3844, %v3843
      %v3889 = vpack.c.b16 %v3846, %v3845
      %v3890 = vpack.c.b16 %v3848, %v3847
      %v3891 = vpack.c.b16 %v3850, %v3849
      %v3892 = vpack.c.b16 %v3852, %v3851
      %v3893 = vpack.c.b16 %v3854, %v3853
      %v3894 = vpack.c.b16 %v3856, %v3855
      %v3895 = vpack.c.b16 %v3858, %v3857
      %v3896 = vpack.c.b16 %v3860, %v3859
      %v3897 = vpack.c.b16 %v3862, %v3861
      %v3898 = vpack.c.b16 %v3864, %v3863
      %v3899 = vpack.c.b16 %v3866, %v3865
      %v3900 = vpack.c.b16 %v3868, %v3867
      %v3901 = vpack.c.b16 %v3870, %v3869
      %v3902 = vpack.c.b16 %v3872, %v3871
      %v3903 = vpack.c.b16 %v3874, %v3873
      %v3904 = vpack.c.b16 %v3876, %v3875
      %v3905 = vpack.c.b16 %v3878, %v3877
      %v3906 = vpack.c.b16 %v3880, %v3879
      %v3907 = vpack.c.b16 %v3882, %v3881
      %v3908 = vpack.c.b16 %v3884, %v3883
      %v3921 = vunpack.c.l.b16 %v3777
      %v3922 = vunpack.c.l.b16 %v3778
      %v3923 = vunpack.c.l.b16 %v3779
      %v3924 = vunpack.c.l.b16 %v3780
      %v3925 = vunpack.c.l.b16 %v3781
      %v3926 = vunpack.c.l.b16 %v3782
      %v3927 = vunpack.c.l.b16 %v3783
      %v3928 = vunpack.c.l.b16 %v3784
      %v3929 = vunpack.c.l.b16 %v3785
      %v3930 = vunpack.c.l.b16 %v3786
      %v3931 = vunpack.c.l.b16 %v3787
      %v3932 = vunpack.c.l.b16 %v3788
      %v3933 = vpack.c.b16 %v3922, %v3921
      %v3934 = vpack.c.b16 %v3924, %v3923
      %v3935 = vpack.c.b16 %v3926, %v3925
      %v3936 = vpack.c.b16 %v3928, %v3927
      %v3937 = vpack.c.b16 %v3930, %v3929
      %v3938 = vpack.c.b16 %v3932, %v3931
      %v3946 = vsel %vm2066, %v3885, 0
      %v3949 = vsel %vm2066, %v3886, 0
      %v3952 = vsel %vm2066, %v3887, 0
      %v3955 = vsel %vm2066, %v3888, 0
      %v3958 = vsel %vm2066, %v3889, 0
      %v3961 = vsel %vm2066, %v3890, 0
      %v3964 = vsel %vm2066, %v3891, 0
      %v3967 = vsel %vm2066, %v3892, 0
      %v3970 = vsel %vm2066, %v3893, 0
      %v3973 = vsel %vm2066, %v3894, 0
      %v3976 = vsel %vm2066, %v3895, 0
      %v3979 = vsel %vm2066, %v3896, 0
      %v3982 = vsel %vm2066, %v3897, 0
      %v3985 = vsel %vm2066, %v3898, 0
      %v3988 = vsel %vm2066, %v3899, 0
      %v3991 = vsel %vm2066, %v3900, 0
      %v3994 = vsel %vm2066, %v3901, 0
      %v3997 = vsel %vm2066, %v3902, 0
      %v4000 = vsel %vm2066, %v3903, 0
      %v4003 = vsel %vm2066, %v3904, 0
      %v4006 = vsel %vm2066, %v3905, 0
      %v4009 = vsel %vm2066, %v3906, 0
      %v4012 = vsel %vm2066, %v3907, 0
      %v4015 = vsel %vm2066, %v3908, 0
      %4017 = vmatprep.subr.bf16.mxu0 0
      %4018 = vmatpush1.bf16.msra.mxu0 0
      %4019 = vmatprep.subr.bf16.mxu0 0
      %4020 = vmatpush1.bf16.msra.mxu0 0
      %4021 = vmatprep.subr.bf16.mxu0 0
      %4022 = vmatpush1.bf16.msra.mxu0 %v3938
      %4023 = vmatprep.subr.bf16.mxu0 0
      %4024 = vmatpush1.bf16.msra.mxu0 %v3937
      %4025 = vmatprep.subr.bf16.mxu0 0
      %4026 = vmatpush1.bf16.msra.mxu0 %v3936
      %4027 = vmatprep.subr.bf16.mxu0 0
      %4028 = vmatpush1.bf16.msra.mxu0 %v3935
      %4029 = vmatprep.subr.bf16.mxu0 0
      %4030 = vmatpush1.bf16.msra.mxu0 %v3934
      %4031 = vmatprep.subr.bf16.mxu0 0
      %4032 = vmatpush1.bf16.msra.mxu0 %v3933
      %4033 = vmatprep.subr.bf16.mxu0 0
      %4034 = vmatpush2.bf16.msra.mxu0 0
      %4035 = vmatprep.subr.bf16.mxu0 0
      %4036 = vmatpush2.bf16.msra.mxu0 0
      %4037 = vmatprep.subr.bf16.mxu0 0
      %4038 = vmatpush2.bf16.msra.mxu0 0
      %4039 = vmatprep.subr.bf16.mxu0 0
      %4040 = vmatpush2.bf16.msra.mxu0 0
      %4041 = vmatprep.subr.bf16.mxu0 0
      %4042 = vmatpush2.bf16.msra.mxu0 0
      %4043 = vmatprep.subr.bf16.mxu0 0
      %4044 = vmatpush2.bf16.msra.mxu0 0
      %4045 = vmatprep.subr.bf16.mxu0 0
      %4046 = vmatpush2.bf16.msra.mxu0 0
      %4047 = vmatprep.subr.bf16.mxu0 0
      %4048 = vmatpush2.bf16.msra.mxu0 0
      %4049 = vmatprep.mubr.bf16.mxu0 0
      %4050 = vmatmul.mubr.bf16.gmra.mxu0 %v3946
      %v4051 = vpop.f32.mrf.mxu0
      %v4052 = vadd.f32 0.0, %v4051
      %v4053 = vpop.f32.mrf.mxu0
      %v4054 = vpop.f32.mrf.mxu0
      %v4055 = vadd.f32 0.0, %v4054
      %v4056 = vpop.f32.mrf.mxu0
      %4057 = vmatprep.mubr.bf16.mxu0 0
      %4058 = vmatmul.mubr.bf16.gmra.mxu0 %v3949
      %v4059 = vpop.f32.mrf.mxu0
      %v4060 = vadd.f32 0.0, %v4059
      %v4061 = vpop.f32.mrf.mxu0
      %v4062 = vpop.f32.mrf.mxu0
      %v4063 = vadd.f32 0.0, %v4062
      %v4064 = vpop.f32.mrf.mxu0
      %4065 = vmatprep.mubr.bf16.mxu0 0
      %4066 = vmatmul.mubr.bf16.gmra.mxu0 %v3952
      %v4067 = vpop.f32.mrf.mxu0
      %v4068 = vadd.f32 0.0, %v4067
      %v4069 = vpop.f32.mrf.mxu0
      %v4070 = vpop.f32.mrf.mxu0
      %v4071 = vadd.f32 0.0, %v4070
      %v4072 = vpop.f32.mrf.mxu0
      %4073 = vmatprep.mubr.bf16.mxu0 0
      %4074 = vmatmul.mubr.bf16.gmra.mxu0 %v3955
      %v4075 = vpop.f32.mrf.mxu0
      %v4076 = vadd.f32 0.0, %v4075
      %v4077 = vpop.f32.mrf.mxu0
      %v4078 = vpop.f32.mrf.mxu0
      %v4079 = vadd.f32 0.0, %v4078
      %v4080 = vpop.f32.mrf.mxu0
      %4081 = vmatprep.mubr.bf16.mxu0 0
      %4082 = vmatmul.mubr.bf16.gmra.mxu0 %v3958
      %v4083 = vpop.f32.mrf.mxu0
      %v4084 = vadd.f32 0.0, %v4083
      %v4085 = vpop.f32.mrf.mxu0
      %v4086 = vpop.f32.mrf.mxu0
      %v4087 = vadd.f32 0.0, %v4086
      %v4088 = vpop.f32.mrf.mxu0
      %4089 = vmatprep.mubr.bf16.mxu0 0
      %4090 = vmatmul.mubr.bf16.gmra.mxu0 %v3961
      %v4091 = vpop.f32.mrf.mxu0
      %v4092 = vadd.f32 0.0, %v4091
      %v4093 = vpop.f32.mrf.mxu0
      %v4094 = vpop.f32.mrf.mxu0
      %v4095 = vadd.f32 0.0, %v4094
      %v4096 = vpop.f32.mrf.mxu0
      %4097 = vmatprep.mubr.bf16.mxu0 0
      %4098 = vmatmul.mubr.bf16.gmra.mxu0 %v3964
      %v4099 = vpop.f32.mrf.mxu0
      %v4100 = vadd.f32 0.0, %v4099
      %v4101 = vpop.f32.mrf.mxu0
      %v4102 = vpop.f32.mrf.mxu0
      %v4103 = vadd.f32 0.0, %v4102
      %v4104 = vpop.f32.mrf.mxu0
      %4105 = vmatprep.mubr.bf16.mxu0 0
      %4106 = vmatmul.mubr.bf16.gmra.mxu0 %v3967
      %v4107 = vpop.f32.mrf.mxu0
      %v4108 = vadd.f32 0.0, %v4107
      %v4109 = vpop.f32.mrf.mxu0
      %v4110 = vpop.f32.mrf.mxu0
      %v4111 = vadd.f32 0.0, %v4110
      %v4112 = vpop.f32.mrf.mxu0
      %4113 = vmatprep.mubr.bf16.mxu0 0
      %4114 = vmatmul.mubr.bf16.gmra.mxu0 %v3970
      %v4115 = vpop.f32.mrf.mxu0
      %v4116 = vadd.f32 0.0, %v4115
      %v4117 = vpop.f32.mrf.mxu0
      %v4118 = vpop.f32.mrf.mxu0
      %v4119 = vadd.f32 0.0, %v4118
      %v4120 = vpop.f32.mrf.mxu0
      %4121 = vmatprep.mubr.bf16.mxu0 0
      %4122 = vmatmul.mubr.bf16.gmra.mxu0 %v3973
      %v4123 = vpop.f32.mrf.mxu0
      %v4124 = vadd.f32 0.0, %v4123
      %v4125 = vpop.f32.mrf.mxu0
      %v4126 = vpop.f32.mrf.mxu0
      %v4127 = vadd.f32 0.0, %v4126
      %v4128 = vpop.f32.mrf.mxu0
      %4129 = vmatprep.mubr.bf16.mxu0 0
      %4130 = vmatmul.mubr.bf16.gmra.mxu0 %v3976
      %v4131 = vpop.f32.mrf.mxu0
      %v4132 = vadd.f32 0.0, %v4131
      %v4133 = vpop.f32.mrf.mxu0
      %v4134 = vpop.f32.mrf.mxu0
      %v4135 = vadd.f32 0.0, %v4134
      %v4136 = vpop.f32.mrf.mxu0
      %4137 = vmatprep.mubr.bf16.mxu0 0
      %4138 = vmatmul.mubr.bf16.gmra.mxu0 %v3979
      %v4139 = vpop.f32.mrf.mxu0
      %v4140 = vadd.f32 0.0, %v4139
      %v4141 = vpop.f32.mrf.mxu0
      %v4142 = vpop.f32.mrf.mxu0
      %v4143 = vadd.f32 0.0, %v4142
      %v4144 = vpop.f32.mrf.mxu0
      %4145 = vmatprep.mubr.bf16.mxu0 0
      %4146 = vmatmul.mubr.bf16.gmra.mxu0 %v3982
      %v4147 = vpop.f32.mrf.mxu0
      %v4148 = vadd.f32 0.0, %v4147
      %v4149 = vpop.f32.mrf.mxu0
      %v4150 = vpop.f32.mrf.mxu0
      %v4151 = vadd.f32 0.0, %v4150
      %v4152 = vpop.f32.mrf.mxu0
      %4153 = vmatprep.mubr.bf16.mxu0 0
      %4154 = vmatmul.mubr.bf16.gmra.mxu0 %v3985
      %v4155 = vpop.f32.mrf.mxu0
      %v4156 = vadd.f32 0.0, %v4155
      %v4157 = vpop.f32.mrf.mxu0
      %v4158 = vpop.f32.mrf.mxu0
      %v4159 = vadd.f32 0.0, %v4158
      %v4160 = vpop.f32.mrf.mxu0
      %4161 = vmatprep.mubr.bf16.mxu0 0
      %4162 = vmatmul.mubr.bf16.gmra.mxu0 %v3988
      %v4163 = vpop.f32.mrf.mxu0
      %v4164 = vadd.f32 0.0, %v4163
      %v4165 = vpop.f32.mrf.mxu0
      %v4166 = vpop.f32.mrf.mxu0
      %v4167 = vadd.f32 0.0, %v4166
      %v4168 = vpop.f32.mrf.mxu0
      %4169 = vmatprep.mubr.bf16.mxu0 0
      %4170 = vmatmul.mubr.bf16.gmra.mxu0 %v3991
      %v4171 = vpop.f32.mrf.mxu0
      %v4172 = vadd.f32 0.0, %v4171
      %v4173 = vpop.f32.mrf.mxu0
      %v4174 = vpop.f32.mrf.mxu0
      %v4175 = vadd.f32 0.0, %v4174
      %v4176 = vpop.f32.mrf.mxu0
      %4177 = vmatprep.mubr.bf16.mxu0 0
      %4178 = vmatmul.mubr.bf16.gmra.mxu0 %v3994
      %v4179 = vpop.f32.mrf.mxu0
      %v4180 = vadd.f32 0.0, %v4179
      %v4181 = vpop.f32.mrf.mxu0
      %v4182 = vpop.f32.mrf.mxu0
      %v4183 = vadd.f32 0.0, %v4182
      %v4184 = vpop.f32.mrf.mxu0
      %4185 = vmatprep.mubr.bf16.mxu0 0
      %4186 = vmatmul.mubr.bf16.gmra.mxu0 %v3997
      %v4187 = vpop.f32.mrf.mxu0
      %v4188 = vadd.f32 0.0, %v4187
      %v4189 = vpop.f32.mrf.mxu0
      %v4190 = vpop.f32.mrf.mxu0
      %v4191 = vadd.f32 0.0, %v4190
      %v4192 = vpop.f32.mrf.mxu0
      %4193 = vmatprep.mubr.bf16.mxu0 0
      %4194 = vmatmul.mubr.bf16.gmra.mxu0 %v4000
      %v4195 = vpop.f32.mrf.mxu0
      %v4196 = vadd.f32 0.0, %v4195
      %v4197 = vpop.f32.mrf.mxu0
      %v4198 = vpop.f32.mrf.mxu0
      %v4199 = vadd.f32 0.0, %v4198
      %v4200 = vpop.f32.mrf.mxu0
      %4201 = vmatprep.mubr.bf16.mxu0 0
      %4202 = vmatmul.mubr.bf16.gmra.mxu0 %v4003
      %v4203 = vpop.f32.mrf.mxu0
      %v4204 = vadd.f32 0.0, %v4203
      %v4205 = vpop.f32.mrf.mxu0
      %v4206 = vpop.f32.mrf.mxu0
      %v4207 = vadd.f32 0.0, %v4206
      %v4208 = vpop.f32.mrf.mxu0
      %4209 = vmatprep.mubr.bf16.mxu0 0
      %4210 = vmatmul.mubr.bf16.gmra.mxu0 %v4006
      %v4211 = vpop.f32.mrf.mxu0
      %v4212 = vadd.f32 0.0, %v4211
      %v4213 = vpop.f32.mrf.mxu0
      %v4214 = vpop.f32.mrf.mxu0
      %v4215 = vadd.f32 0.0, %v4214
      %v4216 = vpop.f32.mrf.mxu0
      %4217 = vmatprep.mubr.bf16.mxu0 0
      %4218 = vmatmul.mubr.bf16.gmra.mxu0 %v4009
      %v4219 = vpop.f32.mrf.mxu0
      %v4220 = vadd.f32 0.0, %v4219
      %v4221 = vpop.f32.mrf.mxu0
      %v4222 = vpop.f32.mrf.mxu0
      %v4223 = vadd.f32 0.0, %v4222
      %v4224 = vpop.f32.mrf.mxu0
      %4225 = vmatprep.mubr.bf16.mxu0 0
      %4226 = vmatmul.mubr.bf16.gmra.mxu0 %v4012
      %v4227 = vpop.f32.mrf.mxu0
      %v4228 = vadd.f32 0.0, %v4227
      %v4229 = vpop.f32.mrf.mxu0
      %v4230 = vpop.f32.mrf.mxu0
      %v4231 = vadd.f32 0.0, %v4230
      %v4232 = vpop.f32.mrf.mxu0
      %4233 = vmatprep.mubr.bf16.mxu0 0
      %4234 = vmatmul.mubr.bf16.gmra.mxu0 %v4015
      %v4235 = vpop.f32.mrf.mxu0
      %v4236 = vadd.f32 0.0, %v4235
      %v4237 = vpop.f32.mrf.mxu0
      %v4238 = vpop.f32.mrf.mxu0
      %v4239 = vadd.f32 0.0, %v4238
      %v4240 = vpop.f32.mrf.mxu0
      %4241 = vdwg.mxu0
      %s4242 = scalar_lea.vmem [#allocation3], 384
      %4243 = vst.msk [vmem:[%s4242] sm:$0xff] %vm2364, %v4052
      %4244 = vst.msk [vmem:[%s4242 + $0x8] sm:$0xff] %vm2364, %v4055
      %4245 = vst.msk [vmem:[%s4242 + $0x10] sm:$0xff] %vm2364, %v4060
      %4246 = vst.msk [vmem:[%s4242 + $0x18] sm:$0xff] %vm2364, %v4063
      %4247 = vst.msk [vmem:[%s4242 + $0x20] sm:$0xff] %vm2364, %v4068
      %4248 = vst.msk [vmem:[%s4242 + $0x28] sm:$0xff] %vm2364, %v4071
      %4249 = vst.msk [vmem:[%s4242 + $0x30] sm:$0xff] %vm2364, %v4076
      %4250 = vst.msk [vmem:[%s4242 + $0x38] sm:$0xff] %vm2364, %v4079
      %4251 = vst.msk [vmem:[%s4242 + $0x40] sm:$0xff] %vm2364, %v4084
      %4252 = vst.msk [vmem:[%s4242 + $0x48] sm:$0xff] %vm2364, %v4087
      %4253 = vst.msk [vmem:[%s4242 + $0x50] sm:$0xff] %vm2364, %v4092
      %4254 = vst.msk [vmem:[%s4242 + $0x58] sm:$0xff] %vm2364, %v4095
      %4255 = vst.msk [vmem:[%s4242 + $0x60] sm:$0xff] %vm2364, %v4100
      %4256 = vst.msk [vmem:[%s4242 + $0x68] sm:$0xff] %vm2364, %v4103
      %4257 = vst.msk [vmem:[%s4242 + $0x70] sm:$0xff] %vm2364, %v4108
      %4258 = vst.msk [vmem:[%s4242 + $0x78] sm:$0xff] %vm2364, %v4111
      %4259 = vst.msk [vmem:[%s4242 + $0x80] sm:$0xff] %vm2364, %v4116
      %4260 = vst.msk [vmem:[%s4242 + $0x88] sm:$0xff] %vm2364, %v4119
      %4261 = vst.msk [vmem:[%s4242 + $0x90] sm:$0xff] %vm2364, %v4124
      %4262 = vst.msk [vmem:[%s4242 + $0x98] sm:$0xff] %vm2364, %v4127
      %4263 = vst.msk [vmem:[%s4242 + $0xa0] sm:$0xff] %vm2364, %v4132
      %4264 = vst.msk [vmem:[%s4242 + $0xa8] sm:$0xff] %vm2364, %v4135
      %4265 = vst.msk [vmem:[%s4242 + $0xb0] sm:$0xff] %vm2364, %v4140
      %4266 = vst.msk [vmem:[%s4242 + $0xb8] sm:$0xff] %vm2364, %v4143
      %4267 = vst.msk [vmem:[%s4242 + $0xc0] sm:$0xff] %vm2364, %v4148
      %4268 = vst.msk [vmem:[%s4242 + $0xc8] sm:$0xff] %vm2364, %v4151
      %4269 = vst.msk [vmem:[%s4242 + $0xd0] sm:$0xff] %vm2364, %v4156
      %4270 = vst.msk [vmem:[%s4242 + $0xd8] sm:$0xff] %vm2364, %v4159
      %4271 = vst.msk [vmem:[%s4242 + $0xe0] sm:$0xff] %vm2364, %v4164
      %4272 = vst.msk [vmem:[%s4242 + $0xe8] sm:$0xff] %vm2364, %v4167
      %4273 = vst.msk [vmem:[%s4242 + $0xf0] sm:$0xff] %vm2364, %v4172
      %4274 = vst.msk [vmem:[%s4242 + $0xf8] sm:$0xff] %vm2364, %v4175
      %4275 = vst.msk [vmem:[%s4242 + $0x100] sm:$0xff] %vm2364, %v4180
      %4276 = vst.msk [vmem:[%s4242 + $0x108] sm:$0xff] %vm2364, %v4183
      %4277 = vst.msk [vmem:[%s4242 + $0x110] sm:$0xff] %vm2364, %v4188
      %4278 = vst.msk [vmem:[%s4242 + $0x118] sm:$0xff] %vm2364, %v4191
      %4279 = vst.msk [vmem:[%s4242 + $0x120] sm:$0xff] %vm2364, %v4196
      %4280 = vst.msk [vmem:[%s4242 + $0x128] sm:$0xff] %vm2364, %v4199
      %4281 = vst.msk [vmem:[%s4242 + $0x130] sm:$0xff] %vm2364, %v4204
      %4282 = vst.msk [vmem:[%s4242 + $0x138] sm:$0xff] %vm2364, %v4207
      %4283 = vst.msk [vmem:[%s4242 + $0x140] sm:$0xff] %vm2364, %v4212
      %4284 = vst.msk [vmem:[%s4242 + $0x148] sm:$0xff] %vm2364, %v4215
      %4285 = vst.msk [vmem:[%s4242 + $0x150] sm:$0xff] %vm2364, %v4220
      %4286 = vst.msk [vmem:[%s4242 + $0x158] sm:$0xff] %vm2364, %v4223
      %4287 = vst.msk [vmem:[%s4242 + $0x160] sm:$0xff] %vm2364, %v4228
      %4288 = vst.msk [vmem:[%s4242 + $0x168] sm:$0xff] %vm2364, %v4231
      %4289 = vst.msk [vmem:[%s4242 + $0x170] sm:$0xff] %vm2364, %v4236
      %4290 = vst.msk [vmem:[%s4242 + $0x178] sm:$0xff] %vm2364, %v4239
      %v4291 = vld [vmem:[#allocation2 + $0xd8] sm:$0xf]
      %v4292 = vld [vmem:[#allocation2 + $0xdc] sm:$0xf]
      %v4293 = vld [vmem:[#allocation2 + $0xe0] sm:$0xf]
      %v4294 = vld [vmem:[#allocation2 + $0xe4] sm:$0xf]
      %v4295 = vld [vmem:[#allocation2 + $0xe8] sm:$0xf]
      %v4296 = vld [vmem:[#allocation2 + $0xec] sm:$0xf]
      %v4297 = vld [vmem:[#allocation2 + $0xf0] sm:$0xf]
      %v4298 = vld [vmem:[#allocation2 + $0xf4] sm:$0xf]
      %v4299 = vld [vmem:[#allocation2 + $0xf8] sm:$0xf]
      %v4300 = vld [vmem:[#allocation2 + $0xfc] sm:$0xf]
      %v4301 = vld [vmem:[#allocation2 + $0x100] sm:$0xf]
      %v4302 = vld [vmem:[#allocation2 + $0x104] sm:$0xf]
      %v4303 = vld [vmem:[#allocation2 + $0x108] sm:$0xf]
      %v4304 = vld [vmem:[#allocation2 + $0x10c] sm:$0xf]
      %v4305 = vld [vmem:[#allocation2 + $0x110] sm:$0xf]
      %v4306 = vld [vmem:[#allocation2 + $0x114] sm:$0xf]
      %v4307 = vld [vmem:[#allocation2 + $0x118] sm:$0xf]
      %v4308 = vld [vmem:[#allocation2 + $0x11c] sm:$0xf]
      %v4309 = vld [vmem:[#allocation2 + $0x120] sm:$0xf]
      %v4310 = vld [vmem:[#allocation2 + $0x124] sm:$0xf]
      %v4311 = vld [vmem:[#allocation2 + $0x128] sm:$0xf]
      %v4312 = vld [vmem:[#allocation2 + $0x12c] sm:$0xf]
      %v4313 = vld [vmem:[#allocation2 + $0x130] sm:$0xf]
      %v4314 = vld [vmem:[#allocation2 + $0x134] sm:$0xf]
      %v4315 = vld [vmem:[#allocation2 + $0x138] sm:$0xf]
      %v4316 = vld [vmem:[#allocation2 + $0x13c] sm:$0xf]
      %v4317 = vld [vmem:[#allocation2 + $0x140] sm:$0xf]
      %v4318 = vld [vmem:[#allocation2 + $0x144] sm:$0xf]
      %v4319 = vld [vmem:[#allocation2 + $0x148] sm:$0xf]
      %v4320 = vld [vmem:[#allocation2 + $0x14c] sm:$0xf]
      %v4321 = vld [vmem:[#allocation2 + $0x150] sm:$0xf]
      %v4322 = vld [vmem:[#allocation2 + $0x154] sm:$0xf]
      %v4323 = vld [vmem:[#allocation2 + $0x158] sm:$0xf]
      %v4324 = vld [vmem:[#allocation2 + $0x15c] sm:$0xf]
      %v4325 = vld [vmem:[#allocation2 + $0x160] sm:$0xf]
      %v4326 = vld [vmem:[#allocation2 + $0x164] sm:$0xf]
      %v4327 = vld [vmem:[#allocation2 + $0x168] sm:$0xf]
      %v4328 = vld [vmem:[#allocation2 + $0x16c] sm:$0xf]
      %v4329 = vld [vmem:[#allocation2 + $0x170] sm:$0xf]
      %v4330 = vld [vmem:[#allocation2 + $0x174] sm:$0xf]
      %v4331 = vld [vmem:[#allocation2 + $0x178] sm:$0xf]
      %v4332 = vld [vmem:[#allocation2 + $0x17c] sm:$0xf]
      %v4333 = vld [vmem:[#allocation2 + $0x180] sm:$0xf]
      %v4334 = vld [vmem:[#allocation2 + $0x184] sm:$0xf]
      %v4335 = vld [vmem:[#allocation2 + $0x188] sm:$0xf]
      %v4336 = vld [vmem:[#allocation2 + $0x18c] sm:$0xf]
      %v4337 = vld [vmem:[#allocation2 + $0x190] sm:$0xf]
      %v4338 = vld [vmem:[#allocation2 + $0x194] sm:$0xf]
      %v4339 = vld [vmem:[%s2461] sm:$0xf]
      %v4340 = vld [vmem:[%s2461 + $0x4] sm:$0xf]
      %v4341 = vld [vmem:[%s2461 + $0x8] sm:$0xf]
      %v4342 = vld [vmem:[%s2461 + $0xc] sm:$0xf]
      %v4343 = vld [vmem:[%s2461 + $0x10] sm:$0xf]
      %v4344 = vld [vmem:[%s2461 + $0x14] sm:$0xf]
      %v4345 = vld [vmem:[%s2461 + $0x18] sm:$0xf]
      %v4346 = vld [vmem:[%s2461 + $0x1c] sm:$0xf]
      %v4347 = vld [vmem:[%s2461 + $0x20] sm:$0xf]
      %v4348 = vld [vmem:[%s2461 + $0x24] sm:$0xf]
      %v4349 = vld [vmem:[%s2461 + $0x28] sm:$0xf]
      %v4350 = vld [vmem:[%s2461 + $0x2c] sm:$0xf]
      %v4399 = vunpack.c.l.b16 %v4291
      %v4400 = vunpack.c.l.b16 %v4292
      %v4401 = vunpack.c.l.b16 %v4293
      %v4402 = vunpack.c.l.b16 %v4294
      %v4403 = vunpack.c.l.b16 %v4295
      %v4404 = vunpack.c.l.b16 %v4296
      %v4405 = vunpack.c.l.b16 %v4297
      %v4406 = vunpack.c.l.b16 %v4298
      %v4407 = vunpack.c.l.b16 %v4299
      %v4408 = vunpack.c.l.b16 %v4300
      %v4409 = vunpack.c.l.b16 %v4301
      %v4410 = vunpack.c.l.b16 %v4302
      %v4411 = vunpack.c.l.b16 %v4303
      %v4412 = vunpack.c.l.b16 %v4304
      %v4413 = vunpack.c.l.b16 %v4305
      %v4414 = vunpack.c.l.b16 %v4306
      %v4415 = vunpack.c.l.b16 %v4307
      %v4416 = vunpack.c.l.b16 %v4308
      %v4417 = vunpack.c.l.b16 %v4309
      %v4418 = vunpack.c.l.b16 %v4310
      %v4419 = vunpack.c.l.b16 %v4311
      %v4420 = vunpack.c.l.b16 %v4312
      %v4421 = vunpack.c.l.b16 %v4313
      %v4422 = vunpack.c.l.b16 %v4314
      %v4423 = vunpack.c.l.b16 %v4315
      %v4424 = vunpack.c.l.b16 %v4316
      %v4425 = vunpack.c.l.b16 %v4317
      %v4426 = vunpack.c.l.b16 %v4318
      %v4427 = vunpack.c.l.b16 %v4319
      %v4428 = vunpack.c.l.b16 %v4320
      %v4429 = vunpack.c.l.b16 %v4321
      %v4430 = vunpack.c.l.b16 %v4322
      %v4431 = vunpack.c.l.b16 %v4323
      %v4432 = vunpack.c.l.b16 %v4324
      %v4433 = vunpack.c.l.b16 %v4325
      %v4434 = vunpack.c.l.b16 %v4326
      %v4435 = vunpack.c.l.b16 %v4327
      %v4436 = vunpack.c.l.b16 %v4328
      %v4437 = vunpack.c.l.b16 %v4329
      %v4438 = vunpack.c.l.b16 %v4330
      %v4439 = vunpack.c.l.b16 %v4331
      %v4440 = vunpack.c.l.b16 %v4332
      %v4441 = vunpack.c.l.b16 %v4333
      %v4442 = vunpack.c.l.b16 %v4334
      %v4443 = vunpack.c.l.b16 %v4335
      %v4444 = vunpack.c.l.b16 %v4336
      %v4445 = vunpack.c.l.b16 %v4337
      %v4446 = vunpack.c.l.b16 %v4338
      %v4447 = vpack.c.b16 %v4400, %v4399
      %v4448 = vpack.c.b16 %v4402, %v4401
      %v4449 = vpack.c.b16 %v4404, %v4403
      %v4450 = vpack.c.b16 %v4406, %v4405
      %v4451 = vpack.c.b16 %v4408, %v4407
      %v4452 = vpack.c.b16 %v4410, %v4409
      %v4453 = vpack.c.b16 %v4412, %v4411
      %v4454 = vpack.c.b16 %v4414, %v4413
      %v4455 = vpack.c.b16 %v4416, %v4415
      %v4456 = vpack.c.b16 %v4418, %v4417
      %v4457 = vpack.c.b16 %v4420, %v4419
      %v4458 = vpack.c.b16 %v4422, %v4421
      %v4459 = vpack.c.b16 %v4424, %v4423
      %v4460 = vpack.c.b16 %v4426, %v4425
      %v4461 = vpack.c.b16 %v4428, %v4427
      %v4462 = vpack.c.b16 %v4430, %v4429
      %v4463 = vpack.c.b16 %v4432, %v4431
      %v4464 = vpack.c.b16 %v4434, %v4433
      %v4465 = vpack.c.b16 %v4436, %v4435
      %v4466 = vpack.c.b16 %v4438, %v4437
      %v4467 = vpack.c.b16 %v4440, %v4439
      %v4468 = vpack.c.b16 %v4442, %v4441
      %v4469 = vpack.c.b16 %v4444, %v4443
      %v4470 = vpack.c.b16 %v4446, %v4445
      %v4483 = vunpack.c.l.b16 %v4339
      %v4484 = vunpack.c.l.b16 %v4340
      %v4485 = vunpack.c.l.b16 %v4341
      %v4486 = vunpack.c.l.b16 %v4342
      %v4487 = vunpack.c.l.b16 %v4343
      %v4488 = vunpack.c.l.b16 %v4344
      %v4489 = vunpack.c.l.b16 %v4345
      %v4490 = vunpack.c.l.b16 %v4346
      %v4491 = vunpack.c.l.b16 %v4347
      %v4492 = vunpack.c.l.b16 %v4348
      %v4493 = vunpack.c.l.b16 %v4349
      %v4494 = vunpack.c.l.b16 %v4350
      %v4495 = vpack.c.b16 %v4484, %v4483
      %v4496 = vpack.c.b16 %v4486, %v4485
      %v4497 = vpack.c.b16 %v4488, %v4487
      %v4498 = vpack.c.b16 %v4490, %v4489
      %v4499 = vpack.c.b16 %v4492, %v4491
      %v4500 = vpack.c.b16 %v4494, %v4493
      %v4508 = vsel %vm2066, %v4447, 0
      %v4511 = vsel %vm2066, %v4448, 0
      %v4514 = vsel %vm2066, %v4449, 0
      %v4517 = vsel %vm2066, %v4450, 0
      %v4520 = vsel %vm2066, %v4451, 0
      %v4523 = vsel %vm2066, %v4452, 0
      %v4526 = vsel %vm2066, %v4453, 0
      %v4529 = vsel %vm2066, %v4454, 0
      %v4532 = vsel %vm2066, %v4455, 0
      %v4535 = vsel %vm2066, %v4456, 0
      %v4538 = vsel %vm2066, %v4457, 0
      %v4541 = vsel %vm2066, %v4458, 0
      %v4544 = vsel %vm2066, %v4459, 0
      %v4547 = vsel %vm2066, %v4460, 0
      %v4550 = vsel %vm2066, %v4461, 0
      %v4553 = vsel %vm2066, %v4462, 0
      %v4556 = vsel %vm2066, %v4463, 0
      %v4559 = vsel %vm2066, %v4464, 0
      %v4562 = vsel %vm2066, %v4465, 0
      %v4565 = vsel %vm2066, %v4466, 0
      %v4568 = vsel %vm2066, %v4467, 0
      %v4571 = vsel %vm2066, %v4468, 0
      %v4574 = vsel %vm2066, %v4469, 0
      %v4577 = vsel %vm2066, %v4470, 0
      %4579 = vmatprep.subr.bf16.mxu0 0
      %4580 = vmatpush1.bf16.msra.mxu0 0
      %4581 = vmatprep.subr.bf16.mxu0 0
      %4582 = vmatpush1.bf16.msra.mxu0 0
      %4583 = vmatprep.subr.bf16.mxu0 0
      %4584 = vmatpush1.bf16.msra.mxu0 %v4500
      %4585 = vmatprep.subr.bf16.mxu0 0
      %4586 = vmatpush1.bf16.msra.mxu0 %v4499
      %4587 = vmatprep.subr.bf16.mxu0 0
      %4588 = vmatpush1.bf16.msra.mxu0 %v4498
      %4589 = vmatprep.subr.bf16.mxu0 0
      %4590 = vmatpush1.bf16.msra.mxu0 %v4497
      %4591 = vmatprep.subr.bf16.mxu0 0
      %4592 = vmatpush1.bf16.msra.mxu0 %v4496
      %4593 = vmatprep.subr.bf16.mxu0 0
      %4594 = vmatpush1.bf16.msra.mxu0 %v4495
      %4595 = vmatprep.subr.bf16.mxu0 0
      %4596 = vmatpush2.bf16.msra.mxu0 0
      %4597 = vmatprep.subr.bf16.mxu0 0
      %4598 = vmatpush2.bf16.msra.mxu0 0
      %4599 = vmatprep.subr.bf16.mxu0 0
      %4600 = vmatpush2.bf16.msra.mxu0 0
      %4601 = vmatprep.subr.bf16.mxu0 0
      %4602 = vmatpush2.bf16.msra.mxu0 0
      %4603 = vmatprep.subr.bf16.mxu0 0
      %4604 = vmatpush2.bf16.msra.mxu0 0
      %4605 = vmatprep.subr.bf16.mxu0 0
      %4606 = vmatpush2.bf16.msra.mxu0 0
      %4607 = vmatprep.subr.bf16.mxu0 0
      %4608 = vmatpush2.bf16.msra.mxu0 0
      %4609 = vmatprep.subr.bf16.mxu0 0
      %4610 = vmatpush2.bf16.msra.mxu0 0
      %4611 = vmatprep.mubr.bf16.mxu0 0
      %4612 = vmatmul.mubr.bf16.gmra.mxu0 %v4508
      %v4613 = vpop.f32.mrf.mxu0
      %v4614 = vadd.f32 0.0, %v4613
      %v4615 = vpop.f32.mrf.mxu0
      %v4616 = vpop.f32.mrf.mxu0
      %v4617 = vadd.f32 0.0, %v4616
      %v4618 = vpop.f32.mrf.mxu0
      %4619 = vmatprep.mubr.bf16.mxu0 0
      %4620 = vmatmul.mubr.bf16.gmra.mxu0 %v4511
      %v4621 = vpop.f32.mrf.mxu0
      %v4622 = vadd.f32 0.0, %v4621
      %v4623 = vpop.f32.mrf.mxu0
      %v4624 = vpop.f32.mrf.mxu0
      %v4625 = vadd.f32 0.0, %v4624
      %v4626 = vpop.f32.mrf.mxu0
      %4627 = vmatprep.mubr.bf16.mxu0 0
      %4628 = vmatmul.mubr.bf16.gmra.mxu0 %v4514
      %v4629 = vpop.f32.mrf.mxu0
      %v4630 = vadd.f32 0.0, %v4629
      %v4631 = vpop.f32.mrf.mxu0
      %v4632 = vpop.f32.mrf.mxu0
      %v4633 = vadd.f32 0.0, %v4632
      %v4634 = vpop.f32.mrf.mxu0
      %4635 = vmatprep.mubr.bf16.mxu0 0
      %4636 = vmatmul.mubr.bf16.gmra.mxu0 %v4517
      %v4637 = vpop.f32.mrf.mxu0
      %v4638 = vadd.f32 0.0, %v4637
      %v4639 = vpop.f32.mrf.mxu0
      %v4640 = vpop.f32.mrf.mxu0
      %v4641 = vadd.f32 0.0, %v4640
      %v4642 = vpop.f32.mrf.mxu0
      %4643 = vmatprep.mubr.bf16.mxu0 0
      %4644 = vmatmul.mubr.bf16.gmra.mxu0 %v4520
      %v4645 = vpop.f32.mrf.mxu0
      %v4646 = vadd.f32 0.0, %v4645
      %v4647 = vpop.f32.mrf.mxu0
      %v4648 = vpop.f32.mrf.mxu0
      %v4649 = vadd.f32 0.0, %v4648
      %v4650 = vpop.f32.mrf.mxu0
      %4651 = vmatprep.mubr.bf16.mxu0 0
      %4652 = vmatmul.mubr.bf16.gmra.mxu0 %v4523
      %v4653 = vpop.f32.mrf.mxu0
      %v4654 = vadd.f32 0.0, %v4653
      %v4655 = vpop.f32.mrf.mxu0
      %v4656 = vpop.f32.mrf.mxu0
      %v4657 = vadd.f32 0.0, %v4656
      %v4658 = vpop.f32.mrf.mxu0
      %4659 = vmatprep.mubr.bf16.mxu0 0
      %4660 = vmatmul.mubr.bf16.gmra.mxu0 %v4526
      %v4661 = vpop.f32.mrf.mxu0
      %v4662 = vadd.f32 0.0, %v4661
      %v4663 = vpop.f32.mrf.mxu0
      %v4664 = vpop.f32.mrf.mxu0
      %v4665 = vadd.f32 0.0, %v4664
      %v4666 = vpop.f32.mrf.mxu0
      %4667 = vmatprep.mubr.bf16.mxu0 0
      %4668 = vmatmul.mubr.bf16.gmra.mxu0 %v4529
      %v4669 = vpop.f32.mrf.mxu0
      %v4670 = vadd.f32 0.0, %v4669
      %v4671 = vpop.f32.mrf.mxu0
      %v4672 = vpop.f32.mrf.mxu0
      %v4673 = vadd.f32 0.0, %v4672
      %v4674 = vpop.f32.mrf.mxu0
      %4675 = vmatprep.mubr.bf16.mxu0 0
      %4676 = vmatmul.mubr.bf16.gmra.mxu0 %v4532
      %v4677 = vpop.f32.mrf.mxu0
      %v4678 = vadd.f32 0.0, %v4677
      %v4679 = vpop.f32.mrf.mxu0
      %v4680 = vpop.f32.mrf.mxu0
      %v4681 = vadd.f32 0.0, %v4680
      %v4682 = vpop.f32.mrf.mxu0
      %4683 = vmatprep.mubr.bf16.mxu0 0
      %4684 = vmatmul.mubr.bf16.gmra.mxu0 %v4535
      %v4685 = vpop.f32.mrf.mxu0
      %v4686 = vadd.f32 0.0, %v4685
      %v4687 = vpop.f32.mrf.mxu0
      %v4688 = vpop.f32.mrf.mxu0
      %v4689 = vadd.f32 0.0, %v4688
      %v4690 = vpop.f32.mrf.mxu0
      %4691 = vmatprep.mubr.bf16.mxu0 0
      %4692 = vmatmul.mubr.bf16.gmra.mxu0 %v4538
      %v4693 = vpop.f32.mrf.mxu0
      %v4694 = vadd.f32 0.0, %v4693
      %v4695 = vpop.f32.mrf.mxu0
      %v4696 = vpop.f32.mrf.mxu0
      %v4697 = vadd.f32 0.0, %v4696
      %v4698 = vpop.f32.mrf.mxu0
      %4699 = vmatprep.mubr.bf16.mxu0 0
      %4700 = vmatmul.mubr.bf16.gmra.mxu0 %v4541
      %v4701 = vpop.f32.mrf.mxu0
      %v4702 = vadd.f32 0.0, %v4701
      %v4703 = vpop.f32.mrf.mxu0
      %v4704 = vpop.f32.mrf.mxu0
      %v4705 = vadd.f32 0.0, %v4704
      %v4706 = vpop.f32.mrf.mxu0
      %4707 = vmatprep.mubr.bf16.mxu0 0
      %4708 = vmatmul.mubr.bf16.gmra.mxu0 %v4544
      %v4709 = vpop.f32.mrf.mxu0
      %v4710 = vadd.f32 0.0, %v4709
      %v4711 = vpop.f32.mrf.mxu0
      %v4712 = vpop.f32.mrf.mxu0
      %v4713 = vadd.f32 0.0, %v4712
      %v4714 = vpop.f32.mrf.mxu0
      %4715 = vmatprep.mubr.bf16.mxu0 0
      %4716 = vmatmul.mubr.bf16.gmra.mxu0 %v4547
      %v4717 = vpop.f32.mrf.mxu0
      %v4718 = vadd.f32 0.0, %v4717
      %v4719 = vpop.f32.mrf.mxu0
      %v4720 = vpop.f32.mrf.mxu0
      %v4721 = vadd.f32 0.0, %v4720
      %v4722 = vpop.f32.mrf.mxu0
      %4723 = vmatprep.mubr.bf16.mxu0 0
      %4724 = vmatmul.mubr.bf16.gmra.mxu0 %v4550
      %v4725 = vpop.f32.mrf.mxu0
      %v4726 = vadd.f32 0.0, %v4725
      %v4727 = vpop.f32.mrf.mxu0
      %v4728 = vpop.f32.mrf.mxu0
      %v4729 = vadd.f32 0.0, %v4728
      %v4730 = vpop.f32.mrf.mxu0
      %4731 = vmatprep.mubr.bf16.mxu0 0
      %4732 = vmatmul.mubr.bf16.gmra.mxu0 %v4553
      %v4733 = vpop.f32.mrf.mxu0
      %v4734 = vadd.f32 0.0, %v4733
      %v4735 = vpop.f32.mrf.mxu0
      %v4736 = vpop.f32.mrf.mxu0
      %v4737 = vadd.f32 0.0, %v4736
      %v4738 = vpop.f32.mrf.mxu0
      %4739 = vmatprep.mubr.bf16.mxu0 0
      %4740 = vmatmul.mubr.bf16.gmra.mxu0 %v4556
      %v4741 = vpop.f32.mrf.mxu0
      %v4742 = vadd.f32 0.0, %v4741
      %v4743 = vpop.f32.mrf.mxu0
      %v4744 = vpop.f32.mrf.mxu0
      %v4745 = vadd.f32 0.0, %v4744
      %v4746 = vpop.f32.mrf.mxu0
      %4747 = vmatprep.mubr.bf16.mxu0 0
      %4748 = vmatmul.mubr.bf16.gmra.mxu0 %v4559
      %v4749 = vpop.f32.mrf.mxu0
      %v4750 = vadd.f32 0.0, %v4749
      %v4751 = vpop.f32.mrf.mxu0
      %v4752 = vpop.f32.mrf.mxu0
      %v4753 = vadd.f32 0.0, %v4752
      %v4754 = vpop.f32.mrf.mxu0
      %4755 = vmatprep.mubr.bf16.mxu0 0
      %4756 = vmatmul.mubr.bf16.gmra.mxu0 %v4562
      %v4757 = vpop.f32.mrf.mxu0
      %v4758 = vadd.f32 0.0, %v4757
      %v4759 = vpop.f32.mrf.mxu0
      %v4760 = vpop.f32.mrf.mxu0
      %v4761 = vadd.f32 0.0, %v4760
      %v4762 = vpop.f32.mrf.mxu0
      %4763 = vmatprep.mubr.bf16.mxu0 0
      %4764 = vmatmul.mubr.bf16.gmra.mxu0 %v4565
      %v4765 = vpop.f32.mrf.mxu0
      %v4766 = vadd.f32 0.0, %v4765
      %v4767 = vpop.f32.mrf.mxu0
      %v4768 = vpop.f32.mrf.mxu0
      %v4769 = vadd.f32 0.0, %v4768
      %v4770 = vpop.f32.mrf.mxu0
      %4771 = vmatprep.mubr.bf16.mxu0 0
      %4772 = vmatmul.mubr.bf16.gmra.mxu0 %v4568
      %v4773 = vpop.f32.mrf.mxu0
      %v4774 = vadd.f32 0.0, %v4773
      %v4775 = vpop.f32.mrf.mxu0
      %v4776 = vpop.f32.mrf.mxu0
      %v4777 = vadd.f32 0.0, %v4776
      %v4778 = vpop.f32.mrf.mxu0
      %4779 = vmatprep.mubr.bf16.mxu0 0
      %4780 = vmatmul.mubr.bf16.gmra.mxu0 %v4571
      %v4781 = vpop.f32.mrf.mxu0
      %v4782 = vadd.f32 0.0, %v4781
      %v4783 = vpop.f32.mrf.mxu0
      %v4784 = vpop.f32.mrf.mxu0
      %v4785 = vadd.f32 0.0, %v4784
      %v4786 = vpop.f32.mrf.mxu0
      %4787 = vmatprep.mubr.bf16.mxu0 0
      %4788 = vmatmul.mubr.bf16.gmra.mxu0 %v4574
      %v4789 = vpop.f32.mrf.mxu0
      %v4790 = vadd.f32 0.0, %v4789
      %v4791 = vpop.f32.mrf.mxu0
      %v4792 = vpop.f32.mrf.mxu0
      %v4793 = vadd.f32 0.0, %v4792
      %v4794 = vpop.f32.mrf.mxu0
      %4795 = vmatprep.mubr.bf16.mxu0 0
      %4796 = vmatmul.mubr.bf16.gmra.mxu0 %v4577
      %v4797 = vpop.f32.mrf.mxu0
      %v4798 = vadd.f32 0.0, %v4797
      %v4799 = vpop.f32.mrf.mxu0
      %v4800 = vpop.f32.mrf.mxu0
      %v4801 = vadd.f32 0.0, %v4800
      %v4802 = vpop.f32.mrf.mxu0
      %4803 = vdwg.mxu0
      %v4804 = vld [vmem:[%s4242] sm:$0xff]
      %v4805 = vld [vmem:[%s4242 + $0x8] sm:$0xff]
      %v4806 = vld [vmem:[%s4242 + $0x10] sm:$0xff]
      %v4807 = vld [vmem:[%s4242 + $0x18] sm:$0xff]
      %v4808 = vld [vmem:[%s4242 + $0x20] sm:$0xff]
      %v4809 = vld [vmem:[%s4242 + $0x28] sm:$0xff]
      %v4810 = vld [vmem:[%s4242 + $0x30] sm:$0xff]
      %v4811 = vld [vmem:[%s4242 + $0x38] sm:$0xff]
      %v4812 = vld [vmem:[%s4242 + $0x40] sm:$0xff]
      %v4813 = vld [vmem:[%s4242 + $0x48] sm:$0xff]
      %v4814 = vld [vmem:[%s4242 + $0x50] sm:$0xff]
      %v4815 = vld [vmem:[%s4242 + $0x58] sm:$0xff]
      %v4816 = vld [vmem:[%s4242 + $0x60] sm:$0xff]
      %v4817 = vld [vmem:[%s4242 + $0x68] sm:$0xff]
      %v4818 = vld [vmem:[%s4242 + $0x70] sm:$0xff]
      %v4819 = vld [vmem:[%s4242 + $0x78] sm:$0xff]
      %v4820 = vld [vmem:[%s4242 + $0x80] sm:$0xff]
      %v4821 = vld [vmem:[%s4242 + $0x88] sm:$0xff]
      %v4822 = vld [vmem:[%s4242 + $0x90] sm:$0xff]
      %v4823 = vld [vmem:[%s4242 + $0x98] sm:$0xff]
      %v4824 = vld [vmem:[%s4242 + $0xa0] sm:$0xff]
      %v4825 = vld [vmem:[%s4242 + $0xa8] sm:$0xff]
      %v4826 = vld [vmem:[%s4242 + $0xb0] sm:$0xff]
      %v4827 = vld [vmem:[%s4242 + $0xb8] sm:$0xff]
      %v4828 = vld [vmem:[%s4242 + $0xc0] sm:$0xff]
      %v4829 = vld [vmem:[%s4242 + $0xc8] sm:$0xff]
      %v4830 = vld [vmem:[%s4242 + $0xd0] sm:$0xff]
      %v4831 = vld [vmem:[%s4242 + $0xd8] sm:$0xff]
      %v4832 = vld [vmem:[%s4242 + $0xe0] sm:$0xff]
      %v4833 = vld [vmem:[%s4242 + $0xe8] sm:$0xff]
      %v4834 = vld [vmem:[%s4242 + $0xf0] sm:$0xff]
      %v4835 = vld [vmem:[%s4242 + $0xf8] sm:$0xff]
      %v4836 = vld [vmem:[%s4242 + $0x100] sm:$0xff]
      %v4837 = vld [vmem:[%s4242 + $0x108] sm:$0xff]
      %v4838 = vld [vmem:[%s4242 + $0x110] sm:$0xff]
      %v4839 = vld [vmem:[%s4242 + $0x118] sm:$0xff]
      %v4840 = vld [vmem:[%s4242 + $0x120] sm:$0xff]
      %v4841 = vld [vmem:[%s4242 + $0x128] sm:$0xff]
      %v4842 = vld [vmem:[%s4242 + $0x130] sm:$0xff]
      %v4843 = vld [vmem:[%s4242 + $0x138] sm:$0xff]
      %v4844 = vld [vmem:[%s4242 + $0x140] sm:$0xff]
      %v4845 = vld [vmem:[%s4242 + $0x148] sm:$0xff]
      %v4846 = vld [vmem:[%s4242 + $0x150] sm:$0xff]
      %v4847 = vld [vmem:[%s4242 + $0x158] sm:$0xff]
      %v4848 = vld [vmem:[%s4242 + $0x160] sm:$0xff]
      %v4849 = vld [vmem:[%s4242 + $0x168] sm:$0xff]
      %v4850 = vld [vmem:[%s4242 + $0x170] sm:$0xff]
      %v4851 = vld [vmem:[%s4242 + $0x178] sm:$0xff]
      %v4852 = vadd.f32 %v4804, %v4614
      %v4853 = vadd.f32 %v4805, %v4617
      %v4854 = vadd.f32 %v4806, %v4622
      %v4855 = vadd.f32 %v4807, %v4625
      %v4856 = vadd.f32 %v4808, %v4630
      %v4857 = vadd.f32 %v4809, %v4633
      %v4858 = vadd.f32 %v4810, %v4638
      %v4859 = vadd.f32 %v4811, %v4641
      %v4860 = vadd.f32 %v4812, %v4646
      %v4861 = vadd.f32 %v4813, %v4649
      %v4862 = vadd.f32 %v4814, %v4654
      %v4863 = vadd.f32 %v4815, %v4657
      %v4864 = vadd.f32 %v4816, %v4662
      %v4865 = vadd.f32 %v4817, %v4665
      %v4866 = vadd.f32 %v4818, %v4670
      %v4867 = vadd.f32 %v4819, %v4673
      %v4868 = vadd.f32 %v4820, %v4678
      %v4869 = vadd.f32 %v4821, %v4681
      %v4870 = vadd.f32 %v4822, %v4686
      %v4871 = vadd.f32 %v4823, %v4689
      %v4872 = vadd.f32 %v4824, %v4694
      %v4873 = vadd.f32 %v4825, %v4697
      %v4874 = vadd.f32 %v4826, %v4702
      %v4875 = vadd.f32 %v4827, %v4705
      %v4876 = vadd.f32 %v4828, %v4710
      %v4877 = vadd.f32 %v4829, %v4713
      %v4878 = vadd.f32 %v4830, %v4718
      %v4879 = vadd.f32 %v4831, %v4721
      %v4880 = vadd.f32 %v4832, %v4726
      %v4881 = vadd.f32 %v4833, %v4729
      %v4882 = vadd.f32 %v4834, %v4734
      %v4883 = vadd.f32 %v4835, %v4737
      %v4884 = vadd.f32 %v4836, %v4742
      %v4885 = vadd.f32 %v4837, %v4745
      %v4886 = vadd.f32 %v4838, %v4750
      %v4887 = vadd.f32 %v4839, %v4753
      %v4888 = vadd.f32 %v4840, %v4758
      %v4889 = vadd.f32 %v4841, %v4761
      %v4890 = vadd.f32 %v4842, %v4766
      %v4891 = vadd.f32 %v4843, %v4769
      %v4892 = vadd.f32 %v4844, %v4774
      %v4893 = vadd.f32 %v4845, %v4777
      %v4894 = vadd.f32 %v4846, %v4782
      %v4895 = vadd.f32 %v4847, %v4785
      %v4896 = vadd.f32 %v4848, %v4790
      %v4897 = vadd.f32 %v4849, %v4793
      %v4898 = vadd.f32 %v4850, %v4798
      %v4899 = vadd.f32 %v4851, %v4801
      %4900 = vst.msk [vmem:[%s4242] sm:$0xff] %vm2364, %v4852
      %4901 = vst.msk [vmem:[%s4242 + $0x8] sm:$0xff] %vm2364, %v4853
      %4902 = vst.msk [vmem:[%s4242 + $0x10] sm:$0xff] %vm2364, %v4854
      %4903 = vst.msk [vmem:[%s4242 + $0x18] sm:$0xff] %vm2364, %v4855
      %4904 = vst.msk [vmem:[%s4242 + $0x20] sm:$0xff] %vm2364, %v4856
      %4905 = vst.msk [vmem:[%s4242 + $0x28] sm:$0xff] %vm2364, %v4857
      %4906 = vst.msk [vmem:[%s4242 + $0x30] sm:$0xff] %vm2364, %v4858
      %4907 = vst.msk [vmem:[%s4242 + $0x38] sm:$0xff] %vm2364, %v4859
      %4908 = vst.msk [vmem:[%s4242 + $0x40] sm:$0xff] %vm2364, %v4860
      %4909 = vst.msk [vmem:[%s4242 + $0x48] sm:$0xff] %vm2364, %v4861
      %4910 = vst.msk [vmem:[%s4242 + $0x50] sm:$0xff] %vm2364, %v4862
      %4911 = vst.msk [vmem:[%s4242 + $0x58] sm:$0xff] %vm2364, %v4863
      %4912 = vst.msk [vmem:[%s4242 + $0x60] sm:$0xff] %vm2364, %v4864
      %4913 = vst.msk [vmem:[%s4242 + $0x68] sm:$0xff] %vm2364, %v4865
      %4914 = vst.msk [vmem:[%s4242 + $0x70] sm:$0xff] %vm2364, %v4866
      %4915 = vst.msk [vmem:[%s4242 + $0x78] sm:$0xff] %vm2364, %v4867
      %4916 = vst.msk [vmem:[%s4242 + $0x80] sm:$0xff] %vm2364, %v4868
      %4917 = vst.msk [vmem:[%s4242 + $0x88] sm:$0xff] %vm2364, %v4869
      %4918 = vst.msk [vmem:[%s4242 + $0x90] sm:$0xff] %vm2364, %v4870
      %4919 = vst.msk [vmem:[%s4242 + $0x98] sm:$0xff] %vm2364, %v4871
      %4920 = vst.msk [vmem:[%s4242 + $0xa0] sm:$0xff] %vm2364, %v4872
      %4921 = vst.msk [vmem:[%s4242 + $0xa8] sm:$0xff] %vm2364, %v4873
      %4922 = vst.msk [vmem:[%s4242 + $0xb0] sm:$0xff] %vm2364, %v4874
      %4923 = vst.msk [vmem:[%s4242 + $0xb8] sm:$0xff] %vm2364, %v4875
      %4924 = vst.msk [vmem:[%s4242 + $0xc0] sm:$0xff] %vm2364, %v4876
      %4925 = vst.msk [vmem:[%s4242 + $0xc8] sm:$0xff] %vm2364, %v4877
      %4926 = vst.msk [vmem:[%s4242 + $0xd0] sm:$0xff] %vm2364, %v4878
      %4927 = vst.msk [vmem:[%s4242 + $0xd8] sm:$0xff] %vm2364, %v4879
      %4928 = vst.msk [vmem:[%s4242 + $0xe0] sm:$0xff] %vm2364, %v4880
      %4929 = vst.msk [vmem:[%s4242 + $0xe8] sm:$0xff] %vm2364, %v4881
      %4930 = vst.msk [vmem:[%s4242 + $0xf0] sm:$0xff] %vm2364, %v4882
      %4931 = vst.msk [vmem:[%s4242 + $0xf8] sm:$0xff] %vm2364, %v4883
      %4932 = vst.msk [vmem:[%s4242 + $0x100] sm:$0xff] %vm2364, %v4884
      %4933 = vst.msk [vmem:[%s4242 + $0x108] sm:$0xff] %vm2364, %v4885
      %4934 = vst.msk [vmem:[%s4242 + $0x110] sm:$0xff] %vm2364, %v4886
      %4935 = vst.msk [vmem:[%s4242 + $0x118] sm:$0xff] %vm2364, %v4887
      %4936 = vst.msk [vmem:[%s4242 + $0x120] sm:$0xff] %vm2364, %v4888
      %4937 = vst.msk [vmem:[%s4242 + $0x128] sm:$0xff] %vm2364, %v4889
      %4938 = vst.msk [vmem:[%s4242 + $0x130] sm:$0xff] %vm2364, %v4890
      %4939 = vst.msk [vmem:[%s4242 + $0x138] sm:$0xff] %vm2364, %v4891
      %4940 = vst.msk [vmem:[%s4242 + $0x140] sm:$0xff] %vm2364, %v4892
      %4941 = vst.msk [vmem:[%s4242 + $0x148] sm:$0xff] %vm2364, %v4893
      %4942 = vst.msk [vmem:[%s4242 + $0x150] sm:$0xff] %vm2364, %v4894
      %4943 = vst.msk [vmem:[%s4242 + $0x158] sm:$0xff] %vm2364, %v4895
      %4944 = vst.msk [vmem:[%s4242 + $0x160] sm:$0xff] %vm2364, %v4896
      %4945 = vst.msk [vmem:[%s4242 + $0x168] sm:$0xff] %vm2364, %v4897
      %4946 = vst.msk [vmem:[%s4242 + $0x170] sm:$0xff] %vm2364, %v4898
      %4947 = vst.msk [vmem:[%s4242 + $0x178] sm:$0xff] %vm2364, %v4899
      %v4948 = vld [vmem:[#allocation2 + $0xe0] sm:$0xf]
      %v4949 = vld [vmem:[#allocation2 + $0xe4] sm:$0xf]
      %v4950 = vld [vmem:[#allocation2 + $0xe8] sm:$0xf]
      %v4951 = vld [vmem:[#allocation2 + $0xec] sm:$0xf]
      %v4952 = vld [vmem:[#allocation2 + $0xf0] sm:$0xf]
      %v4953 = vld [vmem:[#allocation2 + $0xf4] sm:$0xf]
      %v4954 = vld [vmem:[#allocation2 + $0xf8] sm:$0xf]
      %v4955 = vld [vmem:[#allocation2 + $0xfc] sm:$0xf]
      %v4956 = vld [vmem:[#allocation2 + $0x100] sm:$0xf]
      %v4957 = vld [vmem:[#allocation2 + $0x104] sm:$0xf]
      %v4958 = vld [vmem:[#allocation2 + $0x108] sm:$0xf]
      %v4959 = vld [vmem:[#allocation2 + $0x10c] sm:$0xf]
      %v4960 = vld [vmem:[#allocation2 + $0x110] sm:$0xf]
      %v4961 = vld [vmem:[#allocation2 + $0x114] sm:$0xf]
      %v4962 = vld [vmem:[#allocation2 + $0x118] sm:$0xf]
      %v4963 = vld [vmem:[#allocation2 + $0x11c] sm:$0xf]
      %v4964 = vld [vmem:[#allocation2 + $0x120] sm:$0xf]
      %v4965 = vld [vmem:[#allocation2 + $0x124] sm:$0xf]
      %v4966 = vld [vmem:[#allocation2 + $0x128] sm:$0xf]
      %v4967 = vld [vmem:[#allocation2 + $0x12c] sm:$0xf]
      %v4968 = vld [vmem:[#allocation2 + $0x130] sm:$0xf]
      %v4969 = vld [vmem:[#allocation2 + $0x134] sm:$0xf]
      %v4970 = vld [vmem:[#allocation2 + $0x138] sm:$0xf]
      %v4971 = vld [vmem:[#allocation2 + $0x13c] sm:$0xf]
      %v4972 = vld [vmem:[#allocation2 + $0x140] sm:$0xf]
      %v4973 = vld [vmem:[#allocation2 + $0x144] sm:$0xf]
      %v4974 = vld [vmem:[#allocation2 + $0x148] sm:$0xf]
      %v4975 = vld [vmem:[#allocation2 + $0x14c] sm:$0xf]
      %v4976 = vld [vmem:[#allocation2 + $0x150] sm:$0xf]
      %v4977 = vld [vmem:[#allocation2 + $0x154] sm:$0xf]
      %v4978 = vld [vmem:[#allocation2 + $0x158] sm:$0xf]
      %v4979 = vld [vmem:[#allocation2 + $0x15c] sm:$0xf]
      %v4980 = vld [vmem:[#allocation2 + $0x160] sm:$0xf]
      %v4981 = vld [vmem:[#allocation2 + $0x164] sm:$0xf]
      %v4982 = vld [vmem:[#allocation2 + $0x168] sm:$0xf]
      %v4983 = vld [vmem:[#allocation2 + $0x16c] sm:$0xf]
      %v4984 = vld [vmem:[#allocation2 + $0x170] sm:$0xf]
      %v4985 = vld [vmem:[#allocation2 + $0x174] sm:$0xf]
      %v4986 = vld [vmem:[#allocation2 + $0x178] sm:$0xf]
      %v4987 = vld [vmem:[#allocation2 + $0x17c] sm:$0xf]
      %v4988 = vld [vmem:[#allocation2 + $0x180] sm:$0xf]
      %v4989 = vld [vmem:[#allocation2 + $0x184] sm:$0xf]
      %v4990 = vld [vmem:[#allocation2 + $0x188] sm:$0xf]
      %v4991 = vld [vmem:[#allocation2 + $0x18c] sm:$0xf]
      %v4992 = vld [vmem:[#allocation2 + $0x190] sm:$0xf]
      %v4993 = vld [vmem:[#allocation2 + $0x194] sm:$0xf]
      %v4994 = vld [vmem:[#allocation2 + $0x198] sm:$0xf]
      %v4995 = vld [vmem:[#allocation2 + $0x19c] sm:$0xf]
      %v4996 = vld [vmem:[%s3119] sm:$0xf]
      %v4997 = vld [vmem:[%s3119 + $0x4] sm:$0xf]
      %v4998 = vld [vmem:[%s3119 + $0x8] sm:$0xf]
      %v4999 = vld [vmem:[%s3119 + $0xc] sm:$0xf]
      %v5000 = vld [vmem:[%s3119 + $0x10] sm:$0xf]
      %v5001 = vld [vmem:[%s3119 + $0x14] sm:$0xf]
      %v5002 = vld [vmem:[%s3119 + $0x18] sm:$0xf]
      %v5003 = vld [vmem:[%s3119 + $0x1c] sm:$0xf]
      %v5004 = vld [vmem:[%s3119 + $0x20] sm:$0xf]
      %v5005 = vld [vmem:[%s3119 + $0x24] sm:$0xf]
      %v5006 = vld [vmem:[%s3119 + $0x28] sm:$0xf]
      %v5007 = vld [vmem:[%s3119 + $0x2c] sm:$0xf]
      %v5056 = vunpack.c.l.b16 %v4948
      %v5057 = vunpack.c.l.b16 %v4949
      %v5058 = vunpack.c.l.b16 %v4950
      %v5059 = vunpack.c.l.b16 %v4951
      %v5060 = vunpack.c.l.b16 %v4952
      %v5061 = vunpack.c.l.b16 %v4953
      %v5062 = vunpack.c.l.b16 %v4954
      %v5063 = vunpack.c.l.b16 %v4955
      %v5064 = vunpack.c.l.b16 %v4956
      %v5065 = vunpack.c.l.b16 %v4957
      %v5066 = vunpack.c.l.b16 %v4958
      %v5067 = vunpack.c.l.b16 %v4959
      %v5068 = vunpack.c.l.b16 %v4960
      %v5069 = vunpack.c.l.b16 %v4961
      %v5070 = vunpack.c.l.b16 %v4962
      %v5071 = vunpack.c.l.b16 %v4963
      %v5072 = vunpack.c.l.b16 %v4964
      %v5073 = vunpack.c.l.b16 %v4965
      %v5074 = vunpack.c.l.b16 %v4966
      %v5075 = vunpack.c.l.b16 %v4967
      %v5076 = vunpack.c.l.b16 %v4968
      %v5077 = vunpack.c.l.b16 %v4969
      %v5078 = vunpack.c.l.b16 %v4970
      %v5079 = vunpack.c.l.b16 %v4971
      %v5080 = vunpack.c.l.b16 %v4972
      %v5081 = vunpack.c.l.b16 %v4973
      %v5082 = vunpack.c.l.b16 %v4974
      %v5083 = vunpack.c.l.b16 %v4975
      %v5084 = vunpack.c.l.b16 %v4976
      %v5085 = vunpack.c.l.b16 %v4977
      %v5086 = vunpack.c.l.b16 %v4978
      %v5087 = vunpack.c.l.b16 %v4979
      %v5088 = vunpack.c.l.b16 %v4980
      %v5089 = vunpack.c.l.b16 %v4981
      %v5090 = vunpack.c.l.b16 %v4982
      %v5091 = vunpack.c.l.b16 %v4983
      %v5092 = vunpack.c.l.b16 %v4984
      %v5093 = vunpack.c.l.b16 %v4985
      %v5094 = vunpack.c.l.b16 %v4986
      %v5095 = vunpack.c.l.b16 %v4987
      %v5096 = vunpack.c.l.b16 %v4988
      %v5097 = vunpack.c.l.b16 %v4989
      %v5098 = vunpack.c.l.b16 %v4990
      %v5099 = vunpack.c.l.b16 %v4991
      %v5100 = vunpack.c.l.b16 %v4992
      %v5101 = vunpack.c.l.b16 %v4993
      %v5102 = vunpack.c.l.b16 %v4994
      %v5103 = vunpack.c.l.b16 %v4995
      %v5104 = vpack.c.b16 %v5057, %v5056
      %v5105 = vpack.c.b16 %v5059, %v5058
      %v5106 = vpack.c.b16 %v5061, %v5060
      %v5107 = vpack.c.b16 %v5063, %v5062
      %v5108 = vpack.c.b16 %v5065, %v5064
      %v5109 = vpack.c.b16 %v5067, %v5066
      %v5110 = vpack.c.b16 %v5069, %v5068
      %v5111 = vpack.c.b16 %v5071, %v5070
      %v5112 = vpack.c.b16 %v5073, %v5072
      %v5113 = vpack.c.b16 %v5075, %v5074
      %v5114 = vpack.c.b16 %v5077, %v5076
      %v5115 = vpack.c.b16 %v5079, %v5078
      %v5116 = vpack.c.b16 %v5081, %v5080
      %v5117 = vpack.c.b16 %v5083, %v5082
      %v5118 = vpack.c.b16 %v5085, %v5084
      %v5119 = vpack.c.b16 %v5087, %v5086
      %v5120 = vpack.c.b16 %v5089, %v5088
      %v5121 = vpack.c.b16 %v5091, %v5090
      %v5122 = vpack.c.b16 %v5093, %v5092
      %v5123 = vpack.c.b16 %v5095, %v5094
      %v5124 = vpack.c.b16 %v5097, %v5096
      %v5125 = vpack.c.b16 %v5099, %v5098
      %v5126 = vpack.c.b16 %v5101, %v5100
      %v5127 = vpack.c.b16 %v5103, %v5102
      %v5140 = vunpack.c.l.b16 %v4996
      %v5141 = vunpack.c.l.b16 %v4997
      %v5142 = vunpack.c.l.b16 %v4998
      %v5143 = vunpack.c.l.b16 %v4999
      %v5144 = vunpack.c.l.b16 %v5000
      %v5145 = vunpack.c.l.b16 %v5001
      %v5146 = vunpack.c.l.b16 %v5002
      %v5147 = vunpack.c.l.b16 %v5003
      %v5148 = vunpack.c.l.b16 %v5004
      %v5149 = vunpack.c.l.b16 %v5005
      %v5150 = vunpack.c.l.b16 %v5006
      %v5151 = vunpack.c.l.b16 %v5007
      %v5152 = vpack.c.b16 %v5141, %v5140
      %v5153 = vpack.c.b16 %v5143, %v5142
      %v5154 = vpack.c.b16 %v5145, %v5144
      %v5155 = vpack.c.b16 %v5147, %v5146
      %v5156 = vpack.c.b16 %v5149, %v5148
      %v5157 = vpack.c.b16 %v5151, %v5150
      %v5165 = vsel %vm2066, %v5104, 0
      %v5168 = vsel %vm2066, %v5105, 0
      %v5171 = vsel %vm2066, %v5106, 0
      %v5174 = vsel %vm2066, %v5107, 0
      %v5177 = vsel %vm2066, %v5108, 0
      %v5180 = vsel %vm2066, %v5109, 0
      %v5183 = vsel %vm2066, %v5110, 0
      %v5186 = vsel %vm2066, %v5111, 0
      %v5189 = vsel %vm2066, %v5112, 0
      %v5192 = vsel %vm2066, %v5113, 0
      %v5195 = vsel %vm2066, %v5114, 0
      %v5198 = vsel %vm2066, %v5115, 0
      %v5201 = vsel %vm2066, %v5116, 0
      %v5204 = vsel %vm2066, %v5117, 0
      %v5207 = vsel %vm2066, %v5118, 0
      %v5210 = vsel %vm2066, %v5119, 0
      %v5213 = vsel %vm2066, %v5120, 0
      %v5216 = vsel %vm2066, %v5121, 0
      %v5219 = vsel %vm2066, %v5122, 0
      %v5222 = vsel %vm2066, %v5123, 0
      %v5225 = vsel %vm2066, %v5124, 0
      %v5228 = vsel %vm2066, %v5125, 0
      %v5231 = vsel %vm2066, %v5126, 0
      %v5234 = vsel %vm2066, %v5127, 0
      %5236 = vmatprep.subr.bf16.mxu0 0
      %5237 = vmatpush1.bf16.msra.mxu0 0
      %5238 = vmatprep.subr.bf16.mxu0 0
      %5239 = vmatpush1.bf16.msra.mxu0 0
      %5240 = vmatprep.subr.bf16.mxu0 0
      %5241 = vmatpush1.bf16.msra.mxu0 %v5157
      %5242 = vmatprep.subr.bf16.mxu0 0
      %5243 = vmatpush1.bf16.msra.mxu0 %v5156
      %5244 = vmatprep.subr.bf16.mxu0 0
      %5245 = vmatpush1.bf16.msra.mxu0 %v5155
      %5246 = vmatprep.subr.bf16.mxu0 0
      %5247 = vmatpush1.bf16.msra.mxu0 %v5154
      %5248 = vmatprep.subr.bf16.mxu0 0
      %5249 = vmatpush1.bf16.msra.mxu0 %v5153
      %5250 = vmatprep.subr.bf16.mxu0 0
      %5251 = vmatpush1.bf16.msra.mxu0 %v5152
      %5252 = vmatprep.subr.bf16.mxu0 0
      %5253 = vmatpush2.bf16.msra.mxu0 0
      %5254 = vmatprep.subr.bf16.mxu0 0
      %5255 = vmatpush2.bf16.msra.mxu0 0
      %5256 = vmatprep.subr.bf16.mxu0 0
      %5257 = vmatpush2.bf16.msra.mxu0 0
      %5258 = vmatprep.subr.bf16.mxu0 0
      %5259 = vmatpush2.bf16.msra.mxu0 0
      %5260 = vmatprep.subr.bf16.mxu0 0
      %5261 = vmatpush2.bf16.msra.mxu0 0
      %5262 = vmatprep.subr.bf16.mxu0 0
      %5263 = vmatpush2.bf16.msra.mxu0 0
      %5264 = vmatprep.subr.bf16.mxu0 0
      %5265 = vmatpush2.bf16.msra.mxu0 0
      %5266 = vmatprep.subr.bf16.mxu0 0
      %5267 = vmatpush2.bf16.msra.mxu0 0
      %5268 = vmatprep.mubr.bf16.mxu0 0
      %5269 = vmatmul.mubr.bf16.gmra.mxu0 %v5165
      %v5270 = vpop.f32.mrf.mxu0
      %v5271 = vadd.f32 0.0, %v5270
      %v5272 = vpop.f32.mrf.mxu0
      %v5273 = vpop.f32.mrf.mxu0
      %v5274 = vadd.f32 0.0, %v5273
      %v5275 = vpop.f32.mrf.mxu0
      %5276 = vmatprep.mubr.bf16.mxu0 0
      %5277 = vmatmul.mubr.bf16.gmra.mxu0 %v5168
      %v5278 = vpop.f32.mrf.mxu0
      %v5279 = vadd.f32 0.0, %v5278
      %v5280 = vpop.f32.mrf.mxu0
      %v5281 = vpop.f32.mrf.mxu0
      %v5282 = vadd.f32 0.0, %v5281
      %v5283 = vpop.f32.mrf.mxu0
      %5284 = vmatprep.mubr.bf16.mxu0 0
      %5285 = vmatmul.mubr.bf16.gmra.mxu0 %v5171
      %v5286 = vpop.f32.mrf.mxu0
      %v5287 = vadd.f32 0.0, %v5286
      %v5288 = vpop.f32.mrf.mxu0
      %v5289 = vpop.f32.mrf.mxu0
      %v5290 = vadd.f32 0.0, %v5289
      %v5291 = vpop.f32.mrf.mxu0
      %5292 = vmatprep.mubr.bf16.mxu0 0
      %5293 = vmatmul.mubr.bf16.gmra.mxu0 %v5174
      %v5294 = vpop.f32.mrf.mxu0
      %v5295 = vadd.f32 0.0, %v5294
      %v5296 = vpop.f32.mrf.mxu0
      %v5297 = vpop.f32.mrf.mxu0
      %v5298 = vadd.f32 0.0, %v5297
      %v5299 = vpop.f32.mrf.mxu0
      %5300 = vmatprep.mubr.bf16.mxu0 0
      %5301 = vmatmul.mubr.bf16.gmra.mxu0 %v5177
      %v5302 = vpop.f32.mrf.mxu0
      %v5303 = vadd.f32 0.0, %v5302
      %v5304 = vpop.f32.mrf.mxu0
      %v5305 = vpop.f32.mrf.mxu0
      %v5306 = vadd.f32 0.0, %v5305
      %v5307 = vpop.f32.mrf.mxu0
      %5308 = vmatprep.mubr.bf16.mxu0 0
      %5309 = vmatmul.mubr.bf16.gmra.mxu0 %v5180
      %v5310 = vpop.f32.mrf.mxu0
      %v5311 = vadd.f32 0.0, %v5310
      %v5312 = vpop.f32.mrf.mxu0
      %v5313 = vpop.f32.mrf.mxu0
      %v5314 = vadd.f32 0.0, %v5313
      %v5315 = vpop.f32.mrf.mxu0
      %5316 = vmatprep.mubr.bf16.mxu0 0
      %5317 = vmatmul.mubr.bf16.gmra.mxu0 %v5183
      %v5318 = vpop.f32.mrf.mxu0
      %v5319 = vadd.f32 0.0, %v5318
      %v5320 = vpop.f32.mrf.mxu0
      %v5321 = vpop.f32.mrf.mxu0
      %v5322 = vadd.f32 0.0, %v5321
      %v5323 = vpop.f32.mrf.mxu0
      %5324 = vmatprep.mubr.bf16.mxu0 0
      %5325 = vmatmul.mubr.bf16.gmra.mxu0 %v5186
      %v5326 = vpop.f32.mrf.mxu0
      %v5327 = vadd.f32 0.0, %v5326
      %v5328 = vpop.f32.mrf.mxu0
      %v5329 = vpop.f32.mrf.mxu0
      %v5330 = vadd.f32 0.0, %v5329
      %v5331 = vpop.f32.mrf.mxu0
      %5332 = vmatprep.mubr.bf16.mxu0 0
      %5333 = vmatmul.mubr.bf16.gmra.mxu0 %v5189
      %v5334 = vpop.f32.mrf.mxu0
      %v5335 = vadd.f32 0.0, %v5334
      %v5336 = vpop.f32.mrf.mxu0
      %v5337 = vpop.f32.mrf.mxu0
      %v5338 = vadd.f32 0.0, %v5337
      %v5339 = vpop.f32.mrf.mxu0
      %5340 = vmatprep.mubr.bf16.mxu0 0
      %5341 = vmatmul.mubr.bf16.gmra.mxu0 %v5192
      %v5342 = vpop.f32.mrf.mxu0
      %v5343 = vadd.f32 0.0, %v5342
      %v5344 = vpop.f32.mrf.mxu0
      %v5345 = vpop.f32.mrf.mxu0
      %v5346 = vadd.f32 0.0, %v5345
      %v5347 = vpop.f32.mrf.mxu0
      %5348 = vmatprep.mubr.bf16.mxu0 0
      %5349 = vmatmul.mubr.bf16.gmra.mxu0 %v5195
      %v5350 = vpop.f32.mrf.mxu0
      %v5351 = vadd.f32 0.0, %v5350
      %v5352 = vpop.f32.mrf.mxu0
      %v5353 = vpop.f32.mrf.mxu0
      %v5354 = vadd.f32 0.0, %v5353
      %v5355 = vpop.f32.mrf.mxu0
      %5356 = vmatprep.mubr.bf16.mxu0 0
      %5357 = vmatmul.mubr.bf16.gmra.mxu0 %v5198
      %v5358 = vpop.f32.mrf.mxu0
      %v5359 = vadd.f32 0.0, %v5358
      %v5360 = vpop.f32.mrf.mxu0
      %v5361 = vpop.f32.mrf.mxu0
      %v5362 = vadd.f32 0.0, %v5361
      %v5363 = vpop.f32.mrf.mxu0
      %5364 = vmatprep.mubr.bf16.mxu0 0
      %5365 = vmatmul.mubr.bf16.gmra.mxu0 %v5201
      %v5366 = vpop.f32.mrf.mxu0
      %v5367 = vadd.f32 0.0, %v5366
      %v5368 = vpop.f32.mrf.mxu0
      %v5369 = vpop.f32.mrf.mxu0
      %v5370 = vadd.f32 0.0, %v5369
      %v5371 = vpop.f32.mrf.mxu0
      %5372 = vmatprep.mubr.bf16.mxu0 0
      %5373 = vmatmul.mubr.bf16.gmra.mxu0 %v5204
      %v5374 = vpop.f32.mrf.mxu0
      %v5375 = vadd.f32 0.0, %v5374
      %v5376 = vpop.f32.mrf.mxu0
      %v5377 = vpop.f32.mrf.mxu0
      %v5378 = vadd.f32 0.0, %v5377
      %v5379 = vpop.f32.mrf.mxu0
      %5380 = vmatprep.mubr.bf16.mxu0 0
      %5381 = vmatmul.mubr.bf16.gmra.mxu0 %v5207
      %v5382 = vpop.f32.mrf.mxu0
      %v5383 = vadd.f32 0.0, %v5382
      %v5384 = vpop.f32.mrf.mxu0
      %v5385 = vpop.f32.mrf.mxu0
      %v5386 = vadd.f32 0.0, %v5385
      %v5387 = vpop.f32.mrf.mxu0
      %5388 = vmatprep.mubr.bf16.mxu0 0
      %5389 = vmatmul.mubr.bf16.gmra.mxu0 %v5210
      %v5390 = vpop.f32.mrf.mxu0
      %v5391 = vadd.f32 0.0, %v5390
      %v5392 = vpop.f32.mrf.mxu0
      %v5393 = vpop.f32.mrf.mxu0
      %v5394 = vadd.f32 0.0, %v5393
      %v5395 = vpop.f32.mrf.mxu0
      %5396 = vmatprep.mubr.bf16.mxu0 0
      %5397 = vmatmul.mubr.bf16.gmra.mxu0 %v5213
      %v5398 = vpop.f32.mrf.mxu0
      %v5399 = vadd.f32 0.0, %v5398
      %v5400 = vpop.f32.mrf.mxu0
      %v5401 = vpop.f32.mrf.mxu0
      %v5402 = vadd.f32 0.0, %v5401
      %v5403 = vpop.f32.mrf.mxu0
      %5404 = vmatprep.mubr.bf16.mxu0 0
      %5405 = vmatmul.mubr.bf16.gmra.mxu0 %v5216
      %v5406 = vpop.f32.mrf.mxu0
      %v5407 = vadd.f32 0.0, %v5406
      %v5408 = vpop.f32.mrf.mxu0
      %v5409 = vpop.f32.mrf.mxu0
      %v5410 = vadd.f32 0.0, %v5409
      %v5411 = vpop.f32.mrf.mxu0
      %5412 = vmatprep.mubr.bf16.mxu0 0
      %5413 = vmatmul.mubr.bf16.gmra.mxu0 %v5219
      %v5414 = vpop.f32.mrf.mxu0
      %v5415 = vadd.f32 0.0, %v5414
      %v5416 = vpop.f32.mrf.mxu0
      %v5417 = vpop.f32.mrf.mxu0
      %v5418 = vadd.f32 0.0, %v5417
      %v5419 = vpop.f32.mrf.mxu0
      %5420 = vmatprep.mubr.bf16.mxu0 0
      %5421 = vmatmul.mubr.bf16.gmra.mxu0 %v5222
      %v5422 = vpop.f32.mrf.mxu0
      %v5423 = vadd.f32 0.0, %v5422
      %v5424 = vpop.f32.mrf.mxu0
      %v5425 = vpop.f32.mrf.mxu0
      %v5426 = vadd.f32 0.0, %v5425
      %v5427 = vpop.f32.mrf.mxu0
      %5428 = vmatprep.mubr.bf16.mxu0 0
      %5429 = vmatmul.mubr.bf16.gmra.mxu0 %v5225
      %v5430 = vpop.f32.mrf.mxu0
      %v5431 = vadd.f32 0.0, %v5430
      %v5432 = vpop.f32.mrf.mxu0
      %v5433 = vpop.f32.mrf.mxu0
      %v5434 = vadd.f32 0.0, %v5433
      %v5435 = vpop.f32.mrf.mxu0
      %5436 = vmatprep.mubr.bf16.mxu0 0
      %5437 = vmatmul.mubr.bf16.gmra.mxu0 %v5228
      %v5438 = vpop.f32.mrf.mxu0
      %v5439 = vadd.f32 0.0, %v5438
      %v5440 = vpop.f32.mrf.mxu0
      %v5441 = vpop.f32.mrf.mxu0
      %v5442 = vadd.f32 0.0, %v5441
      %v5443 = vpop.f32.mrf.mxu0
      %5444 = vmatprep.mubr.bf16.mxu0 0
      %5445 = vmatmul.mubr.bf16.gmra.mxu0 %v5231
      %v5446 = vpop.f32.mrf.mxu0
      %v5447 = vadd.f32 0.0, %v5446
      %v5448 = vpop.f32.mrf.mxu0
      %v5449 = vpop.f32.mrf.mxu0
      %v5450 = vadd.f32 0.0, %v5449
      %v5451 = vpop.f32.mrf.mxu0
      %5452 = vmatprep.mubr.bf16.mxu0 0
      %5453 = vmatmul.mubr.bf16.gmra.mxu0 %v5234
      %v5454 = vpop.f32.mrf.mxu0
      %v5455 = vadd.f32 0.0, %v5454
      %v5456 = vpop.f32.mrf.mxu0
      %v5457 = vpop.f32.mrf.mxu0
      %v5458 = vadd.f32 0.0, %v5457
      %v5459 = vpop.f32.mrf.mxu0
      %5460 = vdwg.mxu0
      %v5461 = vld [vmem:[%s4242] sm:$0xff]
      %v5462 = vld [vmem:[%s4242 + $0x8] sm:$0xff]
      %v5463 = vld [vmem:[%s4242 + $0x10] sm:$0xff]
      %v5464 = vld [vmem:[%s4242 + $0x18] sm:$0xff]
      %v5465 = vld [vmem:[%s4242 + $0x20] sm:$0xff]
      %v5466 = vld [vmem:[%s4242 + $0x28] sm:$0xff]
      %v5467 = vld [vmem:[%s4242 + $0x30] sm:$0xff]
      %v5468 = vld [vmem:[%s4242 + $0x38] sm:$0xff]
      %v5469 = vld [vmem:[%s4242 + $0x40] sm:$0xff]
      %v5470 = vld [vmem:[%s4242 + $0x48] sm:$0xff]
      %v5471 = vld [vmem:[%s4242 + $0x50] sm:$0xff]
      %v5472 = vld [vmem:[%s4242 + $0x58] sm:$0xff]
      %v5473 = vld [vmem:[%s4242 + $0x60] sm:$0xff]
      %v5474 = vld [vmem:[%s4242 + $0x68] sm:$0xff]
      %v5475 = vld [vmem:[%s4242 + $0x70] sm:$0xff]
      %v5476 = vld [vmem:[%s4242 + $0x78] sm:$0xff]
      %v5477 = vld [vmem:[%s4242 + $0x80] sm:$0xff]
      %v5478 = vld [vmem:[%s4242 + $0x88] sm:$0xff]
      %v5479 = vld [vmem:[%s4242 + $0x90] sm:$0xff]
      %v5480 = vld [vmem:[%s4242 + $0x98] sm:$0xff]
      %v5481 = vld [vmem:[%s4242 + $0xa0] sm:$0xff]
      %v5482 = vld [vmem:[%s4242 + $0xa8] sm:$0xff]
      %v5483 = vld [vmem:[%s4242 + $0xb0] sm:$0xff]
      %v5484 = vld [vmem:[%s4242 + $0xb8] sm:$0xff]
      %v5485 = vld [vmem:[%s4242 + $0xc0] sm:$0xff]
      %v5486 = vld [vmem:[%s4242 + $0xc8] sm:$0xff]
      %v5487 = vld [vmem:[%s4242 + $0xd0] sm:$0xff]
      %v5488 = vld [vmem:[%s4242 + $0xd8] sm:$0xff]
      %v5489 = vld [vmem:[%s4242 + $0xe0] sm:$0xff]
      %v5490 = vld [vmem:[%s4242 + $0xe8] sm:$0xff]
      %v5491 = vld [vmem:[%s4242 + $0xf0] sm:$0xff]
      %v5492 = vld [vmem:[%s4242 + $0xf8] sm:$0xff]
      %v5493 = vld [vmem:[%s4242 + $0x100] sm:$0xff]
      %v5494 = vld [vmem:[%s4242 + $0x108] sm:$0xff]
      %v5495 = vld [vmem:[%s4242 + $0x110] sm:$0xff]
      %v5496 = vld [vmem:[%s4242 + $0x118] sm:$0xff]
      %v5497 = vld [vmem:[%s4242 + $0x120] sm:$0xff]
      %v5498 = vld [vmem:[%s4242 + $0x128] sm:$0xff]
      %v5499 = vld [vmem:[%s4242 + $0x130] sm:$0xff]
      %v5500 = vld [vmem:[%s4242 + $0x138] sm:$0xff]
      %v5501 = vld [vmem:[%s4242 + $0x140] sm:$0xff]
      %v5502 = vld [vmem:[%s4242 + $0x148] sm:$0xff]
      %v5503 = vld [vmem:[%s4242 + $0x150] sm:$0xff]
      %v5504 = vld [vmem:[%s4242 + $0x158] sm:$0xff]
      %v5505 = vld [vmem:[%s4242 + $0x160] sm:$0xff]
      %v5506 = vld [vmem:[%s4242 + $0x168] sm:$0xff]
      %v5507 = vld [vmem:[%s4242 + $0x170] sm:$0xff]
      %v5508 = vld [vmem:[%s4242 + $0x178] sm:$0xff]
      %v5509 = vadd.f32 %v5461, %v5271
      %v5510 = vadd.f32 %v5462, %v5274
      %v5511 = vadd.f32 %v5463, %v5279
      %v5512 = vadd.f32 %v5464, %v5282
      %v5513 = vadd.f32 %v5465, %v5287
      %v5514 = vadd.f32 %v5466, %v5290
      %v5515 = vadd.f32 %v5467, %v5295
      %v5516 = vadd.f32 %v5468, %v5298
      %v5517 = vadd.f32 %v5469, %v5303
      %v5518 = vadd.f32 %v5470, %v5306
      %v5519 = vadd.f32 %v5471, %v5311
      %v5520 = vadd.f32 %v5472, %v5314
      %v5521 = vadd.f32 %v5473, %v5319
      %v5522 = vadd.f32 %v5474, %v5322
      %v5523 = vadd.f32 %v5475, %v5327
      %v5524 = vadd.f32 %v5476, %v5330
      %v5525 = vadd.f32 %v5477, %v5335
      %v5526 = vadd.f32 %v5478, %v5338
      %v5527 = vadd.f32 %v5479, %v5343
      %v5528 = vadd.f32 %v5480, %v5346
      %v5529 = vadd.f32 %v5481, %v5351
      %v5530 = vadd.f32 %v5482, %v5354
      %v5531 = vadd.f32 %v5483, %v5359
      %v5532 = vadd.f32 %v5484, %v5362
      %v5533 = vadd.f32 %v5485, %v5367
      %v5534 = vadd.f32 %v5486, %v5370
      %v5535 = vadd.f32 %v5487, %v5375
      %v5536 = vadd.f32 %v5488, %v5378
      %v5537 = vadd.f32 %v5489, %v5383
      %v5538 = vadd.f32 %v5490, %v5386
      %v5539 = vadd.f32 %v5491, %v5391
      %v5540 = vadd.f32 %v5492, %v5394
      %v5541 = vadd.f32 %v5493, %v5399
      %v5542 = vadd.f32 %v5494, %v5402
      %v5543 = vadd.f32 %v5495, %v5407
      %v5544 = vadd.f32 %v5496, %v5410
      %v5545 = vadd.f32 %v5497, %v5415
      %v5546 = vadd.f32 %v5498, %v5418
      %v5547 = vadd.f32 %v5499, %v5423
      %v5548 = vadd.f32 %v5500, %v5426
      %v5549 = vadd.f32 %v5501, %v5431
      %v5550 = vadd.f32 %v5502, %v5434
      %v5551 = vadd.f32 %v5503, %v5439
      %v5552 = vadd.f32 %v5504, %v5442
      %v5553 = vadd.f32 %v5505, %v5447
      %v5554 = vadd.f32 %v5506, %v5450
      %v5555 = vadd.f32 %v5507, %v5455
      %v5556 = vadd.f32 %v5508, %v5458
      %5557 = vst.msk [vmem:[%s4242] sm:$0xff] %vm2364, %v5509
      %5558 = vst.msk [vmem:[%s4242 + $0x8] sm:$0xff] %vm2364, %v5510
      %5559 = vst.msk [vmem:[%s4242 + $0x10] sm:$0xff] %vm2364, %v5511
      %5560 = vst.msk [vmem:[%s4242 + $0x18] sm:$0xff] %vm2364, %v5512
      %5561 = vst.msk [vmem:[%s4242 + $0x20] sm:$0xff] %vm2364, %v5513
      %5562 = vst.msk [vmem:[%s4242 + $0x28] sm:$0xff] %vm2364, %v5514
      %5563 = vst.msk [vmem:[%s4242 + $0x30] sm:$0xff] %vm2364, %v5515
      %5564 = vst.msk [vmem:[%s4242 + $0x38] sm:$0xff] %vm2364, %v5516
      %5565 = vst.msk [vmem:[%s4242 + $0x40] sm:$0xff] %vm2364, %v5517
      %5566 = vst.msk [vmem:[%s4242 + $0x48] sm:$0xff] %vm2364, %v5518
      %5567 = vst.msk [vmem:[%s4242 + $0x50] sm:$0xff] %vm2364, %v5519
      %5568 = vst.msk [vmem:[%s4242 + $0x58] sm:$0xff] %vm2364, %v5520
      %5569 = vst.msk [vmem:[%s4242 + $0x60] sm:$0xff] %vm2364, %v5521
      %5570 = vst.msk [vmem:[%s4242 + $0x68] sm:$0xff] %vm2364, %v5522
      %5571 = vst.msk [vmem:[%s4242 + $0x70] sm:$0xff] %vm2364, %v5523
      %5572 = vst.msk [vmem:[%s4242 + $0x78] sm:$0xff] %vm2364, %v5524
      %5573 = vst.msk [vmem:[%s4242 + $0x80] sm:$0xff] %vm2364, %v5525
      %5574 = vst.msk [vmem:[%s4242 + $0x88] sm:$0xff] %vm2364, %v5526
      %5575 = vst.msk [vmem:[%s4242 + $0x90] sm:$0xff] %vm2364, %v5527
      %5576 = vst.msk [vmem:[%s4242 + $0x98] sm:$0xff] %vm2364, %v5528
      %5577 = vst.msk [vmem:[%s4242 + $0xa0] sm:$0xff] %vm2364, %v5529
      %5578 = vst.msk [vmem:[%s4242 + $0xa8] sm:$0xff] %vm2364, %v5530
      %5579 = vst.msk [vmem:[%s4242 + $0xb0] sm:$0xff] %vm2364, %v5531
      %5580 = vst.msk [vmem:[%s4242 + $0xb8] sm:$0xff] %vm2364, %v5532
      %5581 = vst.msk [vmem:[%s4242 + $0xc0] sm:$0xff] %vm2364, %v5533
      %5582 = vst.msk [vmem:[%s4242 + $0xc8] sm:$0xff] %vm2364, %v5534
      %5583 = vst.msk [vmem:[%s4242 + $0xd0] sm:$0xff] %vm2364, %v5535
      %5584 = vst.msk [vmem:[%s4242 + $0xd8] sm:$0xff] %vm2364, %v5536
      %5585 = vst.msk [vmem:[%s4242 + $0xe0] sm:$0xff] %vm2364, %v5537
      %5586 = vst.msk [vmem:[%s4242 + $0xe8] sm:$0xff] %vm2364, %v5538
      %5587 = vst.msk [vmem:[%s4242 + $0xf0] sm:$0xff] %vm2364, %v5539
      %5588 = vst.msk [vmem:[%s4242 + $0xf8] sm:$0xff] %vm2364, %v5540
      %5589 = vst.msk [vmem:[%s4242 + $0x100] sm:$0xff] %vm2364, %v5541
      %5590 = vst.msk [vmem:[%s4242 + $0x108] sm:$0xff] %vm2364, %v5542
      %5591 = vst.msk [vmem:[%s4242 + $0x110] sm:$0xff] %vm2364, %v5543
      %5592 = vst.msk [vmem:[%s4242 + $0x118] sm:$0xff] %vm2364, %v5544
      %5593 = vst.msk [vmem:[%s4242 + $0x120] sm:$0xff] %vm2364, %v5545
      %5594 = vst.msk [vmem:[%s4242 + $0x128] sm:$0xff] %vm2364, %v5546
      %5595 = vst.msk [vmem:[%s4242 + $0x130] sm:$0xff] %vm2364, %v5547
      %5596 = vst.msk [vmem:[%s4242 + $0x138] sm:$0xff] %vm2364, %v5548
      %5597 = vst.msk [vmem:[%s4242 + $0x140] sm:$0xff] %vm2364, %v5549
      %5598 = vst.msk [vmem:[%s4242 + $0x148] sm:$0xff] %vm2364, %v5550
      %5599 = vst.msk [vmem:[%s4242 + $0x150] sm:$0xff] %vm2364, %v5551
      %5600 = vst.msk [vmem:[%s4242 + $0x158] sm:$0xff] %vm2364, %v5552
      %5601 = vst.msk [vmem:[%s4242 + $0x160] sm:$0xff] %vm2364, %v5553
      %5602 = vst.msk [vmem:[%s4242 + $0x168] sm:$0xff] %vm2364, %v5554
      %5603 = vst.msk [vmem:[%s4242 + $0x170] sm:$0xff] %vm2364, %v5555
      %5604 = vst.msk [vmem:[%s4242 + $0x178] sm:$0xff] %vm2364, %v5556
      %v5605 = vld [vmem:[#allocation3] sm:$0xff]
      %v5606 = vld [vmem:[#allocation3 + $0x8] sm:$0xff]
      %v5607 = vld [vmem:[#allocation3 + $0x10] sm:$0xff]
      %v5608 = vld [vmem:[#allocation3 + $0x18] sm:$0xff]
      %v5609 = vld [vmem:[#allocation3 + $0x20] sm:$0xff]
      %v5610 = vld [vmem:[#allocation3 + $0x28] sm:$0xff]
      %v5611 = vld [vmem:[#allocation3 + $0x30] sm:$0xff]
      %v5612 = vld [vmem:[#allocation3 + $0x38] sm:$0xff]
      %v5613 = vld [vmem:[#allocation3 + $0x40] sm:$0xff]
      %v5614 = vld [vmem:[#allocation3 + $0x48] sm:$0xff]
      %v5615 = vld [vmem:[#allocation3 + $0x50] sm:$0xff]
      %v5616 = vld [vmem:[#allocation3 + $0x58] sm:$0xff]
      %v5617 = vld [vmem:[#allocation3 + $0x60] sm:$0xff]
      %v5618 = vld [vmem:[#allocation3 + $0x68] sm:$0xff]
      %v5619 = vld [vmem:[#allocation3 + $0x70] sm:$0xff]
      %v5620 = vld [vmem:[#allocation3 + $0x78] sm:$0xff]
      %v5621 = vld [vmem:[#allocation3 + $0x80] sm:$0xff]
      %v5622 = vld [vmem:[#allocation3 + $0x88] sm:$0xff]
      %v5623 = vld [vmem:[#allocation3 + $0x90] sm:$0xff]
      %v5624 = vld [vmem:[#allocation3 + $0x98] sm:$0xff]
      %v5625 = vld [vmem:[#allocation3 + $0xa0] sm:$0xff]
      %v5626 = vld [vmem:[#allocation3 + $0xa8] sm:$0xff]
      %v5627 = vld [vmem:[#allocation3 + $0xb0] sm:$0xff]
      %v5628 = vld [vmem:[#allocation3 + $0xb8] sm:$0xff]
      %v5629 = vld [vmem:[#allocation3 + $0xc0] sm:$0xff]
      %v5630 = vld [vmem:[#allocation3 + $0xc8] sm:$0xff]
      %v5631 = vld [vmem:[#allocation3 + $0xd0] sm:$0xff]
      %v5632 = vld [vmem:[#allocation3 + $0xd8] sm:$0xff]
      %v5633 = vld [vmem:[#allocation3 + $0xe0] sm:$0xff]
      %v5634 = vld [vmem:[#allocation3 + $0xe8] sm:$0xff]
      %v5635 = vld [vmem:[#allocation3 + $0xf0] sm:$0xff]
      %v5636 = vld [vmem:[#allocation3 + $0xf8] sm:$0xff]
      %v5637 = vld [vmem:[#allocation3 + $0x100] sm:$0xff]
      %v5638 = vld [vmem:[#allocation3 + $0x108] sm:$0xff]
      %v5639 = vld [vmem:[#allocation3 + $0x110] sm:$0xff]
      %v5640 = vld [vmem:[#allocation3 + $0x118] sm:$0xff]
      %v5641 = vld [vmem:[#allocation3 + $0x120] sm:$0xff]
      %v5642 = vld [vmem:[#allocation3 + $0x128] sm:$0xff]
      %v5643 = vld [vmem:[#allocation3 + $0x130] sm:$0xff]
      %v5644 = vld [vmem:[#allocation3 + $0x138] sm:$0xff]
      %v5645 = vld [vmem:[#allocation3 + $0x140] sm:$0xff]
      %v5646 = vld [vmem:[#allocation3 + $0x148] sm:$0xff]
      %v5647 = vld [vmem:[#allocation3 + $0x150] sm:$0xff]
      %v5648 = vld [vmem:[#allocation3 + $0x158] sm:$0xff]
      %v5649 = vld [vmem:[#allocation3 + $0x160] sm:$0xff]
      %v5650 = vld [vmem:[#allocation3 + $0x168] sm:$0xff]
      %v5651 = vld [vmem:[#allocation3 + $0x170] sm:$0xff]
      %v5652 = vld [vmem:[#allocation3 + $0x178] sm:$0xff]
      %v5653 = vld [vmem:[%s4242] sm:$0xff]
      %v5654 = vld [vmem:[%s4242 + $0x8] sm:$0xff]
      %v5655 = vld [vmem:[%s4242 + $0x10] sm:$0xff]
      %v5656 = vld [vmem:[%s4242 + $0x18] sm:$0xff]
      %v5657 = vld [vmem:[%s4242 + $0x20] sm:$0xff]
      %v5658 = vld [vmem:[%s4242 + $0x28] sm:$0xff]
      %v5659 = vld [vmem:[%s4242 + $0x30] sm:$0xff]
      %v5660 = vld [vmem:[%s4242 + $0x38] sm:$0xff]
      %v5661 = vld [vmem:[%s4242 + $0x40] sm:$0xff]
      %v5662 = vld [vmem:[%s4242 + $0x48] sm:$0xff]
      %v5663 = vld [vmem:[%s4242 + $0x50] sm:$0xff]
      %v5664 = vld [vmem:[%s4242 + $0x58] sm:$0xff]
      %v5665 = vld [vmem:[%s4242 + $0x60] sm:$0xff]
      %v5666 = vld [vmem:[%s4242 + $0x68] sm:$0xff]
      %v5667 = vld [vmem:[%s4242 + $0x70] sm:$0xff]
      %v5668 = vld [vmem:[%s4242 + $0x78] sm:$0xff]
      %v5669 = vld [vmem:[%s4242 + $0x80] sm:$0xff]
      %v5670 = vld [vmem:[%s4242 + $0x88] sm:$0xff]
      %v5671 = vld [vmem:[%s4242 + $0x90] sm:$0xff]
      %v5672 = vld [vmem:[%s4242 + $0x98] sm:$0xff]
      %v5673 = vld [vmem:[%s4242 + $0xa0] sm:$0xff]
      %v5674 = vld [vmem:[%s4242 + $0xa8] sm:$0xff]
      %v5675 = vld [vmem:[%s4242 + $0xb0] sm:$0xff]
      %v5676 = vld [vmem:[%s4242 + $0xb8] sm:$0xff]
      %v5677 = vld [vmem:[%s4242 + $0xc0] sm:$0xff]
      %v5678 = vld [vmem:[%s4242 + $0xc8] sm:$0xff]
      %v5679 = vld [vmem:[%s4242 + $0xd0] sm:$0xff]
      %v5680 = vld [vmem:[%s4242 + $0xd8] sm:$0xff]
      %v5681 = vld [vmem:[%s4242 + $0xe0] sm:$0xff]
      %v5682 = vld [vmem:[%s4242 + $0xe8] sm:$0xff]
      %v5683 = vld [vmem:[%s4242 + $0xf0] sm:$0xff]
      %v5684 = vld [vmem:[%s4242 + $0xf8] sm:$0xff]
      %v5685 = vld [vmem:[%s4242 + $0x100] sm:$0xff]
      %v5686 = vld [vmem:[%s4242 + $0x108] sm:$0xff]
      %v5687 = vld [vmem:[%s4242 + $0x110] sm:$0xff]
      %v5688 = vld [vmem:[%s4242 + $0x118] sm:$0xff]
      %v5689 = vld [vmem:[%s4242 + $0x120] sm:$0xff]
      %v5690 = vld [vmem:[%s4242 + $0x128] sm:$0xff]
      %v5691 = vld [vmem:[%s4242 + $0x130] sm:$0xff]
      %v5692 = vld [vmem:[%s4242 + $0x138] sm:$0xff]
      %v5693 = vld [vmem:[%s4242 + $0x140] sm:$0xff]
      %v5694 = vld [vmem:[%s4242 + $0x148] sm:$0xff]
      %v5695 = vld [vmem:[%s4242 + $0x150] sm:$0xff]
      %v5696 = vld [vmem:[%s4242 + $0x158] sm:$0xff]
      %v5697 = vld [vmem:[%s4242 + $0x160] sm:$0xff]
      %v5698 = vld [vmem:[%s4242 + $0x168] sm:$0xff]
      %v5699 = vld [vmem:[%s4242 + $0x170] sm:$0xff]
      %v5700 = vld [vmem:[%s4242 + $0x178] sm:$0xff]
      %v5701 = vmax.f32 %v5605, %v5653
      %v5702 = vmax.f32 %v5606, %v5654
      %v5703 = vmax.f32 %v5607, %v5655
      %v5704 = vmax.f32 %v5608, %v5656
      %v5705 = vmax.f32 %v5609, %v5657
      %v5706 = vmax.f32 %v5610, %v5658
      %v5707 = vmax.f32 %v5611, %v5659
      %v5708 = vmax.f32 %v5612, %v5660
      %v5709 = vmax.f32 %v5613, %v5661
      %v5710 = vmax.f32 %v5614, %v5662
      %v5711 = vmax.f32 %v5615, %v5663
      %v5712 = vmax.f32 %v5616, %v5664
      %v5713 = vmax.f32 %v5617, %v5665
      %v5714 = vmax.f32 %v5618, %v5666
      %v5715 = vmax.f32 %v5619, %v5667
      %v5716 = vmax.f32 %v5620, %v5668
      %v5717 = vmax.f32 %v5621, %v5669
      %v5718 = vmax.f32 %v5622, %v5670
      %v5719 = vmax.f32 %v5623, %v5671
      %v5720 = vmax.f32 %v5624, %v5672
      %v5721 = vmax.f32 %v5625, %v5673
      %v5722 = vmax.f32 %v5626, %v5674
      %v5723 = vmax.f32 %v5627, %v5675
      %v5724 = vmax.f32 %v5628, %v5676
      %v5725 = vmax.f32 %v5629, %v5677
      %v5726 = vmax.f32 %v5630, %v5678
      %v5727 = vmax.f32 %v5631, %v5679
      %v5728 = vmax.f32 %v5632, %v5680
      %v5729 = vmax.f32 %v5633, %v5681
      %v5730 = vmax.f32 %v5634, %v5682
      %v5731 = vmax.f32 %v5635, %v5683
      %v5732 = vmax.f32 %v5636, %v5684
      %v5733 = vmax.f32 %v5637, %v5685
      %v5734 = vmax.f32 %v5638, %v5686
      %v5735 = vmax.f32 %v5639, %v5687
      %v5736 = vmax.f32 %v5640, %v5688
      %v5737 = vmax.f32 %v5641, %v5689
      %v5738 = vmax.f32 %v5642, %v5690
      %v5739 = vmax.f32 %v5643, %v5691
      %v5740 = vmax.f32 %v5644, %v5692
      %v5741 = vmax.f32 %v5645, %v5693
      %v5742 = vmax.f32 %v5646, %v5694
      %v5743 = vmax.f32 %v5647, %v5695
      %v5744 = vmax.f32 %v5648, %v5696
      %v5745 = vmax.f32 %v5649, %v5697
      %v5746 = vmax.f32 %v5650, %v5698
      %v5747 = vmax.f32 %v5651, %v5699
      %v5748 = vmax.f32 %v5652, %v5700
      %v5749 = vmax.f32 %v5701, %v5703
      %v5750 = vmax.f32 %v5702, %v5704
      %v5751 = vmax.f32 %v5705, %v5707
      %v5752 = vmax.f32 %v5706, %v5708
      %v5753 = vmax.f32 %v5709, %v5711
      %v5754 = vmax.f32 %v5710, %v5712
      %v5755 = vmax.f32 %v5713, %v5715
      %v5756 = vmax.f32 %v5714, %v5716
      %v5757 = vmax.f32 %v5717, %v5719
      %v5758 = vmax.f32 %v5718, %v5720
      %v5759 = vmax.f32 %v5721, %v5723
      %v5760 = vmax.f32 %v5722, %v5724
      %v5761 = vmax.f32 %v5725, %v5727
      %v5762 = vmax.f32 %v5726, %v5728
      %v5763 = vmax.f32 %v5729, %v5731
      %v5764 = vmax.f32 %v5730, %v5732
      %v5765 = vmax.f32 %v5733, %v5735
      %v5766 = vmax.f32 %v5734, %v5736
      %v5767 = vmax.f32 %v5737, %v5739
      %v5768 = vmax.f32 %v5738, %v5740
      %v5769 = vmax.f32 %v5741, %v5743
      %v5770 = vmax.f32 %v5742, %v5744
      %v5771 = vmax.f32 %v5745, %v5747
      %v5772 = vmax.f32 %v5746, %v5748
      %v5773 = vld [vmem:[%s4] sm:$0x1]
      %v5775 = vlaneseq
      %v5776 = vshrl.u32 %v5775, 7
      %v5777 = vsub.s32 0, %v5776
      %v5778 = vrot.slane %v5773, %v5777
      %v5780 = vadd.f32 %v5749, %v5778
      %v5781 = vadd.f32 %v5750, %v5778
      %v5782 = vadd.f32 %v5751, %v5778
      %v5783 = vadd.f32 %v5752, %v5778
      %v5784 = vadd.f32 %v5753, %v5778
      %v5785 = vadd.f32 %v5754, %v5778
      %v5786 = vadd.f32 %v5755, %v5778
      %v5787 = vadd.f32 %v5756, %v5778
      %v5788 = vadd.f32 %v5757, %v5778
      %v5789 = vadd.f32 %v5758, %v5778
      %v5790 = vadd.f32 %v5759, %v5778
      %v5791 = vadd.f32 %v5760, %v5778
      %v5792 = vadd.f32 %v5761, %v5778
      %v5793 = vadd.f32 %v5762, %v5778
      %v5794 = vadd.f32 %v5763, %v5778
      %v5795 = vadd.f32 %v5764, %v5778
      %v5796 = vadd.f32 %v5765, %v5778
      %v5797 = vadd.f32 %v5766, %v5778
      %v5798 = vadd.f32 %v5767, %v5778
      %v5799 = vadd.f32 %v5768, %v5778
      %v5800 = vadd.f32 %v5769, %v5778
      %v5801 = vadd.f32 %v5770, %v5778
      %v5802 = vadd.f32 %v5771, %v5778
      %v5803 = vadd.f32 %v5772, %v5778
      %v5804 = vmax.f32 %v5780, 0.0
      %v5805 = vmax.f32 %v5781, 0.0
      %v5806 = vmax.f32 %v5782, 0.0
      %v5807 = vmax.f32 %v5783, 0.0
      %v5808 = vmax.f32 %v5784, 0.0
      %v5809 = vmax.f32 %v5785, 0.0
      %v5810 = vmax.f32 %v5786, 0.0
      %v5811 = vmax.f32 %v5787, 0.0
      %v5812 = vmax.f32 %v5788, 0.0
      %v5813 = vmax.f32 %v5789, 0.0
      %v5814 = vmax.f32 %v5790, 0.0
      %v5815 = vmax.f32 %v5791, 0.0
      %v5816 = vmax.f32 %v5792, 0.0
      %v5817 = vmax.f32 %v5793, 0.0
      %v5818 = vmax.f32 %v5794, 0.0
      %v5819 = vmax.f32 %v5795, 0.0
      %v5820 = vmax.f32 %v5796, 0.0
      %v5821 = vmax.f32 %v5797, 0.0
      %v5822 = vmax.f32 %v5798, 0.0
      %v5823 = vmax.f32 %v5799, 0.0
      %v5824 = vmax.f32 %v5800, 0.0
      %v5825 = vmax.f32 %v5801, 0.0
      %v5826 = vmax.f32 %v5802, 0.0
      %v5827 = vmax.f32 %v5803, 0.0
      %v5828 = vpack.c.bf16 %v5805, %v5804
      %v5829 = vpack.c.bf16 %v5807, %v5806
      %v5830 = vpack.c.bf16 %v5809, %v5808
      %v5831 = vpack.c.bf16 %v5811, %v5810
      %v5832 = vpack.c.bf16 %v5813, %v5812
      %v5833 = vpack.c.bf16 %v5815, %v5814
      %v5834 = vpack.c.bf16 %v5817, %v5816
      %v5835 = vpack.c.bf16 %v5819, %v5818
      %v5836 = vpack.c.bf16 %v5821, %v5820
      %v5837 = vpack.c.bf16 %v5823, %v5822
      %v5838 = vpack.c.bf16 %v5825, %v5824
      %v5839 = vpack.c.bf16 %v5827, %v5826
      %v5852 = vunpack.c.l.b16 %v5828
      %v5853 = vunpack.c.h.b16 %v5828
      %v5854 = vunpack.c.l.b16 %v5829
      %v5855 = vunpack.c.h.b16 %v5829
      %v5856 = vunpack.c.l.b16 %v5830
      %v5857 = vunpack.c.h.b16 %v5830
      %v5858 = vunpack.c.l.b16 %v5831
      %v5859 = vunpack.c.h.b16 %v5831
      %v5860 = vunpack.c.l.b16 %v5832
      %v5861 = vunpack.c.h.b16 %v5832
      %v5862 = vunpack.c.l.b16 %v5833
      %v5863 = vunpack.c.h.b16 %v5833
      %v5864 = vunpack.c.l.b16 %v5834
      %v5865 = vunpack.c.h.b16 %v5834
      %v5866 = vunpack.c.l.b16 %v5835
      %v5867 = vunpack.c.h.b16 %v5835
      %v5868 = vunpack.c.l.b16 %v5836
      %v5869 = vunpack.c.h.b16 %v5836
      %v5870 = vunpack.c.l.b16 %v5837
      %v5871 = vunpack.c.h.b16 %v5837
      %v5872 = vunpack.c.l.b16 %v5838
      %v5873 = vunpack.c.h.b16 %v5838
      %v5874 = vunpack.c.l.b16 %v5839
      %v5875 = vunpack.c.h.b16 %v5839
      %v5876 = vpack.c.b16 %v5852, %v5852
      %v5877 = vpack.c.b16 %v5853, %v5853
      %v5878 = vpack.c.b16 %v5854, %v5854
      %v5879 = vpack.c.b16 %v5855, %v5855
      %v5880 = vpack.c.b16 %v5856, %v5856
      %v5881 = vpack.c.b16 %v5857, %v5857
      %v5882 = vpack.c.b16 %v5858, %v5858
      %v5883 = vpack.c.b16 %v5859, %v5859
      %v5884 = vpack.c.b16 %v5860, %v5860
      %v5885 = vpack.c.b16 %v5861, %v5861
      %v5886 = vpack.c.b16 %v5862, %v5862
      %v5887 = vpack.c.b16 %v5863, %v5863
      %v5888 = vpack.c.b16 %v5864, %v5864
      %v5889 = vpack.c.b16 %v5865, %v5865
      %v5890 = vpack.c.b16 %v5866, %v5866
      %v5891 = vpack.c.b16 %v5867, %v5867
      %v5892 = vpack.c.b16 %v5868, %v5868
      %v5893 = vpack.c.b16 %v5869, %v5869
      %v5894 = vpack.c.b16 %v5870, %v5870
      %v5895 = vpack.c.b16 %v5871, %v5871
      %v5896 = vpack.c.b16 %v5872, %v5872
      %v5897 = vpack.c.b16 %v5873, %v5873
      %v5898 = vpack.c.b16 %v5874, %v5874
      %v5899 = vpack.c.b16 %v5875, %v5875
      %vm5924 = vcmask 519168
      %5925 = vst.msk [vmem:[%s224] sm:$0xf] %vm5924, %v5876
      %5926 = vst.msk [vmem:[%s224 + $0x4] sm:$0xf] %vm5924, %v5877
      %5927 = vst.msk [vmem:[%s224 + $0x8] sm:$0xf] %vm5924, %v5878
      %5928 = vst.msk [vmem:[%s224 + $0xc] sm:$0xf] %vm5924, %v5879
      %5929 = vst.msk [vmem:[%s224 + $0x10] sm:$0xf] %vm5924, %v5880
      %5930 = vst.msk [vmem:[%s224 + $0x14] sm:$0xf] %vm5924, %v5881
      %5931 = vst.msk [vmem:[%s224 + $0x18] sm:$0xf] %vm5924, %v5882
      %5932 = vst.msk [vmem:[%s224 + $0x1c] sm:$0xf] %vm5924, %v5883
      %5933 = vst.msk [vmem:[%s224 + $0x20] sm:$0xf] %vm5924, %v5884
      %5934 = vst.msk [vmem:[%s224 + $0x24] sm:$0xf] %vm5924, %v5885
      %5935 = vst.msk [vmem:[%s224 + $0x28] sm:$0xf] %vm5924, %v5886
      %5936 = vst.msk [vmem:[%s224 + $0x2c] sm:$0xf] %vm5924, %v5887
      %5937 = vst.msk [vmem:[%s224 + $0x30] sm:$0xf] %vm5924, %v5888
      %5938 = vst.msk [vmem:[%s224 + $0x34] sm:$0xf] %vm5924, %v5889
      %5939 = vst.msk [vmem:[%s224 + $0x38] sm:$0xf] %vm5924, %v5890
      %5940 = vst.msk [vmem:[%s224 + $0x3c] sm:$0xf] %vm5924, %v5891
      %5941 = vst.msk [vmem:[%s224 + $0x40] sm:$0xf] %vm5924, %v5892
      %5942 = vst.msk [vmem:[%s224 + $0x44] sm:$0xf] %vm5924, %v5893
      %5943 = vst.msk [vmem:[%s224 + $0x48] sm:$0xf] %vm5924, %v5894
      %5944 = vst.msk [vmem:[%s224 + $0x4c] sm:$0xf] %vm5924, %v5895
      %5945 = vst.msk [vmem:[%s224 + $0x50] sm:$0xf] %vm5924, %v5896
      %5946 = vst.msk [vmem:[%s224 + $0x54] sm:$0xf] %vm5924, %v5897
      %5947 = vst.msk [vmem:[%s224 + $0x58] sm:$0xf] %vm5924, %v5898
      %5948 = vst.msk [vmem:[%s224 + $0x5c] sm:$0xf] %vm5924, %v5899
      %p5949 = scmp.lt.s32.totalorder %s16, 1
      %s5950 = scalar_select %p5949, %s16, 1
      %s5951 = smul.addr %s5950, 24
      %s5952 = smul.addr %s5951, 4
      %s5953 = scalar_lea.vmem %s5, %s5952
      // Predicated region
      $region41: #{net_forward.2} parent=39 // pred_check
        %p5954 = pneg %p144
      $region42: #{net_forward.2} parent=39 // pred_check_branch
        %5956 = sbr.rel (%p5954) target = $region44
      $region43: #{net_forward.2} parent=39 // pred_region
        _
      $region44: #{net_forward.2} parent=39 // pred_fallthru
        _
    $region40: #{net_forward.2} parent=5 // pred_fallthru
      _
    %p5957 = scmp.le.s32.totalorder 2, %s11
    // Predicated region
    $region45: #{net_forward.2} parent=5 // pred_check
      %p5958 = pneg %p5957
    $region46: #{net_forward.2} parent=5 // pred_check_branch
      %5960 = sbr.rel (%p5958) target = $region48
    $region47: #{net_forward.2} parent=5 // pred_region
      %s5961 = ssub.s32 %s11, 2
      // Predicated region
      $region49: #{net_forward.2} parent=47 // pred_check
        %p5962 = pneg %p150
      $region50: #{net_forward.2} parent=47 // pred_check_branch
        %5964 = sbr.rel (%p5962) target = $region52
      $region51: #{net_forward.2} parent=47 // pred_region
        %p5965 = scmp.lt.s32.totalorder %s17, 1
        %s5966 = scalar_select %p5965, %s17, 1
        %s5967 = smul.addr %s5966, 24
        %s5968 = smul.addr %s5967, 4
        %s5969 = scalar_lea.vmem %s5, %s5968
      $region52: #{net_forward.2} parent=47 // pred_fallthru
        _
    $region48: #{net_forward.2} parent=5 // pred_fallthru
      _
  $region6: #{net_forward.2} parent=0 // loop_footer
    %s15 = sadd.s32 1, %s11
  $region7: #{net_forward.2} parent=0 // loop_footer_branch
    %10 = sbr.rel target = $region3
  $region8: #{net_forward.2} parent=0 // loop_exit
    _

// kernel: net_forward.3
$region0: #{net_forward.3}
  #allocation0 [shape = 'u32[]', space=smem, size = 0x4, offset = 0x4, fixed_abs, tag = 'smem constant byte address 0x4 - core index']
  #allocation1 [shape = 'u32[144,128]{1,0:T(1,128)}', space=vmem, size = 0x12000, scoped, tag = 'internal scratch']
  %s0 = inlined_call_operand.vmem [shape: bf16[8,12288], index: 0, kind: input, shape index: {}]
  %s1 = inlined_call_operand.vmem [shape: bf16[12288,128], index: 1, kind: input, shape index: {}]
  %s2 = inlined_call_operand.vmem [shape: f32[1,128], index: 2, kind: input, shape index: {}]
  %s3 = inlined_call_operand.vmem [shape: bf16[128,128], index: 3, kind: input, shape index: {}]
  %s4 = inlined_call_operand.vmem [shape: f32[1,128], index: 4, kind: input, shape index: {}]
  %s5 = inlined_call_operand.vmem [shape: f32[8,128], index: 5, kind: output, shape index: {}]
  %s6 = sld [smem:[#allocation0]]
  $region30: #{net_forward.3} parent=0
    _
  %s8 = ssub.s32 1, %s6
  %s9 = scalar_select 0, %s8, %s6
  // Predicated region
  $region2: #{net_forward.3} parent=0 // pred_check
    _
  $region3: #{net_forward.3} parent=0 // pred_check_branch
    %11 = sbr.rel (0) target = $region5
  $region4: #{net_forward.3} parent=0 // pred_region
    _
  $region5: #{net_forward.3} parent=0 // pred_fallthru
    _
  // Predicated region
  $region6: #{net_forward.3} parent=0 // pred_check
    _
  $region7: #{net_forward.3} parent=0 // pred_check_branch
    %13 = sbr.rel (0) target = $region9
  $region8: #{net_forward.3} parent=0 // pred_region
    _
  $region9: #{net_forward.3} parent=0 // pred_fallthru
    _
  // Predicated region
  $region10: #{net_forward.3} parent=0 // pred_check
    _
  $region11: #{net_forward.3} parent=0 // pred_check_branch
    %15 = sbr.rel (0) target = $region13
  $region12: #{net_forward.3} parent=0 // pred_region
    _
  $region13: #{net_forward.3} parent=0 // pred_fallthru
    _
  // Predicated region
  $region14: #{net_forward.3} parent=0 // pred_check
    _
  $region15: #{net_forward.3} parent=0 // pred_check_branch
    %17 = sbr.rel (0) target = $region17
  $region16: #{net_forward.3} parent=0 // pred_region
    _
  $region17: #{net_forward.3} parent=0 // pred_fallthru
    _
  // Predicated region
  $region18: #{net_forward.3} parent=0 // pred_check
    _
  $region19: #{net_forward.3} parent=0 // pred_check_branch
    %19 = sbr.rel (0) target = $region21
  $region20: #{net_forward.3} parent=0 // pred_region
    _
  $region21: #{net_forward.3} parent=0 // pred_fallthru
    _
  %v21 = vld [vmem:[%s0] sm:$0xff]
  %v22 = vld [vmem:[%s0 + $0x8] sm:$0xff]
  %v23 = vld [vmem:[%s0 + $0x10] sm:$0xff]
  %v24 = vld [vmem:[%s0 + $0x18] sm:$0xff]
  %v25 = vld [vmem:[%s0 + $0x20] sm:$0xff]
  %v26 = vld [vmem:[%s0 + $0x28] sm:$0xff]
  %v27 = vld [vmem:[%s0 + $0x30] sm:$0xff]
  %v28 = vld [vmem:[%s0 + $0x38] sm:$0xff]
  %v29 = vld [vmem:[%s0 + $0x40] sm:$0xff]
  %v30 = vld [vmem:[%s0 + $0x48] sm:$0xff]
  %v31 = vld [vmem:[%s0 + $0x50] sm:$0xff]
  %v32 = vld [vmem:[%s0 + $0x58] sm:$0xff]
  %v33 = vld [vmem:[%s0 + $0x60] sm:$0xff]
  %v34 = vld [vmem:[%s0 + $0x68] sm:$0xff]
  %v35 = vld [vmem:[%s0 + $0x70] sm:$0xff]
  %v36 = vld [vmem:[%s0 + $0x78] sm:$0xff]
  %v37 = vld [vmem:[%s0 + $0x80] sm:$0xff]
  %v38 = vld [vmem:[%s0 + $0x88] sm:$0xff]
  %v39 = vld [vmem:[%s0 + $0x90] sm:$0xff]
  %v40 = vld [vmem:[%s0 + $0x98] sm:$0xff]
  %v41 = vld [vmem:[%s0 + $0xa0] sm:$0xff]
  %v42 = vld [vmem:[%s0 + $0xa8] sm:$0xff]
  %v43 = vld [vmem:[%s0 + $0xb0] sm:$0xff]
  %v44 = vld [vmem:[%s0 + $0xb8] sm:$0xff]
  %v45 = vld [vmem:[%s0 + $0xc0] sm:$0xff]
  %v46 = vld [vmem:[%s0 + $0xc8] sm:$0xff]
  %v47 = vld [vmem:[%s0 + $0xd0] sm:$0xff]
  %v48 = vld [vmem:[%s0 + $0xd8] sm:$0xff]
  %v49 = vld [vmem:[%s0 + $0xe0] sm:$0xff]
  %v50 = vld [vmem:[%s0 + $0xe8] sm:$0xff]
  %v51 = vld [vmem:[%s0 + $0xf0] sm:$0xff]
  %v52 = vld [vmem:[%s0 + $0xf8] sm:$0xff]
  %v53 = vld [vmem:[%s0 + $0x100] sm:$0xff]
  %v54 = vld [vmem:[%s0 + $0x108] sm:$0xff]
  %v55 = vld [vmem:[%s0 + $0x110] sm:$0xff]
  %v56 = vld [vmem:[%s0 + $0x118] sm:$0xff]
  %v57 = vld [vmem:[%s0 + $0x120] sm:$0xff]
  %v58 = vld [vmem:[%s0 + $0x128] sm:$0xff]
  %v59 = vld [vmem:[%s0 + $0x130] sm:$0xff]
  %v60 = vld [vmem:[%s0 + $0x138] sm:$0xff]
  %v61 = vld [vmem:[%s0 + $0x140] sm:$0xff]
  %v62 = vld [vmem:[%s0 + $0x148] sm:$0xff]
  %v63 = vld [vmem:[%s0 + $0x150] sm:$0xff]
  %v64 = vld [vmem:[%s0 + $0x158] sm:$0xff]
  %v65 = vld [vmem:[%s0 + $0x160] sm:$0xff]
  %v66 = vld [vmem:[%s0 + $0x168] sm:$0xff]
  %v67 = vld [vmem:[%s0 + $0x170] sm:$0xff]
  %v68 = vld [vmem:[%s0 + $0x178] sm:$0xff]
  %v69 = vld [vmem:[%s1] sm:$0xf]
  %v70 = vld [vmem:[%s1 + $0x4] sm:$0xf]
  %v71 = vld [vmem:[%s1 + $0x8] sm:$0xf]
  %v72 = vld [vmem:[%s1 + $0xc] sm:$0xf]
  %v73 = vld [vmem:[%s1 + $0x10] sm:$0xf]
  %v74 = vld [vmem:[%s1 + $0x14] sm:$0xf]
  %v75 = vld [vmem:[%s1 + $0x18] sm:$0xf]
  %v76 = vld [vmem:[%s1 + $0x1c] sm:$0xf]
  %v77 = vld [vmem:[%s1 + $0x20] sm:$0xf]
  %v78 = vld [vmem:[%s1 + $0x24] sm:$0xf]
  %v79 = vld [vmem:[%s1 + $0x28] sm:$0xf]
  %v80 = vld [vmem:[%s1 + $0x2c] sm:$0xf]
  %v81 = vld [vmem:[%s1 + $0x30] sm:$0xf]
  %v82 = vld [vmem:[%s1 + $0x34] sm:$0xf]
  %v83 = vld [vmem:[%s1 + $0x38] sm:$0xf]
  %v84 = vld [vmem:[%s1 + $0x3c] sm:$0xf]
  %v85 = vld [vmem:[%s1 + $0x40] sm:$0xf]
  %v86 = vld [vmem:[%s1 + $0x44] sm:$0xf]
  %v87 = vld [vmem:[%s1 + $0x48] sm:$0xf]
  %v88 = vld [vmem:[%s1 + $0x4c] sm:$0xf]
  %v89 = vld [vmem:[%s1 + $0x50] sm:$0xf]
  %v90 = vld [vmem:[%s1 + $0x54] sm:$0xf]
  %v91 = vld [vmem:[%s1 + $0x58] sm:$0xf]
  %v92 = vld [vmem:[%s1 + $0x5c] sm:$0xf]
  %v93 = vld [vmem:[%s1 + $0x60] sm:$0xf]
  %v94 = vld [vmem:[%s1 + $0x64] sm:$0xf]
  %v95 = vld [vmem:[%s1 + $0x68] sm:$0xf]
  %v96 = vld [vmem:[%s1 + $0x6c] sm:$0xf]
  %v97 = vld [vmem:[%s1 + $0x70] sm:$0xf]
  %v98 = vld [vmem:[%s1 + $0x74] sm:$0xf]
  %v99 = vld [vmem:[%s1 + $0x78] sm:$0xf]
  %v100 = vld [vmem:[%s1 + $0x7c] sm:$0xf]
  %v101 = vld [vmem:[%s1 + $0x80] sm:$0xf]
  %v102 = vld [vmem:[%s1 + $0x84] sm:$0xf]
  %v103 = vld [vmem:[%s1 + $0x88] sm:$0xf]
  %v104 = vld [vmem:[%s1 + $0x8c] sm:$0xf]
  %v105 = vld [vmem:[%s1 + $0x90] sm:$0xf]
  %v106 = vld [vmem:[%s1 + $0x94] sm:$0xf]
  %v107 = vld [vmem:[%s1 + $0x98] sm:$0xf]
  %v108 = vld [vmem:[%s1 + $0x9c] sm:$0xf]
  %v109 = vld [vmem:[%s1 + $0xa0] sm:$0xf]
  %v110 = vld [vmem:[%s1 + $0xa4] sm:$0xf]
  %v111 = vld [vmem:[%s1 + $0xa8] sm:$0xf]
  %v112 = vld [vmem:[%s1 + $0xac] sm:$0xf]
  %v113 = vld [vmem:[%s1 + $0xb0] sm:$0xf]
  %v114 = vld [vmem:[%s1 + $0xb4] sm:$0xf]
  %v115 = vld [vmem:[%s1 + $0xb8] sm:$0xf]
  %v116 = vld [vmem:[%s1 + $0xbc] sm:$0xf]
  %v117 = vld [vmem:[%s1 + $0xc0] sm:$0xf]
  %v118 = vld [vmem:[%s1 + $0xc4] sm:$0xf]
  %v119 = vld [vmem:[%s1 + $0xc8] sm:$0xf]
  %v120 = vld [vmem:[%s1 + $0xcc] sm:$0xf]
  %v121 = vld [vmem:[%s1 + $0xd0] sm:$0xf]
  %v122 = vld [vmem:[%s1 + $0xd4] sm:$0xf]
  %v123 = vld [vmem:[%s1 + $0xd8] sm:$0xf]
  %v124 = vld [vmem:[%s1 + $0xdc] sm:$0xf]
  %v125 = vld [vmem:[%s1 + $0xe0] sm:$0xf]
  %v126 = vld [vmem:[%s1 + $0xe4] sm:$0xf]
  %v127 = vld [vmem:[%s1 + $0xe8] sm:$0xf]
  %v128 = vld [vmem:[%s1 + $0xec] sm:$0xf]
  %v129 = vld [vmem:[%s1 + $0xf0] sm:$0xf]
  %v130 = vld [vmem:[%s1 + $0xf4] sm:$0xf]
  %v131 = vld [vmem:[%s1 + $0xf8] sm:$0xf]
  %v132 = vld [vmem:[%s1 + $0xfc] sm:$0xf]
  %v133 = vld [vmem:[%s1 + $0x100] sm:$0xf]
  %v134 = vld [vmem:[%s1 + $0x104] sm:$0xf]
  %v135 = vld [vmem:[%s1 + $0x108] sm:$0xf]
  %v136 = vld [vmem:[%s1 + $0x10c] sm:$0xf]
  %v137 = vld [vmem:[%s1 + $0x110] sm:$0xf]
  %v138 = vld [vmem:[%s1 + $0x114] sm:$0xf]
  %v139 = vld [vmem:[%s1 + $0x118] sm:$0xf]
  %v140 = vld [vmem:[%s1 + $0x11c] sm:$0xf]
  %v141 = vld [vmem:[%s1 + $0x120] sm:$0xf]
  %v142 = vld [vmem:[%s1 + $0x124] sm:$0xf]
  %v143 = vld [vmem:[%s1 + $0x128] sm:$0xf]
  %v144 = vld [vmem:[%s1 + $0x12c] sm:$0xf]
  %v145 = vld [vmem:[%s1 + $0x130] sm:$0xf]
  %v146 = vld [vmem:[%s1 + $0x134] sm:$0xf]
  %v147 = vld [vmem:[%s1 + $0x138] sm:$0xf]
  %v148 = vld [vmem:[%s1 + $0x13c] sm:$0xf]
  %v149 = vld [vmem:[%s1 + $0x140] sm:$0xf]
  %v150 = vld [vmem:[%s1 + $0x144] sm:$0xf]
  %v151 = vld [vmem:[%s1 + $0x148] sm:$0xf]
  %v152 = vld [vmem:[%s1 + $0x14c] sm:$0xf]
  %v153 = vld [vmem:[%s1 + $0x150] sm:$0xf]
  %v154 = vld [vmem:[%s1 + $0x154] sm:$0xf]
  %v155 = vld [vmem:[%s1 + $0x158] sm:$0xf]
  %v156 = vld [vmem:[%s1 + $0x15c] sm:$0xf]
  %v157 = vld [vmem:[%s1 + $0x160] sm:$0xf]
  %v158 = vld [vmem:[%s1 + $0x164] sm:$0xf]
  %v159 = vld [vmem:[%s1 + $0x168] sm:$0xf]
  %v160 = vld [vmem:[%s1 + $0x16c] sm:$0xf]
  %v161 = vld [vmem:[%s1 + $0x170] sm:$0xf]
  %v162 = vld [vmem:[%s1 + $0x174] sm:$0xf]
  %v163 = vld [vmem:[%s1 + $0x178] sm:$0xf]
  %v164 = vld [vmem:[%s1 + $0x17c] sm:$0xf]
  %v165 = vld [vmem:[%s1 + $0x180] sm:$0xf]
  %v166 = vld [vmem:[%s1 + $0x184] sm:$0xf]
  %v167 = vld [vmem:[%s1 + $0x188] sm:$0xf]
  %v168 = vld [vmem:[%s1 + $0x18c] sm:$0xf]
  %v169 = vld [vmem:[%s1 + $0x190] sm:$0xf]
  %v170 = vld [vmem:[%s1 + $0x194] sm:$0xf]
  %v171 = vld [vmem:[%s1 + $0x198] sm:$0xf]
  %v172 = vld [vmem:[%s1 + $0x19c] sm:$0xf]
  %v173 = vld [vmem:[%s1 + $0x1a0] sm:$0xf]
  %v174 = vld [vmem:[%s1 + $0x1a4] sm:$0xf]
  %v175 = vld [vmem:[%s1 + $0x1a8] sm:$0xf]
  %v176 = vld [vmem:[%s1 + $0x1ac] sm:$0xf]
  %v177 = vld [vmem:[%s1 + $0x1b0] sm:$0xf]
  %v178 = vld [vmem:[%s1 + $0x1b4] sm:$0xf]
  %v179 = vld [vmem:[%s1 + $0x1b8] sm:$0xf]
  %v180 = vld [vmem:[%s1 + $0x1bc] sm:$0xf]
  %v181 = vld [vmem:[%s1 + $0x1c0] sm:$0xf]
  %v182 = vld [vmem:[%s1 + $0x1c4] sm:$0xf]
  %v183 = vld [vmem:[%s1 + $0x1c8] sm:$0xf]
  %v184 = vld [vmem:[%s1 + $0x1cc] sm:$0xf]
  %v185 = vld [vmem:[%s1 + $0x1d0] sm:$0xf]
  %v186 = vld [vmem:[%s1 + $0x1d4] sm:$0xf]
  %v187 = vld [vmem:[%s1 + $0x1d8] sm:$0xf]
  %v188 = vld [vmem:[%s1 + $0x1dc] sm:$0xf]
  %v189 = vld [vmem:[%s1 + $0x1e0] sm:$0xf]
  %v190 = vld [vmem:[%s1 + $0x1e4] sm:$0xf]
  %v191 = vld [vmem:[%s1 + $0x1e8] sm:$0xf]
  %v192 = vld [vmem:[%s1 + $0x1ec] sm:$0xf]
  %v193 = vld [vmem:[%s1 + $0x1f0] sm:$0xf]
  %v194 = vld [vmem:[%s1 + $0x1f4] sm:$0xf]
  %v195 = vld [vmem:[%s1 + $0x1f8] sm:$0xf]
  %v196 = vld [vmem:[%s1 + $0x1fc] sm:$0xf]
  %v197 = vld [vmem:[%s1 + $0x200] sm:$0xf]
  %v198 = vld [vmem:[%s1 + $0x204] sm:$0xf]
  %v199 = vld [vmem:[%s1 + $0x208] sm:$0xf]
  %v200 = vld [vmem:[%s1 + $0x20c] sm:$0xf]
  %v201 = vld [vmem:[%s1 + $0x210] sm:$0xf]
  %v202 = vld [vmem:[%s1 + $0x214] sm:$0xf]
  %v203 = vld [vmem:[%s1 + $0x218] sm:$0xf]
  %v204 = vld [vmem:[%s1 + $0x21c] sm:$0xf]
  %v205 = vld [vmem:[%s1 + $0x220] sm:$0xf]
  %v206 = vld [vmem:[%s1 + $0x224] sm:$0xf]
  %v207 = vld [vmem:[%s1 + $0x228] sm:$0xf]
  %v208 = vld [vmem:[%s1 + $0x22c] sm:$0xf]
  %v209 = vld [vmem:[%s1 + $0x230] sm:$0xf]
  %v210 = vld [vmem:[%s1 + $0x234] sm:$0xf]
  %v211 = vld [vmem:[%s1 + $0x238] sm:$0xf]
  %v212 = vld [vmem:[%s1 + $0x23c] sm:$0xf]
  %v213 = vld [vmem:[%s1 + $0x240] sm:$0xf]
  %v214 = vld [vmem:[%s1 + $0x244] sm:$0xf]
  %v215 = vld [vmem:[%s1 + $0x248] sm:$0xf]
  %v216 = vld [vmem:[%s1 + $0x24c] sm:$0xf]
  %v217 = vld [vmem:[%s1 + $0x250] sm:$0xf]
  %v218 = vld [vmem:[%s1 + $0x254] sm:$0xf]
  %v219 = vld [vmem:[%s1 + $0x258] sm:$0xf]
  %v220 = vld [vmem:[%s1 + $0x25c] sm:$0xf]
  %v221 = vld [vmem:[%s1 + $0x260] sm:$0xf]
  %v222 = vld [vmem:[%s1 + $0x264] sm:$0xf]
  %v223 = vld [vmem:[%s1 + $0x268] sm:$0xf]
  %v224 = vld [vmem:[%s1 + $0x26c] sm:$0xf]
  %v225 = vld [vmem:[%s1 + $0x270] sm:$0xf]
  %v226 = vld [vmem:[%s1 + $0x274] sm:$0xf]
  %v227 = vld [vmem:[%s1 + $0x278] sm:$0xf]
  %v228 = vld [vmem:[%s1 + $0x27c] sm:$0xf]
  %v229 = vld [vmem:[%s1 + $0x280] sm:$0xf]
  %v230 = vld [vmem:[%s1 + $0x284] sm:$0xf]
  %v231 = vld [vmem:[%s1 + $0x288] sm:$0xf]
  %v232 = vld [vmem:[%s1 + $0x28c] sm:$0xf]
  %v233 = vld [vmem:[%s1 + $0x290] sm:$0xf]
  %v234 = vld [vmem:[%s1 + $0x294] sm:$0xf]
  %v235 = vld [vmem:[%s1 + $0x298] sm:$0xf]
  %v236 = vld [vmem:[%s1 + $0x29c] sm:$0xf]
  %v237 = vld [vmem:[%s1 + $0x2a0] sm:$0xf]
  %v238 = vld [vmem:[%s1 + $0x2a4] sm:$0xf]
  %v239 = vld [vmem:[%s1 + $0x2a8] sm:$0xf]
  %v240 = vld [vmem:[%s1 + $0x2ac] sm:$0xf]
  %v241 = vld [vmem:[%s1 + $0x2b0] sm:$0xf]
  %v242 = vld [vmem:[%s1 + $0x2b4] sm:$0xf]
  %v243 = vld [vmem:[%s1 + $0x2b8] sm:$0xf]
  %v244 = vld [vmem:[%s1 + $0x2bc] sm:$0xf]
  %v245 = vld [vmem:[%s1 + $0x2c0] sm:$0xf]
  %v246 = vld [vmem:[%s1 + $0x2c4] sm:$0xf]
  %v247 = vld [vmem:[%s1 + $0x2c8] sm:$0xf]
  %v248 = vld [vmem:[%s1 + $0x2cc] sm:$0xf]
  %v249 = vld [vmem:[%s1 + $0x2d0] sm:$0xf]
  %v250 = vld [vmem:[%s1 + $0x2d4] sm:$0xf]
  %v251 = vld [vmem:[%s1 + $0x2d8] sm:$0xf]
  %v252 = vld [vmem:[%s1 + $0x2dc] sm:$0xf]
  %v253 = vld [vmem:[%s1 + $0x2e0] sm:$0xf]
  %v254 = vld [vmem:[%s1 + $0x2e4] sm:$0xf]
  %v255 = vld [vmem:[%s1 + $0x2e8] sm:$0xf]
  %v256 = vld [vmem:[%s1 + $0x2ec] sm:$0xf]
  %v257 = vld [vmem:[%s1 + $0x2f0] sm:$0xf]
  %v258 = vld [vmem:[%s1 + $0x2f4] sm:$0xf]
  %v259 = vld [vmem:[%s1 + $0x2f8] sm:$0xf]
  %v260 = vld [vmem:[%s1 + $0x2fc] sm:$0xf]
  %v261 = vld [vmem:[%s1 + $0x300] sm:$0xf]
  %v262 = vld [vmem:[%s1 + $0x304] sm:$0xf]
  %v263 = vld [vmem:[%s1 + $0x308] sm:$0xf]
  %v264 = vld [vmem:[%s1 + $0x30c] sm:$0xf]
  %v265 = vld [vmem:[%s1 + $0x310] sm:$0xf]
  %v266 = vld [vmem:[%s1 + $0x314] sm:$0xf]
  %v267 = vld [vmem:[%s1 + $0x318] sm:$0xf]
  %v268 = vld [vmem:[%s1 + $0x31c] sm:$0xf]
  %v269 = vld [vmem:[%s1 + $0x320] sm:$0xf]
  %v270 = vld [vmem:[%s1 + $0x324] sm:$0xf]
  %v271 = vld [vmem:[%s1 + $0x328] sm:$0xf]
  %v272 = vld [vmem:[%s1 + $0x32c] sm:$0xf]
  %v273 = vld [vmem:[%s1 + $0x330] sm:$0xf]
  %v274 = vld [vmem:[%s1 + $0x334] sm:$0xf]
  %v275 = vld [vmem:[%s1 + $0x338] sm:$0xf]
  %v276 = vld [vmem:[%s1 + $0x33c] sm:$0xf]
  %v277 = vld [vmem:[%s1 + $0x340] sm:$0xf]
  %v278 = vld [vmem:[%s1 + $0x344] sm:$0xf]
  %v279 = vld [vmem:[%s1 + $0x348] sm:$0xf]
  %v280 = vld [vmem:[%s1 + $0x34c] sm:$0xf]
  %v281 = vld [vmem:[%s1 + $0x350] sm:$0xf]
  %v282 = vld [vmem:[%s1 + $0x354] sm:$0xf]
  %v283 = vld [vmem:[%s1 + $0x358] sm:$0xf]
  %v284 = vld [vmem:[%s1 + $0x35c] sm:$0xf]
  %v285 = vld [vmem:[%s1 + $0x360] sm:$0xf]
  %v286 = vld [vmem:[%s1 + $0x364] sm:$0xf]
  %v287 = vld [vmem:[%s1 + $0x368] sm:$0xf]
  %v288 = vld [vmem:[%s1 + $0x36c] sm:$0xf]
  %v289 = vld [vmem:[%s1 + $0x370] sm:$0xf]
  %v290 = vld [vmem:[%s1 + $0x374] sm:$0xf]
  %v291 = vld [vmem:[%s1 + $0x378] sm:$0xf]
  %v292 = vld [vmem:[%s1 + $0x37c] sm:$0xf]
  %v293 = vld [vmem:[%s1 + $0x380] sm:$0xf]
  %v294 = vld [vmem:[%s1 + $0x384] sm:$0xf]
  %v295 = vld [vmem:[%s1 + $0x388] sm:$0xf]
  %v296 = vld [vmem:[%s1 + $0x38c] sm:$0xf]
  %v297 = vld [vmem:[%s1 + $0x390] sm:$0xf]
  %v298 = vld [vmem:[%s1 + $0x394] sm:$0xf]
  %v299 = vld [vmem:[%s1 + $0x398] sm:$0xf]
  %v300 = vld [vmem:[%s1 + $0x39c] sm:$0xf]
  %v301 = vld [vmem:[%s1 + $0x3a0] sm:$0xf]
  %v302 = vld [vmem:[%s1 + $0x3a4] sm:$0xf]
  %v303 = vld [vmem:[%s1 + $0x3a8] sm:$0xf]
  %v304 = vld [vmem:[%s1 + $0x3ac] sm:$0xf]
  %v305 = vld [vmem:[%s1 + $0x3b0] sm:$0xf]
  %v306 = vld [vmem:[%s1 + $0x3b4] sm:$0xf]
  %v307 = vld [vmem:[%s1 + $0x3b8] sm:$0xf]
  %v308 = vld [vmem:[%s1 + $0x3bc] sm:$0xf]
  %v309 = vld [vmem:[%s1 + $0x3c0] sm:$0xf]
  %v310 = vld [vmem:[%s1 + $0x3c4] sm:$0xf]
  %v311 = vld [vmem:[%s1 + $0x3c8] sm:$0xf]
  %v312 = vld [vmem:[%s1 + $0x3cc] sm:$0xf]
  %v313 = vld [vmem:[%s1 + $0x3d0] sm:$0xf]
  %v314 = vld [vmem:[%s1 + $0x3d4] sm:$0xf]
  %v315 = vld [vmem:[%s1 + $0x3d8] sm:$0xf]
  %v316 = vld [vmem:[%s1 + $0x3dc] sm:$0xf]
  %v317 = vld [vmem:[%s1 + $0x3e0] sm:$0xf]
  %v318 = vld [vmem:[%s1 + $0x3e4] sm:$0xf]
  %v319 = vld [vmem:[%s1 + $0x3e8] sm:$0xf]
  %v320 = vld [vmem:[%s1 + $0x3ec] sm:$0xf]
  %v321 = vld [vmem:[%s1 + $0x3f0] sm:$0xf]
  %v322 = vld [vmem:[%s1 + $0x3f4] sm:$0xf]
  %v323 = vld [vmem:[%s1 + $0x3f8] sm:$0xf]
  %v324 = vld [vmem:[%s1 + $0x3fc] sm:$0xf]
  %v325 = vld [vmem:[%s1 + $0x400] sm:$0xf]
  %v326 = vld [vmem:[%s1 + $0x404] sm:$0xf]
  %v327 = vld [vmem:[%s1 + $0x408] sm:$0xf]
  %v328 = vld [vmem:[%s1 + $0x40c] sm:$0xf]
  %v329 = vld [vmem:[%s1 + $0x410] sm:$0xf]
  %v330 = vld [vmem:[%s1 + $0x414] sm:$0xf]
  %v331 = vld [vmem:[%s1 + $0x418] sm:$0xf]
  %v332 = vld [vmem:[%s1 + $0x41c] sm:$0xf]
  %v333 = vld [vmem:[%s1 + $0x420] sm:$0xf]
  %v334 = vld [vmem:[%s1 + $0x424] sm:$0xf]
  %v335 = vld [vmem:[%s1 + $0x428] sm:$0xf]
  %v336 = vld [vmem:[%s1 + $0x42c] sm:$0xf]
  %v337 = vld [vmem:[%s1 + $0x430] sm:$0xf]
  %v338 = vld [vmem:[%s1 + $0x434] sm:$0xf]
  %v339 = vld [vmem:[%s1 + $0x438] sm:$0xf]
  %v340 = vld [vmem:[%s1 + $0x43c] sm:$0xf]
  %v341 = vld [vmem:[%s1 + $0x440] sm:$0xf]
  %v342 = vld [vmem:[%s1 + $0x444] sm:$0xf]
  %v343 = vld [vmem:[%s1 + $0x448] sm:$0xf]
  %v344 = vld [vmem:[%s1 + $0x44c] sm:$0xf]
  %v345 = vld [vmem:[%s1 + $0x450] sm:$0xf]
  %v346 = vld [vmem:[%s1 + $0x454] sm:$0xf]
  %v347 = vld [vmem:[%s1 + $0x458] sm:$0xf]
  %v348 = vld [vmem:[%s1 + $0x45c] sm:$0xf]
  %v349 = vld [vmem:[%s1 + $0x460] sm:$0xf]
  %v350 = vld [vmem:[%s1 + $0x464] sm:$0xf]
  %v351 = vld [vmem:[%s1 + $0x468] sm:$0xf]
  %v352 = vld [vmem:[%s1 + $0x46c] sm:$0xf]
  %v353 = vld [vmem:[%s1 + $0x470] sm:$0xf]
  %v354 = vld [vmem:[%s1 + $0x474] sm:$0xf]
  %v355 = vld [vmem:[%s1 + $0x478] sm:$0xf]
  %v356 = vld [vmem:[%s1 + $0x47c] sm:$0xf]
  %v357 = vld [vmem:[%s1 + $0x480] sm:$0xf]
  %v358 = vld [vmem:[%s1 + $0x484] sm:$0xf]
  %v359 = vld [vmem:[%s1 + $0x488] sm:$0xf]
  %v360 = vld [vmem:[%s1 + $0x48c] sm:$0xf]
  %v361 = vld [vmem:[%s1 + $0x490] sm:$0xf]
  %v362 = vld [vmem:[%s1 + $0x494] sm:$0xf]
  %v363 = vld [vmem:[%s1 + $0x498] sm:$0xf]
  %v364 = vld [vmem:[%s1 + $0x49c] sm:$0xf]
  %v365 = vld [vmem:[%s1 + $0x4a0] sm:$0xf]
  %v366 = vld [vmem:[%s1 + $0x4a4] sm:$0xf]
  %v367 = vld [vmem:[%s1 + $0x4a8] sm:$0xf]
  %v368 = vld [vmem:[%s1 + $0x4ac] sm:$0xf]
  %v369 = vld [vmem:[%s1 + $0x4b0] sm:$0xf]
  %v370 = vld [vmem:[%s1 + $0x4b4] sm:$0xf]
  %v371 = vld [vmem:[%s1 + $0x4b8] sm:$0xf]
  %v372 = vld [vmem:[%s1 + $0x4bc] sm:$0xf]
  %v373 = vld [vmem:[%s1 + $0x4c0] sm:$0xf]
  %v374 = vld [vmem:[%s1 + $0x4c4] sm:$0xf]
  %v375 = vld [vmem:[%s1 + $0x4c8] sm:$0xf]
  %v376 = vld [vmem:[%s1 + $0x4cc] sm:$0xf]
  %v377 = vld [vmem:[%s1 + $0x4d0] sm:$0xf]
  %v378 = vld [vmem:[%s1 + $0x4d4] sm:$0xf]
  %v379 = vld [vmem:[%s1 + $0x4d8] sm:$0xf]
  %v380 = vld [vmem:[%s1 + $0x4dc] sm:$0xf]
  %v381 = vld [vmem:[%s1 + $0x4e0] sm:$0xf]
  %v382 = vld [vmem:[%s1 + $0x4e4] sm:$0xf]
  %v383 = vld [vmem:[%s1 + $0x4e8] sm:$0xf]
  %v384 = vld [vmem:[%s1 + $0x4ec] sm:$0xf]
  %v385 = vld [vmem:[%s1 + $0x4f0] sm:$0xf]
  %v386 = vld [vmem:[%s1 + $0x4f4] sm:$0xf]
  %v387 = vld [vmem:[%s1 + $0x4f8] sm:$0xf]
  %v388 = vld [vmem:[%s1 + $0x4fc] sm:$0xf]
  %v389 = vld [vmem:[%s1 + $0x500] sm:$0xf]
  %v390 = vld [vmem:[%s1 + $0x504] sm:$0xf]
  %v391 = vld [vmem:[%s1 + $0x508] sm:$0xf]
  %v392 = vld [vmem:[%s1 + $0x50c] sm:$0xf]
  %v393 = vld [vmem:[%s1 + $0x510] sm:$0xf]
  %v394 = vld [vmem:[%s1 + $0x514] sm:$0xf]
  %v395 = vld [vmem:[%s1 + $0x518] sm:$0xf]
  %v396 = vld [vmem:[%s1 + $0x51c] sm:$0xf]
  %v397 = vld [vmem:[%s1 + $0x520] sm:$0xf]
  %v398 = vld [vmem:[%s1 + $0x524] sm:$0xf]
  %v399 = vld [vmem:[%s1 + $0x528] sm:$0xf]
  %v400 = vld [vmem:[%s1 + $0x52c] sm:$0xf]
  %v401 = vld [vmem:[%s1 + $0x530] sm:$0xf]
  %v402 = vld [vmem:[%s1 + $0x534] sm:$0xf]
  %v403 = vld [vmem:[%s1 + $0x538] sm:$0xf]
  %v404 = vld [vmem:[%s1 + $0x53c] sm:$0xf]
  %v405 = vld [vmem:[%s1 + $0x540] sm:$0xf]
  %v406 = vld [vmem:[%s1 + $0x544] sm:$0xf]
  %v407 = vld [vmem:[%s1 + $0x548] sm:$0xf]
  %v408 = vld [vmem:[%s1 + $0x54c] sm:$0xf]
  %v409 = vld [vmem:[%s1 + $0x550] sm:$0xf]
  %v410 = vld [vmem:[%s1 + $0x554] sm:$0xf]
  %v411 = vld [vmem:[%s1 + $0x558] sm:$0xf]
  %v412 = vld [vmem:[%s1 + $0x55c] sm:$0xf]
  %v413 = vld [vmem:[%s1 + $0x560] sm:$0xf]
  %v414 = vld [vmem:[%s1 + $0x564] sm:$0xf]
  %v415 = vld [vmem:[%s1 + $0x568] sm:$0xf]
  %v416 = vld [vmem:[%s1 + $0x56c] sm:$0xf]
  %v417 = vld [vmem:[%s1 + $0x570] sm:$0xf]
  %v418 = vld [vmem:[%s1 + $0x574] sm:$0xf]
  %v419 = vld [vmem:[%s1 + $0x578] sm:$0xf]
  %v420 = vld [vmem:[%s1 + $0x57c] sm:$0xf]
  %v421 = vld [vmem:[%s1 + $0x580] sm:$0xf]
  %v422 = vld [vmem:[%s1 + $0x584] sm:$0xf]
  %v423 = vld [vmem:[%s1 + $0x588] sm:$0xf]
  %v424 = vld [vmem:[%s1 + $0x58c] sm:$0xf]
  %v425 = vld [vmem:[%s1 + $0x590] sm:$0xf]
  %v426 = vld [vmem:[%s1 + $0x594] sm:$0xf]
  %v427 = vld [vmem:[%s1 + $0x598] sm:$0xf]
  %v428 = vld [vmem:[%s1 + $0x59c] sm:$0xf]
  %v429 = vld [vmem:[%s1 + $0x5a0] sm:$0xf]
  %v430 = vld [vmem:[%s1 + $0x5a4] sm:$0xf]
  %v431 = vld [vmem:[%s1 + $0x5a8] sm:$0xf]
  %v432 = vld [vmem:[%s1 + $0x5ac] sm:$0xf]
  %v433 = vld [vmem:[%s1 + $0x5b0] sm:$0xf]
  %v434 = vld [vmem:[%s1 + $0x5b4] sm:$0xf]
  %v435 = vld [vmem:[%s1 + $0x5b8] sm:$0xf]
  %v436 = vld [vmem:[%s1 + $0x5bc] sm:$0xf]
  %v437 = vld [vmem:[%s1 + $0x5c0] sm:$0xf]
  %v438 = vld [vmem:[%s1 + $0x5c4] sm:$0xf]
  %v439 = vld [vmem:[%s1 + $0x5c8] sm:$0xf]
  %v440 = vld [vmem:[%s1 + $0x5cc] sm:$0xf]
  %v441 = vld [vmem:[%s1 + $0x5d0] sm:$0xf]
  %v442 = vld [vmem:[%s1 + $0x5d4] sm:$0xf]
  %v443 = vld [vmem:[%s1 + $0x5d8] sm:$0xf]
  %v444 = vld [vmem:[%s1 + $0x5dc] sm:$0xf]
  %v445 = vld [vmem:[%s1 + $0x5e0] sm:$0xf]
  %v446 = vld [vmem:[%s1 + $0x5e4] sm:$0xf]
  %v447 = vld [vmem:[%s1 + $0x5e8] sm:$0xf]
  %v448 = vld [vmem:[%s1 + $0x5ec] sm:$0xf]
  %v449 = vld [vmem:[%s1 + $0x5f0] sm:$0xf]
  %v450 = vld [vmem:[%s1 + $0x5f4] sm:$0xf]
  %v451 = vld [vmem:[%s1 + $0x5f8] sm:$0xf]
  %v452 = vld [vmem:[%s1 + $0x5fc] sm:$0xf]
  %v453 = vld [vmem:[%s1 + $0x600] sm:$0xf]
  %v454 = vld [vmem:[%s1 + $0x604] sm:$0xf]
  %v455 = vld [vmem:[%s1 + $0x608] sm:$0xf]
  %v456 = vld [vmem:[%s1 + $0x60c] sm:$0xf]
  %v457 = vld [vmem:[%s1 + $0x610] sm:$0xf]
  %v458 = vld [vmem:[%s1 + $0x614] sm:$0xf]
  %v459 = vld [vmem:[%s1 + $0x618] sm:$0xf]
  %v460 = vld [vmem:[%s1 + $0x61c] sm:$0xf]
  %v461 = vld [vmem:[%s1 + $0x620] sm:$0xf]
  %v462 = vld [vmem:[%s1 + $0x624] sm:$0xf]
  %v463 = vld [vmem:[%s1 + $0x628] sm:$0xf]
  %v464 = vld [vmem:[%s1 + $0x62c] sm:$0xf]
  %v465 = vld [vmem:[%s1 + $0x630] sm:$0xf]
  %v466 = vld [vmem:[%s1 + $0x634] sm:$0xf]
  %v467 = vld [vmem:[%s1 + $0x638] sm:$0xf]
  %v468 = vld [vmem:[%s1 + $0x63c] sm:$0xf]
  %v469 = vld [vmem:[%s1 + $0x640] sm:$0xf]
  %v470 = vld [vmem:[%s1 + $0x644] sm:$0xf]
  %v471 = vld [vmem:[%s1 + $0x648] sm:$0xf]
  %v472 = vld [vmem:[%s1 + $0x64c] sm:$0xf]
  %v473 = vld [vmem:[%s1 + $0x650] sm:$0xf]
  %v474 = vld [vmem:[%s1 + $0x654] sm:$0xf]
  %v475 = vld [vmem:[%s1 + $0x658] sm:$0xf]
  %v476 = vld [vmem:[%s1 + $0x65c] sm:$0xf]
  %v477 = vld [vmem:[%s1 + $0x660] sm:$0xf]
  %v478 = vld [vmem:[%s1 + $0x664] sm:$0xf]
  %v479 = vld [vmem:[%s1 + $0x668] sm:$0xf]
  %v480 = vld [vmem:[%s1 + $0x66c] sm:$0xf]
  %v481 = vld [vmem:[%s1 + $0x670] sm:$0xf]
  %v482 = vld [vmem:[%s1 + $0x674] sm:$0xf]
  %v483 = vld [vmem:[%s1 + $0x678] sm:$0xf]
  %v484 = vld [vmem:[%s1 + $0x67c] sm:$0xf]
  %v485 = vld [vmem:[%s1 + $0x680] sm:$0xf]
  %v486 = vld [vmem:[%s1 + $0x684] sm:$0xf]
  %v487 = vld [vmem:[%s1 + $0x688] sm:$0xf]
  %v488 = vld [vmem:[%s1 + $0x68c] sm:$0xf]
  %v489 = vld [vmem:[%s1 + $0x690] sm:$0xf]
  %v490 = vld [vmem:[%s1 + $0x694] sm:$0xf]
  %v491 = vld [vmem:[%s1 + $0x698] sm:$0xf]
  %v492 = vld [vmem:[%s1 + $0x69c] sm:$0xf]
  %v493 = vld [vmem:[%s1 + $0x6a0] sm:$0xf]
  %v494 = vld [vmem:[%s1 + $0x6a4] sm:$0xf]
  %v495 = vld [vmem:[%s1 + $0x6a8] sm:$0xf]
  %v496 = vld [vmem:[%s1 + $0x6ac] sm:$0xf]
  %v497 = vld [vmem:[%s1 + $0x6b0] sm:$0xf]
  %v498 = vld [vmem:[%s1 + $0x6b4] sm:$0xf]
  %v499 = vld [vmem:[%s1 + $0x6b8] sm:$0xf]
  %v500 = vld [vmem:[%s1 + $0x6bc] sm:$0xf]
  %v501 = vld [vmem:[%s1 + $0x6c0] sm:$0xf]
  %v502 = vld [vmem:[%s1 + $0x6c4] sm:$0xf]
  %v503 = vld [vmem:[%s1 + $0x6c8] sm:$0xf]
  %v504 = vld [vmem:[%s1 + $0x6cc] sm:$0xf]
  %v505 = vld [vmem:[%s1 + $0x6d0] sm:$0xf]
  %v506 = vld [vmem:[%s1 + $0x6d4] sm:$0xf]
  %v507 = vld [vmem:[%s1 + $0x6d8] sm:$0xf]
  %v508 = vld [vmem:[%s1 + $0x6dc] sm:$0xf]
  %v509 = vld [vmem:[%s1 + $0x6e0] sm:$0xf]
  %v510 = vld [vmem:[%s1 + $0x6e4] sm:$0xf]
  %v511 = vld [vmem:[%s1 + $0x6e8] sm:$0xf]
  %v512 = vld [vmem:[%s1 + $0x6ec] sm:$0xf]
  %v513 = vld [vmem:[%s1 + $0x6f0] sm:$0xf]
  %v514 = vld [vmem:[%s1 + $0x6f4] sm:$0xf]
  %v515 = vld [vmem:[%s1 + $0x6f8] sm:$0xf]
  %v516 = vld [vmem:[%s1 + $0x6fc] sm:$0xf]
  %v517 = vld [vmem:[%s1 + $0x700] sm:$0xf]
  %v518 = vld [vmem:[%s1 + $0x704] sm:$0xf]
  %v519 = vld [vmem:[%s1 + $0x708] sm:$0xf]
  %v520 = vld [vmem:[%s1 + $0x70c] sm:$0xf]
  %v521 = vld [vmem:[%s1 + $0x710] sm:$0xf]
  %v522 = vld [vmem:[%s1 + $0x714] sm:$0xf]
  %v523 = vld [vmem:[%s1 + $0x718] sm:$0xf]
  %v524 = vld [vmem:[%s1 + $0x71c] sm:$0xf]
  %v525 = vld [vmem:[%s1 + $0x720] sm:$0xf]
  %v526 = vld [vmem:[%s1 + $0x724] sm:$0xf]
  %v527 = vld [vmem:[%s1 + $0x728] sm:$0xf]
  %v528 = vld [vmem:[%s1 + $0x72c] sm:$0xf]
  %v529 = vld [vmem:[%s1 + $0x730] sm:$0xf]
  %v530 = vld [vmem:[%s1 + $0x734] sm:$0xf]
  %v531 = vld [vmem:[%s1 + $0x738] sm:$0xf]
  %v532 = vld [vmem:[%s1 + $0x73c] sm:$0xf]
  %v533 = vld [vmem:[%s1 + $0x740] sm:$0xf]
  %v534 = vld [vmem:[%s1 + $0x744] sm:$0xf]
  %v535 = vld [vmem:[%s1 + $0x748] sm:$0xf]
  %v536 = vld [vmem:[%s1 + $0x74c] sm:$0xf]
  %v537 = vld [vmem:[%s1 + $0x750] sm:$0xf]
  %v538 = vld [vmem:[%s1 + $0x754] sm:$0xf]
  %v539 = vld [vmem:[%s1 + $0x758] sm:$0xf]
  %v540 = vld [vmem:[%s1 + $0x75c] sm:$0xf]
  %v541 = vld [vmem:[%s1 + $0x760] sm:$0xf]
  %v542 = vld [vmem:[%s1 + $0x764] sm:$0xf]
  %v543 = vld [vmem:[%s1 + $0x768] sm:$0xf]
  %v544 = vld [vmem:[%s1 + $0x76c] sm:$0xf]
  %v545 = vld [vmem:[%s1 + $0x770] sm:$0xf]
  %v546 = vld [vmem:[%s1 + $0x774] sm:$0xf]
  %v547 = vld [vmem:[%s1 + $0x778] sm:$0xf]
  %v548 = vld [vmem:[%s1 + $0x77c] sm:$0xf]
  %v549 = vld [vmem:[%s1 + $0x780] sm:$0xf]
  %v550 = vld [vmem:[%s1 + $0x784] sm:$0xf]
  %v551 = vld [vmem:[%s1 + $0x788] sm:$0xf]
  %v552 = vld [vmem:[%s1 + $0x78c] sm:$0xf]
  %v553 = vld [vmem:[%s1 + $0x790] sm:$0xf]
  %v554 = vld [vmem:[%s1 + $0x794] sm:$0xf]
  %v555 = vld [vmem:[%s1 + $0x798] sm:$0xf]
  %v556 = vld [vmem:[%s1 + $0x79c] sm:$0xf]
  %v557 = vld [vmem:[%s1 + $0x7a0] sm:$0xf]
  %v558 = vld [vmem:[%s1 + $0x7a4] sm:$0xf]
  %v559 = vld [vmem:[%s1 + $0x7a8] sm:$0xf]
  %v560 = vld [vmem:[%s1 + $0x7ac] sm:$0xf]
  %v561 = vld [vmem:[%s1 + $0x7b0] sm:$0xf]
  %v562 = vld [vmem:[%s1 + $0x7b4] sm:$0xf]
  %v563 = vld [vmem:[%s1 + $0x7b8] sm:$0xf]
  %v564 = vld [vmem:[%s1 + $0x7bc] sm:$0xf]
  %v565 = vld [vmem:[%s1 + $0x7c0] sm:$0xf]
  %v566 = vld [vmem:[%s1 + $0x7c4] sm:$0xf]
  %v567 = vld [vmem:[%s1 + $0x7c8] sm:$0xf]
  %v568 = vld [vmem:[%s1 + $0x7cc] sm:$0xf]
  %v569 = vld [vmem:[%s1 + $0x7d0] sm:$0xf]
  %v570 = vld [vmem:[%s1 + $0x7d4] sm:$0xf]
  %v571 = vld [vmem:[%s1 + $0x7d8] sm:$0xf]
  %v572 = vld [vmem:[%s1 + $0x7dc] sm:$0xf]
  %v573 = vld [vmem:[%s1 + $0x7e0] sm:$0xf]
  %v574 = vld [vmem:[%s1 + $0x7e4] sm:$0xf]
  %v575 = vld [vmem:[%s1 + $0x7e8] sm:$0xf]
  %v576 = vld [vmem:[%s1 + $0x7ec] sm:$0xf]
  %v577 = vld [vmem:[%s1 + $0x7f0] sm:$0xf]
  %v578 = vld [vmem:[%s1 + $0x7f4] sm:$0xf]
  %v579 = vld [vmem:[%s1 + $0x7f8] sm:$0xf]
  %v580 = vld [vmem:[%s1 + $0x7fc] sm:$0xf]
  %v581 = vld [vmem:[%s1 + $0x800] sm:$0xf]
  %v582 = vld [vmem:[%s1 + $0x804] sm:$0xf]
  %v583 = vld [vmem:[%s1 + $0x808] sm:$0xf]
  %v584 = vld [vmem:[%s1 + $0x80c] sm:$0xf]
  %v585 = vld [vmem:[%s1 + $0x810] sm:$0xf]
  %v586 = vld [vmem:[%s1 + $0x814] sm:$0xf]
  %v587 = vld [vmem:[%s1 + $0x818] sm:$0xf]
  %v588 = vld [vmem:[%s1 + $0x81c] sm:$0xf]
  %v589 = vld [vmem:[%s1 + $0x820] sm:$0xf]
  %v590 = vld [vmem:[%s1 + $0x824] sm:$0xf]
  %v591 = vld [vmem:[%s1 + $0x828] sm:$0xf]
  %v592 = vld [vmem:[%s1 + $0x82c] sm:$0xf]
  %v593 = vld [vmem:[%s1 + $0x830] sm:$0xf]
  %v594 = vld [vmem:[%s1 + $0x834] sm:$0xf]
  %v595 = vld [vmem:[%s1 + $0x838] sm:$0xf]
  %v596 = vld [vmem:[%s1 + $0x83c] sm:$0xf]
  %v597 = vld [vmem:[%s1 + $0x840] sm:$0xf]
  %v598 = vld [vmem:[%s1 + $0x844] sm:$0xf]
  %v599 = vld [vmem:[%s1 + $0x848] sm:$0xf]
  %v600 = vld [vmem:[%s1 + $0x84c] sm:$0xf]
  %v601 = vld [vmem:[%s1 + $0x850] sm:$0xf]
  %v602 = vld [vmem:[%s1 + $0x854] sm:$0xf]
  %v603 = vld [vmem:[%s1 + $0x858] sm:$0xf]
  %v604 = vld [vmem:[%s1 + $0x85c] sm:$0xf]
  %v605 = vld [vmem:[%s1 + $0x860] sm:$0xf]
  %v606 = vld [vmem:[%s1 + $0x864] sm:$0xf]
  %v607 = vld [vmem:[%s1 + $0x868] sm:$0xf]
  %v608 = vld [vmem:[%s1 + $0x86c] sm:$0xf]
  %v609 = vld [vmem:[%s1 + $0x870] sm:$0xf]
  %v610 = vld [vmem:[%s1 + $0x874] sm:$0xf]
  %v611 = vld [vmem:[%s1 + $0x878] sm:$0xf]
  %v612 = vld [vmem:[%s1 + $0x87c] sm:$0xf]
  %v613 = vld [vmem:[%s1 + $0x880] sm:$0xf]
  %v614 = vld [vmem:[%s1 + $0x884] sm:$0xf]
  %v615 = vld [vmem:[%s1 + $0x888] sm:$0xf]
  %v616 = vld [vmem:[%s1 + $0x88c] sm:$0xf]
  %v617 = vld [vmem:[%s1 + $0x890] sm:$0xf]
  %v618 = vld [vmem:[%s1 + $0x894] sm:$0xf]
  %v619 = vld [vmem:[%s1 + $0x898] sm:$0xf]
  %v620 = vld [vmem:[%s1 + $0x89c] sm:$0xf]
  %v621 = vld [vmem:[%s1 + $0x8a0] sm:$0xf]
  %v622 = vld [vmem:[%s1 + $0x8a4] sm:$0xf]
  %v623 = vld [vmem:[%s1 + $0x8a8] sm:$0xf]
  %v624 = vld [vmem:[%s1 + $0x8ac] sm:$0xf]
  %v625 = vld [vmem:[%s1 + $0x8b0] sm:$0xf]
  %v626 = vld [vmem:[%s1 + $0x8b4] sm:$0xf]
  %v627 = vld [vmem:[%s1 + $0x8b8] sm:$0xf]
  %v628 = vld [vmem:[%s1 + $0x8bc] sm:$0xf]
  %v629 = vld [vmem:[%s1 + $0x8c0] sm:$0xf]
  %v630 = vld [vmem:[%s1 + $0x8c4] sm:$0xf]
  %v631 = vld [vmem:[%s1 + $0x8c8] sm:$0xf]
  %v632 = vld [vmem:[%s1 + $0x8cc] sm:$0xf]
  %v633 = vld [vmem:[%s1 + $0x8d0] sm:$0xf]
  %v634 = vld [vmem:[%s1 + $0x8d4] sm:$0xf]
  %v635 = vld [vmem:[%s1 + $0x8d8] sm:$0xf]
  %v636 = vld [vmem:[%s1 + $0x8dc] sm:$0xf]
  %v637 = vld [vmem:[%s1 + $0x8e0] sm:$0xf]
  %v638 = vld [vmem:[%s1 + $0x8e4] sm:$0xf]
  %v639 = vld [vmem:[%s1 + $0x8e8] sm:$0xf]
  %v640 = vld [vmem:[%s1 + $0x8ec] sm:$0xf]
  %v641 = vld [vmem:[%s1 + $0x8f0] sm:$0xf]
  %v642 = vld [vmem:[%s1 + $0x8f4] sm:$0xf]
  %v643 = vld [vmem:[%s1 + $0x8f8] sm:$0xf]
  %v644 = vld [vmem:[%s1 + $0x8fc] sm:$0xf]
  %v645 = vld [vmem:[%s1 + $0x900] sm:$0xf]
  %v646 = vld [vmem:[%s1 + $0x904] sm:$0xf]
  %v647 = vld [vmem:[%s1 + $0x908] sm:$0xf]
  %v648 = vld [vmem:[%s1 + $0x90c] sm:$0xf]
  %v649 = vld [vmem:[%s1 + $0x910] sm:$0xf]
  %v650 = vld [vmem:[%s1 + $0x914] sm:$0xf]
  %v651 = vld [vmem:[%s1 + $0x918] sm:$0xf]
  %v652 = vld [vmem:[%s1 + $0x91c] sm:$0xf]
  %v653 = vld [vmem:[%s1 + $0x920] sm:$0xf]
  %v654 = vld [vmem:[%s1 + $0x924] sm:$0xf]
  %v655 = vld [vmem:[%s1 + $0x928] sm:$0xf]
  %v656 = vld [vmem:[%s1 + $0x92c] sm:$0xf]
  %v657 = vld [vmem:[%s1 + $0x930] sm:$0xf]
  %v658 = vld [vmem:[%s1 + $0x934] sm:$0xf]
  %v659 = vld [vmem:[%s1 + $0x938] sm:$0xf]
  %v660 = vld [vmem:[%s1 + $0x93c] sm:$0xf]
  %v661 = vld [vmem:[%s1 + $0x940] sm:$0xf]
  %v662 = vld [vmem:[%s1 + $0x944] sm:$0xf]
  %v663 = vld [vmem:[%s1 + $0x948] sm:$0xf]
  %v664 = vld [vmem:[%s1 + $0x94c] sm:$0xf]
  %v665 = vld [vmem:[%s1 + $0x950] sm:$0xf]
  %v666 = vld [vmem:[%s1 + $0x954] sm:$0xf]
  %v667 = vld [vmem:[%s1 + $0x958] sm:$0xf]
  %v668 = vld [vmem:[%s1 + $0x95c] sm:$0xf]
  %v669 = vld [vmem:[%s1 + $0x960] sm:$0xf]
  %v670 = vld [vmem:[%s1 + $0x964] sm:$0xf]
  %v671 = vld [vmem:[%s1 + $0x968] sm:$0xf]
  %v672 = vld [vmem:[%s1 + $0x96c] sm:$0xf]
  %v673 = vld [vmem:[%s1 + $0x970] sm:$0xf]
  %v674 = vld [vmem:[%s1 + $0x974] sm:$0xf]
  %v675 = vld [vmem:[%s1 + $0x978] sm:$0xf]
  %v676 = vld [vmem:[%s1 + $0x97c] sm:$0xf]
  %v677 = vld [vmem:[%s1 + $0x980] sm:$0xf]
  %v678 = vld [vmem:[%s1 + $0x984] sm:$0xf]
  %v679 = vld [vmem:[%s1 + $0x988] sm:$0xf]
  %v680 = vld [vmem:[%s1 + $0x98c] sm:$0xf]
  %v681 = vld [vmem:[%s1 + $0x990] sm:$0xf]
  %v682 = vld [vmem:[%s1 + $0x994] sm:$0xf]
  %v683 = vld [vmem:[%s1 + $0x998] sm:$0xf]
  %v684 = vld [vmem:[%s1 + $0x99c] sm:$0xf]
  %v685 = vld [vmem:[%s1 + $0x9a0] sm:$0xf]
  %v686 = vld [vmem:[%s1 + $0x9a4] sm:$0xf]
  %v687 = vld [vmem:[%s1 + $0x9a8] sm:$0xf]
  %v688 = vld [vmem:[%s1 + $0x9ac] sm:$0xf]
  %v689 = vld [vmem:[%s1 + $0x9b0] sm:$0xf]
  %v690 = vld [vmem:[%s1 + $0x9b4] sm:$0xf]
  %v691 = vld [vmem:[%s1 + $0x9b8] sm:$0xf]
  %v692 = vld [vmem:[%s1 + $0x9bc] sm:$0xf]
  %v693 = vld [vmem:[%s1 + $0x9c0] sm:$0xf]
  %v694 = vld [vmem:[%s1 + $0x9c4] sm:$0xf]
  %v695 = vld [vmem:[%s1 + $0x9c8] sm:$0xf]
  %v696 = vld [vmem:[%s1 + $0x9cc] sm:$0xf]
  %v697 = vld [vmem:[%s1 + $0x9d0] sm:$0xf]
  %v698 = vld [vmem:[%s1 + $0x9d4] sm:$0xf]
  %v699 = vld [vmem:[%s1 + $0x9d8] sm:$0xf]
  %v700 = vld [vmem:[%s1 + $0x9dc] sm:$0xf]
  %v701 = vld [vmem:[%s1 + $0x9e0] sm:$0xf]
  %v702 = vld [vmem:[%s1 + $0x9e4] sm:$0xf]
  %v703 = vld [vmem:[%s1 + $0x9e8] sm:$0xf]
  %v704 = vld [vmem:[%s1 + $0x9ec] sm:$0xf]
  %v705 = vld [vmem:[%s1 + $0x9f0] sm:$0xf]
  %v706 = vld [vmem:[%s1 + $0x9f4] sm:$0xf]
  %v707 = vld [vmem:[%s1 + $0x9f8] sm:$0xf]
  %v708 = vld [vmem:[%s1 + $0x9fc] sm:$0xf]
  %v709 = vld [vmem:[%s1 + $0xa00] sm:$0xf]
  %v710 = vld [vmem:[%s1 + $0xa04] sm:$0xf]
  %v711 = vld [vmem:[%s1 + $0xa08] sm:$0xf]
  %v712 = vld [vmem:[%s1 + $0xa0c] sm:$0xf]
  %v713 = vld [vmem:[%s1 + $0xa10] sm:$0xf]
  %v714 = vld [vmem:[%s1 + $0xa14] sm:$0xf]
  %v715 = vld [vmem:[%s1 + $0xa18] sm:$0xf]
  %v716 = vld [vmem:[%s1 + $0xa1c] sm:$0xf]
  %v717 = vld [vmem:[%s1 + $0xa20] sm:$0xf]
  %v718 = vld [vmem:[%s1 + $0xa24] sm:$0xf]
  %v719 = vld [vmem:[%s1 + $0xa28] sm:$0xf]
  %v720 = vld [vmem:[%s1 + $0xa2c] sm:$0xf]
  %v721 = vld [vmem:[%s1 + $0xa30] sm:$0xf]
  %v722 = vld [vmem:[%s1 + $0xa34] sm:$0xf]
  %v723 = vld [vmem:[%s1 + $0xa38] sm:$0xf]
  %v724 = vld [vmem:[%s1 + $0xa3c] sm:$0xf]
  %v725 = vld [vmem:[%s1 + $0xa40] sm:$0xf]
  %v726 = vld [vmem:[%s1 + $0xa44] sm:$0xf]
  %v727 = vld [vmem:[%s1 + $0xa48] sm:$0xf]
  %v728 = vld [vmem:[%s1 + $0xa4c] sm:$0xf]
  %v729 = vld [vmem:[%s1 + $0xa50] sm:$0xf]
  %v730 = vld [vmem:[%s1 + $0xa54] sm:$0xf]
  %v731 = vld [vmem:[%s1 + $0xa58] sm:$0xf]
  %v732 = vld [vmem:[%s1 + $0xa5c] sm:$0xf]
  %v733 = vld [vmem:[%s1 + $0xa60] sm:$0xf]
  %v734 = vld [vmem:[%s1 + $0xa64] sm:$0xf]
  %v735 = vld [vmem:[%s1 + $0xa68] sm:$0xf]
  %v736 = vld [vmem:[%s1 + $0xa6c] sm:$0xf]
  %v737 = vld [vmem:[%s1 + $0xa70] sm:$0xf]
  %v738 = vld [vmem:[%s1 + $0xa74] sm:$0xf]
  %v739 = vld [vmem:[%s1 + $0xa78] sm:$0xf]
  %v740 = vld [vmem:[%s1 + $0xa7c] sm:$0xf]
  %v741 = vld [vmem:[%s1 + $0xa80] sm:$0xf]
  %v742 = vld [vmem:[%s1 + $0xa84] sm:$0xf]
  %v743 = vld [vmem:[%s1 + $0xa88] sm:$0xf]
  %v744 = vld [vmem:[%s1 + $0xa8c] sm:$0xf]
  %v745 = vld [vmem:[%s1 + $0xa90] sm:$0xf]
  %v746 = vld [vmem:[%s1 + $0xa94] sm:$0xf]
  %v747 = vld [vmem:[%s1 + $0xa98] sm:$0xf]
  %v748 = vld [vmem:[%s1 + $0xa9c] sm:$0xf]
  %v749 = vld [vmem:[%s1 + $0xaa0] sm:$0xf]
  %v750 = vld [vmem:[%s1 + $0xaa4] sm:$0xf]
  %v751 = vld [vmem:[%s1 + $0xaa8] sm:$0xf]
  %v752 = vld [vmem:[%s1 + $0xaac] sm:$0xf]
  %v753 = vld [vmem:[%s1 + $0xab0] sm:$0xf]
  %v754 = vld [vmem:[%s1 + $0xab4] sm:$0xf]
  %v755 = vld [vmem:[%s1 + $0xab8] sm:$0xf]
  %v756 = vld [vmem:[%s1 + $0xabc] sm:$0xf]
  %v757 = vld [vmem:[%s1 + $0xac0] sm:$0xf]
  %v758 = vld [vmem:[%s1 + $0xac4] sm:$0xf]
  %v759 = vld [vmem:[%s1 + $0xac8] sm:$0xf]
  %v760 = vld [vmem:[%s1 + $0xacc] sm:$0xf]
  %v761 = vld [vmem:[%s1 + $0xad0] sm:$0xf]
  %v762 = vld [vmem:[%s1 + $0xad4] sm:$0xf]
  %v763 = vld [vmem:[%s1 + $0xad8] sm:$0xf]
  %v764 = vld [vmem:[%s1 + $0xadc] sm:$0xf]
  %v765 = vld [vmem:[%s1 + $0xae0] sm:$0xf]
  %v766 = vld [vmem:[%s1 + $0xae4] sm:$0xf]
  %v767 = vld [vmem:[%s1 + $0xae8] sm:$0xf]
  %v768 = vld [vmem:[%s1 + $0xaec] sm:$0xf]
  %v769 = vld [vmem:[%s1 + $0xaf0] sm:$0xf]
  %v770 = vld [vmem:[%s1 + $0xaf4] sm:$0xf]
  %v771 = vld [vmem:[%s1 + $0xaf8] sm:$0xf]
  %v772 = vld [vmem:[%s1 + $0xafc] sm:$0xf]
  %v773 = vld [vmem:[%s1 + $0xb00] sm:$0xf]
  %v774 = vld [vmem:[%s1 + $0xb04] sm:$0xf]
  %v775 = vld [vmem:[%s1 + $0xb08] sm:$0xf]
  %v776 = vld [vmem:[%s1 + $0xb0c] sm:$0xf]
  %v777 = vld [vmem:[%s1 + $0xb10] sm:$0xf]
  %v778 = vld [vmem:[%s1 + $0xb14] sm:$0xf]
  %v779 = vld [vmem:[%s1 + $0xb18] sm:$0xf]
  %v780 = vld [vmem:[%s1 + $0xb1c] sm:$0xf]
  %v781 = vld [vmem:[%s1 + $0xb20] sm:$0xf]
  %v782 = vld [vmem:[%s1 + $0xb24] sm:$0xf]
  %v783 = vld [vmem:[%s1 + $0xb28] sm:$0xf]
  %v784 = vld [vmem:[%s1 + $0xb2c] sm:$0xf]
  %v785 = vld [vmem:[%s1 + $0xb30] sm:$0xf]
  %v786 = vld [vmem:[%s1 + $0xb34] sm:$0xf]
  %v787 = vld [vmem:[%s1 + $0xb38] sm:$0xf]
  %v788 = vld [vmem:[%s1 + $0xb3c] sm:$0xf]
  %v789 = vld [vmem:[%s1 + $0xb40] sm:$0xf]
  %v790 = vld [vmem:[%s1 + $0xb44] sm:$0xf]
  %v791 = vld [vmem:[%s1 + $0xb48] sm:$0xf]
  %v792 = vld [vmem:[%s1 + $0xb4c] sm:$0xf]
  %v793 = vld [vmem:[%s1 + $0xb50] sm:$0xf]
  %v794 = vld [vmem:[%s1 + $0xb54] sm:$0xf]
  %v795 = vld [vmem:[%s1 + $0xb58] sm:$0xf]
  %v796 = vld [vmem:[%s1 + $0xb5c] sm:$0xf]
  %v797 = vld [vmem:[%s1 + $0xb60] sm:$0xf]
  %v798 = vld [vmem:[%s1 + $0xb64] sm:$0xf]
  %v799 = vld [vmem:[%s1 + $0xb68] sm:$0xf]
  %v800 = vld [vmem:[%s1 + $0xb6c] sm:$0xf]
  %v801 = vld [vmem:[%s1 + $0xb70] sm:$0xf]
  %v802 = vld [vmem:[%s1 + $0xb74] sm:$0xf]
  %v803 = vld [vmem:[%s1 + $0xb78] sm:$0xf]
  %v804 = vld [vmem:[%s1 + $0xb7c] sm:$0xf]
  %v805 = vld [vmem:[%s1 + $0xb80] sm:$0xf]
  %v806 = vld [vmem:[%s1 + $0xb84] sm:$0xf]
  %v807 = vld [vmem:[%s1 + $0xb88] sm:$0xf]
  %v808 = vld [vmem:[%s1 + $0xb8c] sm:$0xf]
  %v809 = vld [vmem:[%s1 + $0xb90] sm:$0xf]
  %v810 = vld [vmem:[%s1 + $0xb94] sm:$0xf]
  %v811 = vld [vmem:[%s1 + $0xb98] sm:$0xf]
  %v812 = vld [vmem:[%s1 + $0xb9c] sm:$0xf]
  %v813 = vld [vmem:[%s1 + $0xba0] sm:$0xf]
  %v814 = vld [vmem:[%s1 + $0xba4] sm:$0xf]
  %v815 = vld [vmem:[%s1 + $0xba8] sm:$0xf]
  %v816 = vld [vmem:[%s1 + $0xbac] sm:$0xf]
  %v817 = vld [vmem:[%s1 + $0xbb0] sm:$0xf]
  %v818 = vld [vmem:[%s1 + $0xbb4] sm:$0xf]
  %v819 = vld [vmem:[%s1 + $0xbb8] sm:$0xf]
  %v820 = vld [vmem:[%s1 + $0xbbc] sm:$0xf]
  %v821 = vld [vmem:[%s1 + $0xbc0] sm:$0xf]
  %v822 = vld [vmem:[%s1 + $0xbc4] sm:$0xf]
  %v823 = vld [vmem:[%s1 + $0xbc8] sm:$0xf]
  %v824 = vld [vmem:[%s1 + $0xbcc] sm:$0xf]
  %v825 = vld [vmem:[%s1 + $0xbd0] sm:$0xf]
  %v826 = vld [vmem:[%s1 + $0xbd4] sm:$0xf]
  %v827 = vld [vmem:[%s1 + $0xbd8] sm:$0xf]
  %v828 = vld [vmem:[%s1 + $0xbdc] sm:$0xf]
  %v829 = vld [vmem:[%s1 + $0xbe0] sm:$0xf]
  %v830 = vld [vmem:[%s1 + $0xbe4] sm:$0xf]
  %v831 = vld [vmem:[%s1 + $0xbe8] sm:$0xf]
  %v832 = vld [vmem:[%s1 + $0xbec] sm:$0xf]
  %v833 = vld [vmem:[%s1 + $0xbf0] sm:$0xf]
  %v834 = vld [vmem:[%s1 + $0xbf4] sm:$0xf]
  %v835 = vld [vmem:[%s1 + $0xbf8] sm:$0xf]
  %v836 = vld [vmem:[%s1 + $0xbfc] sm:$0xf]
  %v837 = vld [vmem:[%s1 + $0xc00] sm:$0xf]
  %v838 = vld [vmem:[%s1 + $0xc04] sm:$0xf]
  %v839 = vld [vmem:[%s1 + $0xc08] sm:$0xf]
  %v840 = vld [vmem:[%s1 + $0xc0c] sm:$0xf]
  %v841 = vld [vmem:[%s1 + $0xc10] sm:$0xf]
  %v842 = vld [vmem:[%s1 + $0xc14] sm:$0xf]
  %v843 = vld [vmem:[%s1 + $0xc18] sm:$0xf]
  %v844 = vld [vmem:[%s1 + $0xc1c] sm:$0xf]
  %v845 = vld [vmem:[%s1 + $0xc20] sm:$0xf]
  %v846 = vld [vmem:[%s1 + $0xc24] sm:$0xf]
  %v847 = vld [vmem:[%s1 + $0xc28] sm:$0xf]
  %v848 = vld [vmem:[%s1 + $0xc2c] sm:$0xf]
  %v849 = vld [vmem:[%s1 + $0xc30] sm:$0xf]
  %v850 = vld [vmem:[%s1 + $0xc34] sm:$0xf]
  %v851 = vld [vmem:[%s1 + $0xc38] sm:$0xf]
  %v852 = vld [vmem:[%s1 + $0xc3c] sm:$0xf]
  %v853 = vld [vmem:[%s1 + $0xc40] sm:$0xf]
  %v854 = vld [vmem:[%s1 + $0xc44] sm:$0xf]
  %v855 = vld [vmem:[%s1 + $0xc48] sm:$0xf]
  %v856 = vld [vmem:[%s1 + $0xc4c] sm:$0xf]
  %v857 = vld [vmem:[%s1 + $0xc50] sm:$0xf]
  %v858 = vld [vmem:[%s1 + $0xc54] sm:$0xf]
  %v859 = vld [vmem:[%s1 + $0xc58] sm:$0xf]
  %v860 = vld [vmem:[%s1 + $0xc5c] sm:$0xf]
  %v861 = vld [vmem:[%s1 + $0xc60] sm:$0xf]
  %v862 = vld [vmem:[%s1 + $0xc64] sm:$0xf]
  %v863 = vld [vmem:[%s1 + $0xc68] sm:$0xf]
  %v864 = vld [vmem:[%s1 + $0xc6c] sm:$0xf]
  %v865 = vld [vmem:[%s1 + $0xc70] sm:$0xf]
  %v866 = vld [vmem:[%s1 + $0xc74] sm:$0xf]
  %v867 = vld [vmem:[%s1 + $0xc78] sm:$0xf]
  %v868 = vld [vmem:[%s1 + $0xc7c] sm:$0xf]
  %v869 = vld [vmem:[%s1 + $0xc80] sm:$0xf]
  %v870 = vld [vmem:[%s1 + $0xc84] sm:$0xf]
  %v871 = vld [vmem:[%s1 + $0xc88] sm:$0xf]
  %v872 = vld [vmem:[%s1 + $0xc8c] sm:$0xf]
  %v873 = vld [vmem:[%s1 + $0xc90] sm:$0xf]
  %v874 = vld [vmem:[%s1 + $0xc94] sm:$0xf]
  %v875 = vld [vmem:[%s1 + $0xc98] sm:$0xf]
  %v876 = vld [vmem:[%s1 + $0xc9c] sm:$0xf]
  %v877 = vld [vmem:[%s1 + $0xca0] sm:$0xf]
  %v878 = vld [vmem:[%s1 + $0xca4] sm:$0xf]
  %v879 = vld [vmem:[%s1 + $0xca8] sm:$0xf]
  %v880 = vld [vmem:[%s1 + $0xcac] sm:$0xf]
  %v881 = vld [vmem:[%s1 + $0xcb0] sm:$0xf]
  %v882 = vld [vmem:[%s1 + $0xcb4] sm:$0xf]
  %v883 = vld [vmem:[%s1 + $0xcb8] sm:$0xf]
  %v884 = vld [vmem:[%s1 + $0xcbc] sm:$0xf]
  %v885 = vld [vmem:[%s1 + $0xcc0] sm:$0xf]
  %v886 = vld [vmem:[%s1 + $0xcc4] sm:$0xf]
  %v887 = vld [vmem:[%s1 + $0xcc8] sm:$0xf]
  %v888 = vld [vmem:[%s1 + $0xccc] sm:$0xf]
  %v889 = vld [vmem:[%s1 + $0xcd0] sm:$0xf]
  %v890 = vld [vmem:[%s1 + $0xcd4] sm:$0xf]
  %v891 = vld [vmem:[%s1 + $0xcd8] sm:$0xf]
  %v892 = vld [vmem:[%s1 + $0xcdc] sm:$0xf]
  %v893 = vld [vmem:[%s1 + $0xce0] sm:$0xf]
  %v894 = vld [vmem:[%s1 + $0xce4] sm:$0xf]
  %v895 = vld [vmem:[%s1 + $0xce8] sm:$0xf]
  %v896 = vld [vmem:[%s1 + $0xcec] sm:$0xf]
  %v897 = vld [vmem:[%s1 + $0xcf0] sm:$0xf]
  %v898 = vld [vmem:[%s1 + $0xcf4] sm:$0xf]
  %v899 = vld [vmem:[%s1 + $0xcf8] sm:$0xf]
  %v900 = vld [vmem:[%s1 + $0xcfc] sm:$0xf]
  %v901 = vld [vmem:[%s1 + $0xd00] sm:$0xf]
  %v902 = vld [vmem:[%s1 + $0xd04] sm:$0xf]
  %v903 = vld [vmem:[%s1 + $0xd08] sm:$0xf]
  %v904 = vld [vmem:[%s1 + $0xd0c] sm:$0xf]
  %v905 = vld [vmem:[%s1 + $0xd10] sm:$0xf]
  %v906 = vld [vmem:[%s1 + $0xd14] sm:$0xf]
  %v907 = vld [vmem:[%s1 + $0xd18] sm:$0xf]
  %v908 = vld [vmem:[%s1 + $0xd1c] sm:$0xf]
  %v909 = vld [vmem:[%s1 + $0xd20] sm:$0xf]
  %v910 = vld [vmem:[%s1 + $0xd24] sm:$0xf]
  %v911 = vld [vmem:[%s1 + $0xd28] sm:$0xf]
  %v912 = vld [vmem:[%s1 + $0xd2c] sm:$0xf]
  %v913 = vld [vmem:[%s1 + $0xd30] sm:$0xf]
  %v914 = vld [vmem:[%s1 + $0xd34] sm:$0xf]
  %v915 = vld [vmem:[%s1 + $0xd38] sm:$0xf]
  %v916 = vld [vmem:[%s1 + $0xd3c] sm:$0xf]
  %v917 = vld [vmem:[%s1 + $0xd40] sm:$0xf]
  %v918 = vld [vmem:[%s1 + $0xd44] sm:$0xf]
  %v919 = vld [vmem:[%s1 + $0xd48] sm:$0xf]
  %v920 = vld [vmem:[%s1 + $0xd4c] sm:$0xf]
  %v921 = vld [vmem:[%s1 + $0xd50] sm:$0xf]
  %v922 = vld [vmem:[%s1 + $0xd54] sm:$0xf]
  %v923 = vld [vmem:[%s1 + $0xd58] sm:$0xf]
  %v924 = vld [vmem:[%s1 + $0xd5c] sm:$0xf]
  %v925 = vld [vmem:[%s1 + $0xd60] sm:$0xf]
  %v926 = vld [vmem:[%s1 + $0xd64] sm:$0xf]
  %v927 = vld [vmem:[%s1 + $0xd68] sm:$0xf]
  %v928 = vld [vmem:[%s1 + $0xd6c] sm:$0xf]
  %v929 = vld [vmem:[%s1 + $0xd70] sm:$0xf]
  %v930 = vld [vmem:[%s1 + $0xd74] sm:$0xf]
  %v931 = vld [vmem:[%s1 + $0xd78] sm:$0xf]
  %v932 = vld [vmem:[%s1 + $0xd7c] sm:$0xf]
  %v933 = vld [vmem:[%s1 + $0xd80] sm:$0xf]
  %v934 = vld [vmem:[%s1 + $0xd84] sm:$0xf]
  %v935 = vld [vmem:[%s1 + $0xd88] sm:$0xf]
  %v936 = vld [vmem:[%s1 + $0xd8c] sm:$0xf]
  %v937 = vld [vmem:[%s1 + $0xd90] sm:$0xf]
  %v938 = vld [vmem:[%s1 + $0xd94] sm:$0xf]
  %v939 = vld [vmem:[%s1 + $0xd98] sm:$0xf]
  %v940 = vld [vmem:[%s1 + $0xd9c] sm:$0xf]
  %v941 = vld [vmem:[%s1 + $0xda0] sm:$0xf]
  %v942 = vld [vmem:[%s1 + $0xda4] sm:$0xf]
  %v943 = vld [vmem:[%s1 + $0xda8] sm:$0xf]
  %v944 = vld [vmem:[%s1 + $0xdac] sm:$0xf]
  %v945 = vld [vmem:[%s1 + $0xdb0] sm:$0xf]
  %v946 = vld [vmem:[%s1 + $0xdb4] sm:$0xf]
  %v947 = vld [vmem:[%s1 + $0xdb8] sm:$0xf]
  %v948 = vld [vmem:[%s1 + $0xdbc] sm:$0xf]
  %v949 = vld [vmem:[%s1 + $0xdc0] sm:$0xf]
  %v950 = vld [vmem:[%s1 + $0xdc4] sm:$0xf]
  %v951 = vld [vmem:[%s1 + $0xdc8] sm:$0xf]
  %v952 = vld [vmem:[%s1 + $0xdcc] sm:$0xf]
  %v953 = vld [vmem:[%s1 + $0xdd0] sm:$0xf]
  %v954 = vld [vmem:[%s1 + $0xdd4] sm:$0xf]
  %v955 = vld [vmem:[%s1 + $0xdd8] sm:$0xf]
  %v956 = vld [vmem:[%s1 + $0xddc] sm:$0xf]
  %v957 = vld [vmem:[%s1 + $0xde0] sm:$0xf]
  %v958 = vld [vmem:[%s1 + $0xde4] sm:$0xf]
  %v959 = vld [vmem:[%s1 + $0xde8] sm:$0xf]
  %v960 = vld [vmem:[%s1 + $0xdec] sm:$0xf]
  %v961 = vld [vmem:[%s1 + $0xdf0] sm:$0xf]
  %v962 = vld [vmem:[%s1 + $0xdf4] sm:$0xf]
  %v963 = vld [vmem:[%s1 + $0xdf8] sm:$0xf]
  %v964 = vld [vmem:[%s1 + $0xdfc] sm:$0xf]
  %v965 = vld [vmem:[%s1 + $0xe00] sm:$0xf]
  %v966 = vld [vmem:[%s1 + $0xe04] sm:$0xf]
  %v967 = vld [vmem:[%s1 + $0xe08] sm:$0xf]
  %v968 = vld [vmem:[%s1 + $0xe0c] sm:$0xf]
  %v969 = vld [vmem:[%s1 + $0xe10] sm:$0xf]
  %v970 = vld [vmem:[%s1 + $0xe14] sm:$0xf]
  %v971 = vld [vmem:[%s1 + $0xe18] sm:$0xf]
  %v972 = vld [vmem:[%s1 + $0xe1c] sm:$0xf]
  %v973 = vld [vmem:[%s1 + $0xe20] sm:$0xf]
  %v974 = vld [vmem:[%s1 + $0xe24] sm:$0xf]
  %v975 = vld [vmem:[%s1 + $0xe28] sm:$0xf]
  %v976 = vld [vmem:[%s1 + $0xe2c] sm:$0xf]
  %v977 = vld [vmem:[%s1 + $0xe30] sm:$0xf]
  %v978 = vld [vmem:[%s1 + $0xe34] sm:$0xf]
  %v979 = vld [vmem:[%s1 + $0xe38] sm:$0xf]
  %v980 = vld [vmem:[%s1 + $0xe3c] sm:$0xf]
  %v981 = vld [vmem:[%s1 + $0xe40] sm:$0xf]
  %v982 = vld [vmem:[%s1 + $0xe44] sm:$0xf]
  %v983 = vld [vmem:[%s1 + $0xe48] sm:$0xf]
  %v984 = vld [vmem:[%s1 + $0xe4c] sm:$0xf]
  %v985 = vld [vmem:[%s1 + $0xe50] sm:$0xf]
  %v986 = vld [vmem:[%s1 + $0xe54] sm:$0xf]
  %v987 = vld [vmem:[%s1 + $0xe58] sm:$0xf]
  %v988 = vld [vmem:[%s1 + $0xe5c] sm:$0xf]
  %v989 = vld [vmem:[%s1 + $0xe60] sm:$0xf]
  %v990 = vld [vmem:[%s1 + $0xe64] sm:$0xf]
  %v991 = vld [vmem:[%s1 + $0xe68] sm:$0xf]
  %v992 = vld [vmem:[%s1 + $0xe6c] sm:$0xf]
  %v993 = vld [vmem:[%s1 + $0xe70] sm:$0xf]
  %v994 = vld [vmem:[%s1 + $0xe74] sm:$0xf]
  %v995 = vld [vmem:[%s1 + $0xe78] sm:$0xf]
  %v996 = vld [vmem:[%s1 + $0xe7c] sm:$0xf]
  %v997 = vld [vmem:[%s1 + $0xe80] sm:$0xf]
  %v998 = vld [vmem:[%s1 + $0xe84] sm:$0xf]
  %v999 = vld [vmem:[%s1 + $0xe88] sm:$0xf]
  %v1000 = vld [vmem:[%s1 + $0xe8c] sm:$0xf]
  %v1001 = vld [vmem:[%s1 + $0xe90] sm:$0xf]
  %v1002 = vld [vmem:[%s1 + $0xe94] sm:$0xf]
  %v1003 = vld [vmem:[%s1 + $0xe98] sm:$0xf]
  %v1004 = vld [vmem:[%s1 + $0xe9c] sm:$0xf]
  %v1005 = vld [vmem:[%s1 + $0xea0] sm:$0xf]
  %v1006 = vld [vmem:[%s1 + $0xea4] sm:$0xf]
  %v1007 = vld [vmem:[%s1 + $0xea8] sm:$0xf]
  %v1008 = vld [vmem:[%s1 + $0xeac] sm:$0xf]
  %v1009 = vld [vmem:[%s1 + $0xeb0] sm:$0xf]
  %v1010 = vld [vmem:[%s1 + $0xeb4] sm:$0xf]
  %v1011 = vld [vmem:[%s1 + $0xeb8] sm:$0xf]
  %v1012 = vld [vmem:[%s1 + $0xebc] sm:$0xf]
  %v1013 = vld [vmem:[%s1 + $0xec0] sm:$0xf]
  %v1014 = vld [vmem:[%s1 + $0xec4] sm:$0xf]
  %v1015 = vld [vmem:[%s1 + $0xec8] sm:$0xf]
  %v1016 = vld [vmem:[%s1 + $0xecc] sm:$0xf]
  %v1017 = vld [vmem:[%s1 + $0xed0] sm:$0xf]
  %v1018 = vld [vmem:[%s1 + $0xed4] sm:$0xf]
  %v1019 = vld [vmem:[%s1 + $0xed8] sm:$0xf]
  %v1020 = vld [vmem:[%s1 + $0xedc] sm:$0xf]
  %v1021 = vld [vmem:[%s1 + $0xee0] sm:$0xf]
  %v1022 = vld [vmem:[%s1 + $0xee4] sm:$0xf]
  %v1023 = vld [vmem:[%s1 + $0xee8] sm:$0xf]
  %v1024 = vld [vmem:[%s1 + $0xeec] sm:$0xf]
  %v1025 = vld [vmem:[%s1 + $0xef0] sm:$0xf]
  %v1026 = vld [vmem:[%s1 + $0xef4] sm:$0xf]
  %v1027 = vld [vmem:[%s1 + $0xef8] sm:$0xf]
  %v1028 = vld [vmem:[%s1 + $0xefc] sm:$0xf]
  %v1029 = vld [vmem:[%s1 + $0xf00] sm:$0xf]
  %v1030 = vld [vmem:[%s1 + $0xf04] sm:$0xf]
  %v1031 = vld [vmem:[%s1 + $0xf08] sm:$0xf]
  %v1032 = vld [vmem:[%s1 + $0xf0c] sm:$0xf]
  %v1033 = vld [vmem:[%s1 + $0xf10] sm:$0xf]
  %v1034 = vld [vmem:[%s1 + $0xf14] sm:$0xf]
  %v1035 = vld [vmem:[%s1 + $0xf18] sm:$0xf]
  %v1036 = vld [vmem:[%s1 + $0xf1c] sm:$0xf]
  %v1037 = vld [vmem:[%s1 + $0xf20] sm:$0xf]
  %v1038 = vld [vmem:[%s1 + $0xf24] sm:$0xf]
  %v1039 = vld [vmem:[%s1 + $0xf28] sm:$0xf]
  %v1040 = vld [vmem:[%s1 + $0xf2c] sm:$0xf]
  %v1041 = vld [vmem:[%s1 + $0xf30] sm:$0xf]
  %v1042 = vld [vmem:[%s1 + $0xf34] sm:$0xf]
  %v1043 = vld [vmem:[%s1 + $0xf38] sm:$0xf]
  %v1044 = vld [vmem:[%s1 + $0xf3c] sm:$0xf]
  %v1045 = vld [vmem:[%s1 + $0xf40] sm:$0xf]
  %v1046 = vld [vmem:[%s1 + $0xf44] sm:$0xf]
  %v1047 = vld [vmem:[%s1 + $0xf48] sm:$0xf]
  %v1048 = vld [vmem:[%s1 + $0xf4c] sm:$0xf]
  %v1049 = vld [vmem:[%s1 + $0xf50] sm:$0xf]
  %v1050 = vld [vmem:[%s1 + $0xf54] sm:$0xf]
  %v1051 = vld [vmem:[%s1 + $0xf58] sm:$0xf]
  %v1052 = vld [vmem:[%s1 + $0xf5c] sm:$0xf]
  %v1053 = vld [vmem:[%s1 + $0xf60] sm:$0xf]
  %v1054 = vld [vmem:[%s1 + $0xf64] sm:$0xf]
  %v1055 = vld [vmem:[%s1 + $0xf68] sm:$0xf]
  %v1056 = vld [vmem:[%s1 + $0xf6c] sm:$0xf]
  %v1057 = vld [vmem:[%s1 + $0xf70] sm:$0xf]
  %v1058 = vld [vmem:[%s1 + $0xf74] sm:$0xf]
  %v1059 = vld [vmem:[%s1 + $0xf78] sm:$0xf]
  %v1060 = vld [vmem:[%s1 + $0xf7c] sm:$0xf]
  %v1061 = vld [vmem:[%s1 + $0xf80] sm:$0xf]
  %v1062 = vld [vmem:[%s1 + $0xf84] sm:$0xf]
  %v1063 = vld [vmem:[%s1 + $0xf88] sm:$0xf]
  %v1064 = vld [vmem:[%s1 + $0xf8c] sm:$0xf]
  %v1065 = vld [vmem:[%s1 + $0xf90] sm:$0xf]
  %v1066 = vld [vmem:[%s1 + $0xf94] sm:$0xf]
  %v1067 = vld [vmem:[%s1 + $0xf98] sm:$0xf]
  %v1068 = vld [vmem:[%s1 + $0xf9c] sm:$0xf]
  %v1069 = vld [vmem:[%s1 + $0xfa0] sm:$0xf]
  %v1070 = vld [vmem:[%s1 + $0xfa4] sm:$0xf]
  %v1071 = vld [vmem:[%s1 + $0xfa8] sm:$0xf]
  %v1072 = vld [vmem:[%s1 + $0xfac] sm:$0xf]
  %v1073 = vld [vmem:[%s1 + $0xfb0] sm:$0xf]
  %v1074 = vld [vmem:[%s1 + $0xfb4] sm:$0xf]
  %v1075 = vld [vmem:[%s1 + $0xfb8] sm:$0xf]
  %v1076 = vld [vmem:[%s1 + $0xfbc] sm:$0xf]
  %v1077 = vld [vmem:[%s1 + $0xfc0] sm:$0xf]
  %v1078 = vld [vmem:[%s1 + $0xfc4] sm:$0xf]
  %v1079 = vld [vmem:[%s1 + $0xfc8] sm:$0xf]
  %v1080 = vld [vmem:[%s1 + $0xfcc] sm:$0xf]
  %v1081 = vld [vmem:[%s1 + $0xfd0] sm:$0xf]
  %v1082 = vld [vmem:[%s1 + $0xfd4] sm:$0xf]
  %v1083 = vld [vmem:[%s1 + $0xfd8] sm:$0xf]
  %v1084 = vld [vmem:[%s1 + $0xfdc] sm:$0xf]
  %v1085 = vld [vmem:[%s1 + $0xfe0] sm:$0xf]
  %v1086 = vld [vmem:[%s1 + $0xfe4] sm:$0xf]
  %v1087 = vld [vmem:[%s1 + $0xfe8] sm:$0xf]
  %v1088 = vld [vmem:[%s1 + $0xfec] sm:$0xf]
  %v1089 = vld [vmem:[%s1 + $0xff0] sm:$0xf]
  %v1090 = vld [vmem:[%s1 + $0xff4] sm:$0xf]
  %v1091 = vld [vmem:[%s1 + $0xff8] sm:$0xf]
  %v1092 = vld [vmem:[%s1 + $0xffc] sm:$0xf]
  %v1093 = vld [vmem:[%s1 + $0x1000] sm:$0xf]
  %v1094 = vld [vmem:[%s1 + $0x1004] sm:$0xf]
  %v1095 = vld [vmem:[%s1 + $0x1008] sm:$0xf]
  %v1096 = vld [vmem:[%s1 + $0x100c] sm:$0xf]
  %v1097 = vld [vmem:[%s1 + $0x1010] sm:$0xf]
  %v1098 = vld [vmem:[%s1 + $0x1014] sm:$0xf]
  %v1099 = vld [vmem:[%s1 + $0x1018] sm:$0xf]
  %v1100 = vld [vmem:[%s1 + $0x101c] sm:$0xf]
  %v1101 = vld [vmem:[%s1 + $0x1020] sm:$0xf]
  %v1102 = vld [vmem:[%s1 + $0x1024] sm:$0xf]
  %v1103 = vld [vmem:[%s1 + $0x1028] sm:$0xf]
  %v1104 = vld [vmem:[%s1 + $0x102c] sm:$0xf]
  %v1105 = vld [vmem:[%s1 + $0x1030] sm:$0xf]
  %v1106 = vld [vmem:[%s1 + $0x1034] sm:$0xf]
  %v1107 = vld [vmem:[%s1 + $0x1038] sm:$0xf]
  %v1108 = vld [vmem:[%s1 + $0x103c] sm:$0xf]
  %v1109 = vld [vmem:[%s1 + $0x1040] sm:$0xf]
  %v1110 = vld [vmem:[%s1 + $0x1044] sm:$0xf]
  %v1111 = vld [vmem:[%s1 + $0x1048] sm:$0xf]
  %v1112 = vld [vmem:[%s1 + $0x104c] sm:$0xf]
  %v1113 = vld [vmem:[%s1 + $0x1050] sm:$0xf]
  %v1114 = vld [vmem:[%s1 + $0x1054] sm:$0xf]
  %v1115 = vld [vmem:[%s1 + $0x1058] sm:$0xf]
  %v1116 = vld [vmem:[%s1 + $0x105c] sm:$0xf]
  %v1117 = vld [vmem:[%s1 + $0x1060] sm:$0xf]
  %v1118 = vld [vmem:[%s1 + $0x1064] sm:$0xf]
  %v1119 = vld [vmem:[%s1 + $0x1068] sm:$0xf]
  %v1120 = vld [vmem:[%s1 + $0x106c] sm:$0xf]
  %v1121 = vld [vmem:[%s1 + $0x1070] sm:$0xf]
  %v1122 = vld [vmem:[%s1 + $0x1074] sm:$0xf]
  %v1123 = vld [vmem:[%s1 + $0x1078] sm:$0xf]
  %v1124 = vld [vmem:[%s1 + $0x107c] sm:$0xf]
  %v1125 = vld [vmem:[%s1 + $0x1080] sm:$0xf]
  %v1126 = vld [vmem:[%s1 + $0x1084] sm:$0xf]
  %v1127 = vld [vmem:[%s1 + $0x1088] sm:$0xf]
  %v1128 = vld [vmem:[%s1 + $0x108c] sm:$0xf]
  %v1129 = vld [vmem:[%s1 + $0x1090] sm:$0xf]
  %v1130 = vld [vmem:[%s1 + $0x1094] sm:$0xf]
  %v1131 = vld [vmem:[%s1 + $0x1098] sm:$0xf]
  %v1132 = vld [vmem:[%s1 + $0x109c] sm:$0xf]
  %v1133 = vld [vmem:[%s1 + $0x10a0] sm:$0xf]
  %v1134 = vld [vmem:[%s1 + $0x10a4] sm:$0xf]
  %v1135 = vld [vmem:[%s1 + $0x10a8] sm:$0xf]
  %v1136 = vld [vmem:[%s1 + $0x10ac] sm:$0xf]
  %v1137 = vld [vmem:[%s1 + $0x10b0] sm:$0xf]
  %v1138 = vld [vmem:[%s1 + $0x10b4] sm:$0xf]
  %v1139 = vld [vmem:[%s1 + $0x10b8] sm:$0xf]
  %v1140 = vld [vmem:[%s1 + $0x10bc] sm:$0xf]
  %v1141 = vld [vmem:[%s1 + $0x10c0] sm:$0xf]
  %v1142 = vld [vmem:[%s1 + $0x10c4] sm:$0xf]
  %v1143 = vld [vmem:[%s1 + $0x10c8] sm:$0xf]
  %v1144 = vld [vmem:[%s1 + $0x10cc] sm:$0xf]
  %v1145 = vld [vmem:[%s1 + $0x10d0] sm:$0xf]
  %v1146 = vld [vmem:[%s1 + $0x10d4] sm:$0xf]
  %v1147 = vld [vmem:[%s1 + $0x10d8] sm:$0xf]
  %v1148 = vld [vmem:[%s1 + $0x10dc] sm:$0xf]
  %v1149 = vld [vmem:[%s1 + $0x10e0] sm:$0xf]
  %v1150 = vld [vmem:[%s1 + $0x10e4] sm:$0xf]
  %v1151 = vld [vmem:[%s1 + $0x10e8] sm:$0xf]
  %v1152 = vld [vmem:[%s1 + $0x10ec] sm:$0xf]
  %v1153 = vld [vmem:[%s1 + $0x10f0] sm:$0xf]
  %v1154 = vld [vmem:[%s1 + $0x10f4] sm:$0xf]
  %v1155 = vld [vmem:[%s1 + $0x10f8] sm:$0xf]
  %v1156 = vld [vmem:[%s1 + $0x10fc] sm:$0xf]
  %v1157 = vld [vmem:[%s1 + $0x1100] sm:$0xf]
  %v1158 = vld [vmem:[%s1 + $0x1104] sm:$0xf]
  %v1159 = vld [vmem:[%s1 + $0x1108] sm:$0xf]
  %v1160 = vld [vmem:[%s1 + $0x110c] sm:$0xf]
  %v1161 = vld [vmem:[%s1 + $0x1110] sm:$0xf]
  %v1162 = vld [vmem:[%s1 + $0x1114] sm:$0xf]
  %v1163 = vld [vmem:[%s1 + $0x1118] sm:$0xf]
  %v1164 = vld [vmem:[%s1 + $0x111c] sm:$0xf]
  %v1165 = vld [vmem:[%s1 + $0x1120] sm:$0xf]
  %v1166 = vld [vmem:[%s1 + $0x1124] sm:$0xf]
  %v1167 = vld [vmem:[%s1 + $0x1128] sm:$0xf]
  %v1168 = vld [vmem:[%s1 + $0x112c] sm:$0xf]
  %v1169 = vld [vmem:[%s1 + $0x1130] sm:$0xf]
  %v1170 = vld [vmem:[%s1 + $0x1134] sm:$0xf]
  %v1171 = vld [vmem:[%s1 + $0x1138] sm:$0xf]
  %v1172 = vld [vmem:[%s1 + $0x113c] sm:$0xf]
  %v1173 = vld [vmem:[%s1 + $0x1140] sm:$0xf]
  %v1174 = vld [vmem:[%s1 + $0x1144] sm:$0xf]
  %v1175 = vld [vmem:[%s1 + $0x1148] sm:$0xf]
  %v1176 = vld [vmem:[%s1 + $0x114c] sm:$0xf]
  %v1177 = vld [vmem:[%s1 + $0x1150] sm:$0xf]
  %v1178 = vld [vmem:[%s1 + $0x1154] sm:$0xf]
  %v1179 = vld [vmem:[%s1 + $0x1158] sm:$0xf]
  %v1180 = vld [vmem:[%s1 + $0x115c] sm:$0xf]
  %v1181 = vld [vmem:[%s1 + $0x1160] sm:$0xf]
  %v1182 = vld [vmem:[%s1 + $0x1164] sm:$0xf]
  %v1183 = vld [vmem:[%s1 + $0x1168] sm:$0xf]
  %v1184 = vld [vmem:[%s1 + $0x116c] sm:$0xf]
  %v1185 = vld [vmem:[%s1 + $0x1170] sm:$0xf]
  %v1186 = vld [vmem:[%s1 + $0x1174] sm:$0xf]
  %v1187 = vld [vmem:[%s1 + $0x1178] sm:$0xf]
  %v1188 = vld [vmem:[%s1 + $0x117c] sm:$0xf]
  %v1189 = vld [vmem:[%s1 + $0x1180] sm:$0xf]
  %v1190 = vld [vmem:[%s1 + $0x1184] sm:$0xf]
  %v1191 = vld [vmem:[%s1 + $0x1188] sm:$0xf]
  %v1192 = vld [vmem:[%s1 + $0x118c] sm:$0xf]
  %v1193 = vld [vmem:[%s1 + $0x1190] sm:$0xf]
  %v1194 = vld [vmem:[%s1 + $0x1194] sm:$0xf]
  %v1195 = vld [vmem:[%s1 + $0x1198] sm:$0xf]
  %v1196 = vld [vmem:[%s1 + $0x119c] sm:$0xf]
  %v1197 = vld [vmem:[%s1 + $0x11a0] sm:$0xf]
  %v1198 = vld [vmem:[%s1 + $0x11a4] sm:$0xf]
  %v1199 = vld [vmem:[%s1 + $0x11a8] sm:$0xf]
  %v1200 = vld [vmem:[%s1 + $0x11ac] sm:$0xf]
  %v1201 = vld [vmem:[%s1 + $0x11b0] sm:$0xf]
  %v1202 = vld [vmem:[%s1 + $0x11b4] sm:$0xf]
  %v1203 = vld [vmem:[%s1 + $0x11b8] sm:$0xf]
  %v1204 = vld [vmem:[%s1 + $0x11bc] sm:$0xf]
  %v1205 = vld [vmem:[%s1 + $0x11c0] sm:$0xf]
  %v1206 = vld [vmem:[%s1 + $0x11c4] sm:$0xf]
  %v1207 = vld [vmem:[%s1 + $0x11c8] sm:$0xf]
  %v1208 = vld [vmem:[%s1 + $0x11cc] sm:$0xf]
  %v1209 = vld [vmem:[%s1 + $0x11d0] sm:$0xf]
  %v1210 = vld [vmem:[%s1 + $0x11d4] sm:$0xf]
  %v1211 = vld [vmem:[%s1 + $0x11d8] sm:$0xf]
  %v1212 = vld [vmem:[%s1 + $0x11dc] sm:$0xf]
  %v1213 = vld [vmem:[%s1 + $0x11e0] sm:$0xf]
  %v1214 = vld [vmem:[%s1 + $0x11e4] sm:$0xf]
  %v1215 = vld [vmem:[%s1 + $0x11e8] sm:$0xf]
  %v1216 = vld [vmem:[%s1 + $0x11ec] sm:$0xf]
  %v1217 = vld [vmem:[%s1 + $0x11f0] sm:$0xf]
  %v1218 = vld [vmem:[%s1 + $0x11f4] sm:$0xf]
  %v1219 = vld [vmem:[%s1 + $0x11f8] sm:$0xf]
  %v1220 = vld [vmem:[%s1 + $0x11fc] sm:$0xf]
  %v1221 = vld [vmem:[%s1 + $0x1200] sm:$0xf]
  %v1222 = vld [vmem:[%s1 + $0x1204] sm:$0xf]
  %v1223 = vld [vmem:[%s1 + $0x1208] sm:$0xf]
  %v1224 = vld [vmem:[%s1 + $0x120c] sm:$0xf]
  %v1225 = vld [vmem:[%s1 + $0x1210] sm:$0xf]
  %v1226 = vld [vmem:[%s1 + $0x1214] sm:$0xf]
  %v1227 = vld [vmem:[%s1 + $0x1218] sm:$0xf]
  %v1228 = vld [vmem:[%s1 + $0x121c] sm:$0xf]
  %v1229 = vld [vmem:[%s1 + $0x1220] sm:$0xf]
  %v1230 = vld [vmem:[%s1 + $0x1224] sm:$0xf]
  %v1231 = vld [vmem:[%s1 + $0x1228] sm:$0xf]
  %v1232 = vld [vmem:[%s1 + $0x122c] sm:$0xf]
  %v1233 = vld [vmem:[%s1 + $0x1230] sm:$0xf]
  %v1234 = vld [vmem:[%s1 + $0x1234] sm:$0xf]
  %v1235 = vld [vmem:[%s1 + $0x1238] sm:$0xf]
  %v1236 = vld [vmem:[%s1 + $0x123c] sm:$0xf]
  %v1237 = vld [vmem:[%s1 + $0x1240] sm:$0xf]
  %v1238 = vld [vmem:[%s1 + $0x1244] sm:$0xf]
  %v1239 = vld [vmem:[%s1 + $0x1248] sm:$0xf]
  %v1240 = vld [vmem:[%s1 + $0x124c] sm:$0xf]
  %v1241 = vld [vmem:[%s1 + $0x1250] sm:$0xf]
  %v1242 = vld [vmem:[%s1 + $0x1254] sm:$0xf]
  %v1243 = vld [vmem:[%s1 + $0x1258] sm:$0xf]
  %v1244 = vld [vmem:[%s1 + $0x125c] sm:$0xf]
  %v1245 = vld [vmem:[%s1 + $0x1260] sm:$0xf]
  %v1246 = vld [vmem:[%s1 + $0x1264] sm:$0xf]
  %v1247 = vld [vmem:[%s1 + $0x1268] sm:$0xf]
  %v1248 = vld [vmem:[%s1 + $0x126c] sm:$0xf]
  %v1249 = vld [vmem:[%s1 + $0x1270] sm:$0xf]
  %v1250 = vld [vmem:[%s1 + $0x1274] sm:$0xf]
  %v1251 = vld [vmem:[%s1 + $0x1278] sm:$0xf]
  %v1252 = vld [vmem:[%s1 + $0x127c] sm:$0xf]
  %v1253 = vld [vmem:[%s1 + $0x1280] sm:$0xf]
  %v1254 = vld [vmem:[%s1 + $0x1284] sm:$0xf]
  %v1255 = vld [vmem:[%s1 + $0x1288] sm:$0xf]
  %v1256 = vld [vmem:[%s1 + $0x128c] sm:$0xf]
  %v1257 = vld [vmem:[%s1 + $0x1290] sm:$0xf]
  %v1258 = vld [vmem:[%s1 + $0x1294] sm:$0xf]
  %v1259 = vld [vmem:[%s1 + $0x1298] sm:$0xf]
  %v1260 = vld [vmem:[%s1 + $0x129c] sm:$0xf]
  %v1261 = vld [vmem:[%s1 + $0x12a0] sm:$0xf]
  %v1262 = vld [vmem:[%s1 + $0x12a4] sm:$0xf]
  %v1263 = vld [vmem:[%s1 + $0x12a8] sm:$0xf]
  %v1264 = vld [vmem:[%s1 + $0x12ac] sm:$0xf]
  %v1265 = vld [vmem:[%s1 + $0x12b0] sm:$0xf]
  %v1266 = vld [vmem:[%s1 + $0x12b4] sm:$0xf]
  %v1267 = vld [vmem:[%s1 + $0x12b8] sm:$0xf]
  %v1268 = vld [vmem:[%s1 + $0x12bc] sm:$0xf]
  %v1269 = vld [vmem:[%s1 + $0x12c0] sm:$0xf]
  %v1270 = vld [vmem:[%s1 + $0x12c4] sm:$0xf]
  %v1271 = vld [vmem:[%s1 + $0x12c8] sm:$0xf]
  %v1272 = vld [vmem:[%s1 + $0x12cc] sm:$0xf]
  %v1273 = vld [vmem:[%s1 + $0x12d0] sm:$0xf]
  %v1274 = vld [vmem:[%s1 + $0x12d4] sm:$0xf]
  %v1275 = vld [vmem:[%s1 + $0x12d8] sm:$0xf]
  %v1276 = vld [vmem:[%s1 + $0x12dc] sm:$0xf]
  %v1277 = vld [vmem:[%s1 + $0x12e0] sm:$0xf]
  %v1278 = vld [vmem:[%s1 + $0x12e4] sm:$0xf]
  %v1279 = vld [vmem:[%s1 + $0x12e8] sm:$0xf]
  %v1280 = vld [vmem:[%s1 + $0x12ec] sm:$0xf]
  %v1281 = vld [vmem:[%s1 + $0x12f0] sm:$0xf]
  %v1282 = vld [vmem:[%s1 + $0x12f4] sm:$0xf]
  %v1283 = vld [vmem:[%s1 + $0x12f8] sm:$0xf]
  %v1284 = vld [vmem:[%s1 + $0x12fc] sm:$0xf]
  %v1285 = vld [vmem:[%s1 + $0x1300] sm:$0xf]
  %v1286 = vld [vmem:[%s1 + $0x1304] sm:$0xf]
  %v1287 = vld [vmem:[%s1 + $0x1308] sm:$0xf]
  %v1288 = vld [vmem:[%s1 + $0x130c] sm:$0xf]
  %v1289 = vld [vmem:[%s1 + $0x1310] sm:$0xf]
  %v1290 = vld [vmem:[%s1 + $0x1314] sm:$0xf]
  %v1291 = vld [vmem:[%s1 + $0x1318] sm:$0xf]
  %v1292 = vld [vmem:[%s1 + $0x131c] sm:$0xf]
  %v1293 = vld [vmem:[%s1 + $0x1320] sm:$0xf]
  %v1294 = vld [vmem:[%s1 + $0x1324] sm:$0xf]
  %v1295 = vld [vmem:[%s1 + $0x1328] sm:$0xf]
  %v1296 = vld [vmem:[%s1 + $0x132c] sm:$0xf]
  %v1297 = vld [vmem:[%s1 + $0x1330] sm:$0xf]
  %v1298 = vld [vmem:[%s1 + $0x1334] sm:$0xf]
  %v1299 = vld [vmem:[%s1 + $0x1338] sm:$0xf]
  %v1300 = vld [vmem:[%s1 + $0x133c] sm:$0xf]
  %v1301 = vld [vmem:[%s1 + $0x1340] sm:$0xf]
  %v1302 = vld [vmem:[%s1 + $0x1344] sm:$0xf]
  %v1303 = vld [vmem:[%s1 + $0x1348] sm:$0xf]
  %v1304 = vld [vmem:[%s1 + $0x134c] sm:$0xf]
  %v1305 = vld [vmem:[%s1 + $0x1350] sm:$0xf]
  %v1306 = vld [vmem:[%s1 + $0x1354] sm:$0xf]
  %v1307 = vld [vmem:[%s1 + $0x1358] sm:$0xf]
  %v1308 = vld [vmem:[%s1 + $0x135c] sm:$0xf]
  %v1309 = vld [vmem:[%s1 + $0x1360] sm:$0xf]
  %v1310 = vld [vmem:[%s1 + $0x1364] sm:$0xf]
  %v1311 = vld [vmem:[%s1 + $0x1368] sm:$0xf]
  %v1312 = vld [vmem:[%s1 + $0x136c] sm:$0xf]
  %v1313 = vld [vmem:[%s1 + $0x1370] sm:$0xf]
  %v1314 = vld [vmem:[%s1 + $0x1374] sm:$0xf]
  %v1315 = vld [vmem:[%s1 + $0x1378] sm:$0xf]
  %v1316 = vld [vmem:[%s1 + $0x137c] sm:$0xf]
  %v1317 = vld [vmem:[%s1 + $0x1380] sm:$0xf]
  %v1318 = vld [vmem:[%s1 + $0x1384] sm:$0xf]
  %v1319 = vld [vmem:[%s1 + $0x1388] sm:$0xf]
  %v1320 = vld [vmem:[%s1 + $0x138c] sm:$0xf]
  %v1321 = vld [vmem:[%s1 + $0x1390] sm:$0xf]
  %v1322 = vld [vmem:[%s1 + $0x1394] sm:$0xf]
  %v1323 = vld [vmem:[%s1 + $0x1398] sm:$0xf]
  %v1324 = vld [vmem:[%s1 + $0x139c] sm:$0xf]
  %v1325 = vld [vmem:[%s1 + $0x13a0] sm:$0xf]
  %v1326 = vld [vmem:[%s1 + $0x13a4] sm:$0xf]
  %v1327 = vld [vmem:[%s1 + $0x13a8] sm:$0xf]
  %v1328 = vld [vmem:[%s1 + $0x13ac] sm:$0xf]
  %v1329 = vld [vmem:[%s1 + $0x13b0] sm:$0xf]
  %v1330 = vld [vmem:[%s1 + $0x13b4] sm:$0xf]
  %v1331 = vld [vmem:[%s1 + $0x13b8] sm:$0xf]
  %v1332 = vld [vmem:[%s1 + $0x13bc] sm:$0xf]
  %v1333 = vld [vmem:[%s1 + $0x13c0] sm:$0xf]
  %v1334 = vld [vmem:[%s1 + $0x13c4] sm:$0xf]
  %v1335 = vld [vmem:[%s1 + $0x13c8] sm:$0xf]
  %v1336 = vld [vmem:[%s1 + $0x13cc] sm:$0xf]
  %v1337 = vld [vmem:[%s1 + $0x13d0] sm:$0xf]
  %v1338 = vld [vmem:[%s1 + $0x13d4] sm:$0xf]
  %v1339 = vld [vmem:[%s1 + $0x13d8] sm:$0xf]
  %v1340 = vld [vmem:[%s1 + $0x13dc] sm:$0xf]
  %v1341 = vld [vmem:[%s1 + $0x13e0] sm:$0xf]
  %v1342 = vld [vmem:[%s1 + $0x13e4] sm:$0xf]
  %v1343 = vld [vmem:[%s1 + $0x13e8] sm:$0xf]
  %v1344 = vld [vmem:[%s1 + $0x13ec] sm:$0xf]
  %v1345 = vld [vmem:[%s1 + $0x13f0] sm:$0xf]
  %v1346 = vld [vmem:[%s1 + $0x13f4] sm:$0xf]
  %v1347 = vld [vmem:[%s1 + $0x13f8] sm:$0xf]
  %v1348 = vld [vmem:[%s1 + $0x13fc] sm:$0xf]
  %v1349 = vld [vmem:[%s1 + $0x1400] sm:$0xf]
  %v1350 = vld [vmem:[%s1 + $0x1404] sm:$0xf]
  %v1351 = vld [vmem:[%s1 + $0x1408] sm:$0xf]
  %v1352 = vld [vmem:[%s1 + $0x140c] sm:$0xf]
  %v1353 = vld [vmem:[%s1 + $0x1410] sm:$0xf]
  %v1354 = vld [vmem:[%s1 + $0x1414] sm:$0xf]
  %v1355 = vld [vmem:[%s1 + $0x1418] sm:$0xf]
  %v1356 = vld [vmem:[%s1 + $0x141c] sm:$0xf]
  %v1357 = vld [vmem:[%s1 + $0x1420] sm:$0xf]
  %v1358 = vld [vmem:[%s1 + $0x1424] sm:$0xf]
  %v1359 = vld [vmem:[%s1 + $0x1428] sm:$0xf]
  %v1360 = vld [vmem:[%s1 + $0x142c] sm:$0xf]
  %v1361 = vld [vmem:[%s1 + $0x1430] sm:$0xf]
  %v1362 = vld [vmem:[%s1 + $0x1434] sm:$0xf]
  %v1363 = vld [vmem:[%s1 + $0x1438] sm:$0xf]
  %v1364 = vld [vmem:[%s1 + $0x143c] sm:$0xf]
  %v1365 = vld [vmem:[%s1 + $0x1440] sm:$0xf]
  %v1366 = vld [vmem:[%s1 + $0x1444] sm:$0xf]
  %v1367 = vld [vmem:[%s1 + $0x1448] sm:$0xf]
  %v1368 = vld [vmem:[%s1 + $0x144c] sm:$0xf]
  %v1369 = vld [vmem:[%s1 + $0x1450] sm:$0xf]
  %v1370 = vld [vmem:[%s1 + $0x1454] sm:$0xf]
  %v1371 = vld [vmem:[%s1 + $0x1458] sm:$0xf]
  %v1372 = vld [vmem:[%s1 + $0x145c] sm:$0xf]
  %v1373 = vld [vmem:[%s1 + $0x1460] sm:$0xf]
  %v1374 = vld [vmem:[%s1 + $0x1464] sm:$0xf]
  %v1375 = vld [vmem:[%s1 + $0x1468] sm:$0xf]
  %v1376 = vld [vmem:[%s1 + $0x146c] sm:$0xf]
  %v1377 = vld [vmem:[%s1 + $0x1470] sm:$0xf]
  %v1378 = vld [vmem:[%s1 + $0x1474] sm:$0xf]
  %v1379 = vld [vmem:[%s1 + $0x1478] sm:$0xf]
  %v1380 = vld [vmem:[%s1 + $0x147c] sm:$0xf]
  %v1381 = vld [vmem:[%s1 + $0x1480] sm:$0xf]
  %v1382 = vld [vmem:[%s1 + $0x1484] sm:$0xf]
  %v1383 = vld [vmem:[%s1 + $0x1488] sm:$0xf]
  %v1384 = vld [vmem:[%s1 + $0x148c] sm:$0xf]
  %v1385 = vld [vmem:[%s1 + $0x1490] sm:$0xf]
  %v1386 = vld [vmem:[%s1 + $0x1494] sm:$0xf]
  %v1387 = vld [vmem:[%s1 + $0x1498] sm:$0xf]
  %v1388 = vld [vmem:[%s1 + $0x149c] sm:$0xf]
  %v1389 = vld [vmem:[%s1 + $0x14a0] sm:$0xf]
  %v1390 = vld [vmem:[%s1 + $0x14a4] sm:$0xf]
  %v1391 = vld [vmem:[%s1 + $0x14a8] sm:$0xf]
  %v1392 = vld [vmem:[%s1 + $0x14ac] sm:$0xf]
  %v1393 = vld [vmem:[%s1 + $0x14b0] sm:$0xf]
  %v1394 = vld [vmem:[%s1 + $0x14b4] sm:$0xf]
  %v1395 = vld [vmem:[%s1 + $0x14b8] sm:$0xf]
  %v1396 = vld [vmem:[%s1 + $0x14bc] sm:$0xf]
  %v1397 = vld [vmem:[%s1 + $0x14c0] sm:$0xf]
  %v1398 = vld [vmem:[%s1 + $0x14c4] sm:$0xf]
  %v1399 = vld [vmem:[%s1 + $0x14c8] sm:$0xf]
  %v1400 = vld [vmem:[%s1 + $0x14cc] sm:$0xf]
  %v1401 = vld [vmem:[%s1 + $0x14d0] sm:$0xf]
  %v1402 = vld [vmem:[%s1 + $0x14d4] sm:$0xf]
  %v1403 = vld [vmem:[%s1 + $0x14d8] sm:$0xf]
  %v1404 = vld [vmem:[%s1 + $0x14dc] sm:$0xf]
  %v1405 = vld [vmem:[%s1 + $0x14e0] sm:$0xf]
  %v1406 = vld [vmem:[%s1 + $0x14e4] sm:$0xf]
  %v1407 = vld [vmem:[%s1 + $0x14e8] sm:$0xf]
  %v1408 = vld [vmem:[%s1 + $0x14ec] sm:$0xf]
  %v1409 = vld [vmem:[%s1 + $0x14f0] sm:$0xf]
  %v1410 = vld [vmem:[%s1 + $0x14f4] sm:$0xf]
  %v1411 = vld [vmem:[%s1 + $0x14f8] sm:$0xf]
  %v1412 = vld [vmem:[%s1 + $0x14fc] sm:$0xf]
  %v1413 = vld [vmem:[%s1 + $0x1500] sm:$0xf]
  %v1414 = vld [vmem:[%s1 + $0x1504] sm:$0xf]
  %v1415 = vld [vmem:[%s1 + $0x1508] sm:$0xf]
  %v1416 = vld [vmem:[%s1 + $0x150c] sm:$0xf]
  %v1417 = vld [vmem:[%s1 + $0x1510] sm:$0xf]
  %v1418 = vld [vmem:[%s1 + $0x1514] sm:$0xf]
  %v1419 = vld [vmem:[%s1 + $0x1518] sm:$0xf]
  %v1420 = vld [vmem:[%s1 + $0x151c] sm:$0xf]
  %v1421 = vld [vmem:[%s1 + $0x1520] sm:$0xf]
  %v1422 = vld [vmem:[%s1 + $0x1524] sm:$0xf]
  %v1423 = vld [vmem:[%s1 + $0x1528] sm:$0xf]
  %v1424 = vld [vmem:[%s1 + $0x152c] sm:$0xf]
  %v1425 = vld [vmem:[%s1 + $0x1530] sm:$0xf]
  %v1426 = vld [vmem:[%s1 + $0x1534] sm:$0xf]
  %v1427 = vld [vmem:[%s1 + $0x1538] sm:$0xf]
  %v1428 = vld [vmem:[%s1 + $0x153c] sm:$0xf]
  %v1429 = vld [vmem:[%s1 + $0x1540] sm:$0xf]
  %v1430 = vld [vmem:[%s1 + $0x1544] sm:$0xf]
  %v1431 = vld [vmem:[%s1 + $0x1548] sm:$0xf]
  %v1432 = vld [vmem:[%s1 + $0x154c] sm:$0xf]
  %v1433 = vld [vmem:[%s1 + $0x1550] sm:$0xf]
  %v1434 = vld [vmem:[%s1 + $0x1554] sm:$0xf]
  %v1435 = vld [vmem:[%s1 + $0x1558] sm:$0xf]
  %v1436 = vld [vmem:[%s1 + $0x155c] sm:$0xf]
  %v1437 = vld [vmem:[%s1 + $0x1560] sm:$0xf]
  %v1438 = vld [vmem:[%s1 + $0x1564] sm:$0xf]
  %v1439 = vld [vmem:[%s1 + $0x1568] sm:$0xf]
  %v1440 = vld [vmem:[%s1 + $0x156c] sm:$0xf]
  %v1441 = vld [vmem:[%s1 + $0x1570] sm:$0xf]
  %v1442 = vld [vmem:[%s1 + $0x1574] sm:$0xf]
  %v1443 = vld [vmem:[%s1 + $0x1578] sm:$0xf]
  %v1444 = vld [vmem:[%s1 + $0x157c] sm:$0xf]
  %v1445 = vld [vmem:[%s1 + $0x1580] sm:$0xf]
  %v1446 = vld [vmem:[%s1 + $0x1584] sm:$0xf]
  %v1447 = vld [vmem:[%s1 + $0x1588] sm:$0xf]
  %v1448 = vld [vmem:[%s1 + $0x158c] sm:$0xf]
  %v1449 = vld [vmem:[%s1 + $0x1590] sm:$0xf]
  %v1450 = vld [vmem:[%s1 + $0x1594] sm:$0xf]
  %v1451 = vld [vmem:[%s1 + $0x1598] sm:$0xf]
  %v1452 = vld [vmem:[%s1 + $0x159c] sm:$0xf]
  %v1453 = vld [vmem:[%s1 + $0x15a0] sm:$0xf]
  %v1454 = vld [vmem:[%s1 + $0x15a4] sm:$0xf]
  %v1455 = vld [vmem:[%s1 + $0x15a8] sm:$0xf]
  %v1456 = vld [vmem:[%s1 + $0x15ac] sm:$0xf]
  %v1457 = vld [vmem:[%s1 + $0x15b0] sm:$0xf]
  %v1458 = vld [vmem:[%s1 + $0x15b4] sm:$0xf]
  %v1459 = vld [vmem:[%s1 + $0x15b8] sm:$0xf]
  %v1460 = vld [vmem:[%s1 + $0x15bc] sm:$0xf]
  %v1461 = vld [vmem:[%s1 + $0x15c0] sm:$0xf]
  %v1462 = vld [vmem:[%s1 + $0x15c4] sm:$0xf]
  %v1463 = vld [vmem:[%s1 + $0x15c8] sm:$0xf]
  %v1464 = vld [vmem:[%s1 + $0x15cc] sm:$0xf]
  %v1465 = vld [vmem:[%s1 + $0x15d0] sm:$0xf]
  %v1466 = vld [vmem:[%s1 + $0x15d4] sm:$0xf]
  %v1467 = vld [vmem:[%s1 + $0x15d8] sm:$0xf]
  %v1468 = vld [vmem:[%s1 + $0x15dc] sm:$0xf]
  %v1469 = vld [vmem:[%s1 + $0x15e0] sm:$0xf]
  %v1470 = vld [vmem:[%s1 + $0x15e4] sm:$0xf]
  %v1471 = vld [vmem:[%s1 + $0x15e8] sm:$0xf]
  %v1472 = vld [vmem:[%s1 + $0x15ec] sm:$0xf]
  %v1473 = vld [vmem:[%s1 + $0x15f0] sm:$0xf]
  %v1474 = vld [vmem:[%s1 + $0x15f4] sm:$0xf]
  %v1475 = vld [vmem:[%s1 + $0x15f8] sm:$0xf]
  %v1476 = vld [vmem:[%s1 + $0x15fc] sm:$0xf]
  %v1477 = vld [vmem:[%s1 + $0x1600] sm:$0xf]
  %v1478 = vld [vmem:[%s1 + $0x1604] sm:$0xf]
  %v1479 = vld [vmem:[%s1 + $0x1608] sm:$0xf]
  %v1480 = vld [vmem:[%s1 + $0x160c] sm:$0xf]
  %v1481 = vld [vmem:[%s1 + $0x1610] sm:$0xf]
  %v1482 = vld [vmem:[%s1 + $0x1614] sm:$0xf]
  %v1483 = vld [vmem:[%s1 + $0x1618] sm:$0xf]
  %v1484 = vld [vmem:[%s1 + $0x161c] sm:$0xf]
  %v1485 = vld [vmem:[%s1 + $0x1620] sm:$0xf]
  %v1486 = vld [vmem:[%s1 + $0x1624] sm:$0xf]
  %v1487 = vld [vmem:[%s1 + $0x1628] sm:$0xf]
  %v1488 = vld [vmem:[%s1 + $0x162c] sm:$0xf]
  %v1489 = vld [vmem:[%s1 + $0x1630] sm:$0xf]
  %v1490 = vld [vmem:[%s1 + $0x1634] sm:$0xf]
  %v1491 = vld [vmem:[%s1 + $0x1638] sm:$0xf]
  %v1492 = vld [vmem:[%s1 + $0x163c] sm:$0xf]
  %v1493 = vld [vmem:[%s1 + $0x1640] sm:$0xf]
  %v1494 = vld [vmem:[%s1 + $0x1644] sm:$0xf]
  %v1495 = vld [vmem:[%s1 + $0x1648] sm:$0xf]
  %v1496 = vld [vmem:[%s1 + $0x164c] sm:$0xf]
  %v1497 = vld [vmem:[%s1 + $0x1650] sm:$0xf]
  %v1498 = vld [vmem:[%s1 + $0x1654] sm:$0xf]
  %v1499 = vld [vmem:[%s1 + $0x1658] sm:$0xf]
  %v1500 = vld [vmem:[%s1 + $0x165c] sm:$0xf]
  %v1501 = vld [vmem:[%s1 + $0x1660] sm:$0xf]
  %v1502 = vld [vmem:[%s1 + $0x1664] sm:$0xf]
  %v1503 = vld [vmem:[%s1 + $0x1668] sm:$0xf]
  %v1504 = vld [vmem:[%s1 + $0x166c] sm:$0xf]
  %v1505 = vld [vmem:[%s1 + $0x1670] sm:$0xf]
  %v1506 = vld [vmem:[%s1 + $0x1674] sm:$0xf]
  %v1507 = vld [vmem:[%s1 + $0x1678] sm:$0xf]
  %v1508 = vld [vmem:[%s1 + $0x167c] sm:$0xf]
  %v1509 = vld [vmem:[%s1 + $0x1680] sm:$0xf]
  %v1510 = vld [vmem:[%s1 + $0x1684] sm:$0xf]
  %v1511 = vld [vmem:[%s1 + $0x1688] sm:$0xf]
  %v1512 = vld [vmem:[%s1 + $0x168c] sm:$0xf]
  %v1513 = vld [vmem:[%s1 + $0x1690] sm:$0xf]
  %v1514 = vld [vmem:[%s1 + $0x1694] sm:$0xf]
  %v1515 = vld [vmem:[%s1 + $0x1698] sm:$0xf]
  %v1516 = vld [vmem:[%s1 + $0x169c] sm:$0xf]
  %v1517 = vld [vmem:[%s1 + $0x16a0] sm:$0xf]
  %v1518 = vld [vmem:[%s1 + $0x16a4] sm:$0xf]
  %v1519 = vld [vmem:[%s1 + $0x16a8] sm:$0xf]
  %v1520 = vld [vmem:[%s1 + $0x16ac] sm:$0xf]
  %v1521 = vld [vmem:[%s1 + $0x16b0] sm:$0xf]
  %v1522 = vld [vmem:[%s1 + $0x16b4] sm:$0xf]
  %v1523 = vld [vmem:[%s1 + $0x16b8] sm:$0xf]
  %v1524 = vld [vmem:[%s1 + $0x16bc] sm:$0xf]
  %v1525 = vld [vmem:[%s1 + $0x16c0] sm:$0xf]
  %v1526 = vld [vmem:[%s1 + $0x16c4] sm:$0xf]
  %v1527 = vld [vmem:[%s1 + $0x16c8] sm:$0xf]
  %v1528 = vld [vmem:[%s1 + $0x16cc] sm:$0xf]
  %v1529 = vld [vmem:[%s1 + $0x16d0] sm:$0xf]
  %v1530 = vld [vmem:[%s1 + $0x16d4] sm:$0xf]
  %v1531 = vld [vmem:[%s1 + $0x16d8] sm:$0xf]
  %v1532 = vld [vmem:[%s1 + $0x16dc] sm:$0xf]
  %v1533 = vld [vmem:[%s1 + $0x16e0] sm:$0xf]
  %v1534 = vld [vmem:[%s1 + $0x16e4] sm:$0xf]
  %v1535 = vld [vmem:[%s1 + $0x16e8] sm:$0xf]
  %v1536 = vld [vmem:[%s1 + $0x16ec] sm:$0xf]
  %v1537 = vld [vmem:[%s1 + $0x16f0] sm:$0xf]
  %v1538 = vld [vmem:[%s1 + $0x16f4] sm:$0xf]
  %v1539 = vld [vmem:[%s1 + $0x16f8] sm:$0xf]
  %v1540 = vld [vmem:[%s1 + $0x16fc] sm:$0xf]
  %v1541 = vld [vmem:[%s1 + $0x1700] sm:$0xf]
  %v1542 = vld [vmem:[%s1 + $0x1704] sm:$0xf]
  %v1543 = vld [vmem:[%s1 + $0x1708] sm:$0xf]
  %v1544 = vld [vmem:[%s1 + $0x170c] sm:$0xf]
  %v1545 = vld [vmem:[%s1 + $0x1710] sm:$0xf]
  %v1546 = vld [vmem:[%s1 + $0x1714] sm:$0xf]
  %v1547 = vld [vmem:[%s1 + $0x1718] sm:$0xf]
  %v1548 = vld [vmem:[%s1 + $0x171c] sm:$0xf]
  %v1549 = vld [vmem:[%s1 + $0x1720] sm:$0xf]
  %v1550 = vld [vmem:[%s1 + $0x1724] sm:$0xf]
  %v1551 = vld [vmem:[%s1 + $0x1728] sm:$0xf]
  %v1552 = vld [vmem:[%s1 + $0x172c] sm:$0xf]
  %v1553 = vld [vmem:[%s1 + $0x1730] sm:$0xf]
  %v1554 = vld [vmem:[%s1 + $0x1734] sm:$0xf]
  %v1555 = vld [vmem:[%s1 + $0x1738] sm:$0xf]
  %v1556 = vld [vmem:[%s1 + $0x173c] sm:$0xf]
  %v1557 = vld [vmem:[%s1 + $0x1740] sm:$0xf]
  %v1558 = vld [vmem:[%s1 + $0x1744] sm:$0xf]
  %v1559 = vld [vmem:[%s1 + $0x1748] sm:$0xf]
  %v1560 = vld [vmem:[%s1 + $0x174c] sm:$0xf]
  %v1561 = vld [vmem:[%s1 + $0x1750] sm:$0xf]
  %v1562 = vld [vmem:[%s1 + $0x1754] sm:$0xf]
  %v1563 = vld [vmem:[%s1 + $0x1758] sm:$0xf]
  %v1564 = vld [vmem:[%s1 + $0x175c] sm:$0xf]
  %v1565 = vld [vmem:[%s1 + $0x1760] sm:$0xf]
  %v1566 = vld [vmem:[%s1 + $0x1764] sm:$0xf]
  %v1567 = vld [vmem:[%s1 + $0x1768] sm:$0xf]
  %v1568 = vld [vmem:[%s1 + $0x176c] sm:$0xf]
  %v1569 = vld [vmem:[%s1 + $0x1770] sm:$0xf]
  %v1570 = vld [vmem:[%s1 + $0x1774] sm:$0xf]
  %v1571 = vld [vmem:[%s1 + $0x1778] sm:$0xf]
  %v1572 = vld [vmem:[%s1 + $0x177c] sm:$0xf]
  %v1573 = vld [vmem:[%s1 + $0x1780] sm:$0xf]
  %v1574 = vld [vmem:[%s1 + $0x1784] sm:$0xf]
  %v1575 = vld [vmem:[%s1 + $0x1788] sm:$0xf]
  %v1576 = vld [vmem:[%s1 + $0x178c] sm:$0xf]
  %v1577 = vld [vmem:[%s1 + $0x1790] sm:$0xf]
  %v1578 = vld [vmem:[%s1 + $0x1794] sm:$0xf]
  %v1579 = vld [vmem:[%s1 + $0x1798] sm:$0xf]
  %v1580 = vld [vmem:[%s1 + $0x179c] sm:$0xf]
  %v1581 = vld [vmem:[%s1 + $0x17a0] sm:$0xf]
  %v1582 = vld [vmem:[%s1 + $0x17a4] sm:$0xf]
  %v1583 = vld [vmem:[%s1 + $0x17a8] sm:$0xf]
  %v1584 = vld [vmem:[%s1 + $0x17ac] sm:$0xf]
  %v1585 = vld [vmem:[%s1 + $0x17b0] sm:$0xf]
  %v1586 = vld [vmem:[%s1 + $0x17b4] sm:$0xf]
  %v1587 = vld [vmem:[%s1 + $0x17b8] sm:$0xf]
  %v1588 = vld [vmem:[%s1 + $0x17bc] sm:$0xf]
  %v1589 = vld [vmem:[%s1 + $0x17c0] sm:$0xf]
  %v1590 = vld [vmem:[%s1 + $0x17c4] sm:$0xf]
  %v1591 = vld [vmem:[%s1 + $0x17c8] sm:$0xf]
  %v1592 = vld [vmem:[%s1 + $0x17cc] sm:$0xf]
  %v1593 = vld [vmem:[%s1 + $0x17d0] sm:$0xf]
  %v1594 = vld [vmem:[%s1 + $0x17d4] sm:$0xf]
  %v1595 = vld [vmem:[%s1 + $0x17d8] sm:$0xf]
  %v1596 = vld [vmem:[%s1 + $0x17dc] sm:$0xf]
  %v1597 = vld [vmem:[%s1 + $0x17e0] sm:$0xf]
  %v1598 = vld [vmem:[%s1 + $0x17e4] sm:$0xf]
  %v1599 = vld [vmem:[%s1 + $0x17e8] sm:$0xf]
  %v1600 = vld [vmem:[%s1 + $0x17ec] sm:$0xf]
  %v1601 = vld [vmem:[%s1 + $0x17f0] sm:$0xf]
  %v1602 = vld [vmem:[%s1 + $0x17f4] sm:$0xf]
  %v1603 = vld [vmem:[%s1 + $0x17f8] sm:$0xf]
  %v1604 = vld [vmem:[%s1 + $0x17fc] sm:$0xf]
  %v1605 = vld [vmem:[%s2] sm:$0x1]
  %v1607 = vlaneseq
  %v1608 = vshrl.u32 %v1607, 7
  %v1609 = vsub.s32 0, %v1608
  %v1610 = vrot.slane %v1605, %v1609
  %v1660 = vunpack.c.l.b16 %v21
  %v1661 = vunpack.c.h.b16 %v21
  %v1662 = vunpack.c.l.b16 %v22
  %v1663 = vunpack.c.h.b16 %v22
  %v1664 = vunpack.c.l.b16 %v23
  %v1665 = vunpack.c.h.b16 %v23
  %v1666 = vunpack.c.l.b16 %v24
  %v1667 = vunpack.c.h.b16 %v24
  %v1668 = vunpack.c.l.b16 %v25
  %v1669 = vunpack.c.h.b16 %v25
  %v1670 = vunpack.c.l.b16 %v26
  %v1671 = vunpack.c.h.b16 %v26
  %v1672 = vunpack.c.l.b16 %v27
  %v1673 = vunpack.c.h.b16 %v27
  %v1674 = vunpack.c.l.b16 %v28
  %v1675 = vunpack.c.h.b16 %v28
  %v1676 = vunpack.c.l.b16 %v29
  %v1677 = vunpack.c.h.b16 %v29
  %v1678 = vunpack.c.l.b16 %v30
  %v1679 = vunpack.c.h.b16 %v30
  %v1680 = vunpack.c.l.b16 %v31
  %v1681 = vunpack.c.h.b16 %v31
  %v1682 = vunpack.c.l.b16 %v32
  %v1683 = vunpack.c.h.b16 %v32
  %v1684 = vunpack.c.l.b16 %v33
  %v1685 = vunpack.c.h.b16 %v33
  %v1686 = vunpack.c.l.b16 %v34
  %v1687 = vunpack.c.h.b16 %v34
  %v1688 = vunpack.c.l.b16 %v35
  %v1689 = vunpack.c.h.b16 %v35
  %v1690 = vunpack.c.l.b16 %v36
  %v1691 = vunpack.c.h.b16 %v36
  %v1692 = vunpack.c.l.b16 %v37
  %v1693 = vunpack.c.h.b16 %v37
  %v1694 = vunpack.c.l.b16 %v38
  %v1695 = vunpack.c.h.b16 %v38
  %v1696 = vunpack.c.l.b16 %v39
  %v1697 = vunpack.c.h.b16 %v39
  %v1698 = vunpack.c.l.b16 %v40
  %v1699 = vunpack.c.h.b16 %v40
  %v1700 = vunpack.c.l.b16 %v41
  %v1701 = vunpack.c.h.b16 %v41
  %v1702 = vunpack.c.l.b16 %v42
  %v1703 = vunpack.c.h.b16 %v42
  %v1704 = vunpack.c.l.b16 %v43
  %v1705 = vunpack.c.h.b16 %v43
  %v1706 = vunpack.c.l.b16 %v44
  %v1707 = vunpack.c.h.b16 %v44
  %v1708 = vunpack.c.l.b16 %v45
  %v1709 = vunpack.c.h.b16 %v45
  %v1710 = vunpack.c.l.b16 %v46
  %v1711 = vunpack.c.h.b16 %v46
  %v1712 = vunpack.c.l.b16 %v47
  %v1713 = vunpack.c.h.b16 %v47
  %v1714 = vunpack.c.l.b16 %v48
  %v1715 = vunpack.c.h.b16 %v48
  %v1716 = vunpack.c.l.b16 %v49
  %v1717 = vunpack.c.h.b16 %v49
  %v1718 = vunpack.c.l.b16 %v50
  %v1719 = vunpack.c.h.b16 %v50
  %v1720 = vunpack.c.l.b16 %v51
  %v1721 = vunpack.c.h.b16 %v51
  %v1722 = vunpack.c.l.b16 %v52
  %v1723 = vunpack.c.h.b16 %v52
  %v1724 = vunpack.c.l.b16 %v53
  %v1725 = vunpack.c.h.b16 %v53
  %v1726 = vunpack.c.l.b16 %v54
  %v1727 = vunpack.c.h.b16 %v54
  %v1728 = vunpack.c.l.b16 %v55
  %v1729 = vunpack.c.h.b16 %v55
  %v1730 = vunpack.c.l.b16 %v56
  %v1731 = vunpack.c.h.b16 %v56
  %v1732 = vunpack.c.l.b16 %v57
  %v1733 = vunpack.c.h.b16 %v57
  %v1734 = vunpack.c.l.b16 %v58
  %v1735 = vunpack.c.h.b16 %v58
  %v1736 = vunpack.c.l.b16 %v59
  %v1737 = vunpack.c.h.b16 %v59
  %v1738 = vunpack.c.l.b16 %v60
  %v1739 = vunpack.c.h.b16 %v60
  %v1740 = vunpack.c.l.b16 %v61
  %v1741 = vunpack.c.h.b16 %v61
  %v1742 = vunpack.c.l.b16 %v62
  %v1743 = vunpack.c.h.b16 %v62
  %v1744 = vunpack.c.l.b16 %v63
  %v1745 = vunpack.c.h.b16 %v63
  %v1746 = vunpack.c.l.b16 %v64
  %v1747 = vunpack.c.h.b16 %v64
  %v1748 = vunpack.c.l.b16 %v65
  %v1749 = vunpack.c.h.b16 %v65
  %v1750 = vunpack.c.l.b16 %v66
  %v1751 = vunpack.c.h.b16 %v66
  %v1752 = vunpack.c.l.b16 %v67
  %v1753 = vunpack.c.h.b16 %v67
  %v1754 = vunpack.c.l.b16 %v68
  %v1755 = vunpack.c.h.b16 %v68
  %v1756 = vpack.c.b16 %v1660, %v1660
  %v1757 = vpack.c.b16 %v1661, %v1661
  %v1758 = vpack.c.b16 %v1662, %v1662
  %v1759 = vpack.c.b16 %v1663, %v1663
  %v1760 = vpack.c.b16 %v1664, %v1664
  %v1761 = vpack.c.b16 %v1665, %v1665
  %v1762 = vpack.c.b16 %v1666, %v1666
  %v1763 = vpack.c.b16 %v1667, %v1667
  %v1764 = vpack.c.b16 %v1668, %v1668
  %v1765 = vpack.c.b16 %v1669, %v1669
  %v1766 = vpack.c.b16 %v1670, %v1670
  %v1767 = vpack.c.b16 %v1671, %v1671
  %v1768 = vpack.c.b16 %v1672, %v1672
  %v1769 = vpack.c.b16 %v1673, %v1673
  %v1770 = vpack.c.b16 %v1674, %v1674
  %v1771 = vpack.c.b16 %v1675, %v1675
  %v1772 = vpack.c.b16 %v1676, %v1676
  %v1773 = vpack.c.b16 %v1677, %v1677
  %v1774 = vpack.c.b16 %v1678, %v1678
  %v1775 = vpack.c.b16 %v1679, %v1679
  %v1776 = vpack.c.b16 %v1680, %v1680
  %v1777 = vpack.c.b16 %v1681, %v1681
  %v1778 = vpack.c.b16 %v1682, %v1682
  %v1779 = vpack.c.b16 %v1683, %v1683
  %v1780 = vpack.c.b16 %v1684, %v1684
  %v1781 = vpack.c.b16 %v1685, %v1685
  %v1782 = vpack.c.b16 %v1686, %v1686
  %v1783 = vpack.c.b16 %v1687, %v1687
  %v1784 = vpack.c.b16 %v1688, %v1688
  %v1785 = vpack.c.b16 %v1689, %v1689
  %v1786 = vpack.c.b16 %v1690, %v1690
  %v1787 = vpack.c.b16 %v1691, %v1691
  %v1788 = vpack.c.b16 %v1692, %v1692
  %v1789 = vpack.c.b16 %v1693, %v1693
  %v1790 = vpack.c.b16 %v1694, %v1694
  %v1791 = vpack.c.b16 %v1695, %v1695
  %v1792 = vpack.c.b16 %v1696, %v1696
  %v1793 = vpack.c.b16 %v1697, %v1697
  %v1794 = vpack.c.b16 %v1698, %v1698
  %v1795 = vpack.c.b16 %v1699, %v1699
  %v1796 = vpack.c.b16 %v1700, %v1700
  %v1797 = vpack.c.b16 %v1701, %v1701
  %v1798 = vpack.c.b16 %v1702, %v1702
  %v1799 = vpack.c.b16 %v1703, %v1703
  %v1800 = vpack.c.b16 %v1704, %v1704
  %v1801 = vpack.c.b16 %v1705, %v1705
  %v1802 = vpack.c.b16 %v1706, %v1706
  %v1803 = vpack.c.b16 %v1707, %v1707
  %v1804 = vpack.c.b16 %v1708, %v1708
  %v1805 = vpack.c.b16 %v1709, %v1709
  %v1806 = vpack.c.b16 %v1710, %v1710
  %v1807 = vpack.c.b16 %v1711, %v1711
  %v1808 = vpack.c.b16 %v1712, %v1712
  %v1809 = vpack.c.b16 %v1713, %v1713
  %v1810 = vpack.c.b16 %v1714, %v1714
  %v1811 = vpack.c.b16 %v1715, %v1715
  %v1812 = vpack.c.b16 %v1716, %v1716
  %v1813 = vpack.c.b16 %v1717, %v1717
  %v1814 = vpack.c.b16 %v1718, %v1718
  %v1815 = vpack.c.b16 %v1719, %v1719
  %v1816 = vpack.c.b16 %v1720, %v1720
  %v1817 = vpack.c.b16 %v1721, %v1721
  %v1818 = vpack.c.b16 %v1722, %v1722
  %v1819 = vpack.c.b16 %v1723, %v1723
  %v1820 = vpack.c.b16 %v1724, %v1724
  %v1821 = vpack.c.b16 %v1725, %v1725
  %v1822 = vpack.c.b16 %v1726, %v1726
  %v1823 = vpack.c.b16 %v1727, %v1727
  %v1824 = vpack.c.b16 %v1728, %v1728
  %v1825 = vpack.c.b16 %v1729, %v1729
  %v1826 = vpack.c.b16 %v1730, %v1730
  %v1827 = vpack.c.b16 %v1731, %v1731
  %v1828 = vpack.c.b16 %v1732, %v1732
  %v1829 = vpack.c.b16 %v1733, %v1733
  %v1830 = vpack.c.b16 %v1734, %v1734
  %v1831 = vpack.c.b16 %v1735, %v1735
  %v1832 = vpack.c.b16 %v1736, %v1736
  %v1833 = vpack.c.b16 %v1737, %v1737
  %v1834 = vpack.c.b16 %v1738, %v1738
  %v1835 = vpack.c.b16 %v1739, %v1739
  %v1836 = vpack.c.b16 %v1740, %v1740
  %v1837 = vpack.c.b16 %v1741, %v1741
  %v1838 = vpack.c.b16 %v1742, %v1742
  %v1839 = vpack.c.b16 %v1743, %v1743
  %v1840 = vpack.c.b16 %v1744, %v1744
  %v1841 = vpack.c.b16 %v1745, %v1745
  %v1842 = vpack.c.b16 %v1746, %v1746
  %v1843 = vpack.c.b16 %v1747, %v1747
  %v1844 = vpack.c.b16 %v1748, %v1748
  %v1845 = vpack.c.b16 %v1749, %v1749
  %v1846 = vpack.c.b16 %v1750, %v1750
  %v1847 = vpack.c.b16 %v1751, %v1751
  %v1848 = vpack.c.b16 %v1752, %v1752
  %v1849 = vpack.c.b16 %v1753, %v1753
  %v1850 = vpack.c.b16 %v1754, %v1754
  %v1851 = vpack.c.b16 %v1755, %v1755
  %v3484 = vunpack.c.l.b16 %v69
  %v3485 = vunpack.c.l.b16 %v70
  %v3486 = vunpack.c.l.b16 %v71
  %v3487 = vunpack.c.l.b16 %v72
  %v3488 = vunpack.c.l.b16 %v73
  %v3489 = vunpack.c.l.b16 %v74
  %v3490 = vunpack.c.l.b16 %v75
  %v3491 = vunpack.c.l.b16 %v76
  %v3492 = vunpack.c.l.b16 %v77
  %v3493 = vunpack.c.l.b16 %v78
  %v3494 = vunpack.c.l.b16 %v79
  %v3495 = vunpack.c.l.b16 %v80
  %v3496 = vunpack.c.l.b16 %v81
  %v3497 = vunpack.c.l.b16 %v82
  %v3498 = vunpack.c.l.b16 %v83
  %v3499 = vunpack.c.l.b16 %v84
  %v3500 = vunpack.c.l.b16 %v85
  %v3501 = vunpack.c.l.b16 %v86
  %v3502 = vunpack.c.l.b16 %v87
  %v3503 = vunpack.c.l.b16 %v88
  %v3504 = vunpack.c.l.b16 %v89
  %v3505 = vunpack.c.l.b16 %v90
  %v3506 = vunpack.c.l.b16 %v91
  %v3507 = vunpack.c.l.b16 %v92
  %v3508 = vunpack.c.l.b16 %v93
  %v3509 = vunpack.c.l.b16 %v94
  %v3510 = vunpack.c.l.b16 %v95
  %v3511 = vunpack.c.l.b16 %v96
  %v3512 = vunpack.c.l.b16 %v97
  %v3513 = vunpack.c.l.b16 %v98
  %v3514 = vunpack.c.l.b16 %v99
  %v3515 = vunpack.c.l.b16 %v100
  %v3516 = vunpack.c.l.b16 %v101
  %v3517 = vunpack.c.l.b16 %v102
  %v3518 = vunpack.c.l.b16 %v103
  %v3519 = vunpack.c.l.b16 %v104
  %v3520 = vunpack.c.l.b16 %v105
  %v3521 = vunpack.c.l.b16 %v106
  %v3522 = vunpack.c.l.b16 %v107
  %v3523 = vunpack.c.l.b16 %v108
  %v3524 = vunpack.c.l.b16 %v109
  %v3525 = vunpack.c.l.b16 %v110
  %v3526 = vunpack.c.l.b16 %v111
  %v3527 = vunpack.c.l.b16 %v112
  %v3528 = vunpack.c.l.b16 %v113
  %v3529 = vunpack.c.l.b16 %v114
  %v3530 = vunpack.c.l.b16 %v115
  %v3531 = vunpack.c.l.b16 %v116
  %v3532 = vunpack.c.l.b16 %v117
  %v3533 = vunpack.c.l.b16 %v118
  %v3534 = vunpack.c.l.b16 %v119
  %v3535 = vunpack.c.l.b16 %v120
  %v3536 = vunpack.c.l.b16 %v121
  %v3537 = vunpack.c.l.b16 %v122
  %v3538 = vunpack.c.l.b16 %v123
  %v3539 = vunpack.c.l.b16 %v124
  %v3540 = vunpack.c.l.b16 %v125
  %v3541 = vunpack.c.l.b16 %v126
  %v3542 = vunpack.c.l.b16 %v127
  %v3543 = vunpack.c.l.b16 %v128
  %v3544 = vunpack.c.l.b16 %v129
  %v3545 = vunpack.c.l.b16 %v130
  %v3546 = vunpack.c.l.b16 %v131
  %v3547 = vunpack.c.l.b16 %v132
  %v3548 = vunpack.c.l.b16 %v133
  %v3549 = vunpack.c.l.b16 %v134
  %v3550 = vunpack.c.l.b16 %v135
  %v3551 = vunpack.c.l.b16 %v136
  %v3552 = vunpack.c.l.b16 %v137
  %v3553 = vunpack.c.l.b16 %v138
  %v3554 = vunpack.c.l.b16 %v139
  %v3555 = vunpack.c.l.b16 %v140
  %v3556 = vunpack.c.l.b16 %v141
  %v3557 = vunpack.c.l.b16 %v142
  %v3558 = vunpack.c.l.b16 %v143
  %v3559 = vunpack.c.l.b16 %v144
  %v3560 = vunpack.c.l.b16 %v145
  %v3561 = vunpack.c.l.b16 %v146
  %v3562 = vunpack.c.l.b16 %v147
  %v3563 = vunpack.c.l.b16 %v148
  %v3564 = vunpack.c.l.b16 %v149
  %v3565 = vunpack.c.l.b16 %v150
  %v3566 = vunpack.c.l.b16 %v151
  %v3567 = vunpack.c.l.b16 %v152
  %v3568 = vunpack.c.l.b16 %v153
  %v3569 = vunpack.c.l.b16 %v154
  %v3570 = vunpack.c.l.b16 %v155
  %v3571 = vunpack.c.l.b16 %v156
  %v3572 = vunpack.c.l.b16 %v157
  %v3573 = vunpack.c.l.b16 %v158
  %v3574 = vunpack.c.l.b16 %v159
  %v3575 = vunpack.c.l.b16 %v160
  %v3576 = vunpack.c.l.b16 %v161
  %v3577 = vunpack.c.l.b16 %v162
  %v3578 = vunpack.c.l.b16 %v163
  %v3579 = vunpack.c.l.b16 %v164
  %v3580 = vunpack.c.l.b16 %v165
  %v3581 = vunpack.c.l.b16 %v166
  %v3582 = vunpack.c.l.b16 %v167
  %v3583 = vunpack.c.l.b16 %v168
  %v3584 = vunpack.c.l.b16 %v169
  %v3585 = vunpack.c.l.b16 %v170
  %v3586 = vunpack.c.l.b16 %v171
  %v3587 = vunpack.c.l.b16 %v172
  %v3588 = vunpack.c.l.b16 %v173
  %v3589 = vunpack.c.l.b16 %v174
  %v3590 = vunpack.c.l.b16 %v175
  %v3591 = vunpack.c.l.b16 %v176
  %v3592 = vunpack.c.l.b16 %v177
  %v3593 = vunpack.c.l.b16 %v178
  %v3594 = vunpack.c.l.b16 %v179
  %v3595 = vunpack.c.l.b16 %v180
  %v3596 = vunpack.c.l.b16 %v181
  %v3597 = vunpack.c.l.b16 %v182
  %v3598 = vunpack.c.l.b16 %v183
  %v3599 = vunpack.c.l.b16 %v184
  %v3600 = vunpack.c.l.b16 %v185
  %v3601 = vunpack.c.l.b16 %v186
  %v3602 = vunpack.c.l.b16 %v187
  %v3603 = vunpack.c.l.b16 %v188
  %v3604 = vunpack.c.l.b16 %v189
  %v3605 = vunpack.c.l.b16 %v190
  %v3606 = vunpack.c.l.b16 %v191
  %v3607 = vunpack.c.l.b16 %v192
  %v3608 = vunpack.c.l.b16 %v193
  %v3609 = vunpack.c.l.b16 %v194
  %v3610 = vunpack.c.l.b16 %v195
  %v3611 = vunpack.c.l.b16 %v196
  %v3612 = vunpack.c.l.b16 %v197
  %v3613 = vunpack.c.l.b16 %v198
  %v3614 = vunpack.c.l.b16 %v199
  %v3615 = vunpack.c.l.b16 %v200
  %v3616 = vunpack.c.l.b16 %v201
  %v3617 = vunpack.c.l.b16 %v202
  %v3618 = vunpack.c.l.b16 %v203
  %v3619 = vunpack.c.l.b16 %v204
  %v3620 = vunpack.c.l.b16 %v205
  %v3621 = vunpack.c.l.b16 %v206
  %v3622 = vunpack.c.l.b16 %v207
  %v3623 = vunpack.c.l.b16 %v208
  %v3624 = vunpack.c.l.b16 %v209
  %v3625 = vunpack.c.l.b16 %v210
  %v3626 = vunpack.c.l.b16 %v211
  %v3627 = vunpack.c.l.b16 %v212
  %v3628 = vunpack.c.l.b16 %v213
  %v3629 = vunpack.c.l.b16 %v214
  %v3630 = vunpack.c.l.b16 %v215
  %v3631 = vunpack.c.l.b16 %v216
  %v3632 = vunpack.c.l.b16 %v217
  %v3633 = vunpack.c.l.b16 %v218
  %v3634 = vunpack.c.l.b16 %v219
  %v3635 = vunpack.c.l.b16 %v220
  %v3636 = vunpack.c.l.b16 %v221
  %v3637 = vunpack.c.l.b16 %v222
  %v3638 = vunpack.c.l.b16 %v223
  %v3639 = vunpack.c.l.b16 %v224
  %v3640 = vunpack.c.l.b16 %v225
  %v3641 = vunpack.c.l.b16 %v226
  %v3642 = vunpack.c.l.b16 %v227
  %v3643 = vunpack.c.l.b16 %v228
  %v3644 = vunpack.c.l.b16 %v229
  %v3645 = vunpack.c.l.b16 %v230
  %v3646 = vunpack.c.l.b16 %v231
  %v3647 = vunpack.c.l.b16 %v232
  %v3648 = vunpack.c.l.b16 %v233
  %v3649 = vunpack.c.l.b16 %v234
  %v3650 = vunpack.c.l.b16 %v235
  %v3651 = vunpack.c.l.b16 %v236
  %v3652 = vunpack.c.l.b16 %v237
  %v3653 = vunpack.c.l.b16 %v238
  %v3654 = vunpack.c.l.b16 %v239
  %v3655 = vunpack.c.l.b16 %v240
  %v3656 = vunpack.c.l.b16 %v241
  %v3657 = vunpack.c.l.b16 %v242
  %v3658 = vunpack.c.l.b16 %v243
  %v3659 = vunpack.c.l.b16 %v244
  %v3660 = vunpack.c.l.b16 %v245
  %v3661 = vunpack.c.l.b16 %v246
  %v3662 = vunpack.c.l.b16 %v247
  %v3663 = vunpack.c.l.b16 %v248
  %v3664 = vunpack.c.l.b16 %v249
  %v3665 = vunpack.c.l.b16 %v250
  %v3666 = vunpack.c.l.b16 %v251
  %v3667 = vunpack.c.l.b16 %v252
  %v3668 = vunpack.c.l.b16 %v253
  %v3669 = vunpack.c.l.b16 %v254
  %v3670 = vunpack.c.l.b16 %v255
  %v3671 = vunpack.c.l.b16 %v256
  %v3672 = vunpack.c.l.b16 %v257
  %v3673 = vunpack.c.l.b16 %v258
  %v3674 = vunpack.c.l.b16 %v259
  %v3675 = vunpack.c.l.b16 %v260
  %v3676 = vunpack.c.l.b16 %v261
  %v3677 = vunpack.c.l.b16 %v262
  %v3678 = vunpack.c.l.b16 %v263
  %v3679 = vunpack.c.l.b16 %v264
  %v3680 = vunpack.c.l.b16 %v265
  %v3681 = vunpack.c.l.b16 %v266
  %v3682 = vunpack.c.l.b16 %v267
  %v3683 = vunpack.c.l.b16 %v268
  %v3684 = vunpack.c.l.b16 %v269
  %v3685 = vunpack.c.l.b16 %v270
  %v3686 = vunpack.c.l.b16 %v271
  %v3687 = vunpack.c.l.b16 %v272
  %v3688 = vunpack.c.l.b16 %v273
  %v3689 = vunpack.c.l.b16 %v274
  %v3690 = vunpack.c.l.b16 %v275
  %v3691 = vunpack.c.l.b16 %v276
  %v3692 = vunpack.c.l.b16 %v277
  %v3693 = vunpack.c.l.b16 %v278
  %v3694 = vunpack.c.l.b16 %v279
  %v3695 = vunpack.c.l.b16 %v280
  %v3696 = vunpack.c.l.b16 %v281
  %v3697 = vunpack.c.l.b16 %v282
  %v3698 = vunpack.c.l.b16 %v283
  %v3699 = vunpack.c.l.b16 %v284
  %v3700 = vunpack.c.l.b16 %v285
  %v3701 = vunpack.c.l.b16 %v286
  %v3702 = vunpack.c.l.b16 %v287
  %v3703 = vunpack.c.l.b16 %v288
  %v3704 = vunpack.c.l.b16 %v289
  %v3705 = vunpack.c.l.b16 %v290
  %v3706 = vunpack.c.l.b16 %v291
  %v3707 = vunpack.c.l.b16 %v292
  %v3708 = vunpack.c.l.b16 %v293
  %v3709 = vunpack.c.l.b16 %v294
  %v3710 = vunpack.c.l.b16 %v295
  %v3711 = vunpack.c.l.b16 %v296
  %v3712 = vunpack.c.l.b16 %v297
  %v3713 = vunpack.c.l.b16 %v298
  %v3714 = vunpack.c.l.b16 %v299
  %v3715 = vunpack.c.l.b16 %v300
  %v3716 = vunpack.c.l.b16 %v301
  %v3717 = vunpack.c.l.b16 %v302
  %v3718 = vunpack.c.l.b16 %v303
  %v3719 = vunpack.c.l.b16 %v304
  %v3720 = vunpack.c.l.b16 %v305
  %v3721 = vunpack.c.l.b16 %v306
  %v3722 = vunpack.c.l.b16 %v307
  %v3723 = vunpack.c.l.b16 %v308
  %v3724 = vunpack.c.l.b16 %v309
  %v3725 = vunpack.c.l.b16 %v310
  %v3726 = vunpack.c.l.b16 %v311
  %v3727 = vunpack.c.l.b16 %v312
  %v3728 = vunpack.c.l.b16 %v313
  %v3729 = vunpack.c.l.b16 %v314
  %v3730 = vunpack.c.l.b16 %v315
  %v3731 = vunpack.c.l.b16 %v316
  %v3732 = vunpack.c.l.b16 %v317
  %v3733 = vunpack.c.l.b16 %v318
  %v3734 = vunpack.c.l.b16 %v319
  %v3735 = vunpack.c.l.b16 %v320
  %v3736 = vunpack.c.l.b16 %v321
  %v3737 = vunpack.c.l.b16 %v322
  %v3738 = vunpack.c.l.b16 %v323
  %v3739 = vunpack.c.l.b16 %v324
  %v3740 = vunpack.c.l.b16 %v325
  %v3741 = vunpack.c.l.b16 %v326
  %v3742 = vunpack.c.l.b16 %v327
  %v3743 = vunpack.c.l.b16 %v328
  %v3744 = vunpack.c.l.b16 %v329
  %v3745 = vunpack.c.l.b16 %v330
  %v3746 = vunpack.c.l.b16 %v331
  %v3747 = vunpack.c.l.b16 %v332
  %v3748 = vunpack.c.l.b16 %v333
  %v3749 = vunpack.c.l.b16 %v334
  %v3750 = vunpack.c.l.b16 %v335
  %v3751 = vunpack.c.l.b16 %v336
  %v3752 = vunpack.c.l.b16 %v337
  %v3753 = vunpack.c.l.b16 %v338
  %v3754 = vunpack.c.l.b16 %v339
  %v3755 = vunpack.c.l.b16 %v340
  %v3756 = vunpack.c.l.b16 %v341
  %v3757 = vunpack.c.l.b16 %v342
  %v3758 = vunpack.c.l.b16 %v343
  %v3759 = vunpack.c.l.b16 %v344
  %v3760 = vunpack.c.l.b16 %v345
  %v3761 = vunpack.c.l.b16 %v346
  %v3762 = vunpack.c.l.b16 %v347
  %v3763 = vunpack.c.l.b16 %v348
  %v3764 = vunpack.c.l.b16 %v349
  %v3765 = vunpack.c.l.b16 %v350
  %v3766 = vunpack.c.l.b16 %v351
  %v3767 = vunpack.c.l.b16 %v352
  %v3768 = vunpack.c.l.b16 %v353
  %v3769 = vunpack.c.l.b16 %v354
  %v3770 = vunpack.c.l.b16 %v355
  %v3771 = vunpack.c.l.b16 %v356
  %v3772 = vunpack.c.l.b16 %v357
  %v3773 = vunpack.c.l.b16 %v358
  %v3774 = vunpack.c.l.b16 %v359
  %v3775 = vunpack.c.l.b16 %v360
  %v3776 = vunpack.c.l.b16 %v361
  %v3777 = vunpack.c.l.b16 %v362
  %v3778 = vunpack.c.l.b16 %v363
  %v3779 = vunpack.c.l.b16 %v364
  %v3780 = vunpack.c.l.b16 %v365
  %v3781 = vunpack.c.l.b16 %v366
  %v3782 = vunpack.c.l.b16 %v367
  %v3783 = vunpack.c.l.b16 %v368
  %v3784 = vunpack.c.l.b16 %v369
  %v3785 = vunpack.c.l.b16 %v370
  %v3786 = vunpack.c.l.b16 %v371
  %v3787 = vunpack.c.l.b16 %v372
  %v3788 = vunpack.c.l.b16 %v373
  %v3789 = vunpack.c.l.b16 %v374
  %v3790 = vunpack.c.l.b16 %v375
  %v3791 = vunpack.c.l.b16 %v376
  %v3792 = vunpack.c.l.b16 %v377
  %v3793 = vunpack.c.l.b16 %v378
  %v3794 = vunpack.c.l.b16 %v379
  %v3795 = vunpack.c.l.b16 %v380
  %v3796 = vunpack.c.l.b16 %v381
  %v3797 = vunpack.c.l.b16 %v382
  %v3798 = vunpack.c.l.b16 %v383
  %v3799 = vunpack.c.l.b16 %v384
  %v3800 = vunpack.c.l.b16 %v385
  %v3801 = vunpack.c.l.b16 %v386
  %v3802 = vunpack.c.l.b16 %v387
  %v3803 = vunpack.c.l.b16 %v388
  %v3804 = vunpack.c.l.b16 %v389
  %v3805 = vunpack.c.l.b16 %v390
  %v3806 = vunpack.c.l.b16 %v391
  %v3807 = vunpack.c.l.b16 %v392
  %v3808 = vunpack.c.l.b16 %v393
  %v3809 = vunpack.c.l.b16 %v394
  %v3810 = vunpack.c.l.b16 %v395
  %v3811 = vunpack.c.l.b16 %v396
  %v3812 = vunpack.c.l.b16 %v397
  %v3813 = vunpack.c.l.b16 %v398
  %v3814 = vunpack.c.l.b16 %v399
  %v3815 = vunpack.c.l.b16 %v400
  %v3816 = vunpack.c.l.b16 %v401
  %v3817 = vunpack.c.l.b16 %v402
  %v3818 = vunpack.c.l.b16 %v403
  %v3819 = vunpack.c.l.b16 %v404
  %v3820 = vunpack.c.l.b16 %v405
  %v3821 = vunpack.c.l.b16 %v406
  %v3822 = vunpack.c.l.b16 %v407
  %v3823 = vunpack.c.l.b16 %v408
  %v3824 = vunpack.c.l.b16 %v409
  %v3825 = vunpack.c.l.b16 %v410
  %v3826 = vunpack.c.l.b16 %v411
  %v3827 = vunpack.c.l.b16 %v412
  %v3828 = vunpack.c.l.b16 %v413
  %v3829 = vunpack.c.l.b16 %v414
  %v3830 = vunpack.c.l.b16 %v415
  %v3831 = vunpack.c.l.b16 %v416
  %v3832 = vunpack.c.l.b16 %v417
  %v3833 = vunpack.c.l.b16 %v418
  %v3834 = vunpack.c.l.b16 %v419
  %v3835 = vunpack.c.l.b16 %v420
  %v3836 = vunpack.c.l.b16 %v421
  %v3837 = vunpack.c.l.b16 %v422
  %v3838 = vunpack.c.l.b16 %v423
  %v3839 = vunpack.c.l.b16 %v424
  %v3840 = vunpack.c.l.b16 %v425
  %v3841 = vunpack.c.l.b16 %v426
  %v3842 = vunpack.c.l.b16 %v427
  %v3843 = vunpack.c.l.b16 %v428
  %v3844 = vunpack.c.l.b16 %v429
  %v3845 = vunpack.c.l.b16 %v430
  %v3846 = vunpack.c.l.b16 %v431
  %v3847 = vunpack.c.l.b16 %v432
  %v3848 = vunpack.c.l.b16 %v433
  %v3849 = vunpack.c.l.b16 %v434
  %v3850 = vunpack.c.l.b16 %v435
  %v3851 = vunpack.c.l.b16 %v436
  %v3852 = vunpack.c.l.b16 %v437
  %v3853 = vunpack.c.l.b16 %v438
  %v3854 = vunpack.c.l.b16 %v439
  %v3855 = vunpack.c.l.b16 %v440
  %v3856 = vunpack.c.l.b16 %v441
  %v3857 = vunpack.c.l.b16 %v442
  %v3858 = vunpack.c.l.b16 %v443
  %v3859 = vunpack.c.l.b16 %v444
  %v3860 = vunpack.c.l.b16 %v445
  %v3861 = vunpack.c.l.b16 %v446
  %v3862 = vunpack.c.l.b16 %v447
  %v3863 = vunpack.c.l.b16 %v448
  %v3864 = vunpack.c.l.b16 %v449
  %v3865 = vunpack.c.l.b16 %v450
  %v3866 = vunpack.c.l.b16 %v451
  %v3867 = vunpack.c.l.b16 %v452
  %v3868 = vunpack.c.l.b16 %v453
  %v3869 = vunpack.c.l.b16 %v454
  %v3870 = vunpack.c.l.b16 %v455
  %v3871 = vunpack.c.l.b16 %v456
  %v3872 = vunpack.c.l.b16 %v457
  %v3873 = vunpack.c.l.b16 %v458
  %v3874 = vunpack.c.l.b16 %v459
  %v3875 = vunpack.c.l.b16 %v460
  %v3876 = vunpack.c.l.b16 %v461
  %v3877 = vunpack.c.l.b16 %v462
  %v3878 = vunpack.c.l.b16 %v463
  %v3879 = vunpack.c.l.b16 %v464
  %v3880 = vunpack.c.l.b16 %v465
  %v3881 = vunpack.c.l.b16 %v466
  %v3882 = vunpack.c.l.b16 %v467
  %v3883 = vunpack.c.l.b16 %v468
  %v3884 = vunpack.c.l.b16 %v469
  %v3885 = vunpack.c.l.b16 %v470
  %v3886 = vunpack.c.l.b16 %v471
  %v3887 = vunpack.c.l.b16 %v472
  %v3888 = vunpack.c.l.b16 %v473
  %v3889 = vunpack.c.l.b16 %v474
  %v3890 = vunpack.c.l.b16 %v475
  %v3891 = vunpack.c.l.b16 %v476
  %v3892 = vunpack.c.l.b16 %v477
  %v3893 = vunpack.c.l.b16 %v478
  %v3894 = vunpack.c.l.b16 %v479
  %v3895 = vunpack.c.l.b16 %v480
  %v3896 = vunpack.c.l.b16 %v481
  %v3897 = vunpack.c.l.b16 %v482
  %v3898 = vunpack.c.l.b16 %v483
  %v3899 = vunpack.c.l.b16 %v484
  %v3900 = vunpack.c.l.b16 %v485
  %v3901 = vunpack.c.l.b16 %v486
  %v3902 = vunpack.c.l.b16 %v487
  %v3903 = vunpack.c.l.b16 %v488
  %v3904 = vunpack.c.l.b16 %v489
  %v3905 = vunpack.c.l.b16 %v490
  %v3906 = vunpack.c.l.b16 %v491
  %v3907 = vunpack.c.l.b16 %v492
  %v3908 = vunpack.c.l.b16 %v493
  %v3909 = vunpack.c.l.b16 %v494
  %v3910 = vunpack.c.l.b16 %v495
  %v3911 = vunpack.c.l.b16 %v496
  %v3912 = vunpack.c.l.b16 %v497
  %v3913 = vunpack.c.l.b16 %v498
  %v3914 = vunpack.c.l.b16 %v499
  %v3915 = vunpack.c.l.b16 %v500
  %v3916 = vunpack.c.l.b16 %v501
  %v3917 = vunpack.c.l.b16 %v502
  %v3918 = vunpack.c.l.b16 %v503
  %v3919 = vunpack.c.l.b16 %v504
  %v3920 = vunpack.c.l.b16 %v505
  %v3921 = vunpack.c.l.b16 %v506
  %v3922 = vunpack.c.l.b16 %v507
  %v3923 = vunpack.c.l.b16 %v508
  %v3924 = vunpack.c.l.b16 %v509
  %v3925 = vunpack.c.l.b16 %v510
  %v3926 = vunpack.c.l.b16 %v511
  %v3927 = vunpack.c.l.b16 %v512
  %v3928 = vunpack.c.l.b16 %v513
  %v3929 = vunpack.c.l.b16 %v514
  %v3930 = vunpack.c.l.b16 %v515
  %v3931 = vunpack.c.l.b16 %v516
  %v3932 = vunpack.c.l.b16 %v517
  %v3933 = vunpack.c.l.b16 %v518
  %v3934 = vunpack.c.l.b16 %v519
  %v3935 = vunpack.c.l.b16 %v520
  %v3936 = vunpack.c.l.b16 %v521
  %v3937 = vunpack.c.l.b16 %v522
  %v3938 = vunpack.c.l.b16 %v523
  %v3939 = vunpack.c.l.b16 %v524
  %v3940 = vunpack.c.l.b16 %v525
  %v3941 = vunpack.c.l.b16 %v526
  %v3942 = vunpack.c.l.b16 %v527
  %v3943 = vunpack.c.l.b16 %v528
  %v3944 = vunpack.c.l.b16 %v529
  %v3945 = vunpack.c.l.b16 %v530
  %v3946 = vunpack.c.l.b16 %v531
  %v3947 = vunpack.c.l.b16 %v532
  %v3948 = vunpack.c.l.b16 %v533
  %v3949 = vunpack.c.l.b16 %v534
  %v3950 = vunpack.c.l.b16 %v535
  %v3951 = vunpack.c.l.b16 %v536
  %v3952 = vunpack.c.l.b16 %v537
  %v3953 = vunpack.c.l.b16 %v538
  %v3954 = vunpack.c.l.b16 %v539
  %v3955 = vunpack.c.l.b16 %v540
  %v3956 = vunpack.c.l.b16 %v541
  %v3957 = vunpack.c.l.b16 %v542
  %v3958 = vunpack.c.l.b16 %v543
  %v3959 = vunpack.c.l.b16 %v544
  %v3960 = vunpack.c.l.b16 %v545
  %v3961 = vunpack.c.l.b16 %v546
  %v3962 = vunpack.c.l.b16 %v547
  %v3963 = vunpack.c.l.b16 %v548
  %v3964 = vunpack.c.l.b16 %v549
  %v3965 = vunpack.c.l.b16 %v550
  %v3966 = vunpack.c.l.b16 %v551
  %v3967 = vunpack.c.l.b16 %v552
  %v3968 = vunpack.c.l.b16 %v553
  %v3969 = vunpack.c.l.b16 %v554
  %v3970 = vunpack.c.l.b16 %v555
  %v3971 = vunpack.c.l.b16 %v556
  %v3972 = vunpack.c.l.b16 %v557
  %v3973 = vunpack.c.l.b16 %v558
  %v3974 = vunpack.c.l.b16 %v559
  %v3975 = vunpack.c.l.b16 %v560
  %v3976 = vunpack.c.l.b16 %v561
  %v3977 = vunpack.c.l.b16 %v562
  %v3978 = vunpack.c.l.b16 %v563
  %v3979 = vunpack.c.l.b16 %v564
  %v3980 = vunpack.c.l.b16 %v565
  %v3981 = vunpack.c.l.b16 %v566
  %v3982 = vunpack.c.l.b16 %v567
  %v3983 = vunpack.c.l.b16 %v568
  %v3984 = vunpack.c.l.b16 %v569
  %v3985 = vunpack.c.l.b16 %v570
  %v3986 = vunpack.c.l.b16 %v571
  %v3987 = vunpack.c.l.b16 %v572
  %v3988 = vunpack.c.l.b16 %v573
  %v3989 = vunpack.c.l.b16 %v574
  %v3990 = vunpack.c.l.b16 %v575
  %v3991 = vunpack.c.l.b16 %v576
  %v3992 = vunpack.c.l.b16 %v577
  %v3993 = vunpack.c.l.b16 %v578
  %v3994 = vunpack.c.l.b16 %v579
  %v3995 = vunpack.c.l.b16 %v580
  %v3996 = vunpack.c.l.b16 %v581
  %v3997 = vunpack.c.l.b16 %v582
  %v3998 = vunpack.c.l.b16 %v583
  %v3999 = vunpack.c.l.b16 %v584
  %v4000 = vunpack.c.l.b16 %v585
  %v4001 = vunpack.c.l.b16 %v586
  %v4002 = vunpack.c.l.b16 %v587
  %v4003 = vunpack.c.l.b16 %v588
  %v4004 = vunpack.c.l.b16 %v589
  %v4005 = vunpack.c.l.b16 %v590
  %v4006 = vunpack.c.l.b16 %v591
  %v4007 = vunpack.c.l.b16 %v592
  %v4008 = vunpack.c.l.b16 %v593
  %v4009 = vunpack.c.l.b16 %v594
  %v4010 = vunpack.c.l.b16 %v595
  %v4011 = vunpack.c.l.b16 %v596
  %v4012 = vunpack.c.l.b16 %v597
  %v4013 = vunpack.c.l.b16 %v598
  %v4014 = vunpack.c.l.b16 %v599
  %v4015 = vunpack.c.l.b16 %v600
  %v4016 = vunpack.c.l.b16 %v601
  %v4017 = vunpack.c.l.b16 %v602
  %v4018 = vunpack.c.l.b16 %v603
  %v4019 = vunpack.c.l.b16 %v604
  %v4020 = vunpack.c.l.b16 %v605
  %v4021 = vunpack.c.l.b16 %v606
  %v4022 = vunpack.c.l.b16 %v607
  %v4023 = vunpack.c.l.b16 %v608
  %v4024 = vunpack.c.l.b16 %v609
  %v4025 = vunpack.c.l.b16 %v610
  %v4026 = vunpack.c.l.b16 %v611
  %v4027 = vunpack.c.l.b16 %v612
  %v4028 = vunpack.c.l.b16 %v613
  %v4029 = vunpack.c.l.b16 %v614
  %v4030 = vunpack.c.l.b16 %v615
  %v4031 = vunpack.c.l.b16 %v616
  %v4032 = vunpack.c.l.b16 %v617
  %v4033 = vunpack.c.l.b16 %v618
  %v4034 = vunpack.c.l.b16 %v619
  %v4035 = vunpack.c.l.b16 %v620
  %v4036 = vunpack.c.l.b16 %v621
  %v4037 = vunpack.c.l.b16 %v622
  %v4038 = vunpack.c.l.b16 %v623
  %v4039 = vunpack.c.l.b16 %v624
  %v4040 = vunpack.c.l.b16 %v625
  %v4041 = vunpack.c.l.b16 %v626
  %v4042 = vunpack.c.l.b16 %v627
  %v4043 = vunpack.c.l.b16 %v628
  %v4044 = vunpack.c.l.b16 %v629
  %v4045 = vunpack.c.l.b16 %v630
  %v4046 = vunpack.c.l.b16 %v631
  %v4047 = vunpack.c.l.b16 %v632
  %v4048 = vunpack.c.l.b16 %v633
  %v4049 = vunpack.c.l.b16 %v634
  %v4050 = vunpack.c.l.b16 %v635
  %v4051 = vunpack.c.l.b16 %v636
  %v4052 = vunpack.c.l.b16 %v637
  %v4053 = vunpack.c.l.b16 %v638
  %v4054 = vunpack.c.l.b16 %v639
  %v4055 = vunpack.c.l.b16 %v640
  %v4056 = vunpack.c.l.b16 %v641
  %v4057 = vunpack.c.l.b16 %v642
  %v4058 = vunpack.c.l.b16 %v643
  %v4059 = vunpack.c.l.b16 %v644
  %v4060 = vunpack.c.l.b16 %v645
  %v4061 = vunpack.c.l.b16 %v646
  %v4062 = vunpack.c.l.b16 %v647
  %v4063 = vunpack.c.l.b16 %v648
  %v4064 = vunpack.c.l.b16 %v649
  %v4065 = vunpack.c.l.b16 %v650
  %v4066 = vunpack.c.l.b16 %v651
  %v4067 = vunpack.c.l.b16 %v652
  %v4068 = vunpack.c.l.b16 %v653
  %v4069 = vunpack.c.l.b16 %v654
  %v4070 = vunpack.c.l.b16 %v655
  %v4071 = vunpack.c.l.b16 %v656
  %v4072 = vunpack.c.l.b16 %v657
  %v4073 = vunpack.c.l.b16 %v658
  %v4074 = vunpack.c.l.b16 %v659
  %v4075 = vunpack.c.l.b16 %v660
  %v4076 = vunpack.c.l.b16 %v661
  %v4077 = vunpack.c.l.b16 %v662
  %v4078 = vunpack.c.l.b16 %v663
  %v4079 = vunpack.c.l.b16 %v664
  %v4080 = vunpack.c.l.b16 %v665
  %v4081 = vunpack.c.l.b16 %v666
  %v4082 = vunpack.c.l.b16 %v667
  %v4083 = vunpack.c.l.b16 %v668
  %v4084 = vunpack.c.l.b16 %v669
  %v4085 = vunpack.c.l.b16 %v670
  %v4086 = vunpack.c.l.b16 %v671
  %v4087 = vunpack.c.l.b16 %v672
  %v4088 = vunpack.c.l.b16 %v673
  %v4089 = vunpack.c.l.b16 %v674
  %v4090 = vunpack.c.l.b16 %v675
  %v4091 = vunpack.c.l.b16 %v676
  %v4092 = vunpack.c.l.b16 %v677
  %v4093 = vunpack.c.l.b16 %v678
  %v4094 = vunpack.c.l.b16 %v679
  %v4095 = vunpack.c.l.b16 %v680
  %v4096 = vunpack.c.l.b16 %v681
  %v4097 = vunpack.c.l.b16 %v682
  %v4098 = vunpack.c.l.b16 %v683
  %v4099 = vunpack.c.l.b16 %v684
  %v4100 = vunpack.c.l.b16 %v685
  %v4101 = vunpack.c.l.b16 %v686
  %v4102 = vunpack.c.l.b16 %v687
  %v4103 = vunpack.c.l.b16 %v688
  %v4104 = vunpack.c.l.b16 %v689
  %v4105 = vunpack.c.l.b16 %v690
  %v4106 = vunpack.c.l.b16 %v691
  %v4107 = vunpack.c.l.b16 %v692
  %v4108 = vunpack.c.l.b16 %v693
  %v4109 = vunpack.c.l.b16 %v694
  %v4110 = vunpack.c.l.b16 %v695
  %v4111 = vunpack.c.l.b16 %v696
  %v4112 = vunpack.c.l.b16 %v697
  %v4113 = vunpack.c.l.b16 %v698
  %v4114 = vunpack.c.l.b16 %v699
  %v4115 = vunpack.c.l.b16 %v700
  %v4116 = vunpack.c.l.b16 %v701
  %v4117 = vunpack.c.l.b16 %v702
  %v4118 = vunpack.c.l.b16 %v703
  %v4119 = vunpack.c.l.b16 %v704
  %v4120 = vunpack.c.l.b16 %v705
  %v4121 = vunpack.c.l.b16 %v706
  %v4122 = vunpack.c.l.b16 %v707
  %v4123 = vunpack.c.l.b16 %v708
  %v4124 = vunpack.c.l.b16 %v709
  %v4125 = vunpack.c.l.b16 %v710
  %v4126 = vunpack.c.l.b16 %v711
  %v4127 = vunpack.c.l.b16 %v712
  %v4128 = vunpack.c.l.b16 %v713
  %v4129 = vunpack.c.l.b16 %v714
  %v4130 = vunpack.c.l.b16 %v715
  %v4131 = vunpack.c.l.b16 %v716
  %v4132 = vunpack.c.l.b16 %v717
  %v4133 = vunpack.c.l.b16 %v718
  %v4134 = vunpack.c.l.b16 %v719
  %v4135 = vunpack.c.l.b16 %v720
  %v4136 = vunpack.c.l.b16 %v721
  %v4137 = vunpack.c.l.b16 %v722
  %v4138 = vunpack.c.l.b16 %v723
  %v4139 = vunpack.c.l.b16 %v724
  %v4140 = vunpack.c.l.b16 %v725
  %v4141 = vunpack.c.l.b16 %v726
  %v4142 = vunpack.c.l.b16 %v727
  %v4143 = vunpack.c.l.b16 %v728
  %v4144 = vunpack.c.l.b16 %v729
  %v4145 = vunpack.c.l.b16 %v730
  %v4146 = vunpack.c.l.b16 %v731
  %v4147 = vunpack.c.l.b16 %v732
  %v4148 = vunpack.c.l.b16 %v733
  %v4149 = vunpack.c.l.b16 %v734
  %v4150 = vunpack.c.l.b16 %v735
  %v4151 = vunpack.c.l.b16 %v736
  %v4152 = vunpack.c.l.b16 %v737
  %v4153 = vunpack.c.l.b16 %v738
  %v4154 = vunpack.c.l.b16 %v739
  %v4155 = vunpack.c.l.b16 %v740
  %v4156 = vunpack.c.l.b16 %v741
  %v4157 = vunpack.c.l.b16 %v742
  %v4158 = vunpack.c.l.b16 %v743
  %v4159 = vunpack.c.l.b16 %v744
  %v4160 = vunpack.c.l.b16 %v745
  %v4161 = vunpack.c.l.b16 %v746
  %v4162 = vunpack.c.l.b16 %v747
  %v4163 = vunpack.c.l.b16 %v748
  %v4164 = vunpack.c.l.b16 %v749
  %v4165 = vunpack.c.l.b16 %v750
  %v4166 = vunpack.c.l.b16 %v751
  %v4167 = vunpack.c.l.b16 %v752
  %v4168 = vunpack.c.l.b16 %v753
  %v4169 = vunpack.c.l.b16 %v754
  %v4170 = vunpack.c.l.b16 %v755
  %v4171 = vunpack.c.l.b16 %v756
  %v4172 = vunpack.c.l.b16 %v757
  %v4173 = vunpack.c.l.b16 %v758
  %v4174 = vunpack.c.l.b16 %v759
  %v4175 = vunpack.c.l.b16 %v760
  %v4176 = vunpack.c.l.b16 %v761
  %v4177 = vunpack.c.l.b16 %v762
  %v4178 = vunpack.c.l.b16 %v763
  %v4179 = vunpack.c.l.b16 %v764
  %v4180 = vunpack.c.l.b16 %v765
  %v4181 = vunpack.c.l.b16 %v766
  %v4182 = vunpack.c.l.b16 %v767
  %v4183 = vunpack.c.l.b16 %v768
  %v4184 = vunpack.c.l.b16 %v769
  %v4185 = vunpack.c.l.b16 %v770
  %v4186 = vunpack.c.l.b16 %v771
  %v4187 = vunpack.c.l.b16 %v772
  %v4188 = vunpack.c.l.b16 %v773
  %v4189 = vunpack.c.l.b16 %v774
  %v4190 = vunpack.c.l.b16 %v775
  %v4191 = vunpack.c.l.b16 %v776
  %v4192 = vunpack.c.l.b16 %v777
  %v4193 = vunpack.c.l.b16 %v778
  %v4194 = vunpack.c.l.b16 %v779
  %v4195 = vunpack.c.l.b16 %v780
  %v4196 = vunpack.c.l.b16 %v781
  %v4197 = vunpack.c.l.b16 %v782
  %v4198 = vunpack.c.l.b16 %v783
  %v4199 = vunpack.c.l.b16 %v784
  %v4200 = vunpack.c.l.b16 %v785
  %v4201 = vunpack.c.l.b16 %v786
  %v4202 = vunpack.c.l.b16 %v787
  %v4203 = vunpack.c.l.b16 %v788
  %v4204 = vunpack.c.l.b16 %v789
  %v4205 = vunpack.c.l.b16 %v790
  %v4206 = vunpack.c.l.b16 %v791
  %v4207 = vunpack.c.l.b16 %v792
  %v4208 = vunpack.c.l.b16 %v793
  %v4209 = vunpack.c.l.b16 %v794
  %v4210 = vunpack.c.l.b16 %v795
  %v4211 = vunpack.c.l.b16 %v796
  %v4212 = vunpack.c.l.b16 %v797
  %v4213 = vunpack.c.l.b16 %v798
  %v4214 = vunpack.c.l.b16 %v799
  %v4215 = vunpack.c.l.b16 %v800
  %v4216 = vunpack.c.l.b16 %v801
  %v4217 = vunpack.c.l.b16 %v802
  %v4218 = vunpack.c.l.b16 %v803
  %v4219 = vunpack.c.l.b16 %v804
  %v4220 = vunpack.c.l.b16 %v805
  %v4221 = vunpack.c.l.b16 %v806
  %v4222 = vunpack.c.l.b16 %v807
  %v4223 = vunpack.c.l.b16 %v808
  %v4224 = vunpack.c.l.b16 %v809
  %v4225 = vunpack.c.l.b16 %v810
  %v4226 = vunpack.c.l.b16 %v811
  %v4227 = vunpack.c.l.b16 %v812
  %v4228 = vunpack.c.l.b16 %v813
  %v4229 = vunpack.c.l.b16 %v814
  %v4230 = vunpack.c.l.b16 %v815
  %v4231 = vunpack.c.l.b16 %v816
  %v4232 = vunpack.c.l.b16 %v817
  %v4233 = vunpack.c.l.b16 %v818
  %v4234 = vunpack.c.l.b16 %v819
  %v4235 = vunpack.c.l.b16 %v820
  %v4236 = vunpack.c.l.b16 %v821
  %v4237 = vunpack.c.l.b16 %v822
  %v4238 = vunpack.c.l.b16 %v823
  %v4239 = vunpack.c.l.b16 %v824
  %v4240 = vunpack.c.l.b16 %v825
  %v4241 = vunpack.c.l.b16 %v826
  %v4242 = vunpack.c.l.b16 %v827
  %v4243 = vunpack.c.l.b16 %v828
  %v4244 = vunpack.c.l.b16 %v829
  %v4245 = vunpack.c.l.b16 %v830
  %v4246 = vunpack.c.l.b16 %v831
  %v4247 = vunpack.c.l.b16 %v832
  %v4248 = vunpack.c.l.b16 %v833
  %v4249 = vunpack.c.l.b16 %v834
  %v4250 = vunpack.c.l.b16 %v835
  %v4251 = vunpack.c.l.b16 %v836
  %v4252 = vunpack.c.l.b16 %v837
  %v4253 = vunpack.c.l.b16 %v838
  %v4254 = vunpack.c.l.b16 %v839
  %v4255 = vunpack.c.l.b16 %v840
  %v4256 = vunpack.c.l.b16 %v841
  %v4257 = vunpack.c.l.b16 %v842
  %v4258 = vunpack.c.l.b16 %v843
  %v4259 = vunpack.c.l.b16 %v844
  %v4260 = vunpack.c.l.b16 %v845
  %v4261 = vunpack.c.l.b16 %v846
  %v4262 = vunpack.c.l.b16 %v847
  %v4263 = vunpack.c.l.b16 %v848
  %v4264 = vunpack.c.l.b16 %v849
  %v4265 = vunpack.c.l.b16 %v850
  %v4266 = vunpack.c.l.b16 %v851
  %v4267 = vunpack.c.l.b16 %v852
  %v4268 = vunpack.c.l.b16 %v853
  %v4269 = vunpack.c.l.b16 %v854
  %v4270 = vunpack.c.l.b16 %v855
  %v4271 = vunpack.c.l.b16 %v856
  %v4272 = vunpack.c.l.b16 %v857
  %v4273 = vunpack.c.l.b16 %v858
  %v4274 = vunpack.c.l.b16 %v859
  %v4275 = vunpack.c.l.b16 %v860
  %v4276 = vunpack.c.l.b16 %v861
  %v4277 = vunpack.c.l.b16 %v862
  %v4278 = vunpack.c.l.b16 %v863
  %v4279 = vunpack.c.l.b16 %v864
  %v4280 = vunpack.c.l.b16 %v865
  %v4281 = vunpack.c.l.b16 %v866
  %v4282 = vunpack.c.l.b16 %v867
  %v4283 = vunpack.c.l.b16 %v868
  %v4284 = vunpack.c.l.b16 %v869
  %v4285 = vunpack.c.l.b16 %v870
  %v4286 = vunpack.c.l.b16 %v871
  %v4287 = vunpack.c.l.b16 %v872
  %v4288 = vunpack.c.l.b16 %v873
  %v4289 = vunpack.c.l.b16 %v874
  %v4290 = vunpack.c.l.b16 %v875
  %v4291 = vunpack.c.l.b16 %v876
  %v4292 = vunpack.c.l.b16 %v877
  %v4293 = vunpack.c.l.b16 %v878
  %v4294 = vunpack.c.l.b16 %v879
  %v4295 = vunpack.c.l.b16 %v880
  %v4296 = vunpack.c.l.b16 %v881
  %v4297 = vunpack.c.l.b16 %v882
  %v4298 = vunpack.c.l.b16 %v883
  %v4299 = vunpack.c.l.b16 %v884
  %v4300 = vunpack.c.l.b16 %v885
  %v4301 = vunpack.c.l.b16 %v886
  %v4302 = vunpack.c.l.b16 %v887
  %v4303 = vunpack.c.l.b16 %v888
  %v4304 = vunpack.c.l.b16 %v889
  %v4305 = vunpack.c.l.b16 %v890
  %v4306 = vunpack.c.l.b16 %v891
  %v4307 = vunpack.c.l.b16 %v892
  %v4308 = vunpack.c.l.b16 %v893
  %v4309 = vunpack.c.l.b16 %v894
  %v4310 = vunpack.c.l.b16 %v895
  %v4311 = vunpack.c.l.b16 %v896
  %v4312 = vunpack.c.l.b16 %v897
  %v4313 = vunpack.c.l.b16 %v898
  %v4314 = vunpack.c.l.b16 %v899
  %v4315 = vunpack.c.l.b16 %v900
  %v4316 = vunpack.c.l.b16 %v901
  %v4317 = vunpack.c.l.b16 %v902
  %v4318 = vunpack.c.l.b16 %v903
  %v4319 = vunpack.c.l.b16 %v904
  %v4320 = vunpack.c.l.b16 %v905
  %v4321 = vunpack.c.l.b16 %v906
  %v4322 = vunpack.c.l.b16 %v907
  %v4323 = vunpack.c.l.b16 %v908
  %v4324 = vunpack.c.l.b16 %v909
  %v4325 = vunpack.c.l.b16 %v910
  %v4326 = vunpack.c.l.b16 %v911
  %v4327 = vunpack.c.l.b16 %v912
  %v4328 = vunpack.c.l.b16 %v913
  %v4329 = vunpack.c.l.b16 %v914
  %v4330 = vunpack.c.l.b16 %v915
  %v4331 = vunpack.c.l.b16 %v916
  %v4332 = vunpack.c.l.b16 %v917
  %v4333 = vunpack.c.l.b16 %v918
  %v4334 = vunpack.c.l.b16 %v919
  %v4335 = vunpack.c.l.b16 %v920
  %v4336 = vunpack.c.l.b16 %v921
  %v4337 = vunpack.c.l.b16 %v922
  %v4338 = vunpack.c.l.b16 %v923
  %v4339 = vunpack.c.l.b16 %v924
  %v4340 = vunpack.c.l.b16 %v925
  %v4341 = vunpack.c.l.b16 %v926
  %v4342 = vunpack.c.l.b16 %v927
  %v4343 = vunpack.c.l.b16 %v928
  %v4344 = vunpack.c.l.b16 %v929
  %v4345 = vunpack.c.l.b16 %v930
  %v4346 = vunpack.c.l.b16 %v931
  %v4347 = vunpack.c.l.b16 %v932
  %v4348 = vunpack.c.l.b16 %v933
  %v4349 = vunpack.c.l.b16 %v934
  %v4350 = vunpack.c.l.b16 %v935
  %v4351 = vunpack.c.l.b16 %v936
  %v4352 = vunpack.c.l.b16 %v937
  %v4353 = vunpack.c.l.b16 %v938
  %v4354 = vunpack.c.l.b16 %v939
  %v4355 = vunpack.c.l.b16 %v940
  %v4356 = vunpack.c.l.b16 %v941
  %v4357 = vunpack.c.l.b16 %v942
  %v4358 = vunpack.c.l.b16 %v943
  %v4359 = vunpack.c.l.b16 %v944
  %v4360 = vunpack.c.l.b16 %v945
  %v4361 = vunpack.c.l.b16 %v946
  %v4362 = vunpack.c.l.b16 %v947
  %v4363 = vunpack.c.l.b16 %v948
  %v4364 = vunpack.c.l.b16 %v949
  %v4365 = vunpack.c.l.b16 %v950
  %v4366 = vunpack.c.l.b16 %v951
  %v4367 = vunpack.c.l.b16 %v952
  %v4368 = vunpack.c.l.b16 %v953
  %v4369 = vunpack.c.l.b16 %v954
  %v4370 = vunpack.c.l.b16 %v955
  %v4371 = vunpack.c.l.b16 %v956
  %v4372 = vunpack.c.l.b16 %v957
  %v4373 = vunpack.c.l.b16 %v958
  %v4374 = vunpack.c.l.b16 %v959
  %v4375 = vunpack.c.l.b16 %v960
  %v4376 = vunpack.c.l.b16 %v961
  %v4377 = vunpack.c.l.b16 %v962
  %v4378 = vunpack.c.l.b16 %v963
  %v4379 = vunpack.c.l.b16 %v964
  %v4380 = vunpack.c.l.b16 %v965
  %v4381 = vunpack.c.l.b16 %v966
  %v4382 = vunpack.c.l.b16 %v967
  %v4383 = vunpack.c.l.b16 %v968
  %v4384 = vunpack.c.l.b16 %v969
  %v4385 = vunpack.c.l.b16 %v970
  %v4386 = vunpack.c.l.b16 %v971
  %v4387 = vunpack.c.l.b16 %v972
  %v4388 = vunpack.c.l.b16 %v973
  %v4389 = vunpack.c.l.b16 %v974
  %v4390 = vunpack.c.l.b16 %v975
  %v4391 = vunpack.c.l.b16 %v976
  %v4392 = vunpack.c.l.b16 %v977
  %v4393 = vunpack.c.l.b16 %v978
  %v4394 = vunpack.c.l.b16 %v979
  %v4395 = vunpack.c.l.b16 %v980
  %v4396 = vunpack.c.l.b16 %v981
  %v4397 = vunpack.c.l.b16 %v982
  %v4398 = vunpack.c.l.b16 %v983
  %v4399 = vunpack.c.l.b16 %v984
  %v4400 = vunpack.c.l.b16 %v985
  %v4401 = vunpack.c.l.b16 %v986
  %v4402 = vunpack.c.l.b16 %v987
  %v4403 = vunpack.c.l.b16 %v988
  %v4404 = vunpack.c.l.b16 %v989
  %v4405 = vunpack.c.l.b16 %v990
  %v4406 = vunpack.c.l.b16 %v991
  %v4407 = vunpack.c.l.b16 %v992
  %v4408 = vunpack.c.l.b16 %v993
  %v4409 = vunpack.c.l.b16 %v994
  %v4410 = vunpack.c.l.b16 %v995
  %v4411 = vunpack.c.l.b16 %v996
  %v4412 = vunpack.c.l.b16 %v997
  %v4413 = vunpack.c.l.b16 %v998
  %v4414 = vunpack.c.l.b16 %v999
  %v4415 = vunpack.c.l.b16 %v1000
  %v4416 = vunpack.c.l.b16 %v1001
  %v4417 = vunpack.c.l.b16 %v1002
  %v4418 = vunpack.c.l.b16 %v1003
  %v4419 = vunpack.c.l.b16 %v1004
  %v4420 = vunpack.c.l.b16 %v1005
  %v4421 = vunpack.c.l.b16 %v1006
  %v4422 = vunpack.c.l.b16 %v1007
  %v4423 = vunpack.c.l.b16 %v1008
  %v4424 = vunpack.c.l.b16 %v1009
  %v4425 = vunpack.c.l.b16 %v1010
  %v4426 = vunpack.c.l.b16 %v1011
  %v4427 = vunpack.c.l.b16 %v1012
  %v4428 = vunpack.c.l.b16 %v1013
  %v4429 = vunpack.c.l.b16 %v1014
  %v4430 = vunpack.c.l.b16 %v1015
  %v4431 = vunpack.c.l.b16 %v1016
  %v4432 = vunpack.c.l.b16 %v1017
  %v4433 = vunpack.c.l.b16 %v1018
  %v4434 = vunpack.c.l.b16 %v1019
  %v4435 = vunpack.c.l.b16 %v1020
  %v4436 = vunpack.c.l.b16 %v1021
  %v4437 = vunpack.c.l.b16 %v1022
  %v4438 = vunpack.c.l.b16 %v1023
  %v4439 = vunpack.c.l.b16 %v1024
  %v4440 = vunpack.c.l.b16 %v1025
  %v4441 = vunpack.c.l.b16 %v1026
  %v4442 = vunpack.c.l.b16 %v1027
  %v4443 = vunpack.c.l.b16 %v1028
  %v4444 = vunpack.c.l.b16 %v1029
  %v4445 = vunpack.c.l.b16 %v1030
  %v4446 = vunpack.c.l.b16 %v1031
  %v4447 = vunpack.c.l.b16 %v1032
  %v4448 = vunpack.c.l.b16 %v1033
  %v4449 = vunpack.c.l.b16 %v1034
  %v4450 = vunpack.c.l.b16 %v1035
  %v4451 = vunpack.c.l.b16 %v1036
  %v4452 = vunpack.c.l.b16 %v1037
  %v4453 = vunpack.c.l.b16 %v1038
  %v4454 = vunpack.c.l.b16 %v1039
  %v4455 = vunpack.c.l.b16 %v1040
  %v4456 = vunpack.c.l.b16 %v1041
  %v4457 = vunpack.c.l.b16 %v1042
  %v4458 = vunpack.c.l.b16 %v1043
  %v4459 = vunpack.c.l.b16 %v1044
  %v4460 = vunpack.c.l.b16 %v1045
  %v4461 = vunpack.c.l.b16 %v1046
  %v4462 = vunpack.c.l.b16 %v1047
  %v4463 = vunpack.c.l.b16 %v1048
  %v4464 = vunpack.c.l.b16 %v1049
  %v4465 = vunpack.c.l.b16 %v1050
  %v4466 = vunpack.c.l.b16 %v1051
  %v4467 = vunpack.c.l.b16 %v1052
  %v4468 = vunpack.c.l.b16 %v1053
  %v4469 = vunpack.c.l.b16 %v1054
  %v4470 = vunpack.c.l.b16 %v1055
  %v4471 = vunpack.c.l.b16 %v1056
  %v4472 = vunpack.c.l.b16 %v1057
  %v4473 = vunpack.c.l.b16 %v1058
  %v4474 = vunpack.c.l.b16 %v1059
  %v4475 = vunpack.c.l.b16 %v1060
  %v4476 = vunpack.c.l.b16 %v1061
  %v4477 = vunpack.c.l.b16 %v1062
  %v4478 = vunpack.c.l.b16 %v1063
  %v4479 = vunpack.c.l.b16 %v1064
  %v4480 = vunpack.c.l.b16 %v1065
  %v4481 = vunpack.c.l.b16 %v1066
  %v4482 = vunpack.c.l.b16 %v1067
  %v4483 = vunpack.c.l.b16 %v1068
  %v4484 = vunpack.c.l.b16 %v1069
  %v4485 = vunpack.c.l.b16 %v1070
  %v4486 = vunpack.c.l.b16 %v1071
  %v4487 = vunpack.c.l.b16 %v1072
  %v4488 = vunpack.c.l.b16 %v1073
  %v4489 = vunpack.c.l.b16 %v1074
  %v4490 = vunpack.c.l.b16 %v1075
  %v4491 = vunpack.c.l.b16 %v1076
  %v4492 = vunpack.c.l.b16 %v1077
  %v4493 = vunpack.c.l.b16 %v1078
  %v4494 = vunpack.c.l.b16 %v1079
  %v4495 = vunpack.c.l.b16 %v1080
  %v4496 = vunpack.c.l.b16 %v1081
  %v4497 = vunpack.c.l.b16 %v1082
  %v4498 = vunpack.c.l.b16 %v1083
  %v4499 = vunpack.c.l.b16 %v1084
  %v4500 = vunpack.c.l.b16 %v1085
  %v4501 = vunpack.c.l.b16 %v1086
  %v4502 = vunpack.c.l.b16 %v1087
  %v4503 = vunpack.c.l.b16 %v1088
  %v4504 = vunpack.c.l.b16 %v1089
  %v4505 = vunpack.c.l.b16 %v1090
  %v4506 = vunpack.c.l.b16 %v1091
  %v4507 = vunpack.c.l.b16 %v1092
  %v4508 = vunpack.c.l.b16 %v1093
  %v4509 = vunpack.c.l.b16 %v1094
  %v4510 = vunpack.c.l.b16 %v1095
  %v4511 = vunpack.c.l.b16 %v1096
  %v4512 = vunpack.c.l.b16 %v1097
  %v4513 = vunpack.c.l.b16 %v1098
  %v4514 = vunpack.c.l.b16 %v1099
  %v4515 = vunpack.c.l.b16 %v1100
  %v4516 = vunpack.c.l.b16 %v1101
  %v4517 = vunpack.c.l.b16 %v1102
  %v4518 = vunpack.c.l.b16 %v1103
  %v4519 = vunpack.c.l.b16 %v1104
  %v4520 = vunpack.c.l.b16 %v1105
  %v4521 = vunpack.c.l.b16 %v1106
  %v4522 = vunpack.c.l.b16 %v1107
  %v4523 = vunpack.c.l.b16 %v1108
  %v4524 = vunpack.c.l.b16 %v1109
  %v4525 = vunpack.c.l.b16 %v1110
  %v4526 = vunpack.c.l.b16 %v1111
  %v4527 = vunpack.c.l.b16 %v1112
  %v4528 = vunpack.c.l.b16 %v1113
  %v4529 = vunpack.c.l.b16 %v1114
  %v4530 = vunpack.c.l.b16 %v1115
  %v4531 = vunpack.c.l.b16 %v1116
  %v4532 = vunpack.c.l.b16 %v1117
  %v4533 = vunpack.c.l.b16 %v1118
  %v4534 = vunpack.c.l.b16 %v1119
  %v4535 = vunpack.c.l.b16 %v1120
  %v4536 = vunpack.c.l.b16 %v1121
  %v4537 = vunpack.c.l.b16 %v1122
  %v4538 = vunpack.c.l.b16 %v1123
  %v4539 = vunpack.c.l.b16 %v1124
  %v4540 = vunpack.c.l.b16 %v1125
  %v4541 = vunpack.c.l.b16 %v1126
  %v4542 = vunpack.c.l.b16 %v1127
  %v4543 = vunpack.c.l.b16 %v1128
  %v4544 = vunpack.c.l.b16 %v1129
  %v4545 = vunpack.c.l.b16 %v1130
  %v4546 = vunpack.c.l.b16 %v1131
  %v4547 = vunpack.c.l.b16 %v1132
  %v4548 = vunpack.c.l.b16 %v1133
  %v4549 = vunpack.c.l.b16 %v1134
  %v4550 = vunpack.c.l.b16 %v1135
  %v4551 = vunpack.c.l.b16 %v1136
  %v4552 = vunpack.c.l.b16 %v1137
  %v4553 = vunpack.c.l.b16 %v1138
  %v4554 = vunpack.c.l.b16 %v1139
  %v4555 = vunpack.c.l.b16 %v1140
  %v4556 = vunpack.c.l.b16 %v1141
  %v4557 = vunpack.c.l.b16 %v1142
  %v4558 = vunpack.c.l.b16 %v1143
  %v4559 = vunpack.c.l.b16 %v1144
  %v4560 = vunpack.c.l.b16 %v1145
  %v4561 = vunpack.c.l.b16 %v1146
  %v4562 = vunpack.c.l.b16 %v1147
  %v4563 = vunpack.c.l.b16 %v1148
  %v4564 = vunpack.c.l.b16 %v1149
  %v4565 = vunpack.c.l.b16 %v1150
  %v4566 = vunpack.c.l.b16 %v1151
  %v4567 = vunpack.c.l.b16 %v1152
  %v4568 = vunpack.c.l.b16 %v1153
  %v4569 = vunpack.c.l.b16 %v1154
  %v4570 = vunpack.c.l.b16 %v1155
  %v4571 = vunpack.c.l.b16 %v1156
  %v4572 = vunpack.c.l.b16 %v1157
  %v4573 = vunpack.c.l.b16 %v1158
  %v4574 = vunpack.c.l.b16 %v1159
  %v4575 = vunpack.c.l.b16 %v1160
  %v4576 = vunpack.c.l.b16 %v1161
  %v4577 = vunpack.c.l.b16 %v1162
  %v4578 = vunpack.c.l.b16 %v1163
  %v4579 = vunpack.c.l.b16 %v1164
  %v4580 = vunpack.c.l.b16 %v1165
  %v4581 = vunpack.c.l.b16 %v1166
  %v4582 = vunpack.c.l.b16 %v1167
  %v4583 = vunpack.c.l.b16 %v1168
  %v4584 = vunpack.c.l.b16 %v1169
  %v4585 = vunpack.c.l.b16 %v1170
  %v4586 = vunpack.c.l.b16 %v1171
  %v4587 = vunpack.c.l.b16 %v1172
  %v4588 = vunpack.c.l.b16 %v1173
  %v4589 = vunpack.c.l.b16 %v1174
  %v4590 = vunpack.c.l.b16 %v1175
  %v4591 = vunpack.c.l.b16 %v1176
  %v4592 = vunpack.c.l.b16 %v1177
  %v4593 = vunpack.c.l.b16 %v1178
  %v4594 = vunpack.c.l.b16 %v1179
  %v4595 = vunpack.c.l.b16 %v1180
  %v4596 = vunpack.c.l.b16 %v1181
  %v4597 = vunpack.c.l.b16 %v1182
  %v4598 = vunpack.c.l.b16 %v1183
  %v4599 = vunpack.c.l.b16 %v1184
  %v4600 = vunpack.c.l.b16 %v1185
  %v4601 = vunpack.c.l.b16 %v1186
  %v4602 = vunpack.c.l.b16 %v1187
  %v4603 = vunpack.c.l.b16 %v1188
  %v4604 = vunpack.c.l.b16 %v1189
  %v4605 = vunpack.c.l.b16 %v1190
  %v4606 = vunpack.c.l.b16 %v1191
  %v4607 = vunpack.c.l.b16 %v1192
  %v4608 = vunpack.c.l.b16 %v1193
  %v4609 = vunpack.c.l.b16 %v1194
  %v4610 = vunpack.c.l.b16 %v1195
  %v4611 = vunpack.c.l.b16 %v1196
  %v4612 = vunpack.c.l.b16 %v1197
  %v4613 = vunpack.c.l.b16 %v1198
  %v4614 = vunpack.c.l.b16 %v1199
  %v4615 = vunpack.c.l.b16 %v1200
  %v4616 = vunpack.c.l.b16 %v1201
  %v4617 = vunpack.c.l.b16 %v1202
  %v4618 = vunpack.c.l.b16 %v1203
  %v4619 = vunpack.c.l.b16 %v1204
  %v4620 = vunpack.c.l.b16 %v1205
  %v4621 = vunpack.c.l.b16 %v1206
  %v4622 = vunpack.c.l.b16 %v1207
  %v4623 = vunpack.c.l.b16 %v1208
  %v4624 = vunpack.c.l.b16 %v1209
  %v4625 = vunpack.c.l.b16 %v1210
  %v4626 = vunpack.c.l.b16 %v1211
  %v4627 = vunpack.c.l.b16 %v1212
  %v4628 = vunpack.c.l.b16 %v1213
  %v4629 = vunpack.c.l.b16 %v1214
  %v4630 = vunpack.c.l.b16 %v1215
  %v4631 = vunpack.c.l.b16 %v1216
  %v4632 = vunpack.c.l.b16 %v1217
  %v4633 = vunpack.c.l.b16 %v1218
  %v4634 = vunpack.c.l.b16 %v1219
  %v4635 = vunpack.c.l.b16 %v1220
  %v4636 = vunpack.c.l.b16 %v1221
  %v4637 = vunpack.c.l.b16 %v1222
  %v4638 = vunpack.c.l.b16 %v1223
  %v4639 = vunpack.c.l.b16 %v1224
  %v4640 = vunpack.c.l.b16 %v1225
  %v4641 = vunpack.c.l.b16 %v1226
  %v4642 = vunpack.c.l.b16 %v1227
  %v4643 = vunpack.c.l.b16 %v1228
  %v4644 = vunpack.c.l.b16 %v1229
  %v4645 = vunpack.c.l.b16 %v1230
  %v4646 = vunpack.c.l.b16 %v1231
  %v4647 = vunpack.c.l.b16 %v1232
  %v4648 = vunpack.c.l.b16 %v1233
  %v4649 = vunpack.c.l.b16 %v1234
  %v4650 = vunpack.c.l.b16 %v1235
  %v4651 = vunpack.c.l.b16 %v1236
  %v4652 = vunpack.c.l.b16 %v1237
  %v4653 = vunpack.c.l.b16 %v1238
  %v4654 = vunpack.c.l.b16 %v1239
  %v4655 = vunpack.c.l.b16 %v1240
  %v4656 = vunpack.c.l.b16 %v1241
  %v4657 = vunpack.c.l.b16 %v1242
  %v4658 = vunpack.c.l.b16 %v1243
  %v4659 = vunpack.c.l.b16 %v1244
  %v4660 = vunpack.c.l.b16 %v1245
  %v4661 = vunpack.c.l.b16 %v1246
  %v4662 = vunpack.c.l.b16 %v1247
  %v4663 = vunpack.c.l.b16 %v1248
  %v4664 = vunpack.c.l.b16 %v1249
  %v4665 = vunpack.c.l.b16 %v1250
  %v4666 = vunpack.c.l.b16 %v1251
  %v4667 = vunpack.c.l.b16 %v1252
  %v4668 = vunpack.c.l.b16 %v1253
  %v4669 = vunpack.c.l.b16 %v1254
  %v4670 = vunpack.c.l.b16 %v1255
  %v4671 = vunpack.c.l.b16 %v1256
  %v4672 = vunpack.c.l.b16 %v1257
  %v4673 = vunpack.c.l.b16 %v1258
  %v4674 = vunpack.c.l.b16 %v1259
  %v4675 = vunpack.c.l.b16 %v1260
  %v4676 = vunpack.c.l.b16 %v1261
  %v4677 = vunpack.c.l.b16 %v1262
  %v4678 = vunpack.c.l.b16 %v1263
  %v4679 = vunpack.c.l.b16 %v1264
  %v4680 = vunpack.c.l.b16 %v1265
  %v4681 = vunpack.c.l.b16 %v1266
  %v4682 = vunpack.c.l.b16 %v1267
  %v4683 = vunpack.c.l.b16 %v1268
  %v4684 = vunpack.c.l.b16 %v1269
  %v4685 = vunpack.c.l.b16 %v1270
  %v4686 = vunpack.c.l.b16 %v1271
  %v4687 = vunpack.c.l.b16 %v1272
  %v4688 = vunpack.c.l.b16 %v1273
  %v4689 = vunpack.c.l.b16 %v1274
  %v4690 = vunpack.c.l.b16 %v1275
  %v4691 = vunpack.c.l.b16 %v1276
  %v4692 = vunpack.c.l.b16 %v1277
  %v4693 = vunpack.c.l.b16 %v1278
  %v4694 = vunpack.c.l.b16 %v1279
  %v4695 = vunpack.c.l.b16 %v1280
  %v4696 = vunpack.c.l.b16 %v1281
  %v4697 = vunpack.c.l.b16 %v1282
  %v4698 = vunpack.c.l.b16 %v1283
  %v4699 = vunpack.c.l.b16 %v1284
  %v4700 = vunpack.c.l.b16 %v1285
  %v4701 = vunpack.c.l.b16 %v1286
  %v4702 = vunpack.c.l.b16 %v1287
  %v4703 = vunpack.c.l.b16 %v1288
  %v4704 = vunpack.c.l.b16 %v1289
  %v4705 = vunpack.c.l.b16 %v1290
  %v4706 = vunpack.c.l.b16 %v1291
  %v4707 = vunpack.c.l.b16 %v1292
  %v4708 = vunpack.c.l.b16 %v1293
  %v4709 = vunpack.c.l.b16 %v1294
  %v4710 = vunpack.c.l.b16 %v1295
  %v4711 = vunpack.c.l.b16 %v1296
  %v4712 = vunpack.c.l.b16 %v1297
  %v4713 = vunpack.c.l.b16 %v1298
  %v4714 = vunpack.c.l.b16 %v1299
  %v4715 = vunpack.c.l.b16 %v1300
  %v4716 = vunpack.c.l.b16 %v1301
  %v4717 = vunpack.c.l.b16 %v1302
  %v4718 = vunpack.c.l.b16 %v1303
  %v4719 = vunpack.c.l.b16 %v1304
  %v4720 = vunpack.c.l.b16 %v1305
  %v4721 = vunpack.c.l.b16 %v1306
  %v4722 = vunpack.c.l.b16 %v1307
  %v4723 = vunpack.c.l.b16 %v1308
  %v4724 = vunpack.c.l.b16 %v1309
  %v4725 = vunpack.c.l.b16 %v1310
  %v4726 = vunpack.c.l.b16 %v1311
  %v4727 = vunpack.c.l.b16 %v1312
  %v4728 = vunpack.c.l.b16 %v1313
  %v4729 = vunpack.c.l.b16 %v1314
  %v4730 = vunpack.c.l.b16 %v1315
  %v4731 = vunpack.c.l.b16 %v1316
  %v4732 = vunpack.c.l.b16 %v1317
  %v4733 = vunpack.c.l.b16 %v1318
  %v4734 = vunpack.c.l.b16 %v1319
  %v4735 = vunpack.c.l.b16 %v1320
  %v4736 = vunpack.c.l.b16 %v1321
  %v4737 = vunpack.c.l.b16 %v1322
  %v4738 = vunpack.c.l.b16 %v1323
  %v4739 = vunpack.c.l.b16 %v1324
  %v4740 = vunpack.c.l.b16 %v1325
  %v4741 = vunpack.c.l.b16 %v1326
  %v4742 = vunpack.c.l.b16 %v1327
  %v4743 = vunpack.c.l.b16 %v1328
  %v4744 = vunpack.c.l.b16 %v1329
  %v4745 = vunpack.c.l.b16 %v1330
  %v4746 = vunpack.c.l.b16 %v1331
  %v4747 = vunpack.c.l.b16 %v1332
  %v4748 = vunpack.c.l.b16 %v1333
  %v4749 = vunpack.c.l.b16 %v1334
  %v4750 = vunpack.c.l.b16 %v1335
  %v4751 = vunpack.c.l.b16 %v1336
  %v4752 = vunpack.c.l.b16 %v1337
  %v4753 = vunpack.c.l.b16 %v1338
  %v4754 = vunpack.c.l.b16 %v1339
  %v4755 = vunpack.c.l.b16 %v1340
  %v4756 = vunpack.c.l.b16 %v1341
  %v4757 = vunpack.c.l.b16 %v1342
  %v4758 = vunpack.c.l.b16 %v1343
  %v4759 = vunpack.c.l.b16 %v1344
  %v4760 = vunpack.c.l.b16 %v1345
  %v4761 = vunpack.c.l.b16 %v1346
  %v4762 = vunpack.c.l.b16 %v1347
  %v4763 = vunpack.c.l.b16 %v1348
  %v4764 = vunpack.c.l.b16 %v1349
  %v4765 = vunpack.c.l.b16 %v1350
  %v4766 = vunpack.c.l.b16 %v1351
  %v4767 = vunpack.c.l.b16 %v1352
  %v4768 = vunpack.c.l.b16 %v1353
  %v4769 = vunpack.c.l.b16 %v1354
  %v4770 = vunpack.c.l.b16 %v1355
  %v4771 = vunpack.c.l.b16 %v1356
  %v4772 = vunpack.c.l.b16 %v1357
  %v4773 = vunpack.c.l.b16 %v1358
  %v4774 = vunpack.c.l.b16 %v1359
  %v4775 = vunpack.c.l.b16 %v1360
  %v4776 = vunpack.c.l.b16 %v1361
  %v4777 = vunpack.c.l.b16 %v1362
  %v4778 = vunpack.c.l.b16 %v1363
  %v4779 = vunpack.c.l.b16 %v1364
  %v4780 = vunpack.c.l.b16 %v1365
  %v4781 = vunpack.c.l.b16 %v1366
  %v4782 = vunpack.c.l.b16 %v1367
  %v4783 = vunpack.c.l.b16 %v1368
  %v4784 = vunpack.c.l.b16 %v1369
  %v4785 = vunpack.c.l.b16 %v1370
  %v4786 = vunpack.c.l.b16 %v1371
  %v4787 = vunpack.c.l.b16 %v1372
  %v4788 = vunpack.c.l.b16 %v1373
  %v4789 = vunpack.c.l.b16 %v1374
  %v4790 = vunpack.c.l.b16 %v1375
  %v4791 = vunpack.c.l.b16 %v1376
  %v4792 = vunpack.c.l.b16 %v1377
  %v4793 = vunpack.c.l.b16 %v1378
  %v4794 = vunpack.c.l.b16 %v1379
  %v4795 = vunpack.c.l.b16 %v1380
  %v4796 = vunpack.c.l.b16 %v1381
  %v4797 = vunpack.c.l.b16 %v1382
  %v4798 = vunpack.c.l.b16 %v1383
  %v4799 = vunpack.c.l.b16 %v1384
  %v4800 = vunpack.c.l.b16 %v1385
  %v4801 = vunpack.c.l.b16 %v1386
  %v4802 = vunpack.c.l.b16 %v1387
  %v4803 = vunpack.c.l.b16 %v1388
  %v4804 = vunpack.c.l.b16 %v1389
  %v4805 = vunpack.c.l.b16 %v1390
  %v4806 = vunpack.c.l.b16 %v1391
  %v4807 = vunpack.c.l.b16 %v1392
  %v4808 = vunpack.c.l.b16 %v1393
  %v4809 = vunpack.c.l.b16 %v1394
  %v4810 = vunpack.c.l.b16 %v1395
  %v4811 = vunpack.c.l.b16 %v1396
  %v4812 = vunpack.c.l.b16 %v1397
  %v4813 = vunpack.c.l.b16 %v1398
  %v4814 = vunpack.c.l.b16 %v1399
  %v4815 = vunpack.c.l.b16 %v1400
  %v4816 = vunpack.c.l.b16 %v1401
  %v4817 = vunpack.c.l.b16 %v1402
  %v4818 = vunpack.c.l.b16 %v1403
  %v4819 = vunpack.c.l.b16 %v1404
  %v4820 = vunpack.c.l.b16 %v1405
  %v4821 = vunpack.c.l.b16 %v1406
  %v4822 = vunpack.c.l.b16 %v1407
  %v4823 = vunpack.c.l.b16 %v1408
  %v4824 = vunpack.c.l.b16 %v1409
  %v4825 = vunpack.c.l.b16 %v1410
  %v4826 = vunpack.c.l.b16 %v1411
  %v4827 = vunpack.c.l.b16 %v1412
  %v4828 = vunpack.c.l.b16 %v1413
  %v4829 = vunpack.c.l.b16 %v1414
  %v4830 = vunpack.c.l.b16 %v1415
  %v4831 = vunpack.c.l.b16 %v1416
  %v4832 = vunpack.c.l.b16 %v1417
  %v4833 = vunpack.c.l.b16 %v1418
  %v4834 = vunpack.c.l.b16 %v1419
  %v4835 = vunpack.c.l.b16 %v1420
  %v4836 = vunpack.c.l.b16 %v1421
  %v4837 = vunpack.c.l.b16 %v1422
  %v4838 = vunpack.c.l.b16 %v1423
  %v4839 = vunpack.c.l.b16 %v1424
  %v4840 = vunpack.c.l.b16 %v1425
  %v4841 = vunpack.c.l.b16 %v1426
  %v4842 = vunpack.c.l.b16 %v1427
  %v4843 = vunpack.c.l.b16 %v1428
  %v4844 = vunpack.c.l.b16 %v1429
  %v4845 = vunpack.c.l.b16 %v1430
  %v4846 = vunpack.c.l.b16 %v1431
  %v4847 = vunpack.c.l.b16 %v1432
  %v4848 = vunpack.c.l.b16 %v1433
  %v4849 = vunpack.c.l.b16 %v1434
  %v4850 = vunpack.c.l.b16 %v1435
  %v4851 = vunpack.c.l.b16 %v1436
  %v4852 = vunpack.c.l.b16 %v1437
  %v4853 = vunpack.c.l.b16 %v1438
  %v4854 = vunpack.c.l.b16 %v1439
  %v4855 = vunpack.c.l.b16 %v1440
  %v4856 = vunpack.c.l.b16 %v1441
  %v4857 = vunpack.c.l.b16 %v1442
  %v4858 = vunpack.c.l.b16 %v1443
  %v4859 = vunpack.c.l.b16 %v1444
  %v4860 = vunpack.c.l.b16 %v1445
  %v4861 = vunpack.c.l.b16 %v1446
  %v4862 = vunpack.c.l.b16 %v1447
  %v4863 = vunpack.c.l.b16 %v1448
  %v4864 = vunpack.c.l.b16 %v1449
  %v4865 = vunpack.c.l.b16 %v1450
  %v4866 = vunpack.c.l.b16 %v1451
  %v4867 = vunpack.c.l.b16 %v1452
  %v4868 = vunpack.c.l.b16 %v1453
  %v4869 = vunpack.c.l.b16 %v1454
  %v4870 = vunpack.c.l.b16 %v1455
  %v4871 = vunpack.c.l.b16 %v1456
  %v4872 = vunpack.c.l.b16 %v1457
  %v4873 = vunpack.c.l.b16 %v1458
  %v4874 = vunpack.c.l.b16 %v1459
  %v4875 = vunpack.c.l.b16 %v1460
  %v4876 = vunpack.c.l.b16 %v1461
  %v4877 = vunpack.c.l.b16 %v1462
  %v4878 = vunpack.c.l.b16 %v1463
  %v4879 = vunpack.c.l.b16 %v1464
  %v4880 = vunpack.c.l.b16 %v1465
  %v4881 = vunpack.c.l.b16 %v1466
  %v4882 = vunpack.c.l.b16 %v1467
  %v4883 = vunpack.c.l.b16 %v1468
  %v4884 = vunpack.c.l.b16 %v1469
  %v4885 = vunpack.c.l.b16 %v1470
  %v4886 = vunpack.c.l.b16 %v1471
  %v4887 = vunpack.c.l.b16 %v1472
  %v4888 = vunpack.c.l.b16 %v1473
  %v4889 = vunpack.c.l.b16 %v1474
  %v4890 = vunpack.c.l.b16 %v1475
  %v4891 = vunpack.c.l.b16 %v1476
  %v4892 = vunpack.c.l.b16 %v1477
  %v4893 = vunpack.c.l.b16 %v1478
  %v4894 = vunpack.c.l.b16 %v1479
  %v4895 = vunpack.c.l.b16 %v1480
  %v4896 = vunpack.c.l.b16 %v1481
  %v4897 = vunpack.c.l.b16 %v1482
  %v4898 = vunpack.c.l.b16 %v1483
  %v4899 = vunpack.c.l.b16 %v1484
  %v4900 = vunpack.c.l.b16 %v1485
  %v4901 = vunpack.c.l.b16 %v1486
  %v4902 = vunpack.c.l.b16 %v1487
  %v4903 = vunpack.c.l.b16 %v1488
  %v4904 = vunpack.c.l.b16 %v1489
  %v4905 = vunpack.c.l.b16 %v1490
  %v4906 = vunpack.c.l.b16 %v1491
  %v4907 = vunpack.c.l.b16 %v1492
  %v4908 = vunpack.c.l.b16 %v1493
  %v4909 = vunpack.c.l.b16 %v1494
  %v4910 = vunpack.c.l.b16 %v1495
  %v4911 = vunpack.c.l.b16 %v1496
  %v4912 = vunpack.c.l.b16 %v1497
  %v4913 = vunpack.c.l.b16 %v1498
  %v4914 = vunpack.c.l.b16 %v1499
  %v4915 = vunpack.c.l.b16 %v1500
  %v4916 = vunpack.c.l.b16 %v1501
  %v4917 = vunpack.c.l.b16 %v1502
  %v4918 = vunpack.c.l.b16 %v1503
  %v4919 = vunpack.c.l.b16 %v1504
  %v4920 = vunpack.c.l.b16 %v1505
  %v4921 = vunpack.c.l.b16 %v1506
  %v4922 = vunpack.c.l.b16 %v1507
  %v4923 = vunpack.c.l.b16 %v1508
  %v4924 = vunpack.c.l.b16 %v1509
  %v4925 = vunpack.c.l.b16 %v1510
  %v4926 = vunpack.c.l.b16 %v1511
  %v4927 = vunpack.c.l.b16 %v1512
  %v4928 = vunpack.c.l.b16 %v1513
  %v4929 = vunpack.c.l.b16 %v1514
  %v4930 = vunpack.c.l.b16 %v1515
  %v4931 = vunpack.c.l.b16 %v1516
  %v4932 = vunpack.c.l.b16 %v1517
  %v4933 = vunpack.c.l.b16 %v1518
  %v4934 = vunpack.c.l.b16 %v1519
  %v4935 = vunpack.c.l.b16 %v1520
  %v4936 = vunpack.c.l.b16 %v1521
  %v4937 = vunpack.c.l.b16 %v1522
  %v4938 = vunpack.c.l.b16 %v1523
  %v4939 = vunpack.c.l.b16 %v1524
  %v4940 = vunpack.c.l.b16 %v1525
  %v4941 = vunpack.c.l.b16 %v1526
  %v4942 = vunpack.c.l.b16 %v1527
  %v4943 = vunpack.c.l.b16 %v1528
  %v4944 = vunpack.c.l.b16 %v1529
  %v4945 = vunpack.c.l.b16 %v1530
  %v4946 = vunpack.c.l.b16 %v1531
  %v4947 = vunpack.c.l.b16 %v1532
  %v4948 = vunpack.c.l.b16 %v1533
  %v4949 = vunpack.c.l.b16 %v1534
  %v4950 = vunpack.c.l.b16 %v1535
  %v4951 = vunpack.c.l.b16 %v1536
  %v4952 = vunpack.c.l.b16 %v1537
  %v4953 = vunpack.c.l.b16 %v1538
  %v4954 = vunpack.c.l.b16 %v1539
  %v4955 = vunpack.c.l.b16 %v1540
  %v4956 = vunpack.c.l.b16 %v1541
  %v4957 = vunpack.c.l.b16 %v1542
  %v4958 = vunpack.c.l.b16 %v1543
  %v4959 = vunpack.c.l.b16 %v1544
  %v4960 = vunpack.c.l.b16 %v1545
  %v4961 = vunpack.c.l.b16 %v1546
  %v4962 = vunpack.c.l.b16 %v1547
  %v4963 = vunpack.c.l.b16 %v1548
  %v4964 = vunpack.c.l.b16 %v1549
  %v4965 = vunpack.c.l.b16 %v1550
  %v4966 = vunpack.c.l.b16 %v1551
  %v4967 = vunpack.c.l.b16 %v1552
  %v4968 = vunpack.c.l.b16 %v1553
  %v4969 = vunpack.c.l.b16 %v1554
  %v4970 = vunpack.c.l.b16 %v1555
  %v4971 = vunpack.c.l.b16 %v1556
  %v4972 = vunpack.c.l.b16 %v1557
  %v4973 = vunpack.c.l.b16 %v1558
  %v4974 = vunpack.c.l.b16 %v1559
  %v4975 = vunpack.c.l.b16 %v1560
  %v4976 = vunpack.c.l.b16 %v1561
  %v4977 = vunpack.c.l.b16 %v1562
  %v4978 = vunpack.c.l.b16 %v1563
  %v4979 = vunpack.c.l.b16 %v1564
  %v4980 = vunpack.c.l.b16 %v1565
  %v4981 = vunpack.c.l.b16 %v1566
  %v4982 = vunpack.c.l.b16 %v1567
  %v4983 = vunpack.c.l.b16 %v1568
  %v4984 = vunpack.c.l.b16 %v1569
  %v4985 = vunpack.c.l.b16 %v1570
  %v4986 = vunpack.c.l.b16 %v1571
  %v4987 = vunpack.c.l.b16 %v1572
  %v4988 = vunpack.c.l.b16 %v1573
  %v4989 = vunpack.c.l.b16 %v1574
  %v4990 = vunpack.c.l.b16 %v1575
  %v4991 = vunpack.c.l.b16 %v1576
  %v4992 = vunpack.c.l.b16 %v1577
  %v4993 = vunpack.c.l.b16 %v1578
  %v4994 = vunpack.c.l.b16 %v1579
  %v4995 = vunpack.c.l.b16 %v1580
  %v4996 = vunpack.c.l.b16 %v1581
  %v4997 = vunpack.c.l.b16 %v1582
  %v4998 = vunpack.c.l.b16 %v1583
  %v4999 = vunpack.c.l.b16 %v1584
  %v5000 = vunpack.c.l.b16 %v1585
  %v5001 = vunpack.c.l.b16 %v1586
  %v5002 = vunpack.c.l.b16 %v1587
  %v5003 = vunpack.c.l.b16 %v1588
  %v5004 = vunpack.c.l.b16 %v1589
  %v5005 = vunpack.c.l.b16 %v1590
  %v5006 = vunpack.c.l.b16 %v1591
  %v5007 = vunpack.c.l.b16 %v1592
  %v5008 = vunpack.c.l.b16 %v1593
  %v5009 = vunpack.c.l.b16 %v1594
  %v5010 = vunpack.c.l.b16 %v1595
  %v5011 = vunpack.c.l.b16 %v1596
  %v5012 = vunpack.c.l.b16 %v1597
  %v5013 = vunpack.c.l.b16 %v1598
  %v5014 = vunpack.c.l.b16 %v1599
  %v5015 = vunpack.c.l.b16 %v1600
  %v5016 = vunpack.c.l.b16 %v1601
  %v5017 = vunpack.c.l.b16 %v1602
  %v5018 = vunpack.c.l.b16 %v1603
  %v5019 = vunpack.c.l.b16 %v1604
  %v5020 = vpack.c.b16 %v3485, %v3484
  %v5021 = vpack.c.b16 %v3487, %v3486
  %v5022 = vpack.c.b16 %v3489, %v3488
  %v5023 = vpack.c.b16 %v3491, %v3490
  %v5024 = vpack.c.b16 %v3493, %v3492
  %v5025 = vpack.c.b16 %v3495, %v3494
  %v5026 = vpack.c.b16 %v3497, %v3496
  %v5027 = vpack.c.b16 %v3499, %v3498
  %v5028 = vpack.c.b16 %v3501, %v3500
  %v5029 = vpack.c.b16 %v3503, %v3502
  %v5030 = vpack.c.b16 %v3505, %v3504
  %v5031 = vpack.c.b16 %v3507, %v3506
  %v5032 = vpack.c.b16 %v3509, %v3508
  %v5033 = vpack.c.b16 %v3511, %v3510
  %v5034 = vpack.c.b16 %v3513, %v3512
  %v5035 = vpack.c.b16 %v3515, %v3514
  %v5036 = vpack.c.b16 %v3517, %v3516
  %v5037 = vpack.c.b16 %v3519, %v3518
  %v5038 = vpack.c.b16 %v3521, %v3520
  %v5039 = vpack.c.b16 %v3523, %v3522
  %v5040 = vpack.c.b16 %v3525, %v3524
  %v5041 = vpack.c.b16 %v3527, %v3526
  %v5042 = vpack.c.b16 %v3529, %v3528
  %v5043 = vpack.c.b16 %v3531, %v3530
  %v5044 = vpack.c.b16 %v3533, %v3532
  %v5045 = vpack.c.b16 %v3535, %v3534
  %v5046 = vpack.c.b16 %v3537, %v3536
  %v5047 = vpack.c.b16 %v3539, %v3538
  %v5048 = vpack.c.b16 %v3541, %v3540
  %v5049 = vpack.c.b16 %v3543, %v3542
  %v5050 = vpack.c.b16 %v3545, %v3544
  %v5051 = vpack.c.b16 %v3547, %v3546
  %v5052 = vpack.c.b16 %v3549, %v3548
  %v5053 = vpack.c.b16 %v3551, %v3550
  %v5054 = vpack.c.b16 %v3553, %v3552
  %v5055 = vpack.c.b16 %v3555, %v3554
  %v5056 = vpack.c.b16 %v3557, %v3556
  %v5057 = vpack.c.b16 %v3559, %v3558
  %v5058 = vpack.c.b16 %v3561, %v3560
  %v5059 = vpack.c.b16 %v3563, %v3562
  %v5060 = vpack.c.b16 %v3565, %v3564
  %v5061 = vpack.c.b16 %v3567, %v3566
  %v5062 = vpack.c.b16 %v3569, %v3568
  %v5063 = vpack.c.b16 %v3571, %v3570
  %v5064 = vpack.c.b16 %v3573, %v3572
  %v5065 = vpack.c.b16 %v3575, %v3574
  %v5066 = vpack.c.b16 %v3577, %v3576
  %v5067 = vpack.c.b16 %v3579, %v3578
  %v5068 = vpack.c.b16 %v3581, %v3580
  %v5069 = vpack.c.b16 %v3583, %v3582
  %v5070 = vpack.c.b16 %v3585, %v3584
  %v5071 = vpack.c.b16 %v3587, %v3586
  %v5072 = vpack.c.b16 %v3589, %v3588
  %v5073 = vpack.c.b16 %v3591, %v3590
  %v5074 = vpack.c.b16 %v3593, %v3592
  %v5075 = vpack.c.b16 %v3595, %v3594
  %v5076 = vpack.c.b16 %v3597, %v3596
  %v5077 = vpack.c.b16 %v3599, %v3598
  %v5078 = vpack.c.b16 %v3601, %v3600
  %v5079 = vpack.c.b16 %v3603, %v3602
  %v5080 = vpack.c.b16 %v3605, %v3604
  %v5081 = vpack.c.b16 %v3607, %v3606
  %v5082 = vpack.c.b16 %v3609, %v3608
  %v5083 = vpack.c.b16 %v3611, %v3610
  %v5084 = vpack.c.b16 %v3613, %v3612
  %v5085 = vpack.c.b16 %v3615, %v3614
  %v5086 = vpack.c.b16 %v3617, %v3616
  %v5087 = vpack.c.b16 %v3619, %v3618
  %v5088 = vpack.c.b16 %v3621, %v3620
  %v5089 = vpack.c.b16 %v3623, %v3622
  %v5090 = vpack.c.b16 %v3625, %v3624
  %v5091 = vpack.c.b16 %v3627, %v3626
  %v5092 = vpack.c.b16 %v3629, %v3628
  %v5093 = vpack.c.b16 %v3631, %v3630
  %v5094 = vpack.c.b16 %v3633, %v3632
  %v5095 = vpack.c.b16 %v3635, %v3634
  %v5096 = vpack.c.b16 %v3637, %v3636
  %v5097 = vpack.c.b16 %v3639, %v3638
  %v5098 = vpack.c.b16 %v3641, %v3640
  %v5099 = vpack.c.b16 %v3643, %v3642
  %v5100 = vpack.c.b16 %v3645, %v3644
  %v5101 = vpack.c.b16 %v3647, %v3646
  %v5102 = vpack.c.b16 %v3649, %v3648
  %v5103 = vpack.c.b16 %v3651, %v3650
  %v5104 = vpack.c.b16 %v3653, %v3652
  %v5105 = vpack.c.b16 %v3655, %v3654
  %v5106 = vpack.c.b16 %v3657, %v3656
  %v5107 = vpack.c.b16 %v3659, %v3658
  %v5108 = vpack.c.b16 %v3661, %v3660
  %v5109 = vpack.c.b16 %v3663, %v3662
  %v5110 = vpack.c.b16 %v3665, %v3664
  %v5111 = vpack.c.b16 %v3667, %v3666
  %v5112 = vpack.c.b16 %v3669, %v3668
  %v5113 = vpack.c.b16 %v3671, %v3670
  %v5114 = vpack.c.b16 %v3673, %v3672
  %v5115 = vpack.c.b16 %v3675, %v3674
  %v5116 = vpack.c.b16 %v3677, %v3676
  %v5117 = vpack.c.b16 %v3679, %v3678
  %v5118 = vpack.c.b16 %v3681, %v3680
  %v5119 = vpack.c.b16 %v3683, %v3682
  %v5120 = vpack.c.b16 %v3685, %v3684
  %v5121 = vpack.c.b16 %v3687, %v3686
  %v5122 = vpack.c.b16 %v3689, %v3688
  %v5123 = vpack.c.b16 %v3691, %v3690
  %v5124 = vpack.c.b16 %v3693, %v3692
  %v5125 = vpack.c.b16 %v3695, %v3694
  %v5126 = vpack.c.b16 %v3697, %v3696
  %v5127 = vpack.c.b16 %v3699, %v3698
  %v5128 = vpack.c.b16 %v3701, %v3700
  %v5129 = vpack.c.b16 %v3703, %v3702
  %v5130 = vpack.c.b16 %v3705, %v3704
  %v5131 = vpack.c.b16 %v3707, %v3706
  %v5132 = vpack.c.b16 %v3709, %v3708
  %v5133 = vpack.c.b16 %v3711, %v3710
  %v5134 = vpack.c.b16 %v3713, %v3712
  %v5135 = vpack.c.b16 %v3715, %v3714
  %v5136 = vpack.c.b16 %v3717, %v3716
  %v5137 = vpack.c.b16 %v3719, %v3718
  %v5138 = vpack.c.b16 %v3721, %v3720
  %v5139 = vpack.c.b16 %v3723, %v3722
  %v5140 = vpack.c.b16 %v3725, %v3724
  %v5141 = vpack.c.b16 %v3727, %v3726
  %v5142 = vpack.c.b16 %v3729, %v3728
  %v5143 = vpack.c.b16 %v3731, %v3730
  %v5144 = vpack.c.b16 %v3733, %v3732
  %v5145 = vpack.c.b16 %v3735, %v3734
  %v5146 = vpack.c.b16 %v3737, %v3736
  %v5147 = vpack.c.b16 %v3739, %v3738
  %v5148 = vpack.c.b16 %v3741, %v3740
  %v5149 = vpack.c.b16 %v3743, %v3742
  %v5150 = vpack.c.b16 %v3745, %v3744
  %v5151 = vpack.c.b16 %v3747, %v3746
  %v5152 = vpack.c.b16 %v3749, %v3748
  %v5153 = vpack.c.b16 %v3751, %v3750
  %v5154 = vpack.c.b16 %v3753, %v3752
  %v5155 = vpack.c.b16 %v3755, %v3754
  %v5156 = vpack.c.b16 %v3757, %v3756
  %v5157 = vpack.c.b16 %v3759, %v3758
  %v5158 = vpack.c.b16 %v3761, %v3760
  %v5159 = vpack.c.b16 %v3763, %v3762
  %v5160 = vpack.c.b16 %v3765, %v3764
  %v5161 = vpack.c.b16 %v3767, %v3766
  %v5162 = vpack.c.b16 %v3769, %v3768
  %v5163 = vpack.c.b16 %v3771, %v3770
  %v5164 = vpack.c.b16 %v3773, %v3772
  %v5165 = vpack.c.b16 %v3775, %v3774
  %v5166 = vpack.c.b16 %v3777, %v3776
  %v5167 = vpack.c.b16 %v3779, %v3778
  %v5168 = vpack.c.b16 %v3781, %v3780
  %v5169 = vpack.c.b16 %v3783, %v3782
  %v5170 = vpack.c.b16 %v3785, %v3784
  %v5171 = vpack.c.b16 %v3787, %v3786
  %v5172 = vpack.c.b16 %v3789, %v3788
  %v5173 = vpack.c.b16 %v3791, %v3790
  %v5174 = vpack.c.b16 %v3793, %v3792
  %v5175 = vpack.c.b16 %v3795, %v3794
  %v5176 = vpack.c.b16 %v3797, %v3796
  %v5177 = vpack.c.b16 %v3799, %v3798
  %v5178 = vpack.c.b16 %v3801, %v3800
  %v5179 = vpack.c.b16 %v3803, %v3802
  %v5180 = vpack.c.b16 %v3805, %v3804
  %v5181 = vpack.c.b16 %v3807, %v3806
  %v5182 = vpack.c.b16 %v3809, %v3808
  %v5183 = vpack.c.b16 %v3811, %v3810
  %v5184 = vpack.c.b16 %v3813, %v3812
  %v5185 = vpack.c.b16 %v3815, %v3814
  %v5186 = vpack.c.b16 %v3817, %v3816
  %v5187 = vpack.c.b16 %v3819, %v3818
  %v5188 = vpack.c.b16 %v3821, %v3820
  %v5189 = vpack.c.b16 %v3823, %v3822
  %v5190 = vpack.c.b16 %v3825, %v3824
  %v5191 = vpack.c.b16 %v3827, %v3826
  %v5192 = vpack.c.b16 %v3829, %v3828
  %v5193 = vpack.c.b16 %v3831, %v3830
  %v5194 = vpack.c.b16 %v3833, %v3832
  %v5195 = vpack.c.b16 %v3835, %v3834
  %v5196 = vpack.c.b16 %v3837, %v3836
  %v5197 = vpack.c.b16 %v3839, %v3838
  %v5198 = vpack.c.b16 %v3841, %v3840
  %v5199 = vpack.c.b16 %v3843, %v3842
  %v5200 = vpack.c.b16 %v3845, %v3844
  %v5201 = vpack.c.b16 %v3847, %v3846
  %v5202 = vpack.c.b16 %v3849, %v3848
  %v5203 = vpack.c.b16 %v3851, %v3850
  %v5204 = vpack.c.b16 %v3853, %v3852
  %v5205 = vpack.c.b16 %v3855, %v3854
  %v5206 = vpack.c.b16 %v3857, %v3856
  %v5207 = vpack.c.b16 %v3859, %v3858
  %v5208 = vpack.c.b16 %v3861, %v3860
  %v5209 = vpack.c.b16 %v3863, %v3862
  %v5210 = vpack.c.b16 %v3865, %v3864
  %v5211 = vpack.c.b16 %v3867, %v3866
  %v5212 = vpack.c.b16 %v3869, %v3868
  %v5213 = vpack.c.b16 %v3871, %v3870
  %v5214 = vpack.c.b16 %v3873, %v3872
  %v5215 = vpack.c.b16 %v3875, %v3874
  %v5216 = vpack.c.b16 %v3877, %v3876
  %v5217 = vpack.c.b16 %v3879, %v3878
  %v5218 = vpack.c.b16 %v3881, %v3880
  %v5219 = vpack.c.b16 %v3883, %v3882
  %v5220 = vpack.c.b16 %v3885, %v3884
  %v5221 = vpack.c.b16 %v3887, %v3886
  %v5222 = vpack.c.b16 %v3889, %v3888
  %v5223 = vpack.c.b16 %v3891, %v3890
  %v5224 = vpack.c.b16 %v3893, %v3892
  %v5225 = vpack.c.b16 %v3895, %v3894
  %v5226 = vpack.c.b16 %v3897, %v3896
  %v5227 = vpack.c.b16 %v3899, %v3898
  %v5228 = vpack.c.b16 %v3901, %v3900
  %v5229 = vpack.c.b16 %v3903, %v3902
  %v5230 = vpack.c.b16 %v3905, %v3904
  %v5231 = vpack.c.b16 %v3907, %v3906
  %v5232 = vpack.c.b16 %v3909, %v3908
  %v5233 = vpack.c.b16 %v3911, %v3910
  %v5234 = vpack.c.b16 %v3913, %v3912
  %v5235 = vpack.c.b16 %v3915, %v3914
  %v5236 = vpack.c.b16 %v3917, %v3916
  %v5237 = vpack.c.b16 %v3919, %v3918
  %v5238 = vpack.c.b16 %v3921, %v3920
  %v5239 = vpack.c.b16 %v3923, %v3922
  %v5240 = vpack.c.b16 %v3925, %v3924
  %v5241 = vpack.c.b16 %v3927, %v3926
  %v5242 = vpack.c.b16 %v3929, %v3928
  %v5243 = vpack.c.b16 %v3931, %v3930
  %v5244 = vpack.c.b16 %v3933, %v3932
  %v5245 = vpack.c.b16 %v3935, %v3934
  %v5246 = vpack.c.b16 %v3937, %v3936
  %v5247 = vpack.c.b16 %v3939, %v3938
  %v5248 = vpack.c.b16 %v3941, %v3940
  %v5249 = vpack.c.b16 %v3943, %v3942
  %v5250 = vpack.c.b16 %v3945, %v3944
  %v5251 = vpack.c.b16 %v3947, %v3946
  %v5252 = vpack.c.b16 %v3949, %v3948
  %v5253 = vpack.c.b16 %v3951, %v3950
  %v5254 = vpack.c.b16 %v3953, %v3952
  %v5255 = vpack.c.b16 %v3955, %v3954
  %v5256 = vpack.c.b16 %v3957, %v3956
  %v5257 = vpack.c.b16 %v3959, %v3958
  %v5258 = vpack.c.b16 %v3961, %v3960
  %v5259 = vpack.c.b16 %v3963, %v3962
  %v5260 = vpack.c.b16 %v3965, %v3964
  %v5261 = vpack.c.b16 %v3967, %v3966
  %v5262 = vpack.c.b16 %v3969, %v3968
  %v5263 = vpack.c.b16 %v3971, %v3970
  %v5264 = vpack.c.b16 %v3973, %v3972
  %v5265 = vpack.c.b16 %v3975, %v3974
  %v5266 = vpack.c.b16 %v3977, %v3976
  %v5267 = vpack.c.b16 %v3979, %v3978
  %v5268 = vpack.c.b16 %v3981, %v3980
  %v5269 = vpack.c.b16 %v3983, %v3982
  %v5270 = vpack.c.b16 %v3985, %v3984
  %v5271 = vpack.c.b16 %v3987, %v3986
  %v5272 = vpack.c.b16 %v3989, %v3988
  %v5273 = vpack.c.b16 %v3991, %v3990
  %v5274 = vpack.c.b16 %v3993, %v3992
  %v5275 = vpack.c.b16 %v3995, %v3994
  %v5276 = vpack.c.b16 %v3997, %v3996
  %v5277 = vpack.c.b16 %v3999, %v3998
  %v5278 = vpack.c.b16 %v4001, %v4000
  %v5279 = vpack.c.b16 %v4003, %v4002
  %v5280 = vpack.c.b16 %v4005, %v4004
  %v5281 = vpack.c.b16 %v4007, %v4006
  %v5282 = vpack.c.b16 %v4009, %v4008
  %v5283 = vpack.c.b16 %v4011, %v4010
  %v5284 = vpack.c.b16 %v4013, %v4012
  %v5285 = vpack.c.b16 %v4015, %v4014
  %v5286 = vpack.c.b16 %v4017, %v4016
  %v5287 = vpack.c.b16 %v4019, %v4018
  %v5288 = vpack.c.b16 %v4021, %v4020
  %v5289 = vpack.c.b16 %v4023, %v4022
  %v5290 = vpack.c.b16 %v4025, %v4024
  %v5291 = vpack.c.b16 %v4027, %v4026
  %v5292 = vpack.c.b16 %v4029, %v4028
  %v5293 = vpack.c.b16 %v4031, %v4030
  %v5294 = vpack.c.b16 %v4033, %v4032
  %v5295 = vpack.c.b16 %v4035, %v4034
  %v5296 = vpack.c.b16 %v4037, %v4036
  %v5297 = vpack.c.b16 %v4039, %v4038
  %v5298 = vpack.c.b16 %v4041, %v4040
  %v5299 = vpack.c.b16 %v4043, %v4042
  %v5300 = vpack.c.b16 %v4045, %v4044
  %v5301 = vpack.c.b16 %v4047, %v4046
  %v5302 = vpack.c.b16 %v4049, %v4048
  %v5303 = vpack.c.b16 %v4051, %v4050
  %v5304 = vpack.c.b16 %v4053, %v4052
  %v5305 = vpack.c.b16 %v4055, %v4054
  %v5306 = vpack.c.b16 %v4057, %v4056
  %v5307 = vpack.c.b16 %v4059, %v4058
  %v5308 = vpack.c.b16 %v4061, %v4060
  %v5309 = vpack.c.b16 %v4063, %v4062
  %v5310 = vpack.c.b16 %v4065, %v4064
  %v5311 = vpack.c.b16 %v4067, %v4066
  %v5312 = vpack.c.b16 %v4069, %v4068
  %v5313 = vpack.c.b16 %v4071, %v4070
  %v5314 = vpack.c.b16 %v4073, %v4072
  %v5315 = vpack.c.b16 %v4075, %v4074
  %v5316 = vpack.c.b16 %v4077, %v4076
  %v5317 = vpack.c.b16 %v4079, %v4078
  %v5318 = vpack.c.b16 %v4081, %v4080
  %v5319 = vpack.c.b16 %v4083, %v4082
  %v5320 = vpack.c.b16 %v4085, %v4084
  %v5321 = vpack.c.b16 %v4087, %v4086
  %v5322 = vpack.c.b16 %v4089, %v4088
  %v5323 = vpack.c.b16 %v4091, %v4090
  %v5324 = vpack.c.b16 %v4093, %v4092
  %v5325 = vpack.c.b16 %v4095, %v4094
  %v5326 = vpack.c.b16 %v4097, %v4096
  %v5327 = vpack.c.b16 %v4099, %v4098
  %v5328 = vpack.c.b16 %v4101, %v4100
  %v5329 = vpack.c.b16 %v4103, %v4102
  %v5330 = vpack.c.b16 %v4105, %v4104
  %v5331 = vpack.c.b16 %v4107, %v4106
  %v5332 = vpack.c.b16 %v4109, %v4108
  %v5333 = vpack.c.b16 %v4111, %v4110
  %v5334 = vpack.c.b16 %v4113, %v4112
  %v5335 = vpack.c.b16 %v4115, %v4114
  %v5336 = vpack.c.b16 %v4117, %v4116
  %v5337 = vpack.c.b16 %v4119, %v4118
  %v5338 = vpack.c.b16 %v4121, %v4120
  %v5339 = vpack.c.b16 %v4123, %v4122
  %v5340 = vpack.c.b16 %v4125, %v4124
  %v5341 = vpack.c.b16 %v4127, %v4126
  %v5342 = vpack.c.b16 %v4129, %v4128
  %v5343 = vpack.c.b16 %v4131, %v4130
  %v5344 = vpack.c.b16 %v4133, %v4132
  %v5345 = vpack.c.b16 %v4135, %v4134
  %v5346 = vpack.c.b16 %v4137, %v4136
  %v5347 = vpack.c.b16 %v4139, %v4138
  %v5348 = vpack.c.b16 %v4141, %v4140
  %v5349 = vpack.c.b16 %v4143, %v4142
  %v5350 = vpack.c.b16 %v4145, %v4144
  %v5351 = vpack.c.b16 %v4147, %v4146
  %v5352 = vpack.c.b16 %v4149, %v4148
  %v5353 = vpack.c.b16 %v4151, %v4150
  %v5354 = vpack.c.b16 %v4153, %v4152
  %v5355 = vpack.c.b16 %v4155, %v4154
  %v5356 = vpack.c.b16 %v4157, %v4156
  %v5357 = vpack.c.b16 %v4159, %v4158
  %v5358 = vpack.c.b16 %v4161, %v4160
  %v5359 = vpack.c.b16 %v4163, %v4162
  %v5360 = vpack.c.b16 %v4165, %v4164
  %v5361 = vpack.c.b16 %v4167, %v4166
  %v5362 = vpack.c.b16 %v4169, %v4168
  %v5363 = vpack.c.b16 %v4171, %v4170
  %v5364 = vpack.c.b16 %v4173, %v4172
  %v5365 = vpack.c.b16 %v4175, %v4174
  %v5366 = vpack.c.b16 %v4177, %v4176
  %v5367 = vpack.c.b16 %v4179, %v4178
  %v5368 = vpack.c.b16 %v4181, %v4180
  %v5369 = vpack.c.b16 %v4183, %v4182
  %v5370 = vpack.c.b16 %v4185, %v4184
  %v5371 = vpack.c.b16 %v4187, %v4186
  %v5372 = vpack.c.b16 %v4189, %v4188
  %v5373 = vpack.c.b16 %v4191, %v4190
  %v5374 = vpack.c.b16 %v4193, %v4192
  %v5375 = vpack.c.b16 %v4195, %v4194
  %v5376 = vpack.c.b16 %v4197, %v4196
  %v5377 = vpack.c.b16 %v4199, %v4198
  %v5378 = vpack.c.b16 %v4201, %v4200
  %v5379 = vpack.c.b16 %v4203, %v4202
  %v5380 = vpack.c.b16 %v4205, %v4204
  %v5381 = vpack.c.b16 %v4207, %v4206
  %v5382 = vpack.c.b16 %v4209, %v4208
  %v5383 = vpack.c.b16 %v4211, %v4210
  %v5384 = vpack.c.b16 %v4213, %v4212
  %v5385 = vpack.c.b16 %v4215, %v4214
  %v5386 = vpack.c.b16 %v4217, %v4216
  %v5387 = vpack.c.b16 %v4219, %v4218
  %v5388 = vpack.c.b16 %v4221, %v4220
  %v5389 = vpack.c.b16 %v4223, %v4222
  %v5390 = vpack.c.b16 %v4225, %v4224
  %v5391 = vpack.c.b16 %v4227, %v4226
  %v5392 = vpack.c.b16 %v4229, %v4228
  %v5393 = vpack.c.b16 %v4231, %v4230
  %v5394 = vpack.c.b16 %v4233, %v4232
  %v5395 = vpack.c.b16 %v4235, %v4234
  %v5396 = vpack.c.b16 %v4237, %v4236
  %v5397 = vpack.c.b16 %v4239, %v4238
  %v5398 = vpack.c.b16 %v4241, %v4240
  %v5399 = vpack.c.b16 %v4243, %v4242
  %v5400 = vpack.c.b16 %v4245, %v4244
  %v5401 = vpack.c.b16 %v4247, %v4246
  %v5402 = vpack.c.b16 %v4249, %v4248
  %v5403 = vpack.c.b16 %v4251, %v4250
  %v5404 = vpack.c.b16 %v4253, %v4252
  %v5405 = vpack.c.b16 %v4255, %v4254
  %v5406 = vpack.c.b16 %v4257, %v4256
  %v5407 = vpack.c.b16 %v4259, %v4258
  %v5408 = vpack.c.b16 %v4261, %v4260
  %v5409 = vpack.c.b16 %v4263, %v4262
  %v5410 = vpack.c.b16 %v4265, %v4264
  %v5411 = vpack.c.b16 %v4267, %v4266
  %v5412 = vpack.c.b16 %v4269, %v4268
  %v5413 = vpack.c.b16 %v4271, %v4270
  %v5414 = vpack.c.b16 %v4273, %v4272
  %v5415 = vpack.c.b16 %v4275, %v4274
  %v5416 = vpack.c.b16 %v4277, %v4276
  %v5417 = vpack.c.b16 %v4279, %v4278
  %v5418 = vpack.c.b16 %v4281, %v4280
  %v5419 = vpack.c.b16 %v4283, %v4282
  %v5420 = vpack.c.b16 %v4285, %v4284
  %v5421 = vpack.c.b16 %v4287, %v4286
  %v5422 = vpack.c.b16 %v4289, %v4288
  %v5423 = vpack.c.b16 %v4291, %v4290
  %v5424 = vpack.c.b16 %v4293, %v4292
  %v5425 = vpack.c.b16 %v4295, %v4294
  %v5426 = vpack.c.b16 %v4297, %v4296
  %v5427 = vpack.c.b16 %v4299, %v4298
  %v5428 = vpack.c.b16 %v4301, %v4300
  %v5429 = vpack.c.b16 %v4303, %v4302
  %v5430 = vpack.c.b16 %v4305, %v4304
  %v5431 = vpack.c.b16 %v4307, %v4306
  %v5432 = vpack.c.b16 %v4309, %v4308
  %v5433 = vpack.c.b16 %v4311, %v4310
  %v5434 = vpack.c.b16 %v4313, %v4312
  %v5435 = vpack.c.b16 %v4315, %v4314
  %v5436 = vpack.c.b16 %v4317, %v4316
  %v5437 = vpack.c.b16 %v4319, %v4318
  %v5438 = vpack.c.b16 %v4321, %v4320
  %v5439 = vpack.c.b16 %v4323, %v4322
  %v5440 = vpack.c.b16 %v4325, %v4324
  %v5441 = vpack.c.b16 %v4327, %v4326
  %v5442 = vpack.c.b16 %v4329, %v4328
  %v5443 = vpack.c.b16 %v4331, %v4330
  %v5444 = vpack.c.b16 %v4333, %v4332
  %v5445 = vpack.c.b16 %v4335, %v4334
  %v5446 = vpack.c.b16 %v4337, %v4336
  %v5447 = vpack.c.b16 %v4339, %v4338
  %v5448 = vpack.c.b16 %v4341, %v4340
  %v5449 = vpack.c.b16 %v4343, %v4342
  %v5450 = vpack.c.b16 %v4345, %v4344
  %v5451 = vpack.c.b16 %v4347, %v4346
  %v5452 = vpack.c.b16 %v4349, %v4348
  %v5453 = vpack.c.b16 %v4351, %v4350
  %v5454 = vpack.c.b16 %v4353, %v4352
  %v5455 = vpack.c.b16 %v4355, %v4354
  %v5456 = vpack.c.b16 %v4357, %v4356
  %v5457 = vpack.c.b16 %v4359, %v4358
  %v5458 = vpack.c.b16 %v4361, %v4360
  %v5459 = vpack.c.b16 %v4363, %v4362
  %v5460 = vpack.c.b16 %v4365, %v4364
  %v5461 = vpack.c.b16 %v4367, %v4366
  %v5462 = vpack.c.b16 %v4369, %v4368
  %v5463 = vpack.c.b16 %v4371, %v4370
  %v5464 = vpack.c.b16 %v4373, %v4372
  %v5465 = vpack.c.b16 %v4375, %v4374
  %v5466 = vpack.c.b16 %v4377, %v4376
  %v5467 = vpack.c.b16 %v4379, %v4378
  %v5468 = vpack.c.b16 %v4381, %v4380
  %v5469 = vpack.c.b16 %v4383, %v4382
  %v5470 = vpack.c.b16 %v4385, %v4384
  %v5471 = vpack.c.b16 %v4387, %v4386
  %v5472 = vpack.c.b16 %v4389, %v4388
  %v5473 = vpack.c.b16 %v4391, %v4390
  %v5474 = vpack.c.b16 %v4393, %v4392
  %v5475 = vpack.c.b16 %v4395, %v4394
  %v5476 = vpack.c.b16 %v4397, %v4396
  %v5477 = vpack.c.b16 %v4399, %v4398
  %v5478 = vpack.c.b16 %v4401, %v4400
  %v5479 = vpack.c.b16 %v4403, %v4402
  %v5480 = vpack.c.b16 %v4405, %v4404
  %v5481 = vpack.c.b16 %v4407, %v4406
  %v5482 = vpack.c.b16 %v4409, %v4408
  %v5483 = vpack.c.b16 %v4411, %v4410
  %v5484 = vpack.c.b16 %v4413, %v4412
  %v5485 = vpack.c.b16 %v4415, %v4414
  %v5486 = vpack.c.b16 %v4417, %v4416
  %v5487 = vpack.c.b16 %v4419, %v4418
  %v5488 = vpack.c.b16 %v4421, %v4420
  %v5489 = vpack.c.b16 %v4423, %v4422
  %v5490 = vpack.c.b16 %v4425, %v4424
  %v5491 = vpack.c.b16 %v4427, %v4426
  %v5492 = vpack.c.b16 %v4429, %v4428
  %v5493 = vpack.c.b16 %v4431, %v4430
  %v5494 = vpack.c.b16 %v4433, %v4432
  %v5495 = vpack.c.b16 %v4435, %v4434
  %v5496 = vpack.c.b16 %v4437, %v4436
  %v5497 = vpack.c.b16 %v4439, %v4438
  %v5498 = vpack.c.b16 %v4441, %v4440
  %v5499 = vpack.c.b16 %v4443, %v4442
  %v5500 = vpack.c.b16 %v4445, %v4444
  %v5501 = vpack.c.b16 %v4447, %v4446
  %v5502 = vpack.c.b16 %v4449, %v4448
  %v5503 = vpack.c.b16 %v4451, %v4450
  %v5504 = vpack.c.b16 %v4453, %v4452
  %v5505 = vpack.c.b16 %v4455, %v4454
  %v5506 = vpack.c.b16 %v4457, %v4456
  %v5507 = vpack.c.b16 %v4459, %v4458
  %v5508 = vpack.c.b16 %v4461, %v4460
  %v5509 = vpack.c.b16 %v4463, %v4462
  %v5510 = vpack.c.b16 %v4465, %v4464
  %v5511 = vpack.c.b16 %v4467, %v4466
  %v5512 = vpack.c.b16 %v4469, %v4468
  %v5513 = vpack.c.b16 %v4471, %v4470
  %v5514 = vpack.c.b16 %v4473, %v4472
  %v5515 = vpack.c.b16 %v4475, %v4474
  %v5516 = vpack.c.b16 %v4477, %v4476
  %v5517 = vpack.c.b16 %v4479, %v4478
  %v5518 = vpack.c.b16 %v4481, %v4480
  %v5519 = vpack.c.b16 %v4483, %v4482
  %v5520 = vpack.c.b16 %v4485, %v4484
  %v5521 = vpack.c.b16 %v4487, %v4486
  %v5522 = vpack.c.b16 %v4489, %v4488
  %v5523 = vpack.c.b16 %v4491, %v4490
  %v5524 = vpack.c.b16 %v4493, %v4492
  %v5525 = vpack.c.b16 %v4495, %v4494
  %v5526 = vpack.c.b16 %v4497, %v4496
  %v5527 = vpack.c.b16 %v4499, %v4498
  %v5528 = vpack.c.b16 %v4501, %v4500
  %v5529 = vpack.c.b16 %v4503, %v4502
  %v5530 = vpack.c.b16 %v4505, %v4504
  %v5531 = vpack.c.b16 %v4507, %v4506
  %v5532 = vpack.c.b16 %v4509, %v4508
  %v5533 = vpack.c.b16 %v4511, %v4510
  %v5534 = vpack.c.b16 %v4513, %v4512
  %v5535 = vpack.c.b16 %v4515, %v4514
  %v5536 = vpack.c.b16 %v4517, %v4516
  %v5537 = vpack.c.b16 %v4519, %v4518
  %v5538 = vpack.c.b16 %v4521, %v4520
  %v5539 = vpack.c.b16 %v4523, %v4522
  %v5540 = vpack.c.b16 %v4525, %v4524
  %v5541 = vpack.c.b16 %v4527, %v4526
  %v5542 = vpack.c.b16 %v4529, %v4528
  %v5543 = vpack.c.b16 %v4531, %v4530
  %v5544 = vpack.c.b16 %v4533, %v4532
  %v5545 = vpack.c.b16 %v4535, %v4534
  %v5546 = vpack.c.b16 %v4537, %v4536
  %v5547 = vpack.c.b16 %v4539, %v4538
  %v5548 = vpack.c.b16 %v4541, %v4540
  %v5549 = vpack.c.b16 %v4543, %v4542
  %v5550 = vpack.c.b16 %v4545, %v4544
  %v5551 = vpack.c.b16 %v4547, %v4546
  %v5552 = vpack.c.b16 %v4549, %v4548
  %v5553 = vpack.c.b16 %v4551, %v4550
  %v5554 = vpack.c.b16 %v4553, %v4552
  %v5555 = vpack.c.b16 %v4555, %v4554
  %v5556 = vpack.c.b16 %v4557, %v4556
  %v5557 = vpack.c.b16 %v4559, %v4558
  %v5558 = vpack.c.b16 %v4561, %v4560
  %v5559 = vpack.c.b16 %v4563, %v4562
  %v5560 = vpack.c.b16 %v4565, %v4564
  %v5561 = vpack.c.b16 %v4567, %v4566
  %v5562 = vpack.c.b16 %v4569, %v4568
  %v5563 = vpack.c.b16 %v4571, %v4570
  %v5564 = vpack.c.b16 %v4573, %v4572
  %v5565 = vpack.c.b16 %v4575, %v4574
  %v5566 = vpack.c.b16 %v4577, %v4576
  %v5567 = vpack.c.b16 %v4579, %v4578
  %v5568 = vpack.c.b16 %v4581, %v4580
  %v5569 = vpack.c.b16 %v4583, %v4582
  %v5570 = vpack.c.b16 %v4585, %v4584
  %v5571 = vpack.c.b16 %v4587, %v4586
  %v5572 = vpack.c.b16 %v4589, %v4588
  %v5573 = vpack.c.b16 %v4591, %v4590
  %v5574 = vpack.c.b16 %v4593, %v4592
  %v5575 = vpack.c.b16 %v4595, %v4594
  %v5576 = vpack.c.b16 %v4597, %v4596
  %v5577 = vpack.c.b16 %v4599, %v4598
  %v5578 = vpack.c.b16 %v4601, %v4600
  %v5579 = vpack.c.b16 %v4603, %v4602
  %v5580 = vpack.c.b16 %v4605, %v4604
  %v5581 = vpack.c.b16 %v4607, %v4606
  %v5582 = vpack.c.b16 %v4609, %v4608
  %v5583 = vpack.c.b16 %v4611, %v4610
  %v5584 = vpack.c.b16 %v4613, %v4612
  %v5585 = vpack.c.b16 %v4615, %v4614
  %v5586 = vpack.c.b16 %v4617, %v4616
  %v5587 = vpack.c.b16 %v4619, %v4618
  %v5588 = vpack.c.b16 %v4621, %v4620
  %v5589 = vpack.c.b16 %v4623, %v4622
  %v5590 = vpack.c.b16 %v4625, %v4624
  %v5591 = vpack.c.b16 %v4627, %v4626
  %v5592 = vpack.c.b16 %v4629, %v4628
  %v5593 = vpack.c.b16 %v4631, %v4630
  %v5594 = vpack.c.b16 %v4633, %v4632
  %v5595 = vpack.c.b16 %v4635, %v4634
  %v5596 = vpack.c.b16 %v4637, %v4636
  %v5597 = vpack.c.b16 %v4639, %v4638
  %v5598 = vpack.c.b16 %v4641, %v4640
  %v5599 = vpack.c.b16 %v4643, %v4642
  %v5600 = vpack.c.b16 %v4645, %v4644
  %v5601 = vpack.c.b16 %v4647, %v4646
  %v5602 = vpack.c.b16 %v4649, %v4648
  %v5603 = vpack.c.b16 %v4651, %v4650
  %v5604 = vpack.c.b16 %v4653, %v4652
  %v5605 = vpack.c.b16 %v4655, %v4654
  %v5606 = vpack.c.b16 %v4657, %v4656
  %v5607 = vpack.c.b16 %v4659, %v4658
  %v5608 = vpack.c.b16 %v4661, %v4660
  %v5609 = vpack.c.b16 %v4663, %v4662
  %v5610 = vpack.c.b16 %v4665, %v4664
  %v5611 = vpack.c.b16 %v4667, %v4666
  %v5612 = vpack.c.b16 %v4669, %v4668
  %v5613 = vpack.c.b16 %v4671, %v4670
  %v5614 = vpack.c.b16 %v4673, %v4672
  %v5615 = vpack.c.b16 %v4675, %v4674
  %v5616 = vpack.c.b16 %v4677, %v4676
  %v5617 = vpack.c.b16 %v4679, %v4678
  %v5618 = vpack.c.b16 %v4681, %v4680
  %v5619 = vpack.c.b16 %v4683, %v4682
  %v5620 = vpack.c.b16 %v4685, %v4684
  %v5621 = vpack.c.b16 %v4687, %v4686
  %v5622 = vpack.c.b16 %v4689, %v4688
  %v5623 = vpack.c.b16 %v4691, %v4690
  %v5624 = vpack.c.b16 %v4693, %v4692
  %v5625 = vpack.c.b16 %v4695, %v4694
  %v5626 = vpack.c.b16 %v4697, %v4696
  %v5627 = vpack.c.b16 %v4699, %v4698
  %v5628 = vpack.c.b16 %v4701, %v4700
  %v5629 = vpack.c.b16 %v4703, %v4702
  %v5630 = vpack.c.b16 %v4705, %v4704
  %v5631 = vpack.c.b16 %v4707, %v4706
  %v5632 = vpack.c.b16 %v4709, %v4708
  %v5633 = vpack.c.b16 %v4711, %v4710
  %v5634 = vpack.c.b16 %v4713, %v4712
  %v5635 = vpack.c.b16 %v4715, %v4714
  %v5636 = vpack.c.b16 %v4717, %v4716
  %v5637 = vpack.c.b16 %v4719, %v4718
  %v5638 = vpack.c.b16 %v4721, %v4720
  %v5639 = vpack.c.b16 %v4723, %v4722
  %v5640 = vpack.c.b16 %v4725, %v4724
  %v5641 = vpack.c.b16 %v4727, %v4726
  %v5642 = vpack.c.b16 %v4729, %v4728
  %v5643 = vpack.c.b16 %v4731, %v4730
  %v5644 = vpack.c.b16 %v4733, %v4732
  %v5645 = vpack.c.b16 %v4735, %v4734
  %v5646 = vpack.c.b16 %v4737, %v4736
  %v5647 = vpack.c.b16 %v4739, %v4738
  %v5648 = vpack.c.b16 %v4741, %v4740
  %v5649 = vpack.c.b16 %v4743, %v4742
  %v5650 = vpack.c.b16 %v4745, %v4744
  %v5651 = vpack.c.b16 %v4747, %v4746
  %v5652 = vpack.c.b16 %v4749, %v4748
  %v5653 = vpack.c.b16 %v4751, %v4750
  %v5654 = vpack.c.b16 %v4753, %v4752
  %v5655 = vpack.c.b16 %v4755, %v4754
  %v5656 = vpack.c.b16 %v4757, %v4756
  %v5657 = vpack.c.b16 %v4759, %v4758
  %v5658 = vpack.c.b16 %v4761, %v4760
  %v5659 = vpack.c.b16 %v4763, %v4762
  %v5660 = vpack.c.b16 %v4765, %v4764
  %v5661 = vpack.c.b16 %v4767, %v4766
  %v5662 = vpack.c.b16 %v4769, %v4768
  %v5663 = vpack.c.b16 %v4771, %v4770
  %v5664 = vpack.c.b16 %v4773, %v4772
  %v5665 = vpack.c.b16 %v4775, %v4774
  %v5666 = vpack.c.b16 %v4777, %v4776
  %v5667 = vpack.c.b16 %v4779, %v4778
  %v5668 = vpack.c.b16 %v4781, %v4780
  %v5669 = vpack.c.b16 %v4783, %v4782
  %v5670 = vpack.c.b16 %v4785, %v4784
  %v5671 = vpack.c.b16 %v4787, %v4786
  %v5672 = vpack.c.b16 %v4789, %v4788
  %v5673 = vpack.c.b16 %v4791, %v4790
  %v5674 = vpack.c.b16 %v4793, %v4792
  %v5675 = vpack.c.b16 %v4795, %v4794
  %v5676 = vpack.c.b16 %v4797, %v4796
  %v5677 = vpack.c.b16 %v4799, %v4798
  %v5678 = vpack.c.b16 %v4801, %v4800
  %v5679 = vpack.c.b16 %v4803, %v4802
  %v5680 = vpack.c.b16 %v4805, %v4804
  %v5681 = vpack.c.b16 %v4807, %v4806
  %v5682 = vpack.c.b16 %v4809, %v4808
  %v5683 = vpack.c.b16 %v4811, %v4810
  %v5684 = vpack.c.b16 %v4813, %v4812
  %v5685 = vpack.c.b16 %v4815, %v4814
  %v5686 = vpack.c.b16 %v4817, %v4816
  %v5687 = vpack.c.b16 %v4819, %v4818
  %v5688 = vpack.c.b16 %v4821, %v4820
  %v5689 = vpack.c.b16 %v4823, %v4822
  %v5690 = vpack.c.b16 %v4825, %v4824
  %v5691 = vpack.c.b16 %v4827, %v4826
  %v5692 = vpack.c.b16 %v4829, %v4828
  %v5693 = vpack.c.b16 %v4831, %v4830
  %v5694 = vpack.c.b16 %v4833, %v4832
  %v5695 = vpack.c.b16 %v4835, %v4834
  %v5696 = vpack.c.b16 %v4837, %v4836
  %v5697 = vpack.c.b16 %v4839, %v4838
  %v5698 = vpack.c.b16 %v4841, %v4840
  %v5699 = vpack.c.b16 %v4843, %v4842
  %v5700 = vpack.c.b16 %v4845, %v4844
  %v5701 = vpack.c.b16 %v4847, %v4846
  %v5702 = vpack.c.b16 %v4849, %v4848
  %v5703 = vpack.c.b16 %v4851, %v4850
  %v5704 = vpack.c.b16 %v4853, %v4852
  %v5705 = vpack.c.b16 %v4855, %v4854
  %v5706 = vpack.c.b16 %v4857, %v4856
  %v5707 = vpack.c.b16 %v4859, %v4858
  %v5708 = vpack.c.b16 %v4861, %v4860
  %v5709 = vpack.c.b16 %v4863, %v4862
  %v5710 = vpack.c.b16 %v4865, %v4864
  %v5711 = vpack.c.b16 %v4867, %v4866
  %v5712 = vpack.c.b16 %v4869, %v4868
  %v5713 = vpack.c.b16 %v4871, %v4870
  %v5714 = vpack.c.b16 %v4873, %v4872
  %v5715 = vpack.c.b16 %v4875, %v4874
  %v5716 = vpack.c.b16 %v4877, %v4876
  %v5717 = vpack.c.b16 %v4879, %v4878
  %v5718 = vpack.c.b16 %v4881, %v4880
  %v5719 = vpack.c.b16 %v4883, %v4882
  %v5720 = vpack.c.b16 %v4885, %v4884
  %v5721 = vpack.c.b16 %v4887, %v4886
  %v5722 = vpack.c.b16 %v4889, %v4888
  %v5723 = vpack.c.b16 %v4891, %v4890
  %v5724 = vpack.c.b16 %v4893, %v4892
  %v5725 = vpack.c.b16 %v4895, %v4894
  %v5726 = vpack.c.b16 %v4897, %v4896
  %v5727 = vpack.c.b16 %v4899, %v4898
  %v5728 = vpack.c.b16 %v4901, %v4900
  %v5729 = vpack.c.b16 %v4903, %v4902
  %v5730 = vpack.c.b16 %v4905, %v4904
  %v5731 = vpack.c.b16 %v4907, %v4906
  %v5732 = vpack.c.b16 %v4909, %v4908
  %v5733 = vpack.c.b16 %v4911, %v4910
  %v5734 = vpack.c.b16 %v4913, %v4912
  %v5735 = vpack.c.b16 %v4915, %v4914
  %v5736 = vpack.c.b16 %v4917, %v4916
  %v5737 = vpack.c.b16 %v4919, %v4918
  %v5738 = vpack.c.b16 %v4921, %v4920
  %v5739 = vpack.c.b16 %v4923, %v4922
  %v5740 = vpack.c.b16 %v4925, %v4924
  %v5741 = vpack.c.b16 %v4927, %v4926
  %v5742 = vpack.c.b16 %v4929, %v4928
  %v5743 = vpack.c.b16 %v4931, %v4930
  %v5744 = vpack.c.b16 %v4933, %v4932
  %v5745 = vpack.c.b16 %v4935, %v4934
  %v5746 = vpack.c.b16 %v4937, %v4936
  %v5747 = vpack.c.b16 %v4939, %v4938
  %v5748 = vpack.c.b16 %v4941, %v4940
  %v5749 = vpack.c.b16 %v4943, %v4942
  %v5750 = vpack.c.b16 %v4945, %v4944
  %v5751 = vpack.c.b16 %v4947, %v4946
  %v5752 = vpack.c.b16 %v4949, %v4948
  %v5753 = vpack.c.b16 %v4951, %v4950
  %v5754 = vpack.c.b16 %v4953, %v4952
  %v5755 = vpack.c.b16 %v4955, %v4954
  %v5756 = vpack.c.b16 %v4957, %v4956
  %v5757 = vpack.c.b16 %v4959, %v4958
  %v5758 = vpack.c.b16 %v4961, %v4960
  %v5759 = vpack.c.b16 %v4963, %v4962
  %v5760 = vpack.c.b16 %v4965, %v4964
  %v5761 = vpack.c.b16 %v4967, %v4966
  %v5762 = vpack.c.b16 %v4969, %v4968
  %v5763 = vpack.c.b16 %v4971, %v4970
  %v5764 = vpack.c.b16 %v4973, %v4972
  %v5765 = vpack.c.b16 %v4975, %v4974
  %v5766 = vpack.c.b16 %v4977, %v4976
  %v5767 = vpack.c.b16 %v4979, %v4978
  %v5768 = vpack.c.b16 %v4981, %v4980
  %v5769 = vpack.c.b16 %v4983, %v4982
  %v5770 = vpack.c.b16 %v4985, %v4984
  %v5771 = vpack.c.b16 %v4987, %v4986
  %v5772 = vpack.c.b16 %v4989, %v4988
  %v5773 = vpack.c.b16 %v4991, %v4990
  %v5774 = vpack.c.b16 %v4993, %v4992
  %v5775 = vpack.c.b16 %v4995, %v4994
  %v5776 = vpack.c.b16 %v4997, %v4996
  %v5777 = vpack.c.b16 %v4999, %v4998
  %v5778 = vpack.c.b16 %v5001, %v5000
  %v5779 = vpack.c.b16 %v5003, %v5002
  %v5780 = vpack.c.b16 %v5005, %v5004
  %v5781 = vpack.c.b16 %v5007, %v5006
  %v5782 = vpack.c.b16 %v5009, %v5008
  %v5783 = vpack.c.b16 %v5011, %v5010
  %v5784 = vpack.c.b16 %v5013, %v5012
  %v5785 = vpack.c.b16 %v5015, %v5014
  %v5786 = vpack.c.b16 %v5017, %v5016
  %v5787 = vpack.c.b16 %v5019, %v5018
  %6556 = vmatprep.subr.bf16.mxu0 0
  %6557 = vmatpush1.bf16.msra.mxu0 %v5027
  %6558 = vmatprep.subr.bf16.mxu0 0
  %6559 = vmatpush1.bf16.msra.mxu0 %v5026
  %6560 = vmatprep.subr.bf16.mxu0 0
  %6561 = vmatpush1.bf16.msra.mxu0 %v5025
  %6562 = vmatprep.subr.bf16.mxu0 0
  %6563 = vmatpush1.bf16.msra.mxu0 %v5024
  %6564 = vmatprep.subr.bf16.mxu0 0
  %6565 = vmatpush1.bf16.msra.mxu0 %v5023
  %6566 = vmatprep.subr.bf16.mxu0 0
  %6567 = vmatpush1.bf16.msra.mxu0 %v5022
  %6568 = vmatprep.subr.bf16.mxu0 0
  %6569 = vmatpush1.bf16.msra.mxu0 %v5021
  %6570 = vmatprep.subr.bf16.mxu0 0
  %6571 = vmatpush1.bf16.msra.mxu0 %v5020
  %6572 = vmatprep.subr.bf16.mxu0 0
  %6573 = vmatpush2.bf16.msra.mxu0 %v5035
  %6574 = vmatprep.subr.bf16.mxu0 0
  %6575 = vmatpush2.bf16.msra.mxu0 %v5034
  %6576 = vmatprep.subr.bf16.mxu0 0
  %6577 = vmatpush2.bf16.msra.mxu0 %v5033
  %6578 = vmatprep.subr.bf16.mxu0 0
  %6579 = vmatpush2.bf16.msra.mxu0 %v5032
  %6580 = vmatprep.subr.bf16.mxu0 0
  %6581 = vmatpush2.bf16.msra.mxu0 %v5031
  %6582 = vmatprep.subr.bf16.mxu0 0
  %6583 = vmatpush2.bf16.msra.mxu0 %v5030
  %6584 = vmatprep.subr.bf16.mxu0 0
  %6585 = vmatpush2.bf16.msra.mxu0 %v5029
  %6586 = vmatprep.subr.bf16.mxu0 0
  %6587 = vmatpush2.bf16.msra.mxu0 %v5028
  %6588 = vmatprep.mubr.bf16.mxu0 %v1757
  %6589 = vmatmul.mubr.bf16.gmra.mxu0 %v1756
  %v6590 = vpop.f32.mrf.mxu0
  %v6591 = vadd.f32 %v1610, %v6590
  %v6592 = vpop.f32.mrf.mxu0
  %v6593 = vpop.f32.mrf.mxu0
  %v6594 = vpop.f32.mrf.mxu0
  %6595 = vdwg.mxu0
  %6596 = vmatprep.subr.bf16.mxu0 0
  %6597 = vmatpush1.bf16.msra.mxu0 %v5043
  %6598 = vmatprep.subr.bf16.mxu0 0
  %6599 = vmatpush1.bf16.msra.mxu0 %v5042
  %6600 = vmatprep.subr.bf16.mxu0 0
  %6601 = vmatpush1.bf16.msra.mxu0 %v5041
  %6602 = vmatprep.subr.bf16.mxu0 0
  %6603 = vmatpush1.bf16.msra.mxu0 %v5040
  %6604 = vmatprep.subr.bf16.mxu0 0
  %6605 = vmatpush1.bf16.msra.mxu0 %v5039
  %6606 = vmatprep.subr.bf16.mxu0 0
  %6607 = vmatpush1.bf16.msra.mxu0 %v5038
  %6608 = vmatprep.subr.bf16.mxu0 0
  %6609 = vmatpush1.bf16.msra.mxu0 %v5037
  %6610 = vmatprep.subr.bf16.mxu0 0
  %6611 = vmatpush1.bf16.msra.mxu0 %v5036
  %6612 = vmatprep.subr.bf16.mxu0 0
  %6613 = vmatpush2.bf16.msra.mxu0 %v5051
  %6614 = vmatprep.subr.bf16.mxu0 0
  %6615 = vmatpush2.bf16.msra.mxu0 %v5050
  %6616 = vmatprep.subr.bf16.mxu0 0
  %6617 = vmatpush2.bf16.msra.mxu0 %v5049
  %6618 = vmatprep.subr.bf16.mxu0 0
  %6619 = vmatpush2.bf16.msra.mxu0 %v5048
  %6620 = vmatprep.subr.bf16.mxu0 0
  %6621 = vmatpush2.bf16.msra.mxu0 %v5047
  %6622 = vmatprep.subr.bf16.mxu0 0
  %6623 = vmatpush2.bf16.msra.mxu0 %v5046
  %6624 = vmatprep.subr.bf16.mxu0 0
  %6625 = vmatpush2.bf16.msra.mxu0 %v5045
  %6626 = vmatprep.subr.bf16.mxu0 0
  %6627 = vmatpush2.bf16.msra.mxu0 %v5044
  %6628 = vmatprep.mubr.bf16.mxu0 %v1759
  %6629 = vmatmul.mubr.bf16.gmra.mxu0 %v1758
  %v6630 = vpop.f32.mrf.mxu0
  %v6631 = vadd.f32 %v6591, %v6630
  %v6632 = vpop.f32.mrf.mxu0
  %v6633 = vpop.f32.mrf.mxu0
  %v6634 = vpop.f32.mrf.mxu0
  %6635 = vdwg.mxu0
  %6636 = vmatprep.subr.bf16.mxu0 0
  %6637 = vmatpush1.bf16.msra.mxu0 %v5059
  %6638 = vmatprep.subr.bf16.mxu0 0
  %6639 = vmatpush1.bf16.msra.mxu0 %v5058
  %6640 = vmatprep.subr.bf16.mxu0 0
  %6641 = vmatpush1.bf16.msra.mxu0 %v5057
  %6642 = vmatprep.subr.bf16.mxu0 0
  %6643 = vmatpush1.bf16.msra.mxu0 %v5056
  %6644 = vmatprep.subr.bf16.mxu0 0
  %6645 = vmatpush1.bf16.msra.mxu0 %v5055
  %6646 = vmatprep.subr.bf16.mxu0 0
  %6647 = vmatpush1.bf16.msra.mxu0 %v5054
  %6648 = vmatprep.subr.bf16.mxu0 0
  %6649 = vmatpush1.bf16.msra.mxu0 %v5053
  %6650 = vmatprep.subr.bf16.mxu0 0
  %6651 = vmatpush1.bf16.msra.mxu0 %v5052
  %6652 = vmatprep.subr.bf16.mxu0 0
  %6653 = vmatpush2.bf16.msra.mxu0 %v5067
  %6654 = vmatprep.subr.bf16.mxu0 0
  %6655 = vmatpush2.bf16.msra.mxu0 %v5066
  %6656 = vmatprep.subr.bf16.mxu0 0
  %6657 = vmatpush2.bf16.msra.mxu0 %v5065
  %6658 = vmatprep.subr.bf16.mxu0 0
  %6659 = vmatpush2.bf16.msra.mxu0 %v5064
  %6660 = vmatprep.subr.bf16.mxu0 0
  %6661 = vmatpush2.bf16.msra.mxu0 %v5063
  %6662 = vmatprep.subr.bf16.mxu0 0
  %6663 = vmatpush2.bf16.msra.mxu0 %v5062
  %6664 = vmatprep.subr.bf16.mxu0 0
  %6665 = vmatpush2.bf16.msra.mxu0 %v5061
  %6666 = vmatprep.subr.bf16.mxu0 0
  %6667 = vmatpush2.bf16.msra.mxu0 %v5060
  %6668 = vmatprep.mubr.bf16.mxu0 %v1761
  %6669 = vmatmul.mubr.bf16.gmra.mxu0 %v1760
  %v6670 = vpop.f32.mrf.mxu0
  %v6671 = vadd.f32 %v6631, %v6670
  %v6672 = vpop.f32.mrf.mxu0
  %v6673 = vpop.f32.mrf.mxu0
  %v6674 = vpop.f32.mrf.mxu0
  %6675 = vdwg.mxu0
  %6676 = vmatprep.subr.bf16.mxu0 0
  %6677 = vmatpush1.bf16.msra.mxu0 %v5075
  %6678 = vmatprep.subr.bf16.mxu0 0
  %6679 = vmatpush1.bf16.msra.mxu0 %v5074
  %6680 = vmatprep.subr.bf16.mxu0 0
  %6681 = vmatpush1.bf16.msra.mxu0 %v5073
  %6682 = vmatprep.subr.bf16.mxu0 0
  %6683 = vmatpush1.bf16.msra.mxu0 %v5072
  %6684 = vmatprep.subr.bf16.mxu0 0
  %6685 = vmatpush1.bf16.msra.mxu0 %v5071
  %6686 = vmatprep.subr.bf16.mxu0 0
  %6687 = vmatpush1.bf16.msra.mxu0 %v5070
  %6688 = vmatprep.subr.bf16.mxu0 0
  %6689 = vmatpush1.bf16.msra.mxu0 %v5069
  %6690 = vmatprep.subr.bf16.mxu0 0
  %6691 = vmatpush1.bf16.msra.mxu0 %v5068
  %6692 = vmatprep.subr.bf16.mxu0 0
  %6693 = vmatpush2.bf16.msra.mxu0 %v5083
  %6694 = vmatprep.subr.bf16.mxu0 0
  %6695 = vmatpush2.bf16.msra.mxu0 %v5082
  %6696 = vmatprep.subr.bf16.mxu0 0
  %6697 = vmatpush2.bf16.msra.mxu0 %v5081
  %6698 = vmatprep.subr.bf16.mxu0 0
  %6699 = vmatpush2.bf16.msra.mxu0 %v5080
  %6700 = vmatprep.subr.bf16.mxu0 0
  %6701 = vmatpush2.bf16.msra.mxu0 %v5079
  %6702 = vmatprep.subr.bf16.mxu0 0
  %6703 = vmatpush2.bf16.msra.mxu0 %v5078
  %6704 = vmatprep.subr.bf16.mxu0 0
  %6705 = vmatpush2.bf16.msra.mxu0 %v5077
  %6706 = vmatprep.subr.bf16.mxu0 0
  %6707 = vmatpush2.bf16.msra.mxu0 %v5076
  %6708 = vmatprep.mubr.bf16.mxu0 %v1763
  %6709 = vmatmul.mubr.bf16.gmra.mxu0 %v1762
  %v6710 = vpop.f32.mrf.mxu0
  %v6711 = vadd.f32 %v6671, %v6710
  %v6712 = vpop.f32.mrf.mxu0
  %v6713 = vpop.f32.mrf.mxu0
  %v6714 = vpop.f32.mrf.mxu0
  %6715 = vdwg.mxu0
  %6716 = vmatprep.subr.bf16.mxu0 0
  %6717 = vmatpush1.bf16.msra.mxu0 %v5091
  %6718 = vmatprep.subr.bf16.mxu0 0
  %6719 = vmatpush1.bf16.msra.mxu0 %v5090
  %6720 = vmatprep.subr.bf16.mxu0 0
  %6721 = vmatpush1.bf16.msra.mxu0 %v5089
  %6722 = vmatprep.subr.bf16.mxu0 0
  %6723 = vmatpush1.bf16.msra.mxu0 %v5088
  %6724 = vmatprep.subr.bf16.mxu0 0
  %6725 = vmatpush1.bf16.msra.mxu0 %v5087
  %6726 = vmatprep.subr.bf16.mxu0 0
  %6727 = vmatpush1.bf16.msra.mxu0 %v5086
  %6728 = vmatprep.subr.bf16.mxu0 0
  %6729 = vmatpush1.bf16.msra.mxu0 %v5085
  %6730 = vmatprep.subr.bf16.mxu0 0
  %6731 = vmatpush1.bf16.msra.mxu0 %v5084
  %6732 = vmatprep.subr.bf16.mxu0 0
  %6733 = vmatpush2.bf16.msra.mxu0 %v5099
  %6734 = vmatprep.subr.bf16.mxu0 0
  %6735 = vmatpush2.bf16.msra.mxu0 %v5098
  %6736 = vmatprep.subr.bf16.mxu0 0
  %6737 = vmatpush2.bf16.msra.mxu0 %v5097
  %6738 = vmatprep.subr.bf16.mxu0 0
  %6739 = vmatpush2.bf16.msra.mxu0 %v5096
  %6740 = vmatprep.subr.bf16.mxu0 0
  %6741 = vmatpush2.bf16.msra.mxu0 %v5095
  %6742 = vmatprep.subr.bf16.mxu0 0
  %6743 = vmatpush2.bf16.msra.mxu0 %v5094
  %6744 = vmatprep.subr.bf16.mxu0 0
  %6745 = vmatpush2.bf16.msra.mxu0 %v5093
  %6746 = vmatprep.subr.bf16.mxu0 0
  %6747 = vmatpush2.bf16.msra.mxu0 %v5092
  %6748 = vmatprep.mubr.bf16.mxu0 %v1765
  %6749 = vmatmul.mubr.bf16.gmra.mxu0 %v1764
  %v6750 = vpop.f32.mrf.mxu0
  %v6751 = vadd.f32 %v6711, %v6750
  %v6752 = vpop.f32.mrf.mxu0
  %v6753 = vpop.f32.mrf.mxu0
  %v6754 = vpop.f32.mrf.mxu0
  %6755 = vdwg.mxu0
  %6756 = vmatprep.subr.bf16.mxu0 0
  %6757 = vmatpush1.bf16.msra.mxu0 %v5107
  %6758 = vmatprep.subr.bf16.mxu0 0
  %6759 = vmatpush1.bf16.msra.mxu0 %v5106
  %6760 = vmatprep.subr.bf16.mxu0 0
  %6761 = vmatpush1.bf16.msra.mxu0 %v5105
  %6762 = vmatprep.subr.bf16.mxu0 0
  %6763 = vmatpush1.bf16.msra.mxu0 %v5104
  %6764 = vmatprep.subr.bf16.mxu0 0
  %6765 = vmatpush1.bf16.msra.mxu0 %v5103
  %6766 = vmatprep.subr.bf16.mxu0 0
  %6767 = vmatpush1.bf16.msra.mxu0 %v5102
  %6768 = vmatprep.subr.bf16.mxu0 0
  %6769 = vmatpush1.bf16.msra.mxu0 %v5101
  %6770 = vmatprep.subr.bf16.mxu0 0
  %6771 = vmatpush1.bf16.msra.mxu0 %v5100
  %6772 = vmatprep.subr.bf16.mxu0 0
  %6773 = vmatpush2.bf16.msra.mxu0 %v5115
  %6774 = vmatprep.subr.bf16.mxu0 0
  %6775 = vmatpush2.bf16.msra.mxu0 %v5114
  %6776 = vmatprep.subr.bf16.mxu0 0
  %6777 = vmatpush2.bf16.msra.mxu0 %v5113
  %6778 = vmatprep.subr.bf16.mxu0 0
  %6779 = vmatpush2.bf16.msra.mxu0 %v5112
  %6780 = vmatprep.subr.bf16.mxu0 0
  %6781 = vmatpush2.bf16.msra.mxu0 %v5111
  %6782 = vmatprep.subr.bf16.mxu0 0
  %6783 = vmatpush2.bf16.msra.mxu0 %v5110
  %6784 = vmatprep.subr.bf16.mxu0 0
  %6785 = vmatpush2.bf16.msra.mxu0 %v5109
  %6786 = vmatprep.subr.bf16.mxu0 0
  %6787 = vmatpush2.bf16.msra.mxu0 %v5108
  %6788 = vmatprep.mubr.bf16.mxu0 %v1767
  %6789 = vmatmul.mubr.bf16.gmra.mxu0 %v1766
  %v6790 = vpop.f32.mrf.mxu0
  %v6791 = vadd.f32 %v6751, %v6790
  %v6792 = vpop.f32.mrf.mxu0
  %v6793 = vpop.f32.mrf.mxu0
  %v6794 = vpop.f32.mrf.mxu0
  %6795 = vdwg.mxu0
  %6796 = vmatprep.subr.bf16.mxu0 0
  %6797 = vmatpush1.bf16.msra.mxu0 %v5123
  %6798 = vmatprep.subr.bf16.mxu0 0
  %6799 = vmatpush1.bf16.msra.mxu0 %v5122
  %6800 = vmatprep.subr.bf16.mxu0 0
  %6801 = vmatpush1.bf16.msra.mxu0 %v5121
  %6802 = vmatprep.subr.bf16.mxu0 0
  %6803 = vmatpush1.bf16.msra.mxu0 %v5120
  %6804 = vmatprep.subr.bf16.mxu0 0
  %6805 = vmatpush1.bf16.msra.mxu0 %v5119
  %6806 = vmatprep.subr.bf16.mxu0 0
  %6807 = vmatpush1.bf16.msra.mxu0 %v5118
  %6808 = vmatprep.subr.bf16.mxu0 0
  %6809 = vmatpush1.bf16.msra.mxu0 %v5117
  %6810 = vmatprep.subr.bf16.mxu0 0
  %6811 = vmatpush1.bf16.msra.mxu0 %v5116
  %6812 = vmatprep.subr.bf16.mxu0 0
  %6813 = vmatpush2.bf16.msra.mxu0 %v5131
  %6814 = vmatprep.subr.bf16.mxu0 0
  %6815 = vmatpush2.bf16.msra.mxu0 %v5130
  %6816 = vmatprep.subr.bf16.mxu0 0
  %6817 = vmatpush2.bf16.msra.mxu0 %v5129
  %6818 = vmatprep.subr.bf16.mxu0 0
  %6819 = vmatpush2.bf16.msra.mxu0 %v5128
  %6820 = vmatprep.subr.bf16.mxu0 0
  %6821 = vmatpush2.bf16.msra.mxu0 %v5127
  %6822 = vmatprep.subr.bf16.mxu0 0
  %6823 = vmatpush2.bf16.msra.mxu0 %v5126
  %6824 = vmatprep.subr.bf16.mxu0 0
  %6825 = vmatpush2.bf16.msra.mxu0 %v5125
  %6826 = vmatprep.subr.bf16.mxu0 0
  %6827 = vmatpush2.bf16.msra.mxu0 %v5124
  %6828 = vmatprep.mubr.bf16.mxu0 %v1769
  %6829 = vmatmul.mubr.bf16.gmra.mxu0 %v1768
  %v6830 = vpop.f32.mrf.mxu0
  %v6831 = vadd.f32 %v6791, %v6830
  %v6832 = vpop.f32.mrf.mxu0
  %v6833 = vpop.f32.mrf.mxu0
  %v6834 = vpop.f32.mrf.mxu0
  %6835 = vdwg.mxu0
  %6836 = vmatprep.subr.bf16.mxu0 0
  %6837 = vmatpush1.bf16.msra.mxu0 %v5139
  %6838 = vmatprep.subr.bf16.mxu0 0
  %6839 = vmatpush1.bf16.msra.mxu0 %v5138
  %6840 = vmatprep.subr.bf16.mxu0 0
  %6841 = vmatpush1.bf16.msra.mxu0 %v5137
  %6842 = vmatprep.subr.bf16.mxu0 0
  %6843 = vmatpush1.bf16.msra.mxu0 %v5136
  %6844 = vmatprep.subr.bf16.mxu0 0
  %6845 = vmatpush1.bf16.msra.mxu0 %v5135
  %6846 = vmatprep.subr.bf16.mxu0 0
  %6847 = vmatpush1.bf16.msra.mxu0 %v5134
  %6848 = vmatprep.subr.bf16.mxu0 0
  %6849 = vmatpush1.bf16.msra.mxu0 %v5133
  %6850 = vmatprep.subr.bf16.mxu0 0
  %6851 = vmatpush1.bf16.msra.mxu0 %v5132
  %6852 = vmatprep.subr.bf16.mxu0 0
  %6853 = vmatpush2.bf16.msra.mxu0 %v5147
  %6854 = vmatprep.subr.bf16.mxu0 0
  %6855 = vmatpush2.bf16.msra.mxu0 %v5146
  %6856 = vmatprep.subr.bf16.mxu0 0
  %6857 = vmatpush2.bf16.msra.mxu0 %v5145
  %6858 = vmatprep.subr.bf16.mxu0 0
  %6859 = vmatpush2.bf16.msra.mxu0 %v5144
  %6860 = vmatprep.subr.bf16.mxu0 0
  %6861 = vmatpush2.bf16.msra.mxu0 %v5143
  %6862 = vmatprep.subr.bf16.mxu0 0
  %6863 = vmatpush2.bf16.msra.mxu0 %v5142
  %6864 = vmatprep.subr.bf16.mxu0 0
  %6865 = vmatpush2.bf16.msra.mxu0 %v5141
  %6866 = vmatprep.subr.bf16.mxu0 0
  %6867 = vmatpush2.bf16.msra.mxu0 %v5140
  %6868 = vmatprep.mubr.bf16.mxu0 %v1771
  %6869 = vmatmul.mubr.bf16.gmra.mxu0 %v1770
  %v6870 = vpop.f32.mrf.mxu0
  %v6871 = vadd.f32 %v6831, %v6870
  %v6872 = vpop.f32.mrf.mxu0
  %v6873 = vpop.f32.mrf.mxu0
  %v6874 = vpop.f32.mrf.mxu0
  %6875 = vdwg.mxu0
  %6876 = vmatprep.subr.bf16.mxu0 0
  %6877 = vmatpush1.bf16.msra.mxu0 %v5155
  %6878 = vmatprep.subr.bf16.mxu0 0
  %6879 = vmatpush1.bf16.msra.mxu0 %v5154
  %6880 = vmatprep.subr.bf16.mxu0 0
  %6881 = vmatpush1.bf16.msra.mxu0 %v5153
  %6882 = vmatprep.subr.bf16.mxu0 0
  %6883 = vmatpush1.bf16.msra.mxu0 %v5152
  %6884 = vmatprep.subr.bf16.mxu0 0
  %6885 = vmatpush1.bf16.msra.mxu0 %v5151
  %6886 = vmatprep.subr.bf16.mxu0 0
  %6887 = vmatpush1.bf16.msra.mxu0 %v5150
  %6888 = vmatprep.subr.bf16.mxu0 0
  %6889 = vmatpush1.bf16.msra.mxu0 %v5149
  %6890 = vmatprep.subr.bf16.mxu0 0
  %6891 = vmatpush1.bf16.msra.mxu0 %v5148
  %6892 = vmatprep.subr.bf16.mxu0 0
  %6893 = vmatpush2.bf16.msra.mxu0 %v5163
  %6894 = vmatprep.subr.bf16.mxu0 0
  %6895 = vmatpush2.bf16.msra.mxu0 %v5162
  %6896 = vmatprep.subr.bf16.mxu0 0
  %6897 = vmatpush2.bf16.msra.mxu0 %v5161
  %6898 = vmatprep.subr.bf16.mxu0 0
  %6899 = vmatpush2.bf16.msra.mxu0 %v5160
  %6900 = vmatprep.subr.bf16.mxu0 0
  %6901 = vmatpush2.bf16.msra.mxu0 %v5159
  %6902 = vmatprep.subr.bf16.mxu0 0
  %6903 = vmatpush2.bf16.msra.mxu0 %v5158
  %6904 = vmatprep.subr.bf16.mxu0 0
  %6905 = vmatpush2.bf16.msra.mxu0 %v5157
  %6906 = vmatprep.subr.bf16.mxu0 0
  %6907 = vmatpush2.bf16.msra.mxu0 %v5156
  %6908 = vmatprep.mubr.bf16.mxu0 %v1773
  %6909 = vmatmul.mubr.bf16.gmra.mxu0 %v1772
  %v6910 = vpop.f32.mrf.mxu0
  %v6911 = vadd.f32 %v6871, %v6910
  %v6912 = vpop.f32.mrf.mxu0
  %v6913 = vpop.f32.mrf.mxu0
  %v6914 = vpop.f32.mrf.mxu0
  %6915 = vdwg.mxu0
  %6916 = vmatprep.subr.bf16.mxu0 0
  %6917 = vmatpush1.bf16.msra.mxu0 %v5171
  %6918 = vmatprep.subr.bf16.mxu0 0
  %6919 = vmatpush1.bf16.msra.mxu0 %v5170
  %6920 = vmatprep.subr.bf16.mxu0 0
  %6921 = vmatpush1.bf16.msra.mxu0 %v5169
  %6922 = vmatprep.subr.bf16.mxu0 0
  %6923 = vmatpush1.bf16.msra.mxu0 %v5168
  %6924 = vmatprep.subr.bf16.mxu0 0
  %6925 = vmatpush1.bf16.msra.mxu0 %v5167
  %6926 = vmatprep.subr.bf16.mxu0 0
  %6927 = vmatpush1.bf16.msra.mxu0 %v5166
  %6928 = vmatprep.subr.bf16.mxu0 0
  %6929 = vmatpush1.bf16.msra.mxu0 %v5165
  %6930 = vmatprep.subr.bf16.mxu0 0
  %6931 = vmatpush1.bf16.msra.mxu0 %v5164
  %6932 = vmatprep.subr.bf16.mxu0 0
  %6933 = vmatpush2.bf16.msra.mxu0 %v5179
  %6934 = vmatprep.subr.bf16.mxu0 0
  %6935 = vmatpush2.bf16.msra.mxu0 %v5178
  %6936 = vmatprep.subr.bf16.mxu0 0
  %6937 = vmatpush2.bf16.msra.mxu0 %v5177
  %6938 = vmatprep.subr.bf16.mxu0 0
  %6939 = vmatpush2.bf16.msra.mxu0 %v5176
  %6940 = vmatprep.subr.bf16.mxu0 0
  %6941 = vmatpush2.bf16.msra.mxu0 %v5175
  %6942 = vmatprep.subr.bf16.mxu0 0
  %6943 = vmatpush2.bf16.msra.mxu0 %v5174
  %6944 = vmatprep.subr.bf16.mxu0 0
  %6945 = vmatpush2.bf16.msra.mxu0 %v5173
  %6946 = vmatprep.subr.bf16.mxu0 0
  %6947 = vmatpush2.bf16.msra.mxu0 %v5172
  %6948 = vmatprep.mubr.bf16.mxu0 %v1775
  %6949 = vmatmul.mubr.bf16.gmra.mxu0 %v1774
  %v6950 = vpop.f32.mrf.mxu0
  %v6951 = vadd.f32 %v6911, %v6950
  %v6952 = vpop.f32.mrf.mxu0
  %v6953 = vpop.f32.mrf.mxu0
  %v6954 = vpop.f32.mrf.mxu0
  %6955 = vdwg.mxu0
  %6956 = vmatprep.subr.bf16.mxu0 0
  %6957 = vmatpush1.bf16.msra.mxu0 %v5187
  %6958 = vmatprep.subr.bf16.mxu0 0
  %6959 = vmatpush1.bf16.msra.mxu0 %v5186
  %6960 = vmatprep.subr.bf16.mxu0 0
  %6961 = vmatpush1.bf16.msra.mxu0 %v5185
  %6962 = vmatprep.subr.bf16.mxu0 0
  %6963 = vmatpush1.bf16.msra.mxu0 %v5184
  %6964 = vmatprep.subr.bf16.mxu0 0
  %6965 = vmatpush1.bf16.msra.mxu0 %v5183
  %6966 = vmatprep.subr.bf16.mxu0 0
  %6967 = vmatpush1.bf16.msra.mxu0 %v5182
  %6968 = vmatprep.subr.bf16.mxu0 0
  %6969 = vmatpush1.bf16.msra.mxu0 %v5181
  %6970 = vmatprep.subr.bf16.mxu0 0
  %6971 = vmatpush1.bf16.msra.mxu0 %v5180
  %6972 = vmatprep.subr.bf16.mxu0 0
  %6973 = vmatpush2.bf16.msra.mxu0 %v5195
  %6974 = vmatprep.subr.bf16.mxu0 0
  %6975 = vmatpush2.bf16.msra.mxu0 %v5194
  %6976 = vmatprep.subr.bf16.mxu0 0
  %6977 = vmatpush2.bf16.msra.mxu0 %v5193
  %6978 = vmatprep.subr.bf16.mxu0 0
  %6979 = vmatpush2.bf16.msra.mxu0 %v5192
  %6980 = vmatprep.subr.bf16.mxu0 0
  %6981 = vmatpush2.bf16.msra.mxu0 %v5191
  %6982 = vmatprep.subr.bf16.mxu0 0
  %6983 = vmatpush2.bf16.msra.mxu0 %v5190
  %6984 = vmatprep.subr.bf16.mxu0 0
  %6985 = vmatpush2.bf16.msra.mxu0 %v5189
  %6986 = vmatprep.subr.bf16.mxu0 0
  %6987 = vmatpush2.bf16.msra.mxu0 %v5188
  %6988 = vmatprep.mubr.bf16.mxu0 %v1777
  %6989 = vmatmul.mubr.bf16.gmra.mxu0 %v1776
  %v6990 = vpop.f32.mrf.mxu0
  %v6991 = vadd.f32 %v6951, %v6990
  %v6992 = vpop.f32.mrf.mxu0
  %v6993 = vpop.f32.mrf.mxu0
  %v6994 = vpop.f32.mrf.mxu0
  %6995 = vdwg.mxu0
  %6996 = vmatprep.subr.bf16.mxu0 0
  %6997 = vmatpush1.bf16.msra.mxu0 %v5203
  %6998 = vmatprep.subr.bf16.mxu0 0
  %6999 = vmatpush1.bf16.msra.mxu0 %v5202
  %7000 = vmatprep.subr.bf16.mxu0 0
  %7001 = vmatpush1.bf16.msra.mxu0 %v5201
  %7002 = vmatprep.subr.bf16.mxu0 0
  %7003 = vmatpush1.bf16.msra.mxu0 %v5200
  %7004 = vmatprep.subr.bf16.mxu0 0
  %7005 = vmatpush1.bf16.msra.mxu0 %v5199
  %7006 = vmatprep.subr.bf16.mxu0 0
  %7007 = vmatpush1.bf16.msra.mxu0 %v5198
  %7008 = vmatprep.subr.bf16.mxu0 0
  %7009 = vmatpush1.bf16.msra.mxu0 %v5197
  %7010 = vmatprep.subr.bf16.mxu0 0
  %7011 = vmatpush1.bf16.msra.mxu0 %v5196
  %7012 = vmatprep.subr.bf16.mxu0 0
  %7013 = vmatpush2.bf16.msra.mxu0 %v5211
  %7014 = vmatprep.subr.bf16.mxu0 0
  %7015 = vmatpush2.bf16.msra.mxu0 %v5210
  %7016 = vmatprep.subr.bf16.mxu0 0
  %7017 = vmatpush2.bf16.msra.mxu0 %v5209
  %7018 = vmatprep.subr.bf16.mxu0 0
  %7019 = vmatpush2.bf16.msra.mxu0 %v5208
  %7020 = vmatprep.subr.bf16.mxu0 0
  %7021 = vmatpush2.bf16.msra.mxu0 %v5207
  %7022 = vmatprep.subr.bf16.mxu0 0
  %7023 = vmatpush2.bf16.msra.mxu0 %v5206
  %7024 = vmatprep.subr.bf16.mxu0 0
  %7025 = vmatpush2.bf16.msra.mxu0 %v5205
  %7026 = vmatprep.subr.bf16.mxu0 0
  %7027 = vmatpush2.bf16.msra.mxu0 %v5204
  %7028 = vmatprep.mubr.bf16.mxu0 %v1779
  %7029 = vmatmul.mubr.bf16.gmra.mxu0 %v1778
  %v7030 = vpop.f32.mrf.mxu0
  %v7031 = vadd.f32 %v6991, %v7030
  %v7032 = vpop.f32.mrf.mxu0
  %v7033 = vpop.f32.mrf.mxu0
  %v7034 = vpop.f32.mrf.mxu0
  %7035 = vdwg.mxu0
  %7036 = vmatprep.subr.bf16.mxu0 0
  %7037 = vmatpush1.bf16.msra.mxu0 %v5219
  %7038 = vmatprep.subr.bf16.mxu0 0
  %7039 = vmatpush1.bf16.msra.mxu0 %v5218
  %7040 = vmatprep.subr.bf16.mxu0 0
  %7041 = vmatpush1.bf16.msra.mxu0 %v5217
  %7042 = vmatprep.subr.bf16.mxu0 0
  %7043 = vmatpush1.bf16.msra.mxu0 %v5216
  %7044 = vmatprep.subr.bf16.mxu0 0
  %7045 = vmatpush1.bf16.msra.mxu0 %v5215
  %7046 = vmatprep.subr.bf16.mxu0 0
  %7047 = vmatpush1.bf16.msra.mxu0 %v5214
  %7048 = vmatprep.subr.bf16.mxu0 0
  %7049 = vmatpush1.bf16.msra.mxu0 %v5213
  %7050 = vmatprep.subr.bf16.mxu0 0
  %7051 = vmatpush1.bf16.msra.mxu0 %v5212
  %7052 = vmatprep.subr.bf16.mxu0 0
  %7053 = vmatpush2.bf16.msra.mxu0 %v5227
  %7054 = vmatprep.subr.bf16.mxu0 0
  %7055 = vmatpush2.bf16.msra.mxu0 %v5226
  %7056 = vmatprep.subr.bf16.mxu0 0
  %7057 = vmatpush2.bf16.msra.mxu0 %v5225
  %7058 = vmatprep.subr.bf16.mxu0 0
  %7059 = vmatpush2.bf16.msra.mxu0 %v5224
  %7060 = vmatprep.subr.bf16.mxu0 0
  %7061 = vmatpush2.bf16.msra.mxu0 %v5223
  %7062 = vmatprep.subr.bf16.mxu0 0
  %7063 = vmatpush2.bf16.msra.mxu0 %v5222
  %7064 = vmatprep.subr.bf16.mxu0 0
  %7065 = vmatpush2.bf16.msra.mxu0 %v5221
  %7066 = vmatprep.subr.bf16.mxu0 0
  %7067 = vmatpush2.bf16.msra.mxu0 %v5220
  %7068 = vmatprep.mubr.bf16.mxu0 %v1781
  %7069 = vmatmul.mubr.bf16.gmra.mxu0 %v1780
  %v7070 = vpop.f32.mrf.mxu0
  %v7071 = vadd.f32 %v7031, %v7070
  %v7072 = vpop.f32.mrf.mxu0
  %v7073 = vpop.f32.mrf.mxu0
  %v7074 = vpop.f32.mrf.mxu0
  %7075 = vdwg.mxu0
  %7076 = vmatprep.subr.bf16.mxu0 0
  %7077 = vmatpush1.bf16.msra.mxu0 %v5235
  %7078 = vmatprep.subr.bf16.mxu0 0
  %7079 = vmatpush1.bf16.msra.mxu0 %v5234
  %7080 = vmatprep.subr.bf16.mxu0 0
  %7081 = vmatpush1.bf16.msra.mxu0 %v5233
  %7082 = vmatprep.subr.bf16.mxu0 0
  %7083 = vmatpush1.bf16.msra.mxu0 %v5232
  %7084 = vmatprep.subr.bf16.mxu0 0
  %7085 = vmatpush1.bf16.msra.mxu0 %v5231
  %7086 = vmatprep.subr.bf16.mxu0 0
  %7087 = vmatpush1.bf16.msra.mxu0 %v5230
  %7088 = vmatprep.subr.bf16.mxu0 0
  %7089 = vmatpush1.bf16.msra.mxu0 %v5229
  %7090 = vmatprep.subr.bf16.mxu0 0
  %7091 = vmatpush1.bf16.msra.mxu0 %v5228
  %7092 = vmatprep.subr.bf16.mxu0 0
  %7093 = vmatpush2.bf16.msra.mxu0 %v5243
  %7094 = vmatprep.subr.bf16.mxu0 0
  %7095 = vmatpush2.bf16.msra.mxu0 %v5242
  %7096 = vmatprep.subr.bf16.mxu0 0
  %7097 = vmatpush2.bf16.msra.mxu0 %v5241
  %7098 = vmatprep.subr.bf16.mxu0 0
  %7099 = vmatpush2.bf16.msra.mxu0 %v5240
  %7100 = vmatprep.subr.bf16.mxu0 0
  %7101 = vmatpush2.bf16.msra.mxu0 %v5239
  %7102 = vmatprep.subr.bf16.mxu0 0
  %7103 = vmatpush2.bf16.msra.mxu0 %v5238
  %7104 = vmatprep.subr.bf16.mxu0 0
  %7105 = vmatpush2.bf16.msra.mxu0 %v5237
  %7106 = vmatprep.subr.bf16.mxu0 0
  %7107 = vmatpush2.bf16.msra.mxu0 %v5236
  %7108 = vmatprep.mubr.bf16.mxu0 %v1783
  %7109 = vmatmul.mubr.bf16.gmra.mxu0 %v1782
  %v7110 = vpop.f32.mrf.mxu0
  %v7111 = vadd.f32 %v7071, %v7110
  %v7112 = vpop.f32.mrf.mxu0
  %v7113 = vpop.f32.mrf.mxu0
  %v7114 = vpop.f32.mrf.mxu0
  %7115 = vdwg.mxu0
  %7116 = vmatprep.subr.bf16.mxu0 0
  %7117 = vmatpush1.bf16.msra.mxu0 %v5251
  %7118 = vmatprep.subr.bf16.mxu0 0
  %7119 = vmatpush1.bf16.msra.mxu0 %v5250
  %7120 = vmatprep.subr.bf16.mxu0 0
  %7121 = vmatpush1.bf16.msra.mxu0 %v5249
  %7122 = vmatprep.subr.bf16.mxu0 0
  %7123 = vmatpush1.bf16.msra.mxu0 %v5248
  %7124 = vmatprep.subr.bf16.mxu0 0
  %7125 = vmatpush1.bf16.msra.mxu0 %v5247
  %7126 = vmatprep.subr.bf16.mxu0 0
  %7127 = vmatpush1.bf16.msra.mxu0 %v5246
  %7128 = vmatprep.subr.bf16.mxu0 0
  %7129 = vmatpush1.bf16.msra.mxu0 %v5245
  %7130 = vmatprep.subr.bf16.mxu0 0
  %7131 = vmatpush1.bf16.msra.mxu0 %v5244
  %7132 = vmatprep.subr.bf16.mxu0 0
  %7133 = vmatpush2.bf16.msra.mxu0 %v5259
  %7134 = vmatprep.subr.bf16.mxu0 0
  %7135 = vmatpush2.bf16.msra.mxu0 %v5258
  %7136 = vmatprep.subr.bf16.mxu0 0
  %7137 = vmatpush2.bf16.msra.mxu0 %v5257
  %7138 = vmatprep.subr.bf16.mxu0 0
  %7139 = vmatpush2.bf16.msra.mxu0 %v5256
  %7140 = vmatprep.subr.bf16.mxu0 0
  %7141 = vmatpush2.bf16.msra.mxu0 %v5255
  %7142 = vmatprep.subr.bf16.mxu0 0
  %7143 = vmatpush2.bf16.msra.mxu0 %v5254
  %7144 = vmatprep.subr.bf16.mxu0 0
  %7145 = vmatpush2.bf16.msra.mxu0 %v5253
  %7146 = vmatprep.subr.bf16.mxu0 0
  %7147 = vmatpush2.bf16.msra.mxu0 %v5252
  %7148 = vmatprep.mubr.bf16.mxu0 %v1785
  %7149 = vmatmul.mubr.bf16.gmra.mxu0 %v1784
  %v7150 = vpop.f32.mrf.mxu0
  %v7151 = vadd.f32 %v7111, %v7150
  %v7152 = vpop.f32.mrf.mxu0
  %v7153 = vpop.f32.mrf.mxu0
  %v7154 = vpop.f32.mrf.mxu0
  %7155 = vdwg.mxu0
  %7156 = vmatprep.subr.bf16.mxu0 0
  %7157 = vmatpush1.bf16.msra.mxu0 %v5267
  %7158 = vmatprep.subr.bf16.mxu0 0
  %7159 = vmatpush1.bf16.msra.mxu0 %v5266
  %7160 = vmatprep.subr.bf16.mxu0 0
  %7161 = vmatpush1.bf16.msra.mxu0 %v5265
  %7162 = vmatprep.subr.bf16.mxu0 0
  %7163 = vmatpush1.bf16.msra.mxu0 %v5264
  %7164 = vmatprep.subr.bf16.mxu0 0
  %7165 = vmatpush1.bf16.msra.mxu0 %v5263
  %7166 = vmatprep.subr.bf16.mxu0 0
  %7167 = vmatpush1.bf16.msra.mxu0 %v5262
  %7168 = vmatprep.subr.bf16.mxu0 0
  %7169 = vmatpush1.bf16.msra.mxu0 %v5261
  %7170 = vmatprep.subr.bf16.mxu0 0
  %7171 = vmatpush1.bf16.msra.mxu0 %v5260
  %7172 = vmatprep.subr.bf16.mxu0 0
  %7173 = vmatpush2.bf16.msra.mxu0 %v5275
  %7174 = vmatprep.subr.bf16.mxu0 0
  %7175 = vmatpush2.bf16.msra.mxu0 %v5274
  %7176 = vmatprep.subr.bf16.mxu0 0
  %7177 = vmatpush2.bf16.msra.mxu0 %v5273
  %7178 = vmatprep.subr.bf16.mxu0 0
  %7179 = vmatpush2.bf16.msra.mxu0 %v5272
  %7180 = vmatprep.subr.bf16.mxu0 0
  %7181 = vmatpush2.bf16.msra.mxu0 %v5271
  %7182 = vmatprep.subr.bf16.mxu0 0
  %7183 = vmatpush2.bf16.msra.mxu0 %v5270
  %7184 = vmatprep.subr.bf16.mxu0 0
  %7185 = vmatpush2.bf16.msra.mxu0 %v5269
  %7186 = vmatprep.subr.bf16.mxu0 0
  %7187 = vmatpush2.bf16.msra.mxu0 %v5268
  %7188 = vmatprep.mubr.bf16.mxu0 %v1787
  %7189 = vmatmul.mubr.bf16.gmra.mxu0 %v1786
  %v7190 = vpop.f32.mrf.mxu0
  %v7191 = vadd.f32 %v7151, %v7190
  %v7192 = vpop.f32.mrf.mxu0
  %v7193 = vpop.f32.mrf.mxu0
  %v7194 = vpop.f32.mrf.mxu0
  %7195 = vdwg.mxu0
  %7196 = vmatprep.subr.bf16.mxu0 0
  %7197 = vmatpush1.bf16.msra.mxu0 %v5283
  %7198 = vmatprep.subr.bf16.mxu0 0
  %7199 = vmatpush1.bf16.msra.mxu0 %v5282
  %7200 = vmatprep.subr.bf16.mxu0 0
  %7201 = vmatpush1.bf16.msra.mxu0 %v5281
  %7202 = vmatprep.subr.bf16.mxu0 0
  %7203 = vmatpush1.bf16.msra.mxu0 %v5280
  %7204 = vmatprep.subr.bf16.mxu0 0
  %7205 = vmatpush1.bf16.msra.mxu0 %v5279
  %7206 = vmatprep.subr.bf16.mxu0 0
  %7207 = vmatpush1.bf16.msra.mxu0 %v5278
  %7208 = vmatprep.subr.bf16.mxu0 0
  %7209 = vmatpush1.bf16.msra.mxu0 %v5277
  %7210 = vmatprep.subr.bf16.mxu0 0
  %7211 = vmatpush1.bf16.msra.mxu0 %v5276
  %7212 = vmatprep.subr.bf16.mxu0 0
  %7213 = vmatpush2.bf16.msra.mxu0 %v5291
  %7214 = vmatprep.subr.bf16.mxu0 0
  %7215 = vmatpush2.bf16.msra.mxu0 %v5290
  %7216 = vmatprep.subr.bf16.mxu0 0
  %7217 = vmatpush2.bf16.msra.mxu0 %v5289
  %7218 = vmatprep.subr.bf16.mxu0 0
  %7219 = vmatpush2.bf16.msra.mxu0 %v5288
  %7220 = vmatprep.subr.bf16.mxu0 0
  %7221 = vmatpush2.bf16.msra.mxu0 %v5287
  %7222 = vmatprep.subr.bf16.mxu0 0
  %7223 = vmatpush2.bf16.msra.mxu0 %v5286
  %7224 = vmatprep.subr.bf16.mxu0 0
  %7225 = vmatpush2.bf16.msra.mxu0 %v5285
  %7226 = vmatprep.subr.bf16.mxu0 0
  %7227 = vmatpush2.bf16.msra.mxu0 %v5284
  %7228 = vmatprep.mubr.bf16.mxu0 %v1789
  %7229 = vmatmul.mubr.bf16.gmra.mxu0 %v1788
  %v7230 = vpop.f32.mrf.mxu0
  %v7231 = vadd.f32 %v7191, %v7230
  %v7232 = vpop.f32.mrf.mxu0
  %v7233 = vpop.f32.mrf.mxu0
  %v7234 = vpop.f32.mrf.mxu0
  %7235 = vdwg.mxu0
  %7236 = vmatprep.subr.bf16.mxu0 0
  %7237 = vmatpush1.bf16.msra.mxu0 %v5299
  %7238 = vmatprep.subr.bf16.mxu0 0
  %7239 = vmatpush1.bf16.msra.mxu0 %v5298
  %7240 = vmatprep.subr.bf16.mxu0 0
  %7241 = vmatpush1.bf16.msra.mxu0 %v5297
  %7242 = vmatprep.subr.bf16.mxu0 0
  %7243 = vmatpush1.bf16.msra.mxu0 %v5296
  %7244 = vmatprep.subr.bf16.mxu0 0
  %7245 = vmatpush1.bf16.msra.mxu0 %v5295
  %7246 = vmatprep.subr.bf16.mxu0 0
  %7247 = vmatpush1.bf16.msra.mxu0 %v5294
  %7248 = vmatprep.subr.bf16.mxu0 0
  %7249 = vmatpush1.bf16.msra.mxu0 %v5293
  %7250 = vmatprep.subr.bf16.mxu0 0
  %7251 = vmatpush1.bf16.msra.mxu0 %v5292
  %7252 = vmatprep.subr.bf16.mxu0 0
  %7253 = vmatpush2.bf16.msra.mxu0 %v5307
  %7254 = vmatprep.subr.bf16.mxu0 0
  %7255 = vmatpush2.bf16.msra.mxu0 %v5306
  %7256 = vmatprep.subr.bf16.mxu0 0
  %7257 = vmatpush2.bf16.msra.mxu0 %v5305
  %7258 = vmatprep.subr.bf16.mxu0 0
  %7259 = vmatpush2.bf16.msra.mxu0 %v5304
  %7260 = vmatprep.subr.bf16.mxu0 0
  %7261 = vmatpush2.bf16.msra.mxu0 %v5303
  %7262 = vmatprep.subr.bf16.mxu0 0
  %7263 = vmatpush2.bf16.msra.mxu0 %v5302
  %7264 = vmatprep.subr.bf16.mxu0 0
  %7265 = vmatpush2.bf16.msra.mxu0 %v5301
  %7266 = vmatprep.subr.bf16.mxu0 0
  %7267 = vmatpush2.bf16.msra.mxu0 %v5300
  %7268 = vmatprep.mubr.bf16.mxu0 %v1791
  %7269 = vmatmul.mubr.bf16.gmra.mxu0 %v1790
  %v7270 = vpop.f32.mrf.mxu0
  %v7271 = vadd.f32 %v7231, %v7270
  %v7272 = vpop.f32.mrf.mxu0
  %v7273 = vpop.f32.mrf.mxu0
  %v7274 = vpop.f32.mrf.mxu0
  %7275 = vdwg.mxu0
  %7276 = vmatprep.subr.bf16.mxu0 0
  %7277 = vmatpush1.bf16.msra.mxu0 %v5315
  %7278 = vmatprep.subr.bf16.mxu0 0
  %7279 = vmatpush1.bf16.msra.mxu0 %v5314
  %7280 = vmatprep.subr.bf16.mxu0 0
  %7281 = vmatpush1.bf16.msra.mxu0 %v5313
  %7282 = vmatprep.subr.bf16.mxu0 0
  %7283 = vmatpush1.bf16.msra.mxu0 %v5312
  %7284 = vmatprep.subr.bf16.mxu0 0
  %7285 = vmatpush1.bf16.msra.mxu0 %v5311
  %7286 = vmatprep.subr.bf16.mxu0 0
  %7287 = vmatpush1.bf16.msra.mxu0 %v5310
  %7288 = vmatprep.subr.bf16.mxu0 0
  %7289 = vmatpush1.bf16.msra.mxu0 %v5309
  %7290 = vmatprep.subr.bf16.mxu0 0
  %7291 = vmatpush1.bf16.msra.mxu0 %v5308
  %7292 = vmatprep.subr.bf16.mxu0 0
  %7293 = vmatpush2.bf16.msra.mxu0 %v5323
  %7294 = vmatprep.subr.bf16.mxu0 0
  %7295 = vmatpush2.bf16.msra.mxu0 %v5322
  %7296 = vmatprep.subr.bf16.mxu0 0
  %7297 = vmatpush2.bf16.msra.mxu0 %v5321
  %7298 = vmatprep.subr.bf16.mxu0 0
  %7299 = vmatpush2.bf16.msra.mxu0 %v5320
  %7300 = vmatprep.subr.bf16.mxu0 0
  %7301 = vmatpush2.bf16.msra.mxu0 %v5319
  %7302 = vmatprep.subr.bf16.mxu0 0
  %7303 = vmatpush2.bf16.msra.mxu0 %v5318
  %7304 = vmatprep.subr.bf16.mxu0 0
  %7305 = vmatpush2.bf16.msra.mxu0 %v5317
  %7306 = vmatprep.subr.bf16.mxu0 0
  %7307 = vmatpush2.bf16.msra.mxu0 %v5316
  %7308 = vmatprep.mubr.bf16.mxu0 %v1793
  %7309 = vmatmul.mubr.bf16.gmra.mxu0 %v1792
  %v7310 = vpop.f32.mrf.mxu0
  %v7311 = vadd.f32 %v7271, %v7310
  %v7312 = vpop.f32.mrf.mxu0
  %v7313 = vpop.f32.mrf.mxu0
  %v7314 = vpop.f32.mrf.mxu0
  %7315 = vdwg.mxu0
  %7316 = vmatprep.subr.bf16.mxu0 0
  %7317 = vmatpush1.bf16.msra.mxu0 %v5331
  %7318 = vmatprep.subr.bf16.mxu0 0
  %7319 = vmatpush1.bf16.msra.mxu0 %v5330
  %7320 = vmatprep.subr.bf16.mxu0 0
  %7321 = vmatpush1.bf16.msra.mxu0 %v5329
  %7322 = vmatprep.subr.bf16.mxu0 0
  %7323 = vmatpush1.bf16.msra.mxu0 %v5328
  %7324 = vmatprep.subr.bf16.mxu0 0
  %7325 = vmatpush1.bf16.msra.mxu0 %v5327
  %7326 = vmatprep.subr.bf16.mxu0 0
  %7327 = vmatpush1.bf16.msra.mxu0 %v5326
  %7328 = vmatprep.subr.bf16.mxu0 0
  %7329 = vmatpush1.bf16.msra.mxu0 %v5325
  %7330 = vmatprep.subr.bf16.mxu0 0
  %7331 = vmatpush1.bf16.msra.mxu0 %v5324
  %7332 = vmatprep.subr.bf16.mxu0 0
  %7333 = vmatpush2.bf16.msra.mxu0 %v5339
  %7334 = vmatprep.subr.bf16.mxu0 0
  %7335 = vmatpush2.bf16.msra.mxu0 %v5338
  %7336 = vmatprep.subr.bf16.mxu0 0
  %7337 = vmatpush2.bf16.msra.mxu0 %v5337
  %7338 = vmatprep.subr.bf16.mxu0 0
  %7339 = vmatpush2.bf16.msra.mxu0 %v5336
  %7340 = vmatprep.subr.bf16.mxu0 0
  %7341 = vmatpush2.bf16.msra.mxu0 %v5335
  %7342 = vmatprep.subr.bf16.mxu0 0
  %7343 = vmatpush2.bf16.msra.mxu0 %v5334
  %7344 = vmatprep.subr.bf16.mxu0 0
  %7345 = vmatpush2.bf16.msra.mxu0 %v5333
  %7346 = vmatprep.subr.bf16.mxu0 0
  %7347 = vmatpush2.bf16.msra.mxu0 %v5332
  %7348 = vmatprep.mubr.bf16.mxu0 %v1795
  %7349 = vmatmul.mubr.bf16.gmra.mxu0 %v1794
  %v7350 = vpop.f32.mrf.mxu0
  %v7351 = vadd.f32 %v7311, %v7350
  %v7352 = vpop.f32.mrf.mxu0
  %v7353 = vpop.f32.mrf.mxu0
  %v7354 = vpop.f32.mrf.mxu0
  %7355 = vdwg.mxu0
  %7356 = vmatprep.subr.bf16.mxu0 0
  %7357 = vmatpush1.bf16.msra.mxu0 %v5347
  %7358 = vmatprep.subr.bf16.mxu0 0
  %7359 = vmatpush1.bf16.msra.mxu0 %v5346
  %7360 = vmatprep.subr.bf16.mxu0 0
  %7361 = vmatpush1.bf16.msra.mxu0 %v5345
  %7362 = vmatprep.subr.bf16.mxu0 0
  %7363 = vmatpush1.bf16.msra.mxu0 %v5344
  %7364 = vmatprep.subr.bf16.mxu0 0
  %7365 = vmatpush1.bf16.msra.mxu0 %v5343
  %7366 = vmatprep.subr.bf16.mxu0 0
  %7367 = vmatpush1.bf16.msra.mxu0 %v5342
  %7368 = vmatprep.subr.bf16.mxu0 0
  %7369 = vmatpush1.bf16.msra.mxu0 %v5341
  %7370 = vmatprep.subr.bf16.mxu0 0
  %7371 = vmatpush1.bf16.msra.mxu0 %v5340
  %7372 = vmatprep.subr.bf16.mxu0 0
  %7373 = vmatpush2.bf16.msra.mxu0 %v5355
  %7374 = vmatprep.subr.bf16.mxu0 0
  %7375 = vmatpush2.bf16.msra.mxu0 %v5354
  %7376 = vmatprep.subr.bf16.mxu0 0
  %7377 = vmatpush2.bf16.msra.mxu0 %v5353
  %7378 = vmatprep.subr.bf16.mxu0 0
  %7379 = vmatpush2.bf16.msra.mxu0 %v5352
  %7380 = vmatprep.subr.bf16.mxu0 0
  %7381 = vmatpush2.bf16.msra.mxu0 %v5351
  %7382 = vmatprep.subr.bf16.mxu0 0
  %7383 = vmatpush2.bf16.msra.mxu0 %v5350
  %7384 = vmatprep.subr.bf16.mxu0 0
  %7385 = vmatpush2.bf16.msra.mxu0 %v5349
  %7386 = vmatprep.subr.bf16.mxu0 0
  %7387 = vmatpush2.bf16.msra.mxu0 %v5348
  %7388 = vmatprep.mubr.bf16.mxu0 %v1797
  %7389 = vmatmul.mubr.bf16.gmra.mxu0 %v1796
  %v7390 = vpop.f32.mrf.mxu0
  %v7391 = vadd.f32 %v7351, %v7390
  %v7392 = vpop.f32.mrf.mxu0
  %v7393 = vpop.f32.mrf.mxu0
  %v7394 = vpop.f32.mrf.mxu0
  %7395 = vdwg.mxu0
  %7396 = vmatprep.subr.bf16.mxu0 0
  %7397 = vmatpush1.bf16.msra.mxu0 %v5363
  %7398 = vmatprep.subr.bf16.mxu0 0
  %7399 = vmatpush1.bf16.msra.mxu0 %v5362
  %7400 = vmatprep.subr.bf16.mxu0 0
  %7401 = vmatpush1.bf16.msra.mxu0 %v5361
  %7402 = vmatprep.subr.bf16.mxu0 0
  %7403 = vmatpush1.bf16.msra.mxu0 %v5360
  %7404 = vmatprep.subr.bf16.mxu0 0
  %7405 = vmatpush1.bf16.msra.mxu0 %v5359
  %7406 = vmatprep.subr.bf16.mxu0 0
  %7407 = vmatpush1.bf16.msra.mxu0 %v5358
  %7408 = vmatprep.subr.bf16.mxu0 0
  %7409 = vmatpush1.bf16.msra.mxu0 %v5357
  %7410 = vmatprep.subr.bf16.mxu0 0
  %7411 = vmatpush1.bf16.msra.mxu0 %v5356
  %7412 = vmatprep.subr.bf16.mxu0 0
  %7413 = vmatpush2.bf16.msra.mxu0 %v5371
  %7414 = vmatprep.subr.bf16.mxu0 0
  %7415 = vmatpush2.bf16.msra.mxu0 %v5370
  %7416 = vmatprep.subr.bf16.mxu0 0
  %7417 = vmatpush2.bf16.msra.mxu0 %v5369
  %7418 = vmatprep.subr.bf16.mxu0 0
  %7419 = vmatpush2.bf16.msra.mxu0 %v5368
  %7420 = vmatprep.subr.bf16.mxu0 0
  %7421 = vmatpush2.bf16.msra.mxu0 %v5367
  %7422 = vmatprep.subr.bf16.mxu0 0
  %7423 = vmatpush2.bf16.msra.mxu0 %v5366
  %7424 = vmatprep.subr.bf16.mxu0 0
  %7425 = vmatpush2.bf16.msra.mxu0 %v5365
  %7426 = vmatprep.subr.bf16.mxu0 0
  %7427 = vmatpush2.bf16.msra.mxu0 %v5364
  %7428 = vmatprep.mubr.bf16.mxu0 %v1799
  %7429 = vmatmul.mubr.bf16.gmra.mxu0 %v1798
  %v7430 = vpop.f32.mrf.mxu0
  %v7431 = vadd.f32 %v7391, %v7430
  %v7432 = vpop.f32.mrf.mxu0
  %v7433 = vpop.f32.mrf.mxu0
  %v7434 = vpop.f32.mrf.mxu0
  %7435 = vdwg.mxu0
  %7436 = vmatprep.subr.bf16.mxu0 0
  %7437 = vmatpush1.bf16.msra.mxu0 %v5379
  %7438 = vmatprep.subr.bf16.mxu0 0
  %7439 = vmatpush1.bf16.msra.mxu0 %v5378
  %7440 = vmatprep.subr.bf16.mxu0 0
  %7441 = vmatpush1.bf16.msra.mxu0 %v5377
  %7442 = vmatprep.subr.bf16.mxu0 0
  %7443 = vmatpush1.bf16.msra.mxu0 %v5376
  %7444 = vmatprep.subr.bf16.mxu0 0
  %7445 = vmatpush1.bf16.msra.mxu0 %v5375
  %7446 = vmatprep.subr.bf16.mxu0 0
  %7447 = vmatpush1.bf16.msra.mxu0 %v5374
  %7448 = vmatprep.subr.bf16.mxu0 0
  %7449 = vmatpush1.bf16.msra.mxu0 %v5373
  %7450 = vmatprep.subr.bf16.mxu0 0
  %7451 = vmatpush1.bf16.msra.mxu0 %v5372
  %7452 = vmatprep.subr.bf16.mxu0 0
  %7453 = vmatpush2.bf16.msra.mxu0 %v5387
  %7454 = vmatprep.subr.bf16.mxu0 0
  %7455 = vmatpush2.bf16.msra.mxu0 %v5386
  %7456 = vmatprep.subr.bf16.mxu0 0
  %7457 = vmatpush2.bf16.msra.mxu0 %v5385
  %7458 = vmatprep.subr.bf16.mxu0 0
  %7459 = vmatpush2.bf16.msra.mxu0 %v5384
  %7460 = vmatprep.subr.bf16.mxu0 0
  %7461 = vmatpush2.bf16.msra.mxu0 %v5383
  %7462 = vmatprep.subr.bf16.mxu0 0
  %7463 = vmatpush2.bf16.msra.mxu0 %v5382
  %7464 = vmatprep.subr.bf16.mxu0 0
  %7465 = vmatpush2.bf16.msra.mxu0 %v5381
  %7466 = vmatprep.subr.bf16.mxu0 0
  %7467 = vmatpush2.bf16.msra.mxu0 %v5380
  %7468 = vmatprep.mubr.bf16.mxu0 %v1801
  %7469 = vmatmul.mubr.bf16.gmra.mxu0 %v1800
  %v7470 = vpop.f32.mrf.mxu0
  %v7471 = vadd.f32 %v7431, %v7470
  %v7472 = vpop.f32.mrf.mxu0
  %v7473 = vpop.f32.mrf.mxu0
  %v7474 = vpop.f32.mrf.mxu0
  %7475 = vdwg.mxu0
  %7476 = vmatprep.subr.bf16.mxu0 0
  %7477 = vmatpush1.bf16.msra.mxu0 %v5395
  %7478 = vmatprep.subr.bf16.mxu0 0
  %7479 = vmatpush1.bf16.msra.mxu0 %v5394
  %7480 = vmatprep.subr.bf16.mxu0 0
  %7481 = vmatpush1.bf16.msra.mxu0 %v5393
  %7482 = vmatprep.subr.bf16.mxu0 0
  %7483 = vmatpush1.bf16.msra.mxu0 %v5392
  %7484 = vmatprep.subr.bf16.mxu0 0
  %7485 = vmatpush1.bf16.msra.mxu0 %v5391
  %7486 = vmatprep.subr.bf16.mxu0 0
  %7487 = vmatpush1.bf16.msra.mxu0 %v5390
  %7488 = vmatprep.subr.bf16.mxu0 0
  %7489 = vmatpush1.bf16.msra.mxu0 %v5389
  %7490 = vmatprep.subr.bf16.mxu0 0
  %7491 = vmatpush1.bf16.msra.mxu0 %v5388
  %7492 = vmatprep.subr.bf16.mxu0 0
  %7493 = vmatpush2.bf16.msra.mxu0 %v5403
  %7494 = vmatprep.subr.bf16.mxu0 0
  %7495 = vmatpush2.bf16.msra.mxu0 %v5402
  %7496 = vmatprep.subr.bf16.mxu0 0
  %7497 = vmatpush2.bf16.msra.mxu0 %v5401
  %7498 = vmatprep.subr.bf16.mxu0 0
  %7499 = vmatpush2.bf16.msra.mxu0 %v5400
  %7500 = vmatprep.subr.bf16.mxu0 0
  %7501 = vmatpush2.bf16.msra.mxu0 %v5399
  %7502 = vmatprep.subr.bf16.mxu0 0
  %7503 = vmatpush2.bf16.msra.mxu0 %v5398
  %7504 = vmatprep.subr.bf16.mxu0 0
  %7505 = vmatpush2.bf16.msra.mxu0 %v5397
  %7506 = vmatprep.subr.bf16.mxu0 0
  %7507 = vmatpush2.bf16.msra.mxu0 %v5396
  %7508 = vmatprep.mubr.bf16.mxu0 %v1803
  %7509 = vmatmul.mubr.bf16.gmra.mxu0 %v1802
  %v7510 = vpop.f32.mrf.mxu0
  %v7511 = vadd.f32 %v7471, %v7510
  %v7512 = vpop.f32.mrf.mxu0
  %v7513 = vpop.f32.mrf.mxu0
  %v7514 = vpop.f32.mrf.mxu0
  %7515 = vdwg.mxu0
  %7516 = vmatprep.subr.bf16.mxu0 0
  %7517 = vmatpush1.bf16.msra.mxu0 %v5411
  %7518 = vmatprep.subr.bf16.mxu0 0
  %7519 = vmatpush1.bf16.msra.mxu0 %v5410
  %7520 = vmatprep.subr.bf16.mxu0 0
  %7521 = vmatpush1.bf16.msra.mxu0 %v5409
  %7522 = vmatprep.subr.bf16.mxu0 0
  %7523 = vmatpush1.bf16.msra.mxu0 %v5408
  %7524 = vmatprep.subr.bf16.mxu0 0
  %7525 = vmatpush1.bf16.msra.mxu0 %v5407
  %7526 = vmatprep.subr.bf16.mxu0 0
  %7527 = vmatpush1.bf16.msra.mxu0 %v5406
  %7528 = vmatprep.subr.bf16.mxu0 0
  %7529 = vmatpush1.bf16.msra.mxu0 %v5405
  %7530 = vmatprep.subr.bf16.mxu0 0
  %7531 = vmatpush1.bf16.msra.mxu0 %v5404
  %7532 = vmatprep.subr.bf16.mxu0 0
  %7533 = vmatpush2.bf16.msra.mxu0 %v5419
  %7534 = vmatprep.subr.bf16.mxu0 0
  %7535 = vmatpush2.bf16.msra.mxu0 %v5418
  %7536 = vmatprep.subr.bf16.mxu0 0
  %7537 = vmatpush2.bf16.msra.mxu0 %v5417
  %7538 = vmatprep.subr.bf16.mxu0 0
  %7539 = vmatpush2.bf16.msra.mxu0 %v5416
  %7540 = vmatprep.subr.bf16.mxu0 0
  %7541 = vmatpush2.bf16.msra.mxu0 %v5415
  %7542 = vmatprep.subr.bf16.mxu0 0
  %7543 = vmatpush2.bf16.msra.mxu0 %v5414
  %7544 = vmatprep.subr.bf16.mxu0 0
  %7545 = vmatpush2.bf16.msra.mxu0 %v5413
  %7546 = vmatprep.subr.bf16.mxu0 0
  %7547 = vmatpush2.bf16.msra.mxu0 %v5412
  %7548 = vmatprep.mubr.bf16.mxu0 %v1805
  %7549 = vmatmul.mubr.bf16.gmra.mxu0 %v1804
  %v7550 = vpop.f32.mrf.mxu0
  %v7551 = vadd.f32 %v7511, %v7550
  %v7552 = vpop.f32.mrf.mxu0
  %v7553 = vpop.f32.mrf.mxu0
  %v7554 = vpop.f32.mrf.mxu0
  %7555 = vdwg.mxu0
  %7556 = vmatprep.subr.bf16.mxu0 0
  %7557 = vmatpush1.bf16.msra.mxu0 %v5427
  %7558 = vmatprep.subr.bf16.mxu0 0
  %7559 = vmatpush1.bf16.msra.mxu0 %v5426
  %7560 = vmatprep.subr.bf16.mxu0 0
  %7561 = vmatpush1.bf16.msra.mxu0 %v5425
  %7562 = vmatprep.subr.bf16.mxu0 0
  %7563 = vmatpush1.bf16.msra.mxu0 %v5424
  %7564 = vmatprep.subr.bf16.mxu0 0
  %7565 = vmatpush1.bf16.msra.mxu0 %v5423
  %7566 = vmatprep.subr.bf16.mxu0 0
  %7567 = vmatpush1.bf16.msra.mxu0 %v5422
  %7568 = vmatprep.subr.bf16.mxu0 0
  %7569 = vmatpush1.bf16.msra.mxu0 %v5421
  %7570 = vmatprep.subr.bf16.mxu0 0
  %7571 = vmatpush1.bf16.msra.mxu0 %v5420
  %7572 = vmatprep.subr.bf16.mxu0 0
  %7573 = vmatpush2.bf16.msra.mxu0 %v5435
  %7574 = vmatprep.subr.bf16.mxu0 0
  %7575 = vmatpush2.bf16.msra.mxu0 %v5434
  %7576 = vmatprep.subr.bf16.mxu0 0
  %7577 = vmatpush2.bf16.msra.mxu0 %v5433
  %7578 = vmatprep.subr.bf16.mxu0 0
  %7579 = vmatpush2.bf16.msra.mxu0 %v5432
  %7580 = vmatprep.subr.bf16.mxu0 0
  %7581 = vmatpush2.bf16.msra.mxu0 %v5431
  %7582 = vmatprep.subr.bf16.mxu0 0
  %7583 = vmatpush2.bf16.msra.mxu0 %v5430
  %7584 = vmatprep.subr.bf16.mxu0 0
  %7585 = vmatpush2.bf16.msra.mxu0 %v5429
  %7586 = vmatprep.subr.bf16.mxu0 0
  %7587 = vmatpush2.bf16.msra.mxu0 %v5428
  %7588 = vmatprep.mubr.bf16.mxu0 %v1807
  %7589 = vmatmul.mubr.bf16.gmra.mxu0 %v1806
  %v7590 = vpop.f32.mrf.mxu0
  %v7591 = vadd.f32 %v7551, %v7590
  %v7592 = vpop.f32.mrf.mxu0
  %v7593 = vpop.f32.mrf.mxu0
  %v7594 = vpop.f32.mrf.mxu0
  %7595 = vdwg.mxu0
  %7596 = vmatprep.subr.bf16.mxu0 0
  %7597 = vmatpush1.bf16.msra.mxu0 %v5443
  %7598 = vmatprep.subr.bf16.mxu0 0
  %7599 = vmatpush1.bf16.msra.mxu0 %v5442
  %7600 = vmatprep.subr.bf16.mxu0 0
  %7601 = vmatpush1.bf16.msra.mxu0 %v5441
  %7602 = vmatprep.subr.bf16.mxu0 0
  %7603 = vmatpush1.bf16.msra.mxu0 %v5440
  %7604 = vmatprep.subr.bf16.mxu0 0
  %7605 = vmatpush1.bf16.msra.mxu0 %v5439
  %7606 = vmatprep.subr.bf16.mxu0 0
  %7607 = vmatpush1.bf16.msra.mxu0 %v5438
  %7608 = vmatprep.subr.bf16.mxu0 0
  %7609 = vmatpush1.bf16.msra.mxu0 %v5437
  %7610 = vmatprep.subr.bf16.mxu0 0
  %7611 = vmatpush1.bf16.msra.mxu0 %v5436
  %7612 = vmatprep.subr.bf16.mxu0 0
  %7613 = vmatpush2.bf16.msra.mxu0 %v5451
  %7614 = vmatprep.subr.bf16.mxu0 0
  %7615 = vmatpush2.bf16.msra.mxu0 %v5450
  %7616 = vmatprep.subr.bf16.mxu0 0
  %7617 = vmatpush2.bf16.msra.mxu0 %v5449
  %7618 = vmatprep.subr.bf16.mxu0 0
  %7619 = vmatpush2.bf16.msra.mxu0 %v5448
  %7620 = vmatprep.subr.bf16.mxu0 0
  %7621 = vmatpush2.bf16.msra.mxu0 %v5447
  %7622 = vmatprep.subr.bf16.mxu0 0
  %7623 = vmatpush2.bf16.msra.mxu0 %v5446
  %7624 = vmatprep.subr.bf16.mxu0 0
  %7625 = vmatpush2.bf16.msra.mxu0 %v5445
  %7626 = vmatprep.subr.bf16.mxu0 0
  %7627 = vmatpush2.bf16.msra.mxu0 %v5444
  %7628 = vmatprep.mubr.bf16.mxu0 %v1809
  %7629 = vmatmul.mubr.bf16.gmra.mxu0 %v1808
  %v7630 = vpop.f32.mrf.mxu0
  %v7631 = vadd.f32 %v7591, %v7630
  %v7632 = vpop.f32.mrf.mxu0
  %v7633 = vpop.f32.mrf.mxu0
  %v7634 = vpop.f32.mrf.mxu0
  %7635 = vdwg.mxu0
  %7636 = vmatprep.subr.bf16.mxu0 0
  %7637 = vmatpush1.bf16.msra.mxu0 %v5459
  %7638 = vmatprep.subr.bf16.mxu0 0
  %7639 = vmatpush1.bf16.msra.mxu0 %v5458
  %7640 = vmatprep.subr.bf16.mxu0 0
  %7641 = vmatpush1.bf16.msra.mxu0 %v5457
  %7642 = vmatprep.subr.bf16.mxu0 0
  %7643 = vmatpush1.bf16.msra.mxu0 %v5456
  %7644 = vmatprep.subr.bf16.mxu0 0
  %7645 = vmatpush1.bf16.msra.mxu0 %v5455
  %7646 = vmatprep.subr.bf16.mxu0 0
  %7647 = vmatpush1.bf16.msra.mxu0 %v5454
  %7648 = vmatprep.subr.bf16.mxu0 0
  %7649 = vmatpush1.bf16.msra.mxu0 %v5453
  %7650 = vmatprep.subr.bf16.mxu0 0
  %7651 = vmatpush1.bf16.msra.mxu0 %v5452
  %7652 = vmatprep.subr.bf16.mxu0 0
  %7653 = vmatpush2.bf16.msra.mxu0 %v5467
  %7654 = vmatprep.subr.bf16.mxu0 0
  %7655 = vmatpush2.bf16.msra.mxu0 %v5466
  %7656 = vmatprep.subr.bf16.mxu0 0
  %7657 = vmatpush2.bf16.msra.mxu0 %v5465
  %7658 = vmatprep.subr.bf16.mxu0 0
  %7659 = vmatpush2.bf16.msra.mxu0 %v5464
  %7660 = vmatprep.subr.bf16.mxu0 0
  %7661 = vmatpush2.bf16.msra.mxu0 %v5463
  %7662 = vmatprep.subr.bf16.mxu0 0
  %7663 = vmatpush2.bf16.msra.mxu0 %v5462
  %7664 = vmatprep.subr.bf16.mxu0 0
  %7665 = vmatpush2.bf16.msra.mxu0 %v5461
  %7666 = vmatprep.subr.bf16.mxu0 0
  %7667 = vmatpush2.bf16.msra.mxu0 %v5460
  %7668 = vmatprep.mubr.bf16.mxu0 %v1811
  %7669 = vmatmul.mubr.bf16.gmra.mxu0 %v1810
  %v7670 = vpop.f32.mrf.mxu0
  %v7671 = vadd.f32 %v7631, %v7670
  %v7672 = vpop.f32.mrf.mxu0
  %v7673 = vpop.f32.mrf.mxu0
  %v7674 = vpop.f32.mrf.mxu0
  %7675 = vdwg.mxu0
  %7676 = vmatprep.subr.bf16.mxu0 0
  %7677 = vmatpush1.bf16.msra.mxu0 %v5475
  %7678 = vmatprep.subr.bf16.mxu0 0
  %7679 = vmatpush1.bf16.msra.mxu0 %v5474
  %7680 = vmatprep.subr.bf16.mxu0 0
  %7681 = vmatpush1.bf16.msra.mxu0 %v5473
  %7682 = vmatprep.subr.bf16.mxu0 0
  %7683 = vmatpush1.bf16.msra.mxu0 %v5472
  %7684 = vmatprep.subr.bf16.mxu0 0
  %7685 = vmatpush1.bf16.msra.mxu0 %v5471
  %7686 = vmatprep.subr.bf16.mxu0 0
  %7687 = vmatpush1.bf16.msra.mxu0 %v5470
  %7688 = vmatprep.subr.bf16.mxu0 0
  %7689 = vmatpush1.bf16.msra.mxu0 %v5469
  %7690 = vmatprep.subr.bf16.mxu0 0
  %7691 = vmatpush1.bf16.msra.mxu0 %v5468
  %7692 = vmatprep.subr.bf16.mxu0 0
  %7693 = vmatpush2.bf16.msra.mxu0 %v5483
  %7694 = vmatprep.subr.bf16.mxu0 0
  %7695 = vmatpush2.bf16.msra.mxu0 %v5482
  %7696 = vmatprep.subr.bf16.mxu0 0
  %7697 = vmatpush2.bf16.msra.mxu0 %v5481
  %7698 = vmatprep.subr.bf16.mxu0 0
  %7699 = vmatpush2.bf16.msra.mxu0 %v5480
  %7700 = vmatprep.subr.bf16.mxu0 0
  %7701 = vmatpush2.bf16.msra.mxu0 %v5479
  %7702 = vmatprep.subr.bf16.mxu0 0
  %7703 = vmatpush2.bf16.msra.mxu0 %v5478
  %7704 = vmatprep.subr.bf16.mxu0 0
  %7705 = vmatpush2.bf16.msra.mxu0 %v5477
  %7706 = vmatprep.subr.bf16.mxu0 0
  %7707 = vmatpush2.bf16.msra.mxu0 %v5476
  %7708 = vmatprep.mubr.bf16.mxu0 %v1813
  %7709 = vmatmul.mubr.bf16.gmra.mxu0 %v1812
  %v7710 = vpop.f32.mrf.mxu0
  %v7711 = vadd.f32 %v7671, %v7710
  %v7712 = vpop.f32.mrf.mxu0
  %v7713 = vpop.f32.mrf.mxu0
  %v7714 = vpop.f32.mrf.mxu0
  %7715 = vdwg.mxu0
  %7716 = vmatprep.subr.bf16.mxu0 0
  %7717 = vmatpush1.bf16.msra.mxu0 %v5491
  %7718 = vmatprep.subr.bf16.mxu0 0
  %7719 = vmatpush1.bf16.msra.mxu0 %v5490
  %7720 = vmatprep.subr.bf16.mxu0 0
  %7721 = vmatpush1.bf16.msra.mxu0 %v5489
  %7722 = vmatprep.subr.bf16.mxu0 0
  %7723 = vmatpush1.bf16.msra.mxu0 %v5488
  %7724 = vmatprep.subr.bf16.mxu0 0
  %7725 = vmatpush1.bf16.msra.mxu0 %v5487
  %7726 = vmatprep.subr.bf16.mxu0 0
  %7727 = vmatpush1.bf16.msra.mxu0 %v5486
  %7728 = vmatprep.subr.bf16.mxu0 0
  %7729 = vmatpush1.bf16.msra.mxu0 %v5485
  %7730 = vmatprep.subr.bf16.mxu0 0
  %7731 = vmatpush1.bf16.msra.mxu0 %v5484
  %7732 = vmatprep.subr.bf16.mxu0 0
  %7733 = vmatpush2.bf16.msra.mxu0 %v5499
  %7734 = vmatprep.subr.bf16.mxu0 0
  %7735 = vmatpush2.bf16.msra.mxu0 %v5498
  %7736 = vmatprep.subr.bf16.mxu0 0
  %7737 = vmatpush2.bf16.msra.mxu0 %v5497
  %7738 = vmatprep.subr.bf16.mxu0 0
  %7739 = vmatpush2.bf16.msra.mxu0 %v5496
  %7740 = vmatprep.subr.bf16.mxu0 0
  %7741 = vmatpush2.bf16.msra.mxu0 %v5495
  %7742 = vmatprep.subr.bf16.mxu0 0
  %7743 = vmatpush2.bf16.msra.mxu0 %v5494
  %7744 = vmatprep.subr.bf16.mxu0 0
  %7745 = vmatpush2.bf16.msra.mxu0 %v5493
  %7746 = vmatprep.subr.bf16.mxu0 0
  %7747 = vmatpush2.bf16.msra.mxu0 %v5492
  %7748 = vmatprep.mubr.bf16.mxu0 %v1815
  %7749 = vmatmul.mubr.bf16.gmra.mxu0 %v1814
  %v7750 = vpop.f32.mrf.mxu0
  %v7751 = vadd.f32 %v7711, %v7750
  %v7752 = vpop.f32.mrf.mxu0
  %v7753 = vpop.f32.mrf.mxu0
  %v7754 = vpop.f32.mrf.mxu0
  %7755 = vdwg.mxu0
  %7756 = vmatprep.subr.bf16.mxu0 0
  %7757 = vmatpush1.bf16.msra.mxu0 %v5507
  %7758 = vmatprep.subr.bf16.mxu0 0
  %7759 = vmatpush1.bf16.msra.mxu0 %v5506
  %7760 = vmatprep.subr.bf16.mxu0 0
  %7761 = vmatpush1.bf16.msra.mxu0 %v5505
  %7762 = vmatprep.subr.bf16.mxu0 0
  %7763 = vmatpush1.bf16.msra.mxu0 %v5504
  %7764 = vmatprep.subr.bf16.mxu0 0
  %7765 = vmatpush1.bf16.msra.mxu0 %v5503
  %7766 = vmatprep.subr.bf16.mxu0 0
  %7767 = vmatpush1.bf16.msra.mxu0 %v5502
  %7768 = vmatprep.subr.bf16.mxu0 0
  %7769 = vmatpush1.bf16.msra.mxu0 %v5501
  %7770 = vmatprep.subr.bf16.mxu0 0
  %7771 = vmatpush1.bf16.msra.mxu0 %v5500
  %7772 = vmatprep.subr.bf16.mxu0 0
  %7773 = vmatpush2.bf16.msra.mxu0 %v5515
  %7774 = vmatprep.subr.bf16.mxu0 0
  %7775 = vmatpush2.bf16.msra.mxu0 %v5514
  %7776 = vmatprep.subr.bf16.mxu0 0
  %7777 = vmatpush2.bf16.msra.mxu0 %v5513
  %7778 = vmatprep.subr.bf16.mxu0 0
  %7779 = vmatpush2.bf16.msra.mxu0 %v5512
  %7780 = vmatprep.subr.bf16.mxu0 0
  %7781 = vmatpush2.bf16.msra.mxu0 %v5511
  %7782 = vmatprep.subr.bf16.mxu0 0
  %7783 = vmatpush2.bf16.msra.mxu0 %v5510
  %7784 = vmatprep.subr.bf16.mxu0 0
  %7785 = vmatpush2.bf16.msra.mxu0 %v5509
  %7786 = vmatprep.subr.bf16.mxu0 0
  %7787 = vmatpush2.bf16.msra.mxu0 %v5508
  %7788 = vmatprep.mubr.bf16.mxu0 %v1817
  %7789 = vmatmul.mubr.bf16.gmra.mxu0 %v1816
  %v7790 = vpop.f32.mrf.mxu0
  %v7791 = vadd.f32 %v7751, %v7790
  %v7792 = vpop.f32.mrf.mxu0
  %v7793 = vpop.f32.mrf.mxu0
  %v7794 = vpop.f32.mrf.mxu0
  %7795 = vdwg.mxu0
  %7796 = vmatprep.subr.bf16.mxu0 0
  %7797 = vmatpush1.bf16.msra.mxu0 %v5523
  %7798 = vmatprep.subr.bf16.mxu0 0
  %7799 = vmatpush1.bf16.msra.mxu0 %v5522
  %7800 = vmatprep.subr.bf16.mxu0 0
  %7801 = vmatpush1.bf16.msra.mxu0 %v5521
  %7802 = vmatprep.subr.bf16.mxu0 0
  %7803 = vmatpush1.bf16.msra.mxu0 %v5520
  %7804 = vmatprep.subr.bf16.mxu0 0
  %7805 = vmatpush1.bf16.msra.mxu0 %v5519
  %7806 = vmatprep.subr.bf16.mxu0 0
  %7807 = vmatpush1.bf16.msra.mxu0 %v5518
  %7808 = vmatprep.subr.bf16.mxu0 0
  %7809 = vmatpush1.bf16.msra.mxu0 %v5517
  %7810 = vmatprep.subr.bf16.mxu0 0
  %7811 = vmatpush1.bf16.msra.mxu0 %v5516
  %7812 = vmatprep.subr.bf16.mxu0 0
  %7813 = vmatpush2.bf16.msra.mxu0 %v5531
  %7814 = vmatprep.subr.bf16.mxu0 0
  %7815 = vmatpush2.bf16.msra.mxu0 %v5530
  %7816 = vmatprep.subr.bf16.mxu0 0
  %7817 = vmatpush2.bf16.msra.mxu0 %v5529
  %7818 = vmatprep.subr.bf16.mxu0 0
  %7819 = vmatpush2.bf16.msra.mxu0 %v5528
  %7820 = vmatprep.subr.bf16.mxu0 0
  %7821 = vmatpush2.bf16.msra.mxu0 %v5527
  %7822 = vmatprep.subr.bf16.mxu0 0
  %7823 = vmatpush2.bf16.msra.mxu0 %v5526
  %7824 = vmatprep.subr.bf16.mxu0 0
  %7825 = vmatpush2.bf16.msra.mxu0 %v5525
  %7826 = vmatprep.subr.bf16.mxu0 0
  %7827 = vmatpush2.bf16.msra.mxu0 %v5524
  %7828 = vmatprep.mubr.bf16.mxu0 %v1819
  %7829 = vmatmul.mubr.bf16.gmra.mxu0 %v1818
  %v7830 = vpop.f32.mrf.mxu0
  %v7831 = vadd.f32 %v7791, %v7830
  %v7832 = vpop.f32.mrf.mxu0
  %v7833 = vpop.f32.mrf.mxu0
  %v7834 = vpop.f32.mrf.mxu0
  %7835 = vdwg.mxu0
  %7836 = vmatprep.subr.bf16.mxu0 0
  %7837 = vmatpush1.bf16.msra.mxu0 %v5539
  %7838 = vmatprep.subr.bf16.mxu0 0
  %7839 = vmatpush1.bf16.msra.mxu0 %v5538
  %7840 = vmatprep.subr.bf16.mxu0 0
  %7841 = vmatpush1.bf16.msra.mxu0 %v5537
  %7842 = vmatprep.subr.bf16.mxu0 0
  %7843 = vmatpush1.bf16.msra.mxu0 %v5536
  %7844 = vmatprep.subr.bf16.mxu0 0
  %7845 = vmatpush1.bf16.msra.mxu0 %v5535
  %7846 = vmatprep.subr.bf16.mxu0 0
  %7847 = vmatpush1.bf16.msra.mxu0 %v5534
  %7848 = vmatprep.subr.bf16.mxu0 0
  %7849 = vmatpush1.bf16.msra.mxu0 %v5533
  %7850 = vmatprep.subr.bf16.mxu0 0
  %7851 = vmatpush1.bf16.msra.mxu0 %v5532
  %7852 = vmatprep.subr.bf16.mxu0 0
  %7853 = vmatpush2.bf16.msra.mxu0 %v5547
  %7854 = vmatprep.subr.bf16.mxu0 0
  %7855 = vmatpush2.bf16.msra.mxu0 %v5546
  %7856 = vmatprep.subr.bf16.mxu0 0
  %7857 = vmatpush2.bf16.msra.mxu0 %v5545
  %7858 = vmatprep.subr.bf16.mxu0 0
  %7859 = vmatpush2.bf16.msra.mxu0 %v5544
  %7860 = vmatprep.subr.bf16.mxu0 0
  %7861 = vmatpush2.bf16.msra.mxu0 %v5543
  %7862 = vmatprep.subr.bf16.mxu0 0
  %7863 = vmatpush2.bf16.msra.mxu0 %v5542
  %7864 = vmatprep.subr.bf16.mxu0 0
  %7865 = vmatpush2.bf16.msra.mxu0 %v5541
  %7866 = vmatprep.subr.bf16.mxu0 0
  %7867 = vmatpush2.bf16.msra.mxu0 %v5540
  %7868 = vmatprep.mubr.bf16.mxu0 %v1821
  %7869 = vmatmul.mubr.bf16.gmra.mxu0 %v1820
  %v7870 = vpop.f32.mrf.mxu0
  %v7871 = vadd.f32 %v7831, %v7870
  %v7872 = vpop.f32.mrf.mxu0
  %v7873 = vpop.f32.mrf.mxu0
  %v7874 = vpop.f32.mrf.mxu0
  %7875 = vdwg.mxu0
  %7876 = vmatprep.subr.bf16.mxu0 0
  %7877 = vmatpush1.bf16.msra.mxu0 %v5555
  %7878 = vmatprep.subr.bf16.mxu0 0
  %7879 = vmatpush1.bf16.msra.mxu0 %v5554
  %7880 = vmatprep.subr.bf16.mxu0 0
  %7881 = vmatpush1.bf16.msra.mxu0 %v5553
  %7882 = vmatprep.subr.bf16.mxu0 0
  %7883 = vmatpush1.bf16.msra.mxu0 %v5552
  %7884 = vmatprep.subr.bf16.mxu0 0
  %7885 = vmatpush1.bf16.msra.mxu0 %v5551
  %7886 = vmatprep.subr.bf16.mxu0 0
  %7887 = vmatpush1.bf16.msra.mxu0 %v5550
  %7888 = vmatprep.subr.bf16.mxu0 0
  %7889 = vmatpush1.bf16.msra.mxu0 %v5549
  %7890 = vmatprep.subr.bf16.mxu0 0
  %7891 = vmatpush1.bf16.msra.mxu0 %v5548
  %7892 = vmatprep.subr.bf16.mxu0 0
  %7893 = vmatpush2.bf16.msra.mxu0 %v5563
  %7894 = vmatprep.subr.bf16.mxu0 0
  %7895 = vmatpush2.bf16.msra.mxu0 %v5562
  %7896 = vmatprep.subr.bf16.mxu0 0
  %7897 = vmatpush2.bf16.msra.mxu0 %v5561
  %7898 = vmatprep.subr.bf16.mxu0 0
  %7899 = vmatpush2.bf16.msra.mxu0 %v5560
  %7900 = vmatprep.subr.bf16.mxu0 0
  %7901 = vmatpush2.bf16.msra.mxu0 %v5559
  %7902 = vmatprep.subr.bf16.mxu0 0
  %7903 = vmatpush2.bf16.msra.mxu0 %v5558
  %7904 = vmatprep.subr.bf16.mxu0 0
  %7905 = vmatpush2.bf16.msra.mxu0 %v5557
  %7906 = vmatprep.subr.bf16.mxu0 0
  %7907 = vmatpush2.bf16.msra.mxu0 %v5556
  %7908 = vmatprep.mubr.bf16.mxu0 %v1823
  %7909 = vmatmul.mubr.bf16.gmra.mxu0 %v1822
  %v7910 = vpop.f32.mrf.mxu0
  %v7911 = vadd.f32 %v7871, %v7910
  %v7912 = vpop.f32.mrf.mxu0
  %v7913 = vpop.f32.mrf.mxu0
  %v7914 = vpop.f32.mrf.mxu0
  %7915 = vdwg.mxu0
  %7916 = vmatprep.subr.bf16.mxu0 0
  %7917 = vmatpush1.bf16.msra.mxu0 %v5571
  %7918 = vmatprep.subr.bf16.mxu0 0
  %7919 = vmatpush1.bf16.msra.mxu0 %v5570
  %7920 = vmatprep.subr.bf16.mxu0 0
  %7921 = vmatpush1.bf16.msra.mxu0 %v5569
  %7922 = vmatprep.subr.bf16.mxu0 0
  %7923 = vmatpush1.bf16.msra.mxu0 %v5568
  %7924 = vmatprep.subr.bf16.mxu0 0
  %7925 = vmatpush1.bf16.msra.mxu0 %v5567
  %7926 = vmatprep.subr.bf16.mxu0 0
  %7927 = vmatpush1.bf16.msra.mxu0 %v5566
  %7928 = vmatprep.subr.bf16.mxu0 0
  %7929 = vmatpush1.bf16.msra.mxu0 %v5565
  %7930 = vmatprep.subr.bf16.mxu0 0
  %7931 = vmatpush1.bf16.msra.mxu0 %v5564
  %7932 = vmatprep.subr.bf16.mxu0 0
  %7933 = vmatpush2.bf16.msra.mxu0 %v5579
  %7934 = vmatprep.subr.bf16.mxu0 0
  %7935 = vmatpush2.bf16.msra.mxu0 %v5578
  %7936 = vmatprep.subr.bf16.mxu0 0
  %7937 = vmatpush2.bf16.msra.mxu0 %v5577
  %7938 = vmatprep.subr.bf16.mxu0 0
  %7939 = vmatpush2.bf16.msra.mxu0 %v5576
  %7940 = vmatprep.subr.bf16.mxu0 0
  %7941 = vmatpush2.bf16.msra.mxu0 %v5575
  %7942 = vmatprep.subr.bf16.mxu0 0
  %7943 = vmatpush2.bf16.msra.mxu0 %v5574
  %7944 = vmatprep.subr.bf16.mxu0 0
  %7945 = vmatpush2.bf16.msra.mxu0 %v5573
  %7946 = vmatprep.subr.bf16.mxu0 0
  %7947 = vmatpush2.bf16.msra.mxu0 %v5572
  %7948 = vmatprep.mubr.bf16.mxu0 %v1825
  %7949 = vmatmul.mubr.bf16.gmra.mxu0 %v1824
  %v7950 = vpop.f32.mrf.mxu0
  %v7951 = vadd.f32 %v7911, %v7950
  %v7952 = vpop.f32.mrf.mxu0
  %v7953 = vpop.f32.mrf.mxu0
  %v7954 = vpop.f32.mrf.mxu0
  %7955 = vdwg.mxu0
  %7956 = vmatprep.subr.bf16.mxu0 0
  %7957 = vmatpush1.bf16.msra.mxu0 %v5587
  %7958 = vmatprep.subr.bf16.mxu0 0
  %7959 = vmatpush1.bf16.msra.mxu0 %v5586
  %7960 = vmatprep.subr.bf16.mxu0 0
  %7961 = vmatpush1.bf16.msra.mxu0 %v5585
  %7962 = vmatprep.subr.bf16.mxu0 0
  %7963 = vmatpush1.bf16.msra.mxu0 %v5584
  %7964 = vmatprep.subr.bf16.mxu0 0
  %7965 = vmatpush1.bf16.msra.mxu0 %v5583
  %7966 = vmatprep.subr.bf16.mxu0 0
  %7967 = vmatpush1.bf16.msra.mxu0 %v5582
  %7968 = vmatprep.subr.bf16.mxu0 0
  %7969 = vmatpush1.bf16.msra.mxu0 %v5581
  %7970 = vmatprep.subr.bf16.mxu0 0
  %7971 = vmatpush1.bf16.msra.mxu0 %v5580
  %7972 = vmatprep.subr.bf16.mxu0 0
  %7973 = vmatpush2.bf16.msra.mxu0 %v5595
  %7974 = vmatprep.subr.bf16.mxu0 0
  %7975 = vmatpush2.bf16.msra.mxu0 %v5594
  %7976 = vmatprep.subr.bf16.mxu0 0
  %7977 = vmatpush2.bf16.msra.mxu0 %v5593
  %7978 = vmatprep.subr.bf16.mxu0 0
  %7979 = vmatpush2.bf16.msra.mxu0 %v5592
  %7980 = vmatprep.subr.bf16.mxu0 0
  %7981 = vmatpush2.bf16.msra.mxu0 %v5591
  %7982 = vmatprep.subr.bf16.mxu0 0
  %7983 = vmatpush2.bf16.msra.mxu0 %v5590
  %7984 = vmatprep.subr.bf16.mxu0 0
  %7985 = vmatpush2.bf16.msra.mxu0 %v5589
  %7986 = vmatprep.subr.bf16.mxu0 0
  %7987 = vmatpush2.bf16.msra.mxu0 %v5588
  %7988 = vmatprep.mubr.bf16.mxu0 %v1827
  %7989 = vmatmul.mubr.bf16.gmra.mxu0 %v1826
  %v7990 = vpop.f32.mrf.mxu0
  %v7991 = vadd.f32 %v7951, %v7990
  %v7992 = vpop.f32.mrf.mxu0
  %v7993 = vpop.f32.mrf.mxu0
  %v7994 = vpop.f32.mrf.mxu0
  %7995 = vdwg.mxu0
  %7996 = vmatprep.subr.bf16.mxu0 0
  %7997 = vmatpush1.bf16.msra.mxu0 %v5603
  %7998 = vmatprep.subr.bf16.mxu0 0
  %7999 = vmatpush1.bf16.msra.mxu0 %v5602
  %8000 = vmatprep.subr.bf16.mxu0 0
  %8001 = vmatpush1.bf16.msra.mxu0 %v5601
  %8002 = vmatprep.subr.bf16.mxu0 0
  %8003 = vmatpush1.bf16.msra.mxu0 %v5600
  %8004 = vmatprep.subr.bf16.mxu0 0
  %8005 = vmatpush1.bf16.msra.mxu0 %v5599
  %8006 = vmatprep.subr.bf16.mxu0 0
  %8007 = vmatpush1.bf16.msra.mxu0 %v5598
  %8008 = vmatprep.subr.bf16.mxu0 0
  %8009 = vmatpush1.bf16.msra.mxu0 %v5597
  %8010 = vmatprep.subr.bf16.mxu0 0
  %8011 = vmatpush1.bf16.msra.mxu0 %v5596
  %8012 = vmatprep.subr.bf16.mxu0 0
  %8013 = vmatpush2.bf16.msra.mxu0 %v5611
  %8014 = vmatprep.subr.bf16.mxu0 0
  %8015 = vmatpush2.bf16.msra.mxu0 %v5610
  %8016 = vmatprep.subr.bf16.mxu0 0
  %8017 = vmatpush2.bf16.msra.mxu0 %v5609
  %8018 = vmatprep.subr.bf16.mxu0 0
  %8019 = vmatpush2.bf16.msra.mxu0 %v5608
  %8020 = vmatprep.subr.bf16.mxu0 0
  %8021 = vmatpush2.bf16.msra.mxu0 %v5607
  %8022 = vmatprep.subr.bf16.mxu0 0
  %8023 = vmatpush2.bf16.msra.mxu0 %v5606
  %8024 = vmatprep.subr.bf16.mxu0 0
  %8025 = vmatpush2.bf16.msra.mxu0 %v5605
  %8026 = vmatprep.subr.bf16.mxu0 0
  %8027 = vmatpush2.bf16.msra.mxu0 %v5604
  %8028 = vmatprep.mubr.bf16.mxu0 %v1829
  %8029 = vmatmul.mubr.bf16.gmra.mxu0 %v1828
  %v8030 = vpop.f32.mrf.mxu0
  %v8031 = vadd.f32 %v7991, %v8030
  %v8032 = vpop.f32.mrf.mxu0
  %v8033 = vpop.f32.mrf.mxu0
  %v8034 = vpop.f32.mrf.mxu0
  %8035 = vdwg.mxu0
  %8036 = vmatprep.subr.bf16.mxu0 0
  %8037 = vmatpush1.bf16.msra.mxu0 %v5619
  %8038 = vmatprep.subr.bf16.mxu0 0
  %8039 = vmatpush1.bf16.msra.mxu0 %v5618
  %8040 = vmatprep.subr.bf16.mxu0 0
  %8041 = vmatpush1.bf16.msra.mxu0 %v5617
  %8042 = vmatprep.subr.bf16.mxu0 0
  %8043 = vmatpush1.bf16.msra.mxu0 %v5616
  %8044 = vmatprep.subr.bf16.mxu0 0
  %8045 = vmatpush1.bf16.msra.mxu0 %v5615
  %8046 = vmatprep.subr.bf16.mxu0 0
  %8047 = vmatpush1.bf16.msra.mxu0 %v5614
  %8048 = vmatprep.subr.bf16.mxu0 0
  %8049 = vmatpush1.bf16.msra.mxu0 %v5613
  %8050 = vmatprep.subr.bf16.mxu0 0
  %8051 = vmatpush1.bf16.msra.mxu0 %v5612
  %8052 = vmatprep.subr.bf16.mxu0 0
  %8053 = vmatpush2.bf16.msra.mxu0 %v5627
  %8054 = vmatprep.subr.bf16.mxu0 0
  %8055 = vmatpush2.bf16.msra.mxu0 %v5626
  %8056 = vmatprep.subr.bf16.mxu0 0
  %8057 = vmatpush2.bf16.msra.mxu0 %v5625
  %8058 = vmatprep.subr.bf16.mxu0 0
  %8059 = vmatpush2.bf16.msra.mxu0 %v5624
  %8060 = vmatprep.subr.bf16.mxu0 0
  %8061 = vmatpush2.bf16.msra.mxu0 %v5623
  %8062 = vmatprep.subr.bf16.mxu0 0
  %8063 = vmatpush2.bf16.msra.mxu0 %v5622
  %8064 = vmatprep.subr.bf16.mxu0 0
  %8065 = vmatpush2.bf16.msra.mxu0 %v5621
  %8066 = vmatprep.subr.bf16.mxu0 0
  %8067 = vmatpush2.bf16.msra.mxu0 %v5620
  %8068 = vmatprep.mubr.bf16.mxu0 %v1831
  %8069 = vmatmul.mubr.bf16.gmra.mxu0 %v1830
  %v8070 = vpop.f32.mrf.mxu0
  %v8071 = vadd.f32 %v8031, %v8070
  %v8072 = vpop.f32.mrf.mxu0
  %v8073 = vpop.f32.mrf.mxu0
  %v8074 = vpop.f32.mrf.mxu0
  %8075 = vdwg.mxu0
  %8076 = vmatprep.subr.bf16.mxu0 0
  %8077 = vmatpush1.bf16.msra.mxu0 %v5635
  %8078 = vmatprep.subr.bf16.mxu0 0
  %8079 = vmatpush1.bf16.msra.mxu0 %v5634
  %8080 = vmatprep.subr.bf16.mxu0 0
  %8081 = vmatpush1.bf16.msra.mxu0 %v5633
  %8082 = vmatprep.subr.bf16.mxu0 0
  %8083 = vmatpush1.bf16.msra.mxu0 %v5632
  %8084 = vmatprep.subr.bf16.mxu0 0
  %8085 = vmatpush1.bf16.msra.mxu0 %v5631
  %8086 = vmatprep.subr.bf16.mxu0 0
  %8087 = vmatpush1.bf16.msra.mxu0 %v5630
  %8088 = vmatprep.subr.bf16.mxu0 0
  %8089 = vmatpush1.bf16.msra.mxu0 %v5629
  %8090 = vmatprep.subr.bf16.mxu0 0
  %8091 = vmatpush1.bf16.msra.mxu0 %v5628
  %8092 = vmatprep.subr.bf16.mxu0 0
  %8093 = vmatpush2.bf16.msra.mxu0 %v5643
  %8094 = vmatprep.subr.bf16.mxu0 0
  %8095 = vmatpush2.bf16.msra.mxu0 %v5642
  %8096 = vmatprep.subr.bf16.mxu0 0
  %8097 = vmatpush2.bf16.msra.mxu0 %v5641
  %8098 = vmatprep.subr.bf16.mxu0 0
  %8099 = vmatpush2.bf16.msra.mxu0 %v5640
  %8100 = vmatprep.subr.bf16.mxu0 0
  %8101 = vmatpush2.bf16.msra.mxu0 %v5639
  %8102 = vmatprep.subr.bf16.mxu0 0
  %8103 = vmatpush2.bf16.msra.mxu0 %v5638
  %8104 = vmatprep.subr.bf16.mxu0 0
  %8105 = vmatpush2.bf16.msra.mxu0 %v5637
  %8106 = vmatprep.subr.bf16.mxu0 0
  %8107 = vmatpush2.bf16.msra.mxu0 %v5636
  %8108 = vmatprep.mubr.bf16.mxu0 %v1833
  %8109 = vmatmul.mubr.bf16.gmra.mxu0 %v1832
  %v8110 = vpop.f32.mrf.mxu0
  %v8111 = vadd.f32 %v8071, %v8110
  %v8112 = vpop.f32.mrf.mxu0
  %v8113 = vpop.f32.mrf.mxu0
  %v8114 = vpop.f32.mrf.mxu0
  %8115 = vdwg.mxu0
  %8116 = vmatprep.subr.bf16.mxu0 0
  %8117 = vmatpush1.bf16.msra.mxu0 %v5651
  %8118 = vmatprep.subr.bf16.mxu0 0
  %8119 = vmatpush1.bf16.msra.mxu0 %v5650
  %8120 = vmatprep.subr.bf16.mxu0 0
  %8121 = vmatpush1.bf16.msra.mxu0 %v5649
  %8122 = vmatprep.subr.bf16.mxu0 0
  %8123 = vmatpush1.bf16.msra.mxu0 %v5648
  %8124 = vmatprep.subr.bf16.mxu0 0
  %8125 = vmatpush1.bf16.msra.mxu0 %v5647
  %8126 = vmatprep.subr.bf16.mxu0 0
  %8127 = vmatpush1.bf16.msra.mxu0 %v5646
  %8128 = vmatprep.subr.bf16.mxu0 0
  %8129 = vmatpush1.bf16.msra.mxu0 %v5645
  %8130 = vmatprep.subr.bf16.mxu0 0
  %8131 = vmatpush1.bf16.msra.mxu0 %v5644
  %8132 = vmatprep.subr.bf16.mxu0 0
  %8133 = vmatpush2.bf16.msra.mxu0 %v5659
  %8134 = vmatprep.subr.bf16.mxu0 0
  %8135 = vmatpush2.bf16.msra.mxu0 %v5658
  %8136 = vmatprep.subr.bf16.mxu0 0
  %8137 = vmatpush2.bf16.msra.mxu0 %v5657
  %8138 = vmatprep.subr.bf16.mxu0 0
  %8139 = vmatpush2.bf16.msra.mxu0 %v5656
  %8140 = vmatprep.subr.bf16.mxu0 0
  %8141 = vmatpush2.bf16.msra.mxu0 %v5655
  %8142 = vmatprep.subr.bf16.mxu0 0
  %8143 = vmatpush2.bf16.msra.mxu0 %v5654
  %8144 = vmatprep.subr.bf16.mxu0 0
  %8145 = vmatpush2.bf16.msra.mxu0 %v5653
  %8146 = vmatprep.subr.bf16.mxu0 0
  %8147 = vmatpush2.bf16.msra.mxu0 %v5652
  %8148 = vmatprep.mubr.bf16.mxu0 %v1835
  %8149 = vmatmul.mubr.bf16.gmra.mxu0 %v1834
  %v8150 = vpop.f32.mrf.mxu0
  %v8151 = vadd.f32 %v8111, %v8150
  %v8152 = vpop.f32.mrf.mxu0
  %v8153 = vpop.f32.mrf.mxu0
  %v8154 = vpop.f32.mrf.mxu0
  %8155 = vdwg.mxu0
  %8156 = vmatprep.subr.bf16.mxu0 0
  %8157 = vmatpush1.bf16.msra.mxu0 %v5667
  %8158 = vmatprep.subr.bf16.mxu0 0
  %8159 = vmatpush1.bf16.msra.mxu0 %v5666
  %8160 = vmatprep.subr.bf16.mxu0 0
  %8161 = vmatpush1.bf16.msra.mxu0 %v5665
  %8162 = vmatprep.subr.bf16.mxu0 0
  %8163 = vmatpush1.bf16.msra.mxu0 %v5664
  %8164 = vmatprep.subr.bf16.mxu0 0
  %8165 = vmatpush1.bf16.msra.mxu0 %v5663
  %8166 = vmatprep.subr.bf16.mxu0 0
  %8167 = vmatpush1.bf16.msra.mxu0 %v5662
  %8168 = vmatprep.subr.bf16.mxu0 0
  %8169 = vmatpush1.bf16.msra.mxu0 %v5661
  %8170 = vmatprep.subr.bf16.mxu0 0
  %8171 = vmatpush1.bf16.msra.mxu0 %v5660
  %8172 = vmatprep.subr.bf16.mxu0 0
  %8173 = vmatpush2.bf16.msra.mxu0 %v5675
  %8174 = vmatprep.subr.bf16.mxu0 0
  %8175 = vmatpush2.bf16.msra.mxu0 %v5674
  %8176 = vmatprep.subr.bf16.mxu0 0
  %8177 = vmatpush2.bf16.msra.mxu0 %v5673
  %8178 = vmatprep.subr.bf16.mxu0 0
  %8179 = vmatpush2.bf16.msra.mxu0 %v5672
  %8180 = vmatprep.subr.bf16.mxu0 0
  %8181 = vmatpush2.bf16.msra.mxu0 %v5671
  %8182 = vmatprep.subr.bf16.mxu0 0
  %8183 = vmatpush2.bf16.msra.mxu0 %v5670
  %8184 = vmatprep.subr.bf16.mxu0 0
  %8185 = vmatpush2.bf16.msra.mxu0 %v5669
  %8186 = vmatprep.subr.bf16.mxu0 0
  %8187 = vmatpush2.bf16.msra.mxu0 %v5668
  %8188 = vmatprep.mubr.bf16.mxu0 %v1837
  %8189 = vmatmul.mubr.bf16.gmra.mxu0 %v1836
  %v8190 = vpop.f32.mrf.mxu0
  %v8191 = vadd.f32 %v8151, %v8190
  %v8192 = vpop.f32.mrf.mxu0
  %v8193 = vpop.f32.mrf.mxu0
  %v8194 = vpop.f32.mrf.mxu0
  %8195 = vdwg.mxu0
  %8196 = vmatprep.subr.bf16.mxu0 0
  %8197 = vmatpush1.bf16.msra.mxu0 %v5683
  %8198 = vmatprep.subr.bf16.mxu0 0
  %8199 = vmatpush1.bf16.msra.mxu0 %v5682
  %8200 = vmatprep.subr.bf16.mxu0 0
  %8201 = vmatpush1.bf16.msra.mxu0 %v5681
  %8202 = vmatprep.subr.bf16.mxu0 0
  %8203 = vmatpush1.bf16.msra.mxu0 %v5680
  %8204 = vmatprep.subr.bf16.mxu0 0
  %8205 = vmatpush1.bf16.msra.mxu0 %v5679
  %8206 = vmatprep.subr.bf16.mxu0 0
  %8207 = vmatpush1.bf16.msra.mxu0 %v5678
  %8208 = vmatprep.subr.bf16.mxu0 0
  %8209 = vmatpush1.bf16.msra.mxu0 %v5677
  %8210 = vmatprep.subr.bf16.mxu0 0
  %8211 = vmatpush1.bf16.msra.mxu0 %v5676
  %8212 = vmatprep.subr.bf16.mxu0 0
  %8213 = vmatpush2.bf16.msra.mxu0 %v5691
  %8214 = vmatprep.subr.bf16.mxu0 0
  %8215 = vmatpush2.bf16.msra.mxu0 %v5690
  %8216 = vmatprep.subr.bf16.mxu0 0
  %8217 = vmatpush2.bf16.msra.mxu0 %v5689
  %8218 = vmatprep.subr.bf16.mxu0 0
  %8219 = vmatpush2.bf16.msra.mxu0 %v5688
  %8220 = vmatprep.subr.bf16.mxu0 0
  %8221 = vmatpush2.bf16.msra.mxu0 %v5687
  %8222 = vmatprep.subr.bf16.mxu0 0
  %8223 = vmatpush2.bf16.msra.mxu0 %v5686
  %8224 = vmatprep.subr.bf16.mxu0 0
  %8225 = vmatpush2.bf16.msra.mxu0 %v5685
  %8226 = vmatprep.subr.bf16.mxu0 0
  %8227 = vmatpush2.bf16.msra.mxu0 %v5684
  %8228 = vmatprep.mubr.bf16.mxu0 %v1839
  %8229 = vmatmul.mubr.bf16.gmra.mxu0 %v1838
  %v8230 = vpop.f32.mrf.mxu0
  %v8231 = vadd.f32 %v8191, %v8230
  %v8232 = vpop.f32.mrf.mxu0
  %v8233 = vpop.f32.mrf.mxu0
  %v8234 = vpop.f32.mrf.mxu0
  %8235 = vdwg.mxu0
  %8236 = vmatprep.subr.bf16.mxu0 0
  %8237 = vmatpush1.bf16.msra.mxu0 %v5699
  %8238 = vmatprep.subr.bf16.mxu0 0
  %8239 = vmatpush1.bf16.msra.mxu0 %v5698
  %8240 = vmatprep.subr.bf16.mxu0 0
  %8241 = vmatpush1.bf16.msra.mxu0 %v5697
  %8242 = vmatprep.subr.bf16.mxu0 0
  %8243 = vmatpush1.bf16.msra.mxu0 %v5696
  %8244 = vmatprep.subr.bf16.mxu0 0
  %8245 = vmatpush1.bf16.msra.mxu0 %v5695
  %8246 = vmatprep.subr.bf16.mxu0 0
  %8247 = vmatpush1.bf16.msra.mxu0 %v5694
  %8248 = vmatprep.subr.bf16.mxu0 0
  %8249 = vmatpush1.bf16.msra.mxu0 %v5693
  %8250 = vmatprep.subr.bf16.mxu0 0
  %8251 = vmatpush1.bf16.msra.mxu0 %v5692
  %8252 = vmatprep.subr.bf16.mxu0 0
  %8253 = vmatpush2.bf16.msra.mxu0 %v5707
  %8254 = vmatprep.subr.bf16.mxu0 0
  %8255 = vmatpush2.bf16.msra.mxu0 %v5706
  %8256 = vmatprep.subr.bf16.mxu0 0
  %8257 = vmatpush2.bf16.msra.mxu0 %v5705
  %8258 = vmatprep.subr.bf16.mxu0 0
  %8259 = vmatpush2.bf16.msra.mxu0 %v5704
  %8260 = vmatprep.subr.bf16.mxu0 0
  %8261 = vmatpush2.bf16.msra.mxu0 %v5703
  %8262 = vmatprep.subr.bf16.mxu0 0
  %8263 = vmatpush2.bf16.msra.mxu0 %v5702
  %8264 = vmatprep.subr.bf16.mxu0 0
  %8265 = vmatpush2.bf16.msra.mxu0 %v5701
  %8266 = vmatprep.subr.bf16.mxu0 0
  %8267 = vmatpush2.bf16.msra.mxu0 %v5700
  %8268 = vmatprep.mubr.bf16.mxu0 %v1841
  %8269 = vmatmul.mubr.bf16.gmra.mxu0 %v1840
  %v8270 = vpop.f32.mrf.mxu0
  %v8271 = vadd.f32 %v8231, %v8270
  %v8272 = vpop.f32.mrf.mxu0
  %v8273 = vpop.f32.mrf.mxu0
  %v8274 = vpop.f32.mrf.mxu0
  %8275 = vdwg.mxu0
  %8276 = vmatprep.subr.bf16.mxu0 0
  %8277 = vmatpush1.bf16.msra.mxu0 %v5715
  %8278 = vmatprep.subr.bf16.mxu0 0
  %8279 = vmatpush1.bf16.msra.mxu0 %v5714
  %8280 = vmatprep.subr.bf16.mxu0 0
  %8281 = vmatpush1.bf16.msra.mxu0 %v5713
  %8282 = vmatprep.subr.bf16.mxu0 0
  %8283 = vmatpush1.bf16.msra.mxu0 %v5712
  %8284 = vmatprep.subr.bf16.mxu0 0
  %8285 = vmatpush1.bf16.msra.mxu0 %v5711
  %8286 = vmatprep.subr.bf16.mxu0 0
  %8287 = vmatpush1.bf16.msra.mxu0 %v5710
  %8288 = vmatprep.subr.bf16.mxu0 0
  %8289 = vmatpush1.bf16.msra.mxu0 %v5709
  %8290 = vmatprep.subr.bf16.mxu0 0
  %8291 = vmatpush1.bf16.msra.mxu0 %v5708
  %8292 = vmatprep.subr.bf16.mxu0 0
  %8293 = vmatpush2.bf16.msra.mxu0 %v5723
  %8294 = vmatprep.subr.bf16.mxu0 0
  %8295 = vmatpush2.bf16.msra.mxu0 %v5722
  %8296 = vmatprep.subr.bf16.mxu0 0
  %8297 = vmatpush2.bf16.msra.mxu0 %v5721
  %8298 = vmatprep.subr.bf16.mxu0 0
  %8299 = vmatpush2.bf16.msra.mxu0 %v5720
  %8300 = vmatprep.subr.bf16.mxu0 0
  %8301 = vmatpush2.bf16.msra.mxu0 %v5719
  %8302 = vmatprep.subr.bf16.mxu0 0
  %8303 = vmatpush2.bf16.msra.mxu0 %v5718
  %8304 = vmatprep.subr.bf16.mxu0 0
  %8305 = vmatpush2.bf16.msra.mxu0 %v5717
  %8306 = vmatprep.subr.bf16.mxu0 0
  %8307 = vmatpush2.bf16.msra.mxu0 %v5716
  %8308 = vmatprep.mubr.bf16.mxu0 %v1843
  %8309 = vmatmul.mubr.bf16.gmra.mxu0 %v1842
  %v8310 = vpop.f32.mrf.mxu0
  %v8311 = vadd.f32 %v8271, %v8310
  %v8312 = vpop.f32.mrf.mxu0
  %v8313 = vpop.f32.mrf.mxu0
  %v8314 = vpop.f32.mrf.mxu0
  %8315 = vdwg.mxu0
  %8316 = vmatprep.subr.bf16.mxu0 0
  %8317 = vmatpush1.bf16.msra.mxu0 %v5731
  %8318 = vmatprep.subr.bf16.mxu0 0
  %8319 = vmatpush1.bf16.msra.mxu0 %v5730
  %8320 = vmatprep.subr.bf16.mxu0 0
  %8321 = vmatpush1.bf16.msra.mxu0 %v5729
  %8322 = vmatprep.subr.bf16.mxu0 0
  %8323 = vmatpush1.bf16.msra.mxu0 %v5728
  %8324 = vmatprep.subr.bf16.mxu0 0
  %8325 = vmatpush1.bf16.msra.mxu0 %v5727
  %8326 = vmatprep.subr.bf16.mxu0 0
  %8327 = vmatpush1.bf16.msra.mxu0 %v5726
  %8328 = vmatprep.subr.bf16.mxu0 0
  %8329 = vmatpush1.bf16.msra.mxu0 %v5725
  %8330 = vmatprep.subr.bf16.mxu0 0
  %8331 = vmatpush1.bf16.msra.mxu0 %v5724
  %8332 = vmatprep.subr.bf16.mxu0 0
  %8333 = vmatpush2.bf16.msra.mxu0 %v5739
  %8334 = vmatprep.subr.bf16.mxu0 0
  %8335 = vmatpush2.bf16.msra.mxu0 %v5738
  %8336 = vmatprep.subr.bf16.mxu0 0
  %8337 = vmatpush2.bf16.msra.mxu0 %v5737
  %8338 = vmatprep.subr.bf16.mxu0 0
  %8339 = vmatpush2.bf16.msra.mxu0 %v5736
  %8340 = vmatprep.subr.bf16.mxu0 0
  %8341 = vmatpush2.bf16.msra.mxu0 %v5735
  %8342 = vmatprep.subr.bf16.mxu0 0
  %8343 = vmatpush2.bf16.msra.mxu0 %v5734
  %8344 = vmatprep.subr.bf16.mxu0 0
  %8345 = vmatpush2.bf16.msra.mxu0 %v5733
  %8346 = vmatprep.subr.bf16.mxu0 0
  %8347 = vmatpush2.bf16.msra.mxu0 %v5732
  %8348 = vmatprep.mubr.bf16.mxu0 %v1845
  %8349 = vmatmul.mubr.bf16.gmra.mxu0 %v1844
  %v8350 = vpop.f32.mrf.mxu0
  %v8351 = vadd.f32 %v8311, %v8350
  %v8352 = vpop.f32.mrf.mxu0
  %v8353 = vpop.f32.mrf.mxu0
  %v8354 = vpop.f32.mrf.mxu0
  %8355 = vdwg.mxu0
  %8356 = vmatprep.subr.bf16.mxu0 0
  %8357 = vmatpush1.bf16.msra.mxu0 %v5747
  %8358 = vmatprep.subr.bf16.mxu0 0
  %8359 = vmatpush1.bf16.msra.mxu0 %v5746
  %8360 = vmatprep.subr.bf16.mxu0 0
  %8361 = vmatpush1.bf16.msra.mxu0 %v5745
  %8362 = vmatprep.subr.bf16.mxu0 0
  %8363 = vmatpush1.bf16.msra.mxu0 %v5744
  %8364 = vmatprep.subr.bf16.mxu0 0
  %8365 = vmatpush1.bf16.msra.mxu0 %v5743
  %8366 = vmatprep.subr.bf16.mxu0 0
  %8367 = vmatpush1.bf16.msra.mxu0 %v5742
  %8368 = vmatprep.subr.bf16.mxu0 0
  %8369 = vmatpush1.bf16.msra.mxu0 %v5741
  %8370 = vmatprep.subr.bf16.mxu0 0
  %8371 = vmatpush1.bf16.msra.mxu0 %v5740
  %8372 = vmatprep.subr.bf16.mxu0 0
  %8373 = vmatpush2.bf16.msra.mxu0 %v5755
  %8374 = vmatprep.subr.bf16.mxu0 0
  %8375 = vmatpush2.bf16.msra.mxu0 %v5754
  %8376 = vmatprep.subr.bf16.mxu0 0
  %8377 = vmatpush2.bf16.msra.mxu0 %v5753
  %8378 = vmatprep.subr.bf16.mxu0 0
  %8379 = vmatpush2.bf16.msra.mxu0 %v5752
  %8380 = vmatprep.subr.bf16.mxu0 0
  %8381 = vmatpush2.bf16.msra.mxu0 %v5751
  %8382 = vmatprep.subr.bf16.mxu0 0
  %8383 = vmatpush2.bf16.msra.mxu0 %v5750
  %8384 = vmatprep.subr.bf16.mxu0 0
  %8385 = vmatpush2.bf16.msra.mxu0 %v5749
  %8386 = vmatprep.subr.bf16.mxu0 0
  %8387 = vmatpush2.bf16.msra.mxu0 %v5748
  %8388 = vmatprep.mubr.bf16.mxu0 %v1847
  %8389 = vmatmul.mubr.bf16.gmra.mxu0 %v1846
  %v8390 = vpop.f32.mrf.mxu0
  %v8391 = vadd.f32 %v8351, %v8390
  %v8392 = vpop.f32.mrf.mxu0
  %v8393 = vpop.f32.mrf.mxu0
  %v8394 = vpop.f32.mrf.mxu0
  %8395 = vdwg.mxu0
  %8396 = vmatprep.subr.bf16.mxu0 0
  %8397 = vmatpush1.bf16.msra.mxu0 %v5763
  %8398 = vmatprep.subr.bf16.mxu0 0
  %8399 = vmatpush1.bf16.msra.mxu0 %v5762
  %8400 = vmatprep.subr.bf16.mxu0 0
  %8401 = vmatpush1.bf16.msra.mxu0 %v5761
  %8402 = vmatprep.subr.bf16.mxu0 0
  %8403 = vmatpush1.bf16.msra.mxu0 %v5760
  %8404 = vmatprep.subr.bf16.mxu0 0
  %8405 = vmatpush1.bf16.msra.mxu0 %v5759
  %8406 = vmatprep.subr.bf16.mxu0 0
  %8407 = vmatpush1.bf16.msra.mxu0 %v5758
  %8408 = vmatprep.subr.bf16.mxu0 0
  %8409 = vmatpush1.bf16.msra.mxu0 %v5757
  %8410 = vmatprep.subr.bf16.mxu0 0
  %8411 = vmatpush1.bf16.msra.mxu0 %v5756
  %8412 = vmatprep.subr.bf16.mxu0 0
  %8413 = vmatpush2.bf16.msra.mxu0 %v5771
  %8414 = vmatprep.subr.bf16.mxu0 0
  %8415 = vmatpush2.bf16.msra.mxu0 %v5770
  %8416 = vmatprep.subr.bf16.mxu0 0
  %8417 = vmatpush2.bf16.msra.mxu0 %v5769
  %8418 = vmatprep.subr.bf16.mxu0 0
  %8419 = vmatpush2.bf16.msra.mxu0 %v5768
  %8420 = vmatprep.subr.bf16.mxu0 0
  %8421 = vmatpush2.bf16.msra.mxu0 %v5767
  %8422 = vmatprep.subr.bf16.mxu0 0
  %8423 = vmatpush2.bf16.msra.mxu0 %v5766
  %8424 = vmatprep.subr.bf16.mxu0 0
  %8425 = vmatpush2.bf16.msra.mxu0 %v5765
  %8426 = vmatprep.subr.bf16.mxu0 0
  %8427 = vmatpush2.bf16.msra.mxu0 %v5764
  %8428 = vmatprep.mubr.bf16.mxu0 %v1849
  %8429 = vmatmul.mubr.bf16.gmra.mxu0 %v1848
  %v8430 = vpop.f32.mrf.mxu0
  %v8431 = vadd.f32 %v8391, %v8430
  %v8432 = vpop.f32.mrf.mxu0
  %v8433 = vpop.f32.mrf.mxu0
  %v8434 = vpop.f32.mrf.mxu0
  %8435 = vdwg.mxu0
  %8436 = vmatprep.subr.bf16.mxu0 0
  %8437 = vmatpush1.bf16.msra.mxu0 %v5779
  %8438 = vmatprep.subr.bf16.mxu0 0
  %8439 = vmatpush1.bf16.msra.mxu0 %v5778
  %8440 = vmatprep.subr.bf16.mxu0 0
  %8441 = vmatpush1.bf16.msra.mxu0 %v5777
  %8442 = vmatprep.subr.bf16.mxu0 0
  %8443 = vmatpush1.bf16.msra.mxu0 %v5776
  %8444 = vmatprep.subr.bf16.mxu0 0
  %8445 = vmatpush1.bf16.msra.mxu0 %v5775
  %8446 = vmatprep.subr.bf16.mxu0 0
  %8447 = vmatpush1.bf16.msra.mxu0 %v5774
  %8448 = vmatprep.subr.bf16.mxu0 0
  %8449 = vmatpush1.bf16.msra.mxu0 %v5773
  %8450 = vmatprep.subr.bf16.mxu0 0
  %8451 = vmatpush1.bf16.msra.mxu0 %v5772
  %8452 = vmatprep.subr.bf16.mxu0 0
  %8453 = vmatpush2.bf16.msra.mxu0 %v5787
  %8454 = vmatprep.subr.bf16.mxu0 0
  %8455 = vmatpush2.bf16.msra.mxu0 %v5786
  %8456 = vmatprep.subr.bf16.mxu0 0
  %8457 = vmatpush2.bf16.msra.mxu0 %v5785
  %8458 = vmatprep.subr.bf16.mxu0 0
  %8459 = vmatpush2.bf16.msra.mxu0 %v5784
  %8460 = vmatprep.subr.bf16.mxu0 0
  %8461 = vmatpush2.bf16.msra.mxu0 %v5783
  %8462 = vmatprep.subr.bf16.mxu0 0
  %8463 = vmatpush2.bf16.msra.mxu0 %v5782
  %8464 = vmatprep.subr.bf16.mxu0 0
  %8465 = vmatpush2.bf16.msra.mxu0 %v5781
  %8466 = vmatprep.subr.bf16.mxu0 0
  %8467 = vmatpush2.bf16.msra.mxu0 %v5780
  %8468 = vmatprep.mubr.bf16.mxu0 %v1851
  %8469 = vmatmul.mubr.bf16.gmra.mxu0 %v1850
  %v8470 = vpop.f32.mrf.mxu0
  %v8471 = vadd.f32 %v8431, %v8470
  %v8472 = vpop.f32.mrf.mxu0
  %v8473 = vpop.f32.mrf.mxu0
  %v8474 = vpop.f32.mrf.mxu0
  %8475 = vdwg.mxu0
  %v8476 = vmax.f32 %v8471, 0.0
  %v8477 = vpack.c.bf16 %v8476, %v8476
  %v8478 = vld [vmem:[%s3] sm:$0xf]
  %v8479 = vld [vmem:[%s3 + $0x4] sm:$0xf]
  %v8480 = vld [vmem:[%s3 + $0x8] sm:$0xf]
  %v8481 = vld [vmem:[%s3 + $0xc] sm:$0xf]
  %v8482 = vld [vmem:[%s3 + $0x10] sm:$0xf]
  %v8483 = vld [vmem:[%s3 + $0x14] sm:$0xf]
  %v8484 = vld [vmem:[%s3 + $0x18] sm:$0xf]
  %v8485 = vld [vmem:[%s3 + $0x1c] sm:$0xf]
  %v8486 = vld [vmem:[%s3 + $0x20] sm:$0xf]
  %v8487 = vld [vmem:[%s3 + $0x24] sm:$0xf]
  %v8488 = vld [vmem:[%s3 + $0x28] sm:$0xf]
  %v8489 = vld [vmem:[%s3 + $0x2c] sm:$0xf]
  %v8490 = vld [vmem:[%s3 + $0x30] sm:$0xf]
  %v8491 = vld [vmem:[%s3 + $0x34] sm:$0xf]
  %v8492 = vld [vmem:[%s3 + $0x38] sm:$0xf]
  %v8493 = vld [vmem:[%s3 + $0x3c] sm:$0xf]
  %v8494 = vld [vmem:[%s4] sm:$0x1]
  %v8496 = vlaneseq
  %v8497 = vshrl.u32 %v8496, 7
  %v8498 = vsub.s32 0, %v8497
  %v8499 = vrot.slane %v8494, %v8498
  %v8517 = vunpack.c.l.b16 %v8478
  %v8518 = vunpack.c.l.b16 %v8479
  %v8519 = vunpack.c.l.b16 %v8480
  %v8520 = vunpack.c.l.b16 %v8481
  %v8521 = vunpack.c.l.b16 %v8482
  %v8522 = vunpack.c.l.b16 %v8483
  %v8523 = vunpack.c.l.b16 %v8484
  %v8524 = vunpack.c.l.b16 %v8485
  %v8525 = vunpack.c.l.b16 %v8486
  %v8526 = vunpack.c.l.b16 %v8487
  %v8527 = vunpack.c.l.b16 %v8488
  %v8528 = vunpack.c.l.b16 %v8489
  %v8529 = vunpack.c.l.b16 %v8490
  %v8530 = vunpack.c.l.b16 %v8491
  %v8531 = vunpack.c.l.b16 %v8492
  %v8532 = vunpack.c.l.b16 %v8493
  %v8533 = vpack.c.b16 %v8518, %v8517
  %v8534 = vpack.c.b16 %v8520, %v8519
  %v8535 = vpack.c.b16 %v8522, %v8521
  %v8536 = vpack.c.b16 %v8524, %v8523
  %v8537 = vpack.c.b16 %v8526, %v8525
  %v8538 = vpack.c.b16 %v8528, %v8527
  %v8539 = vpack.c.b16 %v8530, %v8529
  %v8540 = vpack.c.b16 %v8532, %v8531
  %8549 = vmatprep.subr.bf16.mxu0 0
  %8550 = vmatpush1.bf16.msra.mxu0 %v8540
  %8551 = vmatprep.subr.bf16.mxu0 0
  %8552 = vmatpush1.bf16.msra.mxu0 %v8539
  %8553 = vmatprep.subr.bf16.mxu0 0
  %8554 = vmatpush1.bf16.msra.mxu0 %v8538
  %8555 = vmatprep.subr.bf16.mxu0 0
  %8556 = vmatpush1.bf16.msra.mxu0 %v8537
  %8557 = vmatprep.subr.bf16.mxu0 0
  %8558 = vmatpush1.bf16.msra.mxu0 %v8536
  %8559 = vmatprep.subr.bf16.mxu0 0
  %8560 = vmatpush1.bf16.msra.mxu0 %v8535
  %8561 = vmatprep.subr.bf16.mxu0 0
  %8562 = vmatpush1.bf16.msra.mxu0 %v8534
  %8563 = vmatprep.subr.bf16.mxu0 0
  %8564 = vmatpush1.bf16.msra.mxu0 %v8533
  %8565 = vmatprep.subr.bf16.mxu0 0
  %8566 = vmatpush2.bf16.msra.mxu0 0
  %8567 = vmatprep.subr.bf16.mxu0 0
  %8568 = vmatpush2.bf16.msra.mxu0 0
  %8569 = vmatprep.subr.bf16.mxu0 0
  %8570 = vmatpush2.bf16.msra.mxu0 0
  %8571 = vmatprep.subr.bf16.mxu0 0
  %8572 = vmatpush2.bf16.msra.mxu0 0
  %8573 = vmatprep.subr.bf16.mxu0 0
  %8574 = vmatpush2.bf16.msra.mxu0 0
  %8575 = vmatprep.subr.bf16.mxu0 0
  %8576 = vmatpush2.bf16.msra.mxu0 0
  %8577 = vmatprep.subr.bf16.mxu0 0
  %8578 = vmatpush2.bf16.msra.mxu0 0
  %8579 = vmatprep.subr.bf16.mxu0 0
  %8580 = vmatpush2.bf16.msra.mxu0 0
  %8581 = vmatprep.mubr.bf16.mxu0 0
  %8582 = vmatmul.mubr.bf16.gmra.mxu0 %v8477
  %v8583 = vpop.f32.mrf.mxu0
  %v8584 = vadd.f32 %v8499, %v8583
  %v8585 = vpop.f32.mrf.mxu0
  %v8586 = vpop.f32.mrf.mxu0
  %v8587 = vpop.f32.mrf.mxu0
  %8588 = vdwg.mxu0
  %8589 = vmax.xlane.f32.xlu0 %v8584
  %v8590 = vpop.xlane.xlu0 %8589
  %v8591 = vsub.f32 %v8584, %v8590
  %v8592 = vmul.f32 %v8591, 1.442695
  %v8593 = vpow.pop %v8592
  %8594 = vadd.xlane.f32.xlu0 %v8593
  %v8595 = vpop.xlane.xlu0 %8594
  %v8596 = vlog2.pop %v8595
  %v8597 = vmul.f32 %v8596, 0.6931472
  %v8598 = vadd.f32 %v8597, %v8590
  %v8599 = vsub.f32 %v8584, %v8598
  %8600 = vst [vmem:[%s5] sm:$0xff] %v8599
  // Predicated region
  $region22: #{net_forward.3} parent=0 // pred_check
    _
  $region23: #{net_forward.3} parent=0 // pred_check_branch
    %8602 = sbr.rel (0) target = $region25
  $region24: #{net_forward.3} parent=0 // pred_region
    _
  $region25: #{net_forward.3} parent=0 // pred_fallthru
    _
  // Predicated region
  $region26: #{net_forward.3} parent=0 // pred_check
    _
  $region27: #{net_forward.3} parent=0 // pred_check_branch
    %8604 = sbr.rel (0) target = $region29
  $region28: #{net_forward.3} parent=0 // pred_region
    _
  $region29: #{net_forward.3} parent=0 // pred_fallthru
    _

</llo_original>
